<compile_context>
chip_gen: v7x
topology: tpu7x:2x2x1
jax: 0.10.0
libtpu: 0.0.40
codegen_flags: <defaults>
</compile_context>

<pallas_src>
import functools

import jax
import jax.numpy as jnp
from jax.experimental import pallas as pl
from jax.experimental.pallas import tpu as pltpu

BN_EPS = 1e-5


# ----------------------------------------------------------------------------
# Kernel 1: conv1 = single im2col matmul + BN + ReLU6, grid over batch.
# ----------------------------------------------------------------------------
def _conv1_kernel(xi_ref, w_ref, scale_ref, shift_ref, o_ref):
    y = jnp.dot(xi_ref[0], w_ref[...], preferred_element_type=jnp.float32)  # (HW, Cout)
    o_ref[0] = jnp.clip(y * scale_ref[...] + shift_ref[...], 0.0, 6.0)


def conv1_bn_relu6(x, pc):
    N, H, W, Cin = x.shape
    Cout = pc["scale"].shape[-1]
    xp = jnp.pad(x, ((0, 0), (1, 1), (1, 1), (0, 0)))
    # Tiny im2col in the wrapper (2x256x27 f32 ~ 55 KB): one MXU push in-kernel.
    cols = [xp[:, kh:kh + H, kw:kw + W, :] for kh in range(3) for kw in range(3)]
    xi = jnp.concatenate(cols, axis=-1).reshape(N, H * W, 9 * Cin)
    w27 = pc["w"].reshape(9 * Cin, Cout)
    cost = pl.CostEstimate(
        flops=int(2 * N * H * W * 9 * Cin * Cout),
        transcendentals=0,
        bytes_accessed=int(4 * (xi.size + w27.size + 2 * Cout + N * H * W * Cout)))
    y = pl.pallas_call(
        _conv1_kernel,
        out_shape=jax.ShapeDtypeStruct((N, H * W, Cout), jnp.float32),
        grid=(N,),
        in_specs=[
            pl.BlockSpec((1, H * W, 9 * Cin), lambda n: (n, 0, 0)),
            pl.BlockSpec((9 * Cin, Cout), lambda n: (0, 0)),
            pl.BlockSpec((1, Cout), lambda n: (0, 0)),
            pl.BlockSpec((1, Cout), lambda n: (0, 0)),
        ],
        out_specs=pl.BlockSpec((1, H * W, Cout), lambda n: (n, 0, 0)),
        compiler_params=pltpu.CompilerParams(dimension_semantics=("parallel",)),
        cost_estimate=cost,
    )(xi, w27, pc["scale"], pc["shift"])
    return y.reshape(N, H, W, Cout)


# ----------------------------------------------------------------------------
# Kernel 2: fused [stride-2 DSConv -> stride-1 DSConv -> STAM] per image.
#   stage a: depthwise 3x3 stride-2 (parity-quadrant input, contiguous slices only)
#            + BN + ReLU6 + ONE slab pointwise matmul + BN + ReLU6
#   stage b: depthwise 3x3 stride-1 via zero-padded VMEM scratch + BN + ReLU6
#            + ONE slab pointwise matmul + BN + ReLU6
#   STAM   : slab-wide spatial attention, channel attention on the live slab,
#            single final store.
# ----------------------------------------------------------------------------
def _block_stam_kernel(xq_ref,
                       adw_ref, as1_ref, ab1_ref, apw_ref, as2_ref, ab2_ref,
                       bdw_ref, bs1_ref, bb1_ref, bpw_ref, bs2_ref, bb2_ref,
                       wsp_ref, bsp_ref, w1_ref, w2_ref,
                       o_ref, pad_ref, *, Ho, Wo):
    xq = xq_ref[0]                                   # (4, Ho+1, Wo+1, Cin) parity quadrants
    adw = adw_ref[...]                               # (3, 3, Cin)
    Cin = adw.shape[-1]

    # -- stage a: depthwise 3x3, stride 2 (parity form -> only contiguous slices) --
    acc = jnp.zeros((Ho, Wo, Cin), jnp.float32)
    for kh in range(3):
        for kw in range(3):
            q = (kh % 2) * 2 + (kw % 2)
            tap = xq[q, kh // 2:kh // 2 + Ho, kw // 2:kw // 2 + Wo, :]
            acc = acc + tap * adw[kh, kw, :]
    dwa = jnp.clip(acc * as1_ref[0] + ab1_ref[0], 0.0, 6.0)          # (Ho, Wo, Cin)

    # -- stage a: pointwise 1x1 as ONE slab matmul (f32) + BN + ReLU6 --
    apw = apw_ref[...]                                               # (Cin, Cmid)
    Cmid = apw.shape[-1]
    xa = jnp.dot(dwa.reshape(Ho * Wo, Cin), apw, preferred_element_type=jnp.float32)
    xa = jnp.clip(xa * as2_ref[...] + ab2_ref[...], 0.0, 6.0)        # (Ho*Wo, Cmid)

    # -- stage b: depthwise 3x3, stride 1, via zero-padded VMEM scratch --
    pad_ref[...] = jnp.zeros_like(pad_ref)
    pad_ref[1:Ho + 1, 1:Wo + 1, :] = xa.reshape(Ho, Wo, Cmid)
    bdw = bdw_ref[...]                                               # (3, 3, Cmid)
    accb = jnp.zeros((Ho, Wo, Cmid), jnp.float32)
    for kh in range(3):
        for kw in range(3):
            accb = accb + pad_ref[kh:kh + Ho, kw:kw + Wo, :] * bdw[kh, kw, :]
    dwb = jnp.clip(accb * bs1_ref[0] + bb1_ref[0], 0.0, 6.0)

    # -- stage b: pointwise 1x1 as ONE slab matmul + BN + ReLU6 --
    xb = jnp.dot(dwb.reshape(Ho * Wo, Cmid), bpw_ref[...],
                 preferred_element_type=jnp.float32)
    xb = jnp.clip(xb * bs2_ref[...] + bb2_ref[...], 0.0, 6.0)        # (Ho*Wo, Cmid)

    # -- STAM spatial attention: slab-wide VPU multiply + lane reduce + EUP sigmoid --
    s_logit = jnp.sum(xb * wsp_ref[...], axis=-1, keepdims=True) + bsp_ref[...]
    x_sp = xb * jax.nn.sigmoid(s_logit)                              # (Ho*Wo, Cmid)

    # -- STAM channel attention on the live slab (no store/reload of o_ref) --
    avg = jnp.mean(x_sp, axis=0, keepdims=True)                      # (1, Cmid)
    mx = jnp.max(x_sp, axis=0, keepdims=True)                        # (1, Cmid)
    v = jnp.concatenate([avg, mx], axis=0)                           # (2, Cmid)
    hid = jnp.maximum(jnp.dot(v, w1_ref[...], preferred_element_type=jnp.float32), 0.0)
    mlp = jnp.dot(hid, w2_ref[...], preferred_element_type=jnp.float32)
    ch_att = jax.nn.sigmoid(mlp[0:1, :] + mlp[1:2, :])               # (1, Cmid)

    o_ref[0] = x_sp * ch_att                                         # single store


def _pad_parity_stack(x):
    """(N,H,W,C) -> (N,4,H//2+1,W//2+1,C): parity quadrants of the zero-padded array."""
    xp = jnp.pad(x, ((0, 0), (1, 1), (1, 1), (0, 0)))
    return jnp.stack([xp[:, 0::2, 0::2, :], xp[:, 0::2, 1::2, :],
                      xp[:, 1::2, 0::2, :], xp[:, 1::2, 1::2, :]], axis=1)


def block_stam(x, pa, pb, ps):
    """DepthwiseSeparableConv(stride=2) -> DepthwiseSeparableConv(stride=1) -> STAM."""
    N, H, W, Cin = x.shape
    Ho, Wo = H // 2, W // 2
    Hp, Wp = Ho + 1, Wo + 1
    Cmid = pa["pw_w"].shape[1]
    Cr = ps["w1"].shape[1]
    xq = _pad_parity_stack(x)                        # (N, 4, Hp, Wp, Cin) -> one DMA/step
    kern = functools.partial(_block_stam_kernel, Ho=Ho, Wo=Wo)

    def cvec(C):
        return pl.BlockSpec((1, C), lambda n: (0, 0))

    cost = pl.CostEstimate(
        flops=int(N * (2 * Ho * Wo * Cin * 9 + 2 * Ho * Wo * Cin * Cmid
                       + 2 * Ho * Wo * Cmid * 9 + 2 * Ho * Wo * Cmid * Cmid
                       + 4 * Ho * Wo * Cmid + 8 * Cmid * Cr)),
        transcendentals=int(N * (Ho * Wo + Cmid)),
        bytes_accessed=int(4 * (xq.size + 9 * Cin + Cin * Cmid + 9 * Cmid + Cmid * Cmid
                                + 2 * Cin + 6 * Cmid + 1 + 2 * Cmid * Cr
                                + N * Ho * Wo * Cmid)))

    y = pl.pallas_call(
        kern,
        out_shape=jax.ShapeDtypeStruct((N, Ho * Wo, Cmid), jnp.float32),
        grid=(N,),
        in_specs=[
            pl.BlockSpec((1, 4, Hp, Wp, Cin), lambda n: (n, 0, 0, 0, 0)),
            pl.BlockSpec((3, 3, Cin), lambda n: (0, 0, 0)), cvec(Cin), cvec(Cin),
            pl.BlockSpec((Cin, Cmid), lambda n: (0, 0)), cvec(Cmid), cvec(Cmid),
            pl.BlockSpec((3, 3, Cmid), lambda n: (0, 0, 0)), cvec(Cmid), cvec(Cmid),
            pl.BlockSpec((Cmid, Cmid), lambda n: (0, 0)), cvec(Cmid), cvec(Cmid),
            cvec(Cmid),                                     # wsp (1, Cmid)
            pl.BlockSpec((1, 1), lambda n: (0, 0)),         # bsp
            pl.BlockSpec((Cmid, Cr), lambda n: (0, 0)),
            pl.BlockSpec((Cr, Cmid), lambda n: (0, 0)),
        ],
        out_specs=pl.BlockSpec((1, Ho * Wo, Cmid), lambda n: (n, 0, 0)),
        scratch_shapes=[pltpu.VMEM((Ho + 2, Wo + 2, Cmid), jnp.float32)],
        compiler_params=pltpu.CompilerParams(dimension_semantics=("parallel",)),
        cost_estimate=cost,
    )(xq,
      pa["dw_w"], pa["bn1_scale"], pa["bn1_shift"], pa["pw_w"], pa["bn2_scale"], pa["bn2_shift"],
      pb["dw_w"], pb["bn1_scale"], pb["bn1_shift"], pb["pw_w"], pb["bn2_scale"], pb["bn2_shift"],
      ps["wsp"], ps["bsp"], ps["w1"], ps["w2"])
    return y.reshape(N, Ho, Wo, Cmid)


# ----------------------------------------------------------------------------
# Params (inference-folded BatchNorm) and forward glue
# ----------------------------------------------------------------------------
def _fold_bn(gamma, beta, mean, var):
    scale = gamma / jnp.sqrt(var + BN_EPS)
    shift = beta - mean * scale
    return (scale.reshape(1, -1).astype(jnp.float32),
            shift.reshape(1, -1).astype(jnp.float32))


def init_params(key, in_ch=3, base=32):
    keys = iter(jax.random.split(key, 128))

    def nrm(shape, std=0.1):
        return jax.random.normal(next(keys), shape, jnp.float32) * std

    def bn(C):
        gamma = 1.0 + 0.1 * jax.random.normal(next(keys), (C,), jnp.float32)
        beta = 0.1 * jax.random.normal(next(keys), (C,), jnp.float32)
        mean = 0.1 * jax.random.normal(next(keys), (C,), jnp.float32)
        var = jax.random.uniform(next(keys), (C,), jnp.float32, minval=0.5, maxval=1.5)
        return _fold_bn(gamma, beta, mean, var)

    def dsconv_p(cin, cout):
        s1, b1 = bn(cin)
        s2, b2 = bn(cout)
        return dict(dw_w=nrm((3, 3, cin)), bn1_scale=s1, bn1_shift=b1,
                    pw_w=nrm((cin, cout)), bn2_scale=s2, bn2_shift=b2)

    def stam_p(c, red=8):
        return dict(wsp=nrm((1, c)), bsp=nrm((1, 1)),
                    w1=nrm((c, c // red)), w2=nrm((c // red, c)))

    p = {}
    s, b = bn(base)
    p["conv1"] = dict(w=nrm((3, 3, in_ch, base)), scale=s, shift=b)
    c1, c2, c3 = base * 2, base * 4, base * 8
    p["b1a"] = dsconv_p(base, c1); p["b1b"] = dsconv_p(c1, c1); p["stam1"] = stam_p(c1)
    p["b2a"] = dsconv_p(c1, c2);   p["b2b"] = dsconv_p(c2, c2); p["stam2"] = stam_p(c2)
    p["b3a"] = dsconv_p(c2, c3);   p["b3b"] = dsconv_p(c3, c3); p["stam3"] = stam_p(c3)
    return p


def lightweight_cnn_forward(x_nchw, params):
    x = jnp.transpose(x_nchw, (0, 2, 3, 1)).astype(jnp.float32)      # NCHW -> NHWC
    p = params
    x = conv1_bn_relu6(x, p["conv1"])                                # (N, 16, 16, 32)
    x = block_stam(x, p["b1a"], p["b1b"], p["stam1"])                # (N,  8,  8, 64)
    x = block_stam(x, p["b2a"], p["b2b"], p["stam2"])                # (N,  4,  4, 128)
    x = block_stam(x, p["b3a"], p["b3b"], p["stam3"])                # (N,  2,  2, 256)
    return jnp.transpose(x, (0, 3, 1, 2))                            # NHWC -> NCHW


# ----------------------------------------------------------------------------
# Pure-JAX reference (same inference-folded BN semantics) for validation.
# ----------------------------------------------------------------------------
def _ref_forward(x_nchw, p):
    x = jnp.transpose(x_nchw, (0, 2, 3, 1)).astype(jnp.float32)
    hi = jax.lax.Precision.HIGHEST

    def conv(x, w, stride, groups):
        return jax.lax.conv_general_dilated(
            x, w, window_strides=(stride, stride), padding=((1, 1), (1, 1)),
            dimension_numbers=("NHWC", "HWIO", "NHWC"),
            feature_group_count=groups, precision=hi)

    def relu6(v):
        return jnp.clip(v, 0.0, 6.0)

    def dsconv(x, pp, stride):
        C = pp["dw_w"].shape[-1]
        y = conv(x, pp["dw_w"].reshape(3, 3, 1, C), stride, C)
        y = relu6(y * pp["bn1_scale"][0] + pp["bn1_shift"][0])
        y = jnp.einsum("nhwc,cd->nhwd", y, pp["pw_w"], precision=hi)
        return relu6(y * pp["bn2_scale"][0] + pp["bn2_shift"][0])

    def stam(x, ps):
        s = jax.nn.sigmoid(
            jnp.einsum("nhwc,c->nhw", x, ps["wsp"][0], precision=hi)[..., None]
            + ps["bsp"][0, 0])
        x_sp = x * s
        avg = jnp.mean(x_sp, axis=(1, 2))
        mx = jnp.max(x_sp, axis=(1, 2))

        def mlp(v):
            return jnp.maximum(v @ ps["w1"], 0.0) @ ps["w2"]

        ch = jax.nn.sigmoid(mlp(avg) + mlp(mx))
        return x_sp * ch[:, None, None, :]

    y = relu6(conv(x, p["conv1"]["w"], 1, 1) * p["conv1"]["scale"][0] + p["conv1"]["shift"][0])
    y = stam(dsconv(dsconv(y, p["b1a"], 2), p["b1b"], 1), p["stam1"])
    y = stam(dsconv(dsconv(y, p["b2a"], 2), p["b2b"], 1), p["stam2"])
    y = stam(dsconv(dsconv(y, p["b3a"], 2), p["b3b"], 1), p["stam3"])
    return jnp.transpose(y, (0, 3, 1, 2))


if __name__ == "__main__":
    key = jax.random.PRNGKey(0)
    kx, kp = jax.random.split(key)
    # PyTorch-convention NCHW input: batch=2, channels=3, spatial=16x16
    x = jax.random.normal(kx, (2, 3, 16, 16), jnp.float32)
    params = init_params(kp, in_ch=3, base=32)

    fwd = jax.jit(lightweight_cnn_forward)
    out = fwd(x, params)
    jax.block_until_ready(out)
    assert out.shape == (2, 256, 2, 2), out.shape
    assert bool(jnp.all(jnp.isfinite(out)))

    ref = _ref_forward(x, params)
    max_diff = float(jnp.max(jnp.abs(out - ref)))
    assert bool(jnp.allclose(out, ref, rtol=2e-2, atol=2e-2)), f"max |diff| = {max_diff}"
    print("KERNEL_OK")
</pallas_src>

<mosaic_0001>
module attributes {stable_mosaic.version = 11 : i64} {
  func.func @_conv1_kernel(%arg0: i32, %arg1: memref<1x256x27xf32, #tpu.memory_space<vmem>>, %arg2: memref<27x32xf32, #tpu.memory_space<vmem>>, %arg3: memref<1x32xf32, #tpu.memory_space<vmem>>, %arg4: memref<1x32xf32, #tpu.memory_space<vmem>>, %arg5: memref<1x256x32xf32, #tpu.memory_space<vmem>>) attributes {dimension_semantics = [#tpu.dimension_semantics<parallel>], iteration_bounds = array<i64: 2>, scalar_prefetch = 0 : i64, scratch_operands = 0 : i64, tpu.core_type = #tpu.core_type<tc>, window_params = [{transform_indices = @transform_0, window_bounds = array<i64: 1, 256, 27>}, {pipeline_mode = #tpu.pipeline_mode<synchronous>, transform_indices = @transform_1, window_bounds = array<i64: 27, 32>}, {pipeline_mode = #tpu.pipeline_mode<synchronous>, transform_indices = @transform_2, window_bounds = array<i64: 1, 32>}, {pipeline_mode = #tpu.pipeline_mode<synchronous>, transform_indices = @transform_3, window_bounds = array<i64: 1, 32>}, {transform_indices = @transform_4, window_bounds = array<i64: 1, 256, 32>}]} {
    %c0 = arith.constant 0 : index
    %c0_0 = arith.constant 0 : index
    %c0_1 = arith.constant 0 : index
    %0 = vector.load %arg1[%c0, %c0_0, %c0_1] : memref<1x256x27xf32, #tpu.memory_space<vmem>>, vector<1x256x27xf32>
    %1 = vector.shape_cast %0 : vector<1x256x27xf32> to vector<256x27xf32>
    %c0_2 = arith.constant 0 : index
    %c0_3 = arith.constant 0 : index
    %2 = vector.load %arg2[%c0_2, %c0_3] : memref<27x32xf32, #tpu.memory_space<vmem>>, vector<27x32xf32>
    %cst = arith.constant dense<0.000000e+00> : vector<256x32xf32>
    %3 = tpu.matmul %1, %2, %cst {dimension_numbers = #tpu.dot_dimension_numbers<[1], [0], [0], [1], [0, 0, 1, 1], [], []>} : vector<256x27xf32>, vector<27x32xf32>, vector<256x32xf32> -> vector<256x32xf32>
    %c0_4 = arith.constant 0 : index
    %c0_5 = arith.constant 0 : index
    %4 = vector.load %arg3[%c0_4, %c0_5] : memref<1x32xf32, #tpu.memory_space<vmem>>, vector<1x32xf32>
    %5 = vector.broadcast %4 : vector<1x32xf32> to vector<256x32xf32>
    %6 = arith.mulf %3, %5 : vector<256x32xf32>
    %c0_6 = arith.constant 0 : index
    %c0_7 = arith.constant 0 : index
    %7 = vector.load %arg4[%c0_6, %c0_7] : memref<1x32xf32, #tpu.memory_space<vmem>>, vector<1x32xf32>
    %8 = vector.broadcast %7 : vector<1x32xf32> to vector<256x32xf32>
    %9 = arith.addf %6, %8 : vector<256x32xf32>
    %cst_8 = arith.constant 0.000000e+00 : f32
    %cst_9 = arith.constant 6.000000e+00 : f32
    %10 = vector.broadcast %cst_8 : f32 to vector<256x32xf32>
    %11 = arith.maximumf %10, %9 : vector<256x32xf32>
    %12 = vector.broadcast %cst_9 : f32 to vector<256x32xf32>
    %13 = arith.minimumf %12, %11 : vector<256x32xf32>
    %c0_10 = arith.constant 0 : index
    %c0_11 = arith.constant 0 : index
    %c0_12 = arith.constant 0 : index
    %14 = vector.load %arg5[%c0_10, %c0_11, %c0_12] : memref<1x256x32xf32, #tpu.memory_space<vmem>>, vector<1x256x32xf32>
    %15 = vector.shape_cast %14 : vector<1x256x32xf32> to vector<256x32xf32>
    %16 = vector.shape_cast %13 : vector<256x32xf32> to vector<1x256x32xf32>
    tpu.vector_store %arg5[%c0_10, %c0_11, %c0_12], %16 {strides = array<i32>} : memref<1x256x32xf32, #tpu.memory_space<vmem>>, vector<1x256x32xf32>,
    return
  }
  func.func @transform_0(%arg0: i32) -> (i32, i32, i32) {
    %c0_i32 = arith.constant 0 : i32
    %c0_i32_0 = arith.constant 0 : i32
    %c0_i32_1 = arith.constant 0 : i32
    return %arg0, %c0_i32, %c0_i32_0 : i32, i32, i32
  }
  func.func @transform_1(%arg0: i32) -> (i32, i32) {
    %c0_i32 = arith.constant 0 : i32
    %c0_i32_0 = arith.constant 0 : i32
    %c0_i32_1 = arith.constant 0 : i32
    return %c0_i32, %c0_i32_0 : i32, i32
  }
  func.func @transform_2(%arg0: i32) -> (i32, i32) {
    %c0_i32 = arith.constant 0 : i32
    %c0_i32_0 = arith.constant 0 : i32
    %c0_i32_1 = arith.constant 0 : i32
    return %c0_i32, %c0_i32_0 : i32, i32
  }
  func.func @transform_3(%arg0: i32) -> (i32, i32) {
    %c0_i32 = arith.constant 0 : i32
    %c0_i32_0 = arith.constant 0 : i32
    %c0_i32_1 = arith.constant 0 : i32
    return %c0_i32, %c0_i32_0 : i32, i32
  }
  func.func @transform_4(%arg0: i32) -> (i32, i32, i32) {
    %c0_i32 = arith.constant 0 : i32
    %c0_i32_0 = arith.constant 0 : i32
    %c0_i32_1 = arith.constant 0 : i32
    return %arg0, %c0_i32, %c0_i32_0 : i32, i32, i32
  }
}

module attributes {stable_mosaic.version = 11 : i64} {
  func.func @_block_stam_kernel(%arg0: i32, %arg1: memref<1x4x9x9x32xf32, #tpu.memory_space<vmem>>, %arg2: memref<3x3x32xf32, #tpu.memory_space<vmem>>, %arg3: memref<1x32xf32, #tpu.memory_space<vmem>>, %arg4: memref<1x32xf32, #tpu.memory_space<vmem>>, %arg5: memref<32x64xf32, #tpu.memory_space<vmem>>, %arg6: memref<1x64xf32, #tpu.memory_space<vmem>>, %arg7: memref<1x64xf32, #tpu.memory_space<vmem>>, %arg8: memref<3x3x64xf32, #tpu.memory_space<vmem>>, %arg9: memref<1x64xf32, #tpu.memory_space<vmem>>, %arg10: memref<1x64xf32, #tpu.memory_space<vmem>>, %arg11: memref<64x64xf32, #tpu.memory_space<vmem>>, %arg12: memref<1x64xf32, #tpu.memory_space<vmem>>, %arg13: memref<1x64xf32, #tpu.memory_space<vmem>>, %arg14: memref<1x64xf32, #tpu.memory_space<vmem>>, %arg15: memref<1x1xf32, #tpu.memory_space<vmem>>, %arg16: memref<64x8xf32, #tpu.memory_space<vmem>>, %arg17: memref<8x64xf32, #tpu.memory_space<vmem>>, %arg18: memref<1x64x64xf32, #tpu.memory_space<vmem>>, %arg19: memref<10x10x64xf32, #tpu.memory_space<vmem>>) attributes {dimension_semantics = [#tpu.dimension_semantics<parallel>], iteration_bounds = array<i64: 2>, scalar_prefetch = 0 : i64, scratch_operands = 1 : i64, tpu.core_type = #tpu.core_type<tc>, window_params = [{transform_indices = @transform_0, window_bounds = array<i64: 1, 4, 9, 9, 32>}, {pipeline_mode = #tpu.pipeline_mode<synchronous>, transform_indices = @transform_1, window_bounds = array<i64: 3, 3, 32>}, {pipeline_mode = #tpu.pipeline_mode<synchronous>, transform_indices = @transform_2, window_bounds = array<i64: 1, 32>}, {pipeline_mode = #tpu.pipeline_mode<synchronous>, transform_indices = @transform_3, window_bounds = array<i64: 1, 32>}, {pipeline_mode = #tpu.pipeline_mode<synchronous>, transform_indices = @transform_4, window_bounds = array<i64: 32, 64>}, {pipeline_mode = #tpu.pipeline_mode<synchronous>, transform_indices = @transform_5, window_bounds = array<i64: 1, 64>}, {pipeline_mode = #tpu.pipeline_mode<synchronous>, transform_indices = @transform_6, window_bounds = array<i64: 1, 64>}, {pipeline_mode = #tpu.pipeline_mode<synchronous>, transform_indices = @transform_7, window_bounds = array<i64: 3, 3, 64>}, {pipeline_mode = #tpu.pipeline_mode<synchronous>, transform_indices = @transform_8, window_bounds = array<i64: 1, 64>}, {pipeline_mode = #tpu.pipeline_mode<synchronous>, transform_indices = @transform_9, window_bounds = array<i64: 1, 64>}, {pipeline_mode = #tpu.pipeline_mode<synchronous>, transform_indices = @transform_10, window_bounds = array<i64: 64, 64>}, {pipeline_mode = #tpu.pipeline_mode<synchronous>, transform_indices = @transform_11, window_bounds = array<i64: 1, 64>}, {pipeline_mode = #tpu.pipeline_mode<synchronous>, transform_indices = @transform_12, window_bounds = array<i64: 1, 64>}, {pipeline_mode = #tpu.pipeline_mode<synchronous>, transform_indices = @transform_13, window_bounds = array<i64: 1, 64>}, {pipeline_mode = #tpu.pipeline_mode<synchronous>, transform_indices = @transform_14, window_bounds = array<i64: 1, 1>}, {pipeline_mode = #tpu.pipeline_mode<synchronous>, transform_indices = @transform_15, window_bounds = array<i64: 64, 8>}, {pipeline_mode = #tpu.pipeline_mode<synchronous>, transform_indices = @transform_16, window_bounds = array<i64: 8, 64>}, {transform_indices = @transform_17, window_bounds = array<i64: 1, 64, 64>}]} {
    %c0 = arith.constant 0 : index
    %c0_0 = arith.constant 0 : index
    %c0_1 = arith.constant 0 : index
    %c0_2 = arith.constant 0 : index
    %c0_3 = arith.constant 0 : index
    %0 = vector.load %arg1[%c0, %c0_0, %c0_1, %c0_2, %c0_3] : memref<1x4x9x9x32xf32, #tpu.memory_space<vmem>>, vector<1x4x9x9x32xf32>
    %1 = vector.shape_cast %0 : vector<1x4x9x9x32xf32> to vector<4x9x9x32xf32>
    %c0_4 = arith.constant 0 : index
    %c0_5 = arith.constant 0 : index
    %c0_6 = arith.constant 0 : index
    %2 = vector.load %arg2[%c0_4, %c0_5, %c0_6] : memref<3x3x32xf32, #tpu.memory_space<vmem>>, vector<3x3x32xf32>
    %cst = arith.constant 0.000000e+00 : f32
    %3 = vector.broadcast %cst : f32 to vector<8x8x32xf32>
    %4 = vector.extract_strided_slice %1 {offsets = [0, 0, 0, 0], sizes = [1, 8, 8, 32], strides = [1, 1, 1, 1]} : vector<4x9x9x32xf32> to vector<1x8x8x32xf32>
    %5 = vector.shape_cast %4 : vector<1x8x8x32xf32> to vector<8x8x32xf32>
    %6 = vector.extract_strided_slice %2 {offsets = [0, 0, 0], sizes = [1, 1, 32], strides = [1, 1, 1]} : vector<3x3x32xf32> to vector<1x1x32xf32>
    %7 = vector.shape_cast %6 : vector<1x1x32xf32> to vector<32xf32>
    %8 = vector.shape_cast %7 : vector<32xf32> to vector<1x1x32xf32>
    %9 = vector.broadcast %8 : vector<1x1x32xf32> to vector<8x8x32xf32>
    %10 = arith.mulf %5, %9 : vector<8x8x32xf32>
    %11 = arith.addf %3, %10 : vector<8x8x32xf32>
    %12 = vector.extract_strided_slice %1 {offsets = [1, 0, 0, 0], sizes = [1, 8, 8, 32], strides = [1, 1, 1, 1]} : vector<4x9x9x32xf32> to vector<1x8x8x32xf32>
    %13 = vector.shape_cast %12 : vector<1x8x8x32xf32> to vector<8x8x32xf32>
    %14 = vector.extract_strided_slice %2 {offsets = [0, 1, 0], sizes = [1, 1, 32], strides = [1, 1, 1]} : vector<3x3x32xf32> to vector<1x1x32xf32>
    %15 = vector.shape_cast %14 : vector<1x1x32xf32> to vector<32xf32>
    %16 = vector.shape_cast %15 : vector<32xf32> to vector<1x1x32xf32>
    %17 = vector.broadcast %16 : vector<1x1x32xf32> to vector<8x8x32xf32>
    %18 = arith.mulf %13, %17 : vector<8x8x32xf32>
    %19 = arith.addf %11, %18 : vector<8x8x32xf32>
    %20 = vector.extract_strided_slice %1 {offsets = [0, 0, 1, 0], sizes = [1, 8, 8, 32], strides = [1, 1, 1, 1]} : vector<4x9x9x32xf32> to vector<1x8x8x32xf32>
    %21 = vector.shape_cast %20 : vector<1x8x8x32xf32> to vector<8x8x32xf32>
    %22 = vector.extract_strided_slice %2 {offsets = [0, 2, 0], sizes = [1, 1, 32], strides = [1, 1, 1]} : vector<3x3x32xf32> to vector<1x1x32xf32>
    %23 = vector.shape_cast %22 : vector<1x1x32xf32> to vector<32xf32>
    %24 = vector.shape_cast %23 : vector<32xf32> to vector<1x1x32xf32>
    %25 = vector.broadcast %24 : vector<1x1x32xf32> to vector<8x8x32xf32>
    %26 = arith.mulf %21, %25 : vector<8x8x32xf32>
    %27 = arith.addf %19, %26 : vector<8x8x32xf32>
    %28 = vector.extract_strided_slice %1 {offsets = [2, 0, 0, 0], sizes = [1, 8, 8, 32], strides = [1, 1, 1, 1]} : vector<4x9x9x32xf32> to vector<1x8x8x32xf32>
    %29 = vector.shape_cast %28 : vector<1x8x8x32xf32> to vector<8x8x32xf32>
    %30 = vector.extract_strided_slice %2 {offsets = [1, 0, 0], sizes = [1, 1, 32], strides = [1, 1, 1]} : vector<3x3x32xf32> to vector<1x1x32xf32>
    %31 = vector.shape_cast %30 : vector<1x1x32xf32> to vector<32xf32>
    %32 = vector.shape_cast %31 : vector<32xf32> to vector<1x1x32xf32>
    %33 = vector.broadcast %32 : vector<1x1x32xf32> to vector<8x8x32xf32>
    %34 = arith.mulf %29, %33 : vector<8x8x32xf32>
    %35 = arith.addf %27, %34 : vector<8x8x32xf32>
    %36 = vector.extract_strided_slice %1 {offsets = [3, 0, 0, 0], sizes = [1, 8, 8, 32], strides = [1, 1, 1, 1]} : vector<4x9x9x32xf32> to vector<1x8x8x32xf32>
    %37 = vector.shape_cast %36 : vector<1x8x8x32xf32> to vector<8x8x32xf32>
    %38 = vector.extract_strided_slice %2 {offsets = [1, 1, 0], sizes = [1, 1, 32], strides = [1, 1, 1]} : vector<3x3x32xf32> to vector<1x1x32xf32>
    %39 = vector.shape_cast %38 : vector<1x1x32xf32> to vector<32xf32>
    %40 = vector.shape_cast %39 : vector<32xf32> to vector<1x1x32xf32>
    %41 = vector.broadcast %40 : vector<1x1x32xf32> to vector<8x8x32xf32>
    %42 = arith.mulf %37, %41 : vector<8x8x32xf32>
    %43 = arith.addf %35, %42 : vector<8x8x32xf32>
    %44 = vector.extract_strided_slice %1 {offsets = [2, 0, 1, 0], sizes = [1, 8, 8, 32], strides = [1, 1, 1, 1]} : vector<4x9x9x32xf32> to vector<1x8x8x32xf32>
    %45 = vector.shape_cast %44 : vector<1x8x8x32xf32> to vector<8x8x32xf32>
    %46 = vector.extract_strided_slice %2 {offsets = [1, 2, 0], sizes = [1, 1, 32], strides = [1, 1, 1]} : vector<3x3x32xf32> to vector<1x1x32xf32>
    %47 = vector.shape_cast %46 : vector<1x1x32xf32> to vector<32xf32>
    %48 = vector.shape_cast %47 : vector<32xf32> to vector<1x1x32xf32>
    %49 = vector.broadcast %48 : vector<1x1x32xf32> to vector<8x8x32xf32>
    %50 = arith.mulf %45, %49 : vector<8x8x32xf32>
    %51 = arith.addf %43, %50 : vector<8x8x32xf32>
    %52 = vector.extract_strided_slice %1 {offsets = [0, 1, 0, 0], sizes = [1, 8, 8, 32], strides = [1, 1, 1, 1]} : vector<4x9x9x32xf32> to vector<1x8x8x32xf32>
    %53 = vector.shape_cast %52 : vector<1x8x8x32xf32> to vector<8x8x32xf32>
    %54 = vector.extract_strided_slice %2 {offsets = [2, 0, 0], sizes = [1, 1, 32], strides = [1, 1, 1]} : vector<3x3x32xf32> to vector<1x1x32xf32>
    %55 = vector.shape_cast %54 : vector<1x1x32xf32> to vector<32xf32>
    %56 = vector.shape_cast %55 : vector<32xf32> to vector<1x1x32xf32>
    %57 = vector.broadcast %56 : vector<1x1x32xf32> to vector<8x8x32xf32>
    %58 = arith.mulf %53, %57 : vector<8x8x32xf32>
    %59 = arith.addf %51, %58 : vector<8x8x32xf32>
    %60 = vector.extract_strided_slice %1 {offsets = [1, 1, 0, 0], sizes = [1, 8, 8, 32], strides = [1, 1, 1, 1]} : vector<4x9x9x32xf32> to vector<1x8x8x32xf32>
    %61 = vector.shape_cast %60 : vector<1x8x8x32xf32> to vector<8x8x32xf32>
    %62 = vector.extract_strided_slice %2 {offsets = [2, 1, 0], sizes = [1, 1, 32], strides = [1, 1, 1]} : vector<3x3x32xf32> to vector<1x1x32xf32>
    %63 = vector.shape_cast %62 : vector<1x1x32xf32> to vector<32xf32>
    %64 = vector.shape_cast %63 : vector<32xf32> to vector<1x1x32xf32>
    %65 = vector.broadcast %64 : vector<1x1x32xf32> to vector<8x8x32xf32>
    %66 = arith.mulf %61, %65 : vector<8x8x32xf32>
    %67 = arith.addf %59, %66 : vector<8x8x32xf32>
    %68 = vector.extract_strided_slice %1 {offsets = [0, 1, 1, 0], sizes = [1, 8, 8, 32], strides = [1, 1, 1, 1]} : vector<4x9x9x32xf32> to vector<1x8x8x32xf32>
    %69 = vector.shape_cast %68 : vector<1x8x8x32xf32> to vector<8x8x32xf32>
    %70 = vector.extract_strided_slice %2 {offsets = [2, 2, 0], sizes = [1, 1, 32], strides = [1, 1, 1]} : vector<3x3x32xf32> to vector<1x1x32xf32>
    %71 = vector.shape_cast %70 : vector<1x1x32xf32> to vector<32xf32>
    %72 = vector.shape_cast %71 : vector<32xf32> to vector<1x1x32xf32>
    %73 = vector.broadcast %72 : vector<1x1x32xf32> to vector<8x8x32xf32>
    %74 = arith.mulf %69, %73 : vector<8x8x32xf32>
    %75 = arith.addf %67, %74 : vector<8x8x32xf32>
    %c0_7 = arith.constant 0 : index
    %c0_8 = arith.constant 0 : index
    %76 = vector.load %arg3[%c0_7, %c0_8] : memref<1x32xf32, #tpu.memory_space<vmem>>, vector<1x32xf32>
    %77 = vector.shape_cast %76 : vector<1x32xf32> to vector<32xf32>
    %78 = vector.shape_cast %77 : vector<32xf32> to vector<1x1x32xf32>
    %79 = vector.broadcast %78 : vector<1x1x32xf32> to vector<8x8x32xf32>
    %80 = arith.mulf %75, %79 : vector<8x8x32xf32>
    %c0_9 = arith.constant 0 : index
    %c0_10 = arith.constant 0 : index
    %81 = vector.load %arg4[%c0_9, %c0_10] : memref<1x32xf32, #tpu.memory_space<vmem>>, vector<1x32xf32>
    %82 = vector.shape_cast %81 : vector<1x32xf32> to vector<32xf32>
    %83 = vector.shape_cast %82 : vector<32xf32> to vector<1x1x32xf32>
    %84 = vector.broadcast %83 : vector<1x1x32xf32> to vector<8x8x32xf32>
    %85 = arith.addf %80, %84 : vector<8x8x32xf32>
    %cst_11 = arith.constant 0.000000e+00 : f32
    %cst_12 = arith.constant 6.000000e+00 : f32
    %86 = vector.broadcast %cst_11 : f32 to vector<8x8x32xf32>
    %87 = arith.maximumf %86, %85 : vector<8x8x32xf32>
    %88 = vector.broadcast %cst_12 : f32 to vector<8x8x32xf32>
    %89 = arith.minimumf %88, %87 : vector<8x8x32xf32>
    %c0_13 = arith.constant 0 : index
    %c0_14 = arith.constant 0 : index
    %90 = vector.load %arg5[%c0_13, %c0_14] : memref<32x64xf32, #tpu.memory_space<vmem>>, vector<32x64xf32>
    %91 = vector.shape_cast %89 : vector<8x8x32xf32> to vector<64x32xf32>
    %cst_15 = arith.constant dense<0.000000e+00> : vector<64x64xf32>
    %92 = tpu.matmul %91, %90, %cst_15 {dimension_numbers = #tpu.dot_dimension_numbers<[1], [0], [0], [1], [0, 0, 1, 1], [], []>} : vector<64x32xf32>, vector<32x64xf32>, vector<64x64xf32> -> vector<64x64xf32>
    %c0_16 = arith.constant 0 : index
    %c0_17 = arith.constant 0 : index
    %93 = vector.load %arg6[%c0_16, %c0_17] : memref<1x64xf32, #tpu.memory_space<vmem>>, vector<1x64xf32>
    %94 = vector.broadcast %93 : vector<1x64xf32> to vector<64x64xf32>
    %95 = arith.mulf %92, %94 : vector<64x64xf32>
    %c0_18 = arith.constant 0 : index
    %c0_19 = arith.constant 0 : index
    %96 = vector.load %arg7[%c0_18, %c0_19] : memref<1x64xf32, #tpu.memory_space<vmem>>, vector<1x64xf32>
    %97 = vector.broadcast %96 : vector<1x64xf32> to vector<64x64xf32>
    %98 = arith.addf %95, %97 : vector<64x64xf32>
    %cst_20 = arith.constant 0.000000e+00 : f32
    %cst_21 = arith.constant 6.000000e+00 : f32
    %99 = vector.broadcast %cst_20 : f32 to vector<64x64xf32>
    %100 = arith.maximumf %99, %98 : vector<64x64xf32>
    %101 = vector.broadcast %cst_21 : f32 to vector<64x64xf32>
    %102 = arith.minimumf %101, %100 : vector<64x64xf32>
    %cst_22 = arith.constant 0.000000e+00 : f32
    %103 = vector.broadcast %cst_22 : f32 to vector<10x10x64xf32>
    %c0_23 = arith.constant 0 : index
    %c0_24 = arith.constant 0 : index
    %c0_25 = arith.constant 0 : index
    %104 = vector.load %arg19[%c0_23, %c0_24, %c0_25] : memref<10x10x64xf32, #tpu.memory_space<vmem>>, vector<10x10x64xf32>
    tpu.vector_store %arg19[%c0_23, %c0_24, %c0_25], %103 {strides = array<i32>} : memref<10x10x64xf32, #tpu.memory_space<vmem>>, vector<10x10x64xf32>,
    %105 = vector.shape_cast %102 : vector<64x64xf32> to vector<8x8x64xf32>
    %c1 = arith.constant 1 : index
    %c1_26 = arith.constant 1 : index
    %c0_27 = arith.constant 0 : index
    %106 = vector.load %arg19[%c1, %c1_26, %c0_27] : memref<10x10x64xf32, #tpu.memory_space<vmem>>, vector<8x8x64xf32>
    tpu.vector_store %arg19[%c1, %c1_26, %c0_27], %105 {strides = array<i32>} : memref<10x10x64xf32, #tpu.memory_space<vmem>>, vector<8x8x64xf32>,
    %c0_28 = arith.constant 0 : index
    %c0_29 = arith.constant 0 : index
    %c0_30 = arith.constant 0 : index
    %107 = vector.load %arg8[%c0_28, %c0_29, %c0_30] : memref<3x3x64xf32, #tpu.memory_space<vmem>>, vector<3x3x64xf32>
    %cst_31 = arith.constant 0.000000e+00 : f32
    %108 = vector.broadcast %cst_31 : f32 to vector<8x8x64xf32>
    %c0_32 = arith.constant 0 : index
    %c0_33 = arith.constant 0 : index
    %c0_34 = arith.constant 0 : index
    %109 = vector.load %arg19[%c0_32, %c0_33, %c0_34] : memref<10x10x64xf32, #tpu.memory_space<vmem>>, vector<8x8x64xf32>
    %110 = vector.extract_strided_slice %107 {offsets = [0, 0, 0], sizes = [1, 1, 64], strides = [1, 1, 1]} : vector<3x3x64xf32> to vector<1x1x64xf32>
    %111 = vector.shape_cast %110 : vector<1x1x64xf32> to vector<64xf32>
    %112 = vector.shape_cast %111 : vector<64xf32> to vector<1x1x64xf32>
    %113 = vector.broadcast %112 : vector<1x1x64xf32> to vector<8x8x64xf32>
    %114 = arith.mulf %109, %113 : vector<8x8x64xf32>
    %115 = arith.addf %108, %114 : vector<8x8x64xf32>
    %c0_35 = arith.constant 0 : index
    %c1_36 = arith.constant 1 : index
    %c0_37 = arith.constant 0 : index
    %116 = vector.load %arg19[%c0_35, %c1_36, %c0_37] : memref<10x10x64xf32, #tpu.memory_space<vmem>>, vector<8x8x64xf32>
    %117 = vector.extract_strided_slice %107 {offsets = [0, 1, 0], sizes = [1, 1, 64], strides = [1, 1, 1]} : vector<3x3x64xf32> to vector<1x1x64xf32>
    %118 = vector.shape_cast %117 : vector<1x1x64xf32> to vector<64xf32>
    %119 = vector.shape_cast %118 : vector<64xf32> to vector<1x1x64xf32>
    %120 = vector.broadcast %119 : vector<1x1x64xf32> to vector<8x8x64xf32>
    %121 = arith.mulf %116, %120 : vector<8x8x64xf32>
    %122 = arith.addf %115, %121 : vector<8x8x64xf32>
    %c0_38 = arith.constant 0 : index
    %c2 = arith.constant 2 : index
    %c0_39 = arith.constant 0 : index
    %123 = vector.load %arg19[%c0_38, %c2, %c0_39] : memref<10x10x64xf32, #tpu.memory_space<vmem>>, vector<8x8x64xf32>
    %124 = vector.extract_strided_slice %107 {offsets = [0, 2, 0], sizes = [1, 1, 64], strides = [1, 1, 1]} : vector<3x3x64xf32> to vector<1x1x64xf32>
    %125 = vector.shape_cast %124 : vector<1x1x64xf32> to vector<64xf32>
    %126 = vector.shape_cast %125 : vector<64xf32> to vector<1x1x64xf32>
    %127 = vector.broadcast %126 : vector<1x1x64xf32> to vector<8x8x64xf32>
    %128 = arith.mulf %123, %127 : vector<8x8x64xf32>
    %129 = arith.addf %122, %128 : vector<8x8x64xf32>
    %c1_40 = arith.constant 1 : index
    %c0_41 = arith.constant 0 : index
    %c0_42 = arith.constant 0 : index
    %130 = vector.load %arg19[%c1_40, %c0_41, %c0_42] : memref<10x10x64xf32, #tpu.memory_space<vmem>>, vector<8x8x64xf32>
    %131 = vector.extract_strided_slice %107 {offsets = [1, 0, 0], sizes = [1, 1, 64], strides = [1, 1, 1]} : vector<3x3x64xf32> to vector<1x1x64xf32>
    %132 = vector.shape_cast %131 : vector<1x1x64xf32> to vector<64xf32>
    %133 = vector.shape_cast %132 : vector<64xf32> to vector<1x1x64xf32>
    %134 = vector.broadcast %133 : vector<1x1x64xf32> to vector<8x8x64xf32>
    %135 = arith.mulf %130, %134 : vector<8x8x64xf32>
    %136 = arith.addf %129, %135 : vector<8x8x64xf32>
    %c1_43 = arith.constant 1 : index
    %c1_44 = arith.constant 1 : index
    %c0_45 = arith.constant 0 : index
    %137 = vector.load %arg19[%c1_43, %c1_44, %c0_45] : memref<10x10x64xf32, #tpu.memory_space<vmem>>, vector<8x8x64xf32>
    %138 = vector.extract_strided_slice %107 {offsets = [1, 1, 0], sizes = [1, 1, 64], strides = [1, 1, 1]} : vector<3x3x64xf32> to vector<1x1x64xf32>
    %139 = vector.shape_cast %138 : vector<1x1x64xf32> to vector<64xf32>
    %140 = vector.shape_cast %139 : vector<64xf32> to vector<1x1x64xf32>
    %141 = vector.broadcast %140 : vector<1x1x64xf32> to vector<8x8x64xf32>
    %142 = arith.mulf %137, %141 : vector<8x8x64xf32>
    %143 = arith.addf %136, %142 : vector<8x8x64xf32>
    %c1_46 = arith.constant 1 : index
    %c2_47 = arith.constant 2 : index
    %c0_48 = arith.constant 0 : index
    %144 = vector.load %arg19[%c1_46, %c2_47, %c0_48] : memref<10x10x64xf32, #tpu.memory_space<vmem>>, vector<8x8x64xf32>
    %145 = vector.extract_strided_slice %107 {offsets = [1, 2, 0], sizes = [1, 1, 64], strides = [1, 1, 1]} : vector<3x3x64xf32> to vector<1x1x64xf32>
    %146 = vector.shape_cast %145 : vector<1x1x64xf32> to vector<64xf32>
    %147 = vector.shape_cast %146 : vector<64xf32> to vector<1x1x64xf32>
    %148 = vector.broadcast %147 : vector<1x1x64xf32> to vector<8x8x64xf32>
    %149 = arith.mulf %144, %148 : vector<8x8x64xf32>
    %150 = arith.addf %143, %149 : vector<8x8x64xf32>
    %c2_49 = arith.constant 2 : index
    %c0_50 = arith.constant 0 : index
    %c0_51 = arith.constant 0 : index
    %151 = vector.load %arg19[%c2_49, %c0_50, %c0_51] : memref<10x10x64xf32, #tpu.memory_space<vmem>>, vector<8x8x64xf32>
    %152 = vector.extract_strided_slice %107 {offsets = [2, 0, 0], sizes = [1, 1, 64], strides = [1, 1, 1]} : vector<3x3x64xf32> to vector<1x1x64xf32>
    %153 = vector.shape_cast %152 : vector<1x1x64xf32> to vector<64xf32>
    %154 = vector.shape_cast %153 : vector<64xf32> to vector<1x1x64xf32>
    %155 = vector.broadcast %154 : vector<1x1x64xf32> to vector<8x8x64xf32>
    %156 = arith.mulf %151, %155 : vector<8x8x64xf32>
    %157 = arith.addf %150, %156 : vector<8x8x64xf32>
    %c2_52 = arith.constant 2 : index
    %c1_53 = arith.constant 1 : index
    %c0_54 = arith.constant 0 : index
    %158 = vector.load %arg19[%c2_52, %c1_53, %c0_54] : memref<10x10x64xf32, #tpu.memory_space<vmem>>, vector<8x8x64xf32>
    %159 = vector.extract_strided_slice %107 {offsets = [2, 1, 0], sizes = [1, 1, 64], strides = [1, 1, 1]} : vector<3x3x64xf32> to vector<1x1x64xf32>
    %160 = vector.shape_cast %159 : vector<1x1x64xf32> to vector<64xf32>
    %161 = vector.shape_cast %160 : vector<64xf32> to vector<1x1x64xf32>
    %162 = vector.broadcast %161 : vector<1x1x64xf32> to vector<8x8x64xf32>
    %163 = arith.mulf %158, %162 : vector<8x8x64xf32>
    %164 = arith.addf %157, %163 : vector<8x8x64xf32>
    %c2_55 = arith.constant 2 : index
    %c2_56 = arith.constant 2 : index
    %c0_57 = arith.constant 0 : index
    %165 = vector.load %arg19[%c2_55, %c2_56, %c0_57] : memref<10x10x64xf32, #tpu.memory_space<vmem>>, vector<8x8x64xf32>
    %166 = vector.extract_strided_slice %107 {offsets = [2, 2, 0], sizes = [1, 1, 64], strides = [1, 1, 1]} : vector<3x3x64xf32> to vector<1x1x64xf32>
    %167 = vector.shape_cast %166 : vector<1x1x64xf32> to vector<64xf32>
    %168 = vector.shape_cast %167 : vector<64xf32> to vector<1x1x64xf32>
    %169 = vector.broadcast %168 : vector<1x1x64xf32> to vector<8x8x64xf32>
    %170 = arith.mulf %165, %169 : vector<8x8x64xf32>
    %171 = arith.addf %164, %170 : vector<8x8x64xf32>
    %c0_58 = arith.constant 0 : index
    %c0_59 = arith.constant 0 : index
    %172 = vector.load %arg9[%c0_58, %c0_59] : memref<1x64xf32, #tpu.memory_space<vmem>>, vector<1x64xf32>
    %173 = vector.shape_cast %172 : vector<1x64xf32> to vector<64xf32>
    %174 = vector.shape_cast %173 : vector<64xf32> to vector<1x1x64xf32>
    %175 = vector.broadcast %174 : vector<1x1x64xf32> to vector<8x8x64xf32>
    %176 = arith.mulf %171, %175 : vector<8x8x64xf32>
    %c0_60 = arith.constant 0 : index
    %c0_61 = arith.constant 0 : index
    %177 = vector.load %arg10[%c0_60, %c0_61] : memref<1x64xf32, #tpu.memory_space<vmem>>, vector<1x64xf32>
    %178 = vector.shape_cast %177 : vector<1x64xf32> to vector<64xf32>
    %179 = vector.shape_cast %178 : vector<64xf32> to vector<1x1x64xf32>
    %180 = vector.broadcast %179 : vector<1x1x64xf32> to vector<8x8x64xf32>
    %181 = arith.addf %176, %180 : vector<8x8x64xf32>
    %cst_62 = arith.constant 0.000000e+00 : f32
    %cst_63 = arith.constant 6.000000e+00 : f32
    %182 = vector.broadcast %cst_62 : f32 to vector<8x8x64xf32>
    %183 = arith.maximumf %182, %181 : vector<8x8x64xf32>
    %184 = vector.broadcast %cst_63 : f32 to vector<8x8x64xf32>
    %185 = arith.minimumf %184, %183 : vector<8x8x64xf32>
    %186 = vector.shape_cast %185 : vector<8x8x64xf32> to vector<64x64xf32>
    %c0_64 = arith.constant 0 : index
    %c0_65 = arith.constant 0 : index
    %187 = vector.load %arg11[%c0_64, %c0_65] : memref<64x64xf32, #tpu.memory_space<vmem>>, vector<64x64xf32>
    %cst_66 = arith.constant dense<0.000000e+00> : vector<64x64xf32>
    %188 = tpu.matmul %186, %187, %cst_66 {dimension_numbers = #tpu.dot_dimension_numbers<[1], [0], [0], [1], [0, 0, 1, 1], [], []>} : vector<64x64xf32>, vector<64x64xf32>, vector<64x64xf32> -> vector<64x64xf32>
    %c0_67 = arith.constant 0 : index
    %c0_68 = arith.constant 0 : index
    %189 = vector.load %arg12[%c0_67, %c0_68] : memref<1x64xf32, #tpu.memory_space<vmem>>, vector<1x64xf32>
    %190 = vector.broadcast %189 : vector<1x64xf32> to vector<64x64xf32>
    %191 = arith.mulf %188, %190 : vector<64x64xf32>
    %c0_69 = arith.constant 0 : index
    %c0_70 = arith.constant 0 : index
    %192 = vector.load %arg13[%c0_69, %c0_70] : memref<1x64xf32, #tpu.memory_space<vmem>>, vector<1x64xf32>
    %193 = vector.broadcast %192 : vector<1x64xf32> to vector<64x64xf32>
    %194 = arith.addf %191, %193 : vector<64x64xf32>
    %cst_71 = arith.constant 0.000000e+00 : f32
    %cst_72 = arith.constant 6.000000e+00 : f32
    %195 = vector.broadcast %cst_71 : f32 to vector<64x64xf32>
    %196 = arith.maximumf %195, %194 : vector<64x64xf32>
    %197 = vector.broadcast %cst_72 : f32 to vector<64x64xf32>
    %198 = arith.minimumf %197, %196 : vector<64x64xf32>
    %c0_73 = arith.constant 0 : index
    %c0_74 = arith.constant 0 : index
    %199 = vector.load %arg14[%c0_73, %c0_74] : memref<1x64xf32, #tpu.memory_space<vmem>>, vector<1x64xf32>
    %200 = vector.broadcast %199 : vector<1x64xf32> to vector<64x64xf32>
    %201 = arith.mulf %198, %200 : vector<64x64xf32>
    %cst_75 = arith.constant dense<0.000000e+00> : vector<64xf32>
    %202 = vector.multi_reduction <add>, %201, %cst_75 [1] : vector<64x64xf32> to vector<64xf32>
    %203 = vector.shape_cast %202 : vector<64xf32> to vector<64x1xf32>
    %c0_76 = arith.constant 0 : index
    %c0_77 = arith.constant 0 : index
    %204 = vector.load %arg15[%c0_76, %c0_77] : memref<1x1xf32, #tpu.memory_space<vmem>>, vector<1x1xf32>
    %205 = vector.broadcast %204 : vector<1x1xf32> to vector<64x1xf32>
    %206 = arith.addf %203, %205 : vector<64x1xf32>
    %207 = arith.negf %206 : vector<64x1xf32>
    %208 = math.exp %207 : vector<64x1xf32>
    %cst_78 = arith.constant 1.000000e+00 : f32
    %209 = vector.broadcast %cst_78 : f32 to vector<64x1xf32>
    %210 = arith.addf %209, %208 : vector<64x1xf32>
    %211 = arith.divf %209, %210 : vector<64x1xf32>
    %212 = vector.broadcast %211 : vector<64x1xf32> to vector<64x64xf32>
    %213 = arith.mulf %198, %212 : vector<64x64xf32>
    %cst_79 = arith.constant dense<0.000000e+00> : vector<64xf32>
    %214 = vector.multi_reduction <add>, %213, %cst_79 [0] : vector<64x64xf32> to vector<64xf32>
    %215 = vector.shape_cast %214 : vector<64xf32> to vector<1x64xf32>
    %cst_80 = arith.constant 6.400000e+01 : f32
    %216 = vector.broadcast %cst_80 : f32 to vector<1x64xf32>
    %217 = arith.divf %215, %216 : vector<1x64xf32>
    %cst_81 = arith.constant dense<0xFF800000> : vector<64xf32>
    %218 = vector.multi_reduction <maximumf>, %213, %cst_81 [0] : vector<64x64xf32> to vector<64xf32>
    %219 = vector.shape_cast %218 : vector<64xf32> to vector<1x64xf32>
    %220 = tpu.concatenate %217, %219 in 0 : vector<1x64xf32>, vector<1x64xf32> -> vector<2x64xf32>
    %c0_82 = arith.constant 0 : index
    %c0_83 = arith.constant 0 : index
    %221 = vector.load %arg16[%c0_82, %c0_83] : memref<64x8xf32, #tpu.memory_space<vmem>>, vector<64x8xf32>
    %cst_84 = arith.constant dense<0.000000e+00> : vector<2x8xf32>
    %222 = tpu.matmul %220, %221, %cst_84 {dimension_numbers = #tpu.dot_dimension_numbers<[1], [0], [0], [1], [0, 0, 1, 1], [], []>} : vector<2x64xf32>, vector<64x8xf32>, vector<2x8xf32> -> vector<2x8xf32>
    %cst_85 = arith.constant 0.000000e+00 : f32
    %223 = vector.broadcast %cst_85 : f32 to vector<2x8xf32>
    %224 = arith.maximumf %222, %223 : vector<2x8xf32>
    %c0_86 = arith.constant 0 : index
    %c0_87 = arith.constant 0 : index
    %225 = vector.load %arg17[%c0_86, %c0_87] : memref<8x64xf32, #tpu.memory_space<vmem>>, vector<8x64xf32>
    %cst_88 = arith.constant dense<0.000000e+00> : vector<2x64xf32>
    %226 = tpu.matmul %224, %225, %cst_88 {dimension_numbers = #tpu.dot_dimension_numbers<[1], [0], [0], [1], [0, 0, 1, 1], [], []>} : vector<2x8xf32>, vector<8x64xf32>, vector<2x64xf32> -> vector<2x64xf32>
    %227 = vector.extract_strided_slice %226 {offsets = [0, 0], sizes = [1, 64], strides = [1, 1]} : vector<2x64xf32> to vector<1x64xf32>
    %228 = vector.extract_strided_slice %226 {offsets = [1, 0], sizes = [1, 64], strides = [1, 1]} : vector<2x64xf32> to vector<1x64xf32>
    %229 = arith.addf %227, %228 : vector<1x64xf32>
    %230 = arith.negf %229 : vector<1x64xf32>
    %231 = math.exp %230 : vector<1x64xf32>
    %cst_89 = arith.constant 1.000000e+00 : f32
    %232 = vector.broadcast %cst_89 : f32 to vector<1x64xf32>
    %233 = arith.addf %232, %231 : vector<1x64xf32>
    %234 = arith.divf %232, %233 : vector<1x64xf32>
    %235 = vector.broadcast %234 : vector<1x64xf32> to vector<64x64xf32>
    %236 = arith.mulf %213, %235 : vector<64x64xf32>
    %c0_90 = arith.constant 0 : index
    %c0_91 = arith.constant 0 : index
    %c0_92 = arith.constant 0 : index
    %237 = vector.load %arg18[%c0_90, %c0_91, %c0_92] : memref<1x64x64xf32, #tpu.memory_space<vmem>>, vector<1x64x64xf32>
    %238 = vector.shape_cast %237 : vector<1x64x64xf32> to vector<64x64xf32>
    %239 = vector.shape_cast %236 : vector<64x64xf32> to vector<1x64x64xf32>
    tpu.vector_store %arg18[%c0_90, %c0_91, %c0_92], %239 {strides = array<i32>} : memref<1x64x64xf32, #tpu.memory_space<vmem>>, vector<1x64x64xf32>,
    return
  }
  func.func @transform_0(%arg0: i32) -> (i32, i32, i32, i32, i32) {
    %c0_i32 = arith.constant 0 : i32
    %c0_i32_0 = arith.constant 0 : i32
    %c0_i32_1 = arith.constant 0 : i32
    %c0_i32_2 = arith.constant 0 : i32
    %c0_i32_3 = arith.constant 0 : i32
    return %arg0, %c0_i32, %c0_i32_0, %c0_i32_1, %c0_i32_2 : i32, i32, i32, i32, i32
  }
  func.func @transform_1(%arg0: i32) -> (i32, i32, i32) {
    %c0_i32 = arith.constant 0 : i32
    %c0_i32_0 = arith.constant 0 : i32
    %c0_i32_1 = arith.constant 0 : i32
    %c0_i32_2 = arith.constant 0 : i32
    return %c0_i32, %c0_i32_0, %c0_i32_1 : i32, i32, i32
  }
  func.func @transform_2(%arg0: i32) -> (i32, i32) {
    %c0_i32 = arith.constant 0 : i32
    %c0_i32_0 = arith.constant 0 : i32
    %c0_i32_1 = arith.constant 0 : i32
    return %c0_i32, %c0_i32_0 : i32, i32
  }
  func.func @transform_3(%arg0: i32) -> (i32, i32) {
    %c0_i32 = arith.constant 0 : i32
    %c0_i32_0 = arith.constant 0 : i32
    %c0_i32_1 = arith.constant 0 : i32
    return %c0_i32, %c0_i32_0 : i32, i32
  }
  func.func @transform_4(%arg0: i32) -> (i32, i32) {
    %c0_i32 = arith.constant 0 : i32
    %c0_i32_0 = arith.constant 0 : i32
    %c0_i32_1 = arith.constant 0 : i32
    return %c0_i32, %c0_i32_0 : i32, i32
  }
  func.func @transform_5(%arg0: i32) -> (i32, i32) {
    %c0_i32 = arith.constant 0 : i32
    %c0_i32_0 = arith.constant 0 : i32
    %c0_i32_1 = arith.constant 0 : i32
    return %c0_i32, %c0_i32_0 : i32, i32
  }
  func.func @transform_6(%arg0: i32) -> (i32, i32) {
    %c0_i32 = arith.constant 0 : i32
    %c0_i32_0 = arith.constant 0 : i32
    %c0_i32_1 = arith.constant 0 : i32
    return %c0_i32, %c0_i32_0 : i32, i32
  }
  func.func @transform_7(%arg0: i32) -> (i32, i32, i32) {
    %c0_i32 = arith.constant 0 : i32
    %c0_i32_0 = arith.constant 0 : i32
    %c0_i32_1 = arith.constant 0 : i32
    %c0_i32_2 = arith.constant 0 : i32
    return %c0_i32, %c0_i32_0, %c0_i32_1 : i32, i32, i32
  }
  func.func @transform_8(%arg0: i32) -> (i32, i32) {
    %c0_i32 = arith.constant 0 : i32
    %c0_i32_0 = arith.constant 0 : i32
    %c0_i32_1 = arith.constant 0 : i32
    return %c0_i32, %c0_i32_0 : i32, i32
  }
  func.func @transform_9(%arg0: i32) -> (i32, i32) {
    %c0_i32 = arith.constant 0 : i32
    %c0_i32_0 = arith.constant 0 : i32
    %c0_i32_1 = arith.constant 0 : i32
    return %c0_i32, %c0_i32_0 : i32, i32
  }
  func.func @transform_10(%arg0: i32) -> (i32, i32) {
    %c0_i32 = arith.constant 0 : i32
    %c0_i32_0 = arith.constant 0 : i32
    %c0_i32_1 = arith.constant 0 : i32
    return %c0_i32, %c0_i32_0 : i32, i32
  }
  func.func @transform_11(%arg0: i32) -> (i32, i32) {
    %c0_i32 = arith.constant 0 : i32
    %c0_i32_0 = arith.constant 0 : i32
    %c0_i32_1 = arith.constant 0 : i32
    return %c0_i32, %c0_i32_0 : i32, i32
  }
  func.func @transform_12(%arg0: i32) -> (i32, i32) {
    %c0_i32 = arith.constant 0 : i32
    %c0_i32_0 = arith.constant 0 : i32
    %c0_i32_1 = arith.constant 0 : i32
    return %c0_i32, %c0_i32_0 : i32, i32
  }
  func.func @transform_13(%arg0: i32) -> (i32, i32) {
    %c0_i32 = arith.constant 0 : i32
    %c0_i32_0 = arith.constant 0 : i32
    %c0_i32_1 = arith.constant 0 : i32
    return %c0_i32, %c0_i32_0 : i32, i32
  }
  func.func @transform_14(%arg0: i32) -> (i32, i32) {
    %c0_i32 = arith.constant 0 : i32
    %c0_i32_0 = arith.constant 0 : i32
    %c0_i32_1 = arith.constant 0 : i32
    return %c0_i32, %c0_i32_0 : i32, i32
  }
  func.func @transform_15(%arg0: i32) -> (i32, i32) {
    %c0_i32 = arith.constant 0 : i32
    %c0_i32_0 = arith.constant 0 : i32
    %c0_i32_1 = arith.constant 0 : i32
    return %c0_i32, %c0_i32_0 : i32, i32
  }
  func.func @transform_16(%arg0: i32) -> (i32, i32) {
    %c0_i32 = arith.constant 0 : i32
    %c0_i32_0 = arith.constant 0 : i32
    %c0_i32_1 = arith.constant 0 : i32
    return %c0_i32, %c0_i32_0 : i32, i32
  }
  func.func @transform_17(%arg0: i32) -> (i32, i32, i32) {
    %c0_i32 = arith.constant 0 : i32
    %c0_i32_0 = arith.constant 0 : i32
    %c0_i32_1 = arith.constant 0 : i32
    return %arg0, %c0_i32, %c0_i32_0 : i32, i32, i32
  }
}

module attributes {stable_mosaic.version = 11 : i64} {
  func.func @_block_stam_kernel(%arg0: i32, %arg1: memref<1x4x5x5x64xf32, #tpu.memory_space<vmem>>, %arg2: memref<3x3x64xf32, #tpu.memory_space<vmem>>, %arg3: memref<1x64xf32, #tpu.memory_space<vmem>>, %arg4: memref<1x64xf32, #tpu.memory_space<vmem>>, %arg5: memref<64x128xf32, #tpu.memory_space<vmem>>, %arg6: memref<1x128xf32, #tpu.memory_space<vmem>>, %arg7: memref<1x128xf32, #tpu.memory_space<vmem>>, %arg8: memref<3x3x128xf32, #tpu.memory_space<vmem>>, %arg9: memref<1x128xf32, #tpu.memory_space<vmem>>, %arg10: memref<1x128xf32, #tpu.memory_space<vmem>>, %arg11: memref<128x128xf32, #tpu.memory_space<vmem>>, %arg12: memref<1x128xf32, #tpu.memory_space<vmem>>, %arg13: memref<1x128xf32, #tpu.memory_space<vmem>>, %arg14: memref<1x128xf32, #tpu.memory_space<vmem>>, %arg15: memref<1x1xf32, #tpu.memory_space<vmem>>, %arg16: memref<128x16xf32, #tpu.memory_space<vmem>>, %arg17: memref<16x128xf32, #tpu.memory_space<vmem>>, %arg18: memref<1x16x128xf32, #tpu.memory_space<vmem>>, %arg19: memref<6x6x128xf32, #tpu.memory_space<vmem>>) attributes {dimension_semantics = [#tpu.dimension_semantics<parallel>], iteration_bounds = array<i64: 2>, scalar_prefetch = 0 : i64, scratch_operands = 1 : i64, tpu.core_type = #tpu.core_type<tc>, window_params = [{transform_indices = @transform_0, window_bounds = array<i64: 1, 4, 5, 5, 64>}, {pipeline_mode = #tpu.pipeline_mode<synchronous>, transform_indices = @transform_1, window_bounds = array<i64: 3, 3, 64>}, {pipeline_mode = #tpu.pipeline_mode<synchronous>, transform_indices = @transform_2, window_bounds = array<i64: 1, 64>}, {pipeline_mode = #tpu.pipeline_mode<synchronous>, transform_indices = @transform_3, window_bounds = array<i64: 1, 64>}, {pipeline_mode = #tpu.pipeline_mode<synchronous>, transform_indices = @transform_4, window_bounds = array<i64: 64, 128>}, {pipeline_mode = #tpu.pipeline_mode<synchronous>, transform_indices = @transform_5, window_bounds = array<i64: 1, 128>}, {pipeline_mode = #tpu.pipeline_mode<synchronous>, transform_indices = @transform_6, window_bounds = array<i64: 1, 128>}, {pipeline_mode = #tpu.pipeline_mode<synchronous>, transform_indices = @transform_7, window_bounds = array<i64: 3, 3, 128>}, {pipeline_mode = #tpu.pipeline_mode<synchronous>, transform_indices = @transform_8, window_bounds = array<i64: 1, 128>}, {pipeline_mode = #tpu.pipeline_mode<synchronous>, transform_indices = @transform_9, window_bounds = array<i64: 1, 128>}, {pipeline_mode = #tpu.pipeline_mode<synchronous>, transform_indices = @transform_10, window_bounds = array<i64: 128, 128>}, {pipeline_mode = #tpu.pipeline_mode<synchronous>, transform_indices = @transform_11, window_bounds = array<i64: 1, 128>}, {pipeline_mode = #tpu.pipeline_mode<synchronous>, transform_indices = @transform_12, window_bounds = array<i64: 1, 128>}, {pipeline_mode = #tpu.pipeline_mode<synchronous>, transform_indices = @transform_13, window_bounds = array<i64: 1, 128>}, {pipeline_mode = #tpu.pipeline_mode<synchronous>, transform_indices = @transform_14, window_bounds = array<i64: 1, 1>}, {pipeline_mode = #tpu.pipeline_mode<synchronous>, transform_indices = @transform_15, window_bounds = array<i64: 128, 16>}, {pipeline_mode = #tpu.pipeline_mode<synchronous>, transform_indices = @transform_16, window_bounds = array<i64: 16, 128>}, {transform_indices = @transform_17, window_bounds = array<i64: 1, 16, 128>}]} {
    %c0 = arith.constant 0 : index
    %c0_0 = arith.constant 0 : index
    %c0_1 = arith.constant 0 : index
    %c0_2 = arith.constant 0 : index
    %c0_3 = arith.constant 0 : index
    %0 = vector.load %arg1[%c0, %c0_0, %c0_1, %c0_2, %c0_3] : memref<1x4x5x5x64xf32, #tpu.memory_space<vmem>>, vector<1x4x5x5x64xf32>
    %1 = vector.shape_cast %0 : vector<1x4x5x5x64xf32> to vector<4x5x5x64xf32>
    %c0_4 = arith.constant 0 : index
    %c0_5 = arith.constant 0 : index
    %c0_6 = arith.constant 0 : index
    %2 = vector.load %arg2[%c0_4, %c0_5, %c0_6] : memref<3x3x64xf32, #tpu.memory_space<vmem>>, vector<3x3x64xf32>
    %cst = arith.constant 0.000000e+00 : f32
    %3 = vector.broadcast %cst : f32 to vector<4x4x64xf32>
    %4 = vector.extract_strided_slice %1 {offsets = [0, 0, 0, 0], sizes = [1, 4, 4, 64], strides = [1, 1, 1, 1]} : vector<4x5x5x64xf32> to vector<1x4x4x64xf32>
    %5 = vector.shape_cast %4 : vector<1x4x4x64xf32> to vector<4x4x64xf32>
    %6 = vector.extract_strided_slice %2 {offsets = [0, 0, 0], sizes = [1, 1, 64], strides = [1, 1, 1]} : vector<3x3x64xf32> to vector<1x1x64xf32>
    %7 = vector.shape_cast %6 : vector<1x1x64xf32> to vector<64xf32>
    %8 = vector.shape_cast %7 : vector<64xf32> to vector<1x1x64xf32>
    %9 = vector.broadcast %8 : vector<1x1x64xf32> to vector<4x4x64xf32>
    %10 = arith.mulf %5, %9 : vector<4x4x64xf32>
    %11 = arith.addf %3, %10 : vector<4x4x64xf32>
    %12 = vector.extract_strided_slice %1 {offsets = [1, 0, 0, 0], sizes = [1, 4, 4, 64], strides = [1, 1, 1, 1]} : vector<4x5x5x64xf32> to vector<1x4x4x64xf32>
    %13 = vector.shape_cast %12 : vector<1x4x4x64xf32> to vector<4x4x64xf32>
    %14 = vector.extract_strided_slice %2 {offsets = [0, 1, 0], sizes = [1, 1, 64], strides = [1, 1, 1]} : vector<3x3x64xf32> to vector<1x1x64xf32>
    %15 = vector.shape_cast %14 : vector<1x1x64xf32> to vector<64xf32>
    %16 = vector.shape_cast %15 : vector<64xf32> to vector<1x1x64xf32>
    %17 = vector.broadcast %16 : vector<1x1x64xf32> to vector<4x4x64xf32>
    %18 = arith.mulf %13, %17 : vector<4x4x64xf32>
    %19 = arith.addf %11, %18 : vector<4x4x64xf32>
    %20 = vector.extract_strided_slice %1 {offsets = [0, 0, 1, 0], sizes = [1, 4, 4, 64], strides = [1, 1, 1, 1]} : vector<4x5x5x64xf32> to vector<1x4x4x64xf32>
    %21 = vector.shape_cast %20 : vector<1x4x4x64xf32> to vector<4x4x64xf32>
    %22 = vector.extract_strided_slice %2 {offsets = [0, 2, 0], sizes = [1, 1, 64], strides = [1, 1, 1]} : vector<3x3x64xf32> to vector<1x1x64xf32>
    %23 = vector.shape_cast %22 : vector<1x1x64xf32> to vector<64xf32>
    %24 = vector.shape_cast %23 : vector<64xf32> to vector<1x1x64xf32>
    %25 = vector.broadcast %24 : vector<1x1x64xf32> to vector<4x4x64xf32>
    %26 = arith.mulf %21, %25 : vector<4x4x64xf32>
    %27 = arith.addf %19, %26 : vector<4x4x64xf32>
    %28 = vector.extract_strided_slice %1 {offsets = [2, 0, 0, 0], sizes = [1, 4, 4, 64], strides = [1, 1, 1, 1]} : vector<4x5x5x64xf32> to vector<1x4x4x64xf32>
    %29 = vector.shape_cast %28 : vector<1x4x4x64xf32> to vector<4x4x64xf32>
    %30 = vector.extract_strided_slice %2 {offsets = [1, 0, 0], sizes = [1, 1, 64], strides = [1, 1, 1]} : vector<3x3x64xf32> to vector<1x1x64xf32>
    %31 = vector.shape_cast %30 : vector<1x1x64xf32> to vector<64xf32>
    %32 = vector.shape_cast %31 : vector<64xf32> to vector<1x1x64xf32>
    %33 = vector.broadcast %32 : vector<1x1x64xf32> to vector<4x4x64xf32>
    %34 = arith.mulf %29, %33 : vector<4x4x64xf32>
    %35 = arith.addf %27, %34 : vector<4x4x64xf32>
    %36 = vector.extract_strided_slice %1 {offsets = [3, 0, 0, 0], sizes = [1, 4, 4, 64], strides = [1, 1, 1, 1]} : vector<4x5x5x64xf32> to vector<1x4x4x64xf32>
    %37 = vector.shape_cast %36 : vector<1x4x4x64xf32> to vector<4x4x64xf32>
    %38 = vector.extract_strided_slice %2 {offsets = [1, 1, 0], sizes = [1, 1, 64], strides = [1, 1, 1]} : vector<3x3x64xf32> to vector<1x1x64xf32>
    %39 = vector.shape_cast %38 : vector<1x1x64xf32> to vector<64xf32>
    %40 = vector.shape_cast %39 : vector<64xf32> to vector<1x1x64xf32>
    %41 = vector.broadcast %40 : vector<1x1x64xf32> to vector<4x4x64xf32>
    %42 = arith.mulf %37, %41 : vector<4x4x64xf32>
    %43 = arith.addf %35, %42 : vector<4x4x64xf32>
    %44 = vector.extract_strided_slice %1 {offsets = [2, 0, 1, 0], sizes = [1, 4, 4, 64], strides = [1, 1, 1, 1]} : vector<4x5x5x64xf32> to vector<1x4x4x64xf32>
    %45 = vector.shape_cast %44 : vector<1x4x4x64xf32> to vector<4x4x64xf32>
    %46 = vector.extract_strided_slice %2 {offsets = [1, 2, 0], sizes = [1, 1, 64], strides = [1, 1, 1]} : vector<3x3x64xf32> to vector<1x1x64xf32>
    %47 = vector.shape_cast %46 : vector<1x1x64xf32> to vector<64xf32>
    %48 = vector.shape_cast %47 : vector<64xf32> to vector<1x1x64xf32>
    %49 = vector.broadcast %48 : vector<1x1x64xf32> to vector<4x4x64xf32>
    %50 = arith.mulf %45, %49 : vector<4x4x64xf32>
    %51 = arith.addf %43, %50 : vector<4x4x64xf32>
    %52 = vector.extract_strided_slice %1 {offsets = [0, 1, 0, 0], sizes = [1, 4, 4, 64], strides = [1, 1, 1, 1]} : vector<4x5x5x64xf32> to vector<1x4x4x64xf32>
    %53 = vector.shape_cast %52 : vector<1x4x4x64xf32> to vector<4x4x64xf32>
    %54 = vector.extract_strided_slice %2 {offsets = [2, 0, 0], sizes = [1, 1, 64], strides = [1, 1, 1]} : vector<3x3x64xf32> to vector<1x1x64xf32>
    %55 = vector.shape_cast %54 : vector<1x1x64xf32> to vector<64xf32>
    %56 = vector.shape_cast %55 : vector<64xf32> to vector<1x1x64xf32>
    %57 = vector.broadcast %56 : vector<1x1x64xf32> to vector<4x4x64xf32>
    %58 = arith.mulf %53, %57 : vector<4x4x64xf32>
    %59 = arith.addf %51, %58 : vector<4x4x64xf32>
    %60 = vector.extract_strided_slice %1 {offsets = [1, 1, 0, 0], sizes = [1, 4, 4, 64], strides = [1, 1, 1, 1]} : vector<4x5x5x64xf32> to vector<1x4x4x64xf32>
    %61 = vector.shape_cast %60 : vector<1x4x4x64xf32> to vector<4x4x64xf32>
    %62 = vector.extract_strided_slice %2 {offsets = [2, 1, 0], sizes = [1, 1, 64], strides = [1, 1, 1]} : vector<3x3x64xf32> to vector<1x1x64xf32>
    %63 = vector.shape_cast %62 : vector<1x1x64xf32> to vector<64xf32>
    %64 = vector.shape_cast %63 : vector<64xf32> to vector<1x1x64xf32>
    %65 = vector.broadcast %64 : vector<1x1x64xf32> to vector<4x4x64xf32>
    %66 = arith.mulf %61, %65 : vector<4x4x64xf32>
    %67 = arith.addf %59, %66 : vector<4x4x64xf32>
    %68 = vector.extract_strided_slice %1 {offsets = [0, 1, 1, 0], sizes = [1, 4, 4, 64], strides = [1, 1, 1, 1]} : vector<4x5x5x64xf32> to vector<1x4x4x64xf32>
    %69 = vector.shape_cast %68 : vector<1x4x4x64xf32> to vector<4x4x64xf32>
    %70 = vector.extract_strided_slice %2 {offsets = [2, 2, 0], sizes = [1, 1, 64], strides = [1, 1, 1]} : vector<3x3x64xf32> to vector<1x1x64xf32>
    %71 = vector.shape_cast %70 : vector<1x1x64xf32> to vector<64xf32>
    %72 = vector.shape_cast %71 : vector<64xf32> to vector<1x1x64xf32>
    %73 = vector.broadcast %72 : vector<1x1x64xf32> to vector<4x4x64xf32>
    %74 = arith.mulf %69, %73 : vector<4x4x64xf32>
    %75 = arith.addf %67, %74 : vector<4x4x64xf32>
    %c0_7 = arith.constant 0 : index
    %c0_8 = arith.constant 0 : index
    %76 = vector.load %arg3[%c0_7, %c0_8] : memref<1x64xf32, #tpu.memory_space<vmem>>, vector<1x64xf32>
    %77 = vector.shape_cast %76 : vector<1x64xf32> to vector<64xf32>
    %78 = vector.shape_cast %77 : vector<64xf32> to vector<1x1x64xf32>
    %79 = vector.broadcast %78 : vector<1x1x64xf32> to vector<4x4x64xf32>
    %80 = arith.mulf %75, %79 : vector<4x4x64xf32>
    %c0_9 = arith.constant 0 : index
    %c0_10 = arith.constant 0 : index
    %81 = vector.load %arg4[%c0_9, %c0_10] : memref<1x64xf32, #tpu.memory_space<vmem>>, vector<1x64xf32>
    %82 = vector.shape_cast %81 : vector<1x64xf32> to vector<64xf32>
    %83 = vector.shape_cast %82 : vector<64xf32> to vector<1x1x64xf32>
    %84 = vector.broadcast %83 : vector<1x1x64xf32> to vector<4x4x64xf32>
    %85 = arith.addf %80, %84 : vector<4x4x64xf32>
    %cst_11 = arith.constant 0.000000e+00 : f32
    %cst_12 = arith.constant 6.000000e+00 : f32
    %86 = vector.broadcast %cst_11 : f32 to vector<4x4x64xf32>
    %87 = arith.maximumf %86, %85 : vector<4x4x64xf32>
    %88 = vector.broadcast %cst_12 : f32 to vector<4x4x64xf32>
    %89 = arith.minimumf %88, %87 : vector<4x4x64xf32>
    %c0_13 = arith.constant 0 : index
    %c0_14 = arith.constant 0 : index
    %90 = vector.load %arg5[%c0_13, %c0_14] : memref<64x128xf32, #tpu.memory_space<vmem>>, vector<64x128xf32>
    %91 = vector.shape_cast %89 : vector<4x4x64xf32> to vector<16x64xf32>
    %cst_15 = arith.constant dense<0.000000e+00> : vector<16x128xf32>
    %92 = tpu.matmul %91, %90, %cst_15 {dimension_numbers = #tpu.dot_dimension_numbers<[1], [0], [0], [1], [0, 0, 1, 1], [], []>} : vector<16x64xf32>, vector<64x128xf32>, vector<16x128xf32> -> vector<16x128xf32>
    %c0_16 = arith.constant 0 : index
    %c0_17 = arith.constant 0 : index
    %93 = vector.load %arg6[%c0_16, %c0_17] : memref<1x128xf32, #tpu.memory_space<vmem>>, vector<1x128xf32>
    %94 = vector.broadcast %93 : vector<1x128xf32> to vector<16x128xf32>
    %95 = arith.mulf %92, %94 : vector<16x128xf32>
    %c0_18 = arith.constant 0 : index
    %c0_19 = arith.constant 0 : index
    %96 = vector.load %arg7[%c0_18, %c0_19] : memref<1x128xf32, #tpu.memory_space<vmem>>, vector<1x128xf32>
    %97 = vector.broadcast %96 : vector<1x128xf32> to vector<16x128xf32>
    %98 = arith.addf %95, %97 : vector<16x128xf32>
    %cst_20 = arith.constant 0.000000e+00 : f32
    %cst_21 = arith.constant 6.000000e+00 : f32
    %99 = vector.broadcast %cst_20 : f32 to vector<16x128xf32>
    %100 = arith.maximumf %99, %98 : vector<16x128xf32>
    %101 = vector.broadcast %cst_21 : f32 to vector<16x128xf32>
    %102 = arith.minimumf %101, %100 : vector<16x128xf32>
    %cst_22 = arith.constant 0.000000e+00 : f32
    %103 = vector.broadcast %cst_22 : f32 to vector<6x6x128xf32>
    %c0_23 = arith.constant 0 : index
    %c0_24 = arith.constant 0 : index
    %c0_25 = arith.constant 0 : index
    %104 = vector.load %arg19[%c0_23, %c0_24, %c0_25] : memref<6x6x128xf32, #tpu.memory_space<vmem>>, vector<6x6x128xf32>
    tpu.vector_store %arg19[%c0_23, %c0_24, %c0_25], %103 {strides = array<i32>} : memref<6x6x128xf32, #tpu.memory_space<vmem>>, vector<6x6x128xf32>,
    %105 = vector.shape_cast %102 : vector<16x128xf32> to vector<4x4x128xf32>
    %c1 = arith.constant 1 : index
    %c1_26 = arith.constant 1 : index
    %c0_27 = arith.constant 0 : index
    %106 = vector.load %arg19[%c1, %c1_26, %c0_27] : memref<6x6x128xf32, #tpu.memory_space<vmem>>, vector<4x4x128xf32>
    tpu.vector_store %arg19[%c1, %c1_26, %c0_27], %105 {strides = array<i32>} : memref<6x6x128xf32, #tpu.memory_space<vmem>>, vector<4x4x128xf32>,
    %c0_28 = arith.constant 0 : index
    %c0_29 = arith.constant 0 : index
    %c0_30 = arith.constant 0 : index
    %107 = vector.load %arg8[%c0_28, %c0_29, %c0_30] : memref<3x3x128xf32, #tpu.memory_space<vmem>>, vector<3x3x128xf32>
    %cst_31 = arith.constant 0.000000e+00 : f32
    %108 = vector.broadcast %cst_31 : f32 to vector<4x4x128xf32>
    %c0_32 = arith.constant 0 : index
    %c0_33 = arith.constant 0 : index
    %c0_34 = arith.constant 0 : index
    %109 = vector.load %arg19[%c0_32, %c0_33, %c0_34] : memref<6x6x128xf32, #tpu.memory_space<vmem>>, vector<4x4x128xf32>
    %110 = vector.extract_strided_slice %107 {offsets = [0, 0, 0], sizes = [1, 1, 128], strides = [1, 1, 1]} : vector<3x3x128xf32> to vector<1x1x128xf32>
    %111 = vector.shape_cast %110 : vector<1x1x128xf32> to vector<128xf32>
    %112 = vector.shape_cast %111 : vector<128xf32> to vector<1x1x128xf32>
    %113 = vector.broadcast %112 : vector<1x1x128xf32> to vector<4x4x128xf32>
    %114 = arith.mulf %109, %113 : vector<4x4x128xf32>
    %115 = arith.addf %108, %114 : vector<4x4x128xf32>
    %c0_35 = arith.constant 0 : index
    %c1_36 = arith.constant 1 : index
    %c0_37 = arith.constant 0 : index
    %116 = vector.load %arg19[%c0_35, %c1_36, %c0_37] : memref<6x6x128xf32, #tpu.memory_space<vmem>>, vector<4x4x128xf32>
    %117 = vector.extract_strided_slice %107 {offsets = [0, 1, 0], sizes = [1, 1, 128], strides = [1, 1, 1]} : vector<3x3x128xf32> to vector<1x1x128xf32>
    %118 = vector.shape_cast %117 : vector<1x1x128xf32> to vector<128xf32>
    %119 = vector.shape_cast %118 : vector<128xf32> to vector<1x1x128xf32>
    %120 = vector.broadcast %119 : vector<1x1x128xf32> to vector<4x4x128xf32>
    %121 = arith.mulf %116, %120 : vector<4x4x128xf32>
    %122 = arith.addf %115, %121 : vector<4x4x128xf32>
    %c0_38 = arith.constant 0 : index
    %c2 = arith.constant 2 : index
    %c0_39 = arith.constant 0 : index
    %123 = vector.load %arg19[%c0_38, %c2, %c0_39] : memref<6x6x128xf32, #tpu.memory_space<vmem>>, vector<4x4x128xf32>
    %124 = vector.extract_strided_slice %107 {offsets = [0, 2, 0], sizes = [1, 1, 128], strides = [1, 1, 1]} : vector<3x3x128xf32> to vector<1x1x128xf32>
    %125 = vector.shape_cast %124 : vector<1x1x128xf32> to vector<128xf32>
    %126 = vector.shape_cast %125 : vector<128xf32> to vector<1x1x128xf32>
    %127 = vector.broadcast %126 : vector<1x1x128xf32> to vector<4x4x128xf32>
    %128 = arith.mulf %123, %127 : vector<4x4x128xf32>
    %129 = arith.addf %122, %128 : vector<4x4x128xf32>
    %c1_40 = arith.constant 1 : index
    %c0_41 = arith.constant 0 : index
    %c0_42 = arith.constant 0 : index
    %130 = vector.load %arg19[%c1_40, %c0_41, %c0_42] : memref<6x6x128xf32, #tpu.memory_space<vmem>>, vector<4x4x128xf32>
    %131 = vector.extract_strided_slice %107 {offsets = [1, 0, 0], sizes = [1, 1, 128], strides = [1, 1, 1]} : vector<3x3x128xf32> to vector<1x1x128xf32>
    %132 = vector.shape_cast %131 : vector<1x1x128xf32> to vector<128xf32>
    %133 = vector.shape_cast %132 : vector<128xf32> to vector<1x1x128xf32>
    %134 = vector.broadcast %133 : vector<1x1x128xf32> to vector<4x4x128xf32>
    %135 = arith.mulf %130, %134 : vector<4x4x128xf32>
    %136 = arith.addf %129, %135 : vector<4x4x128xf32>
    %c1_43 = arith.constant 1 : index
    %c1_44 = arith.constant 1 : index
    %c0_45 = arith.constant 0 : index
    %137 = vector.load %arg19[%c1_43, %c1_44, %c0_45] : memref<6x6x128xf32, #tpu.memory_space<vmem>>, vector<4x4x128xf32>
    %138 = vector.extract_strided_slice %107 {offsets = [1, 1, 0], sizes = [1, 1, 128], strides = [1, 1, 1]} : vector<3x3x128xf32> to vector<1x1x128xf32>
    %139 = vector.shape_cast %138 : vector<1x1x128xf32> to vector<128xf32>
    %140 = vector.shape_cast %139 : vector<128xf32> to vector<1x1x128xf32>
    %141 = vector.broadcast %140 : vector<1x1x128xf32> to vector<4x4x128xf32>
    %142 = arith.mulf %137, %141 : vector<4x4x128xf32>
    %143 = arith.addf %136, %142 : vector<4x4x128xf32>
    %c1_46 = arith.constant 1 : index
    %c2_47 = arith.constant 2 : index
    %c0_48 = arith.constant 0 : index
    %144 = vector.load %arg19[%c1_46, %c2_47, %c0_48] : memref<6x6x128xf32, #tpu.memory_space<vmem>>, vector<4x4x128xf32>
    %145 = vector.extract_strided_slice %107 {offsets = [1, 2, 0], sizes = [1, 1, 128], strides = [1, 1, 1]} : vector<3x3x128xf32> to vector<1x1x128xf32>
    %146 = vector.shape_cast %145 : vector<1x1x128xf32> to vector<128xf32>
    %147 = vector.shape_cast %146 : vector<128xf32> to vector<1x1x128xf32>
    %148 = vector.broadcast %147 : vector<1x1x128xf32> to vector<4x4x128xf32>
    %149 = arith.mulf %144, %148 : vector<4x4x128xf32>
    %150 = arith.addf %143, %149 : vector<4x4x128xf32>
    %c2_49 = arith.constant 2 : index
    %c0_50 = arith.constant 0 : index
    %c0_51 = arith.constant 0 : index
    %151 = vector.load %arg19[%c2_49, %c0_50, %c0_51] : memref<6x6x128xf32, #tpu.memory_space<vmem>>, vector<4x4x128xf32>
    %152 = vector.extract_strided_slice %107 {offsets = [2, 0, 0], sizes = [1, 1, 128], strides = [1, 1, 1]} : vector<3x3x128xf32> to vector<1x1x128xf32>
    %153 = vector.shape_cast %152 : vector<1x1x128xf32> to vector<128xf32>
    %154 = vector.shape_cast %153 : vector<128xf32> to vector<1x1x128xf32>
    %155 = vector.broadcast %154 : vector<1x1x128xf32> to vector<4x4x128xf32>
    %156 = arith.mulf %151, %155 : vector<4x4x128xf32>
    %157 = arith.addf %150, %156 : vector<4x4x128xf32>
    %c2_52 = arith.constant 2 : index
    %c1_53 = arith.constant 1 : index
    %c0_54 = arith.constant 0 : index
    %158 = vector.load %arg19[%c2_52, %c1_53, %c0_54] : memref<6x6x128xf32, #tpu.memory_space<vmem>>, vector<4x4x128xf32>
    %159 = vector.extract_strided_slice %107 {offsets = [2, 1, 0], sizes = [1, 1, 128], strides = [1, 1, 1]} : vector<3x3x128xf32> to vector<1x1x128xf32>
    %160 = vector.shape_cast %159 : vector<1x1x128xf32> to vector<128xf32>
    %161 = vector.shape_cast %160 : vector<128xf32> to vector<1x1x128xf32>
    %162 = vector.broadcast %161 : vector<1x1x128xf32> to vector<4x4x128xf32>
    %163 = arith.mulf %158, %162 : vector<4x4x128xf32>
    %164 = arith.addf %157, %163 : vector<4x4x128xf32>
    %c2_55 = arith.constant 2 : index
    %c2_56 = arith.constant 2 : index
    %c0_57 = arith.constant 0 : index
    %165 = vector.load %arg19[%c2_55, %c2_56, %c0_57] : memref<6x6x128xf32, #tpu.memory_space<vmem>>, vector<4x4x128xf32>
    %166 = vector.extract_strided_slice %107 {offsets = [2, 2, 0], sizes = [1, 1, 128], strides = [1, 1, 1]} : vector<3x3x128xf32> to vector<1x1x128xf32>
    %167 = vector.shape_cast %166 : vector<1x1x128xf32> to vector<128xf32>
    %168 = vector.shape_cast %167 : vector<128xf32> to vector<1x1x128xf32>
    %169 = vector.broadcast %168 : vector<1x1x128xf32> to vector<4x4x128xf32>
    %170 = arith.mulf %165, %169 : vector<4x4x128xf32>
    %171 = arith.addf %164, %170 : vector<4x4x128xf32>
    %c0_58 = arith.constant 0 : index
    %c0_59 = arith.constant 0 : index
    %172 = vector.load %arg9[%c0_58, %c0_59] : memref<1x128xf32, #tpu.memory_space<vmem>>, vector<1x128xf32>
    %173 = vector.shape_cast %172 : vector<1x128xf32> to vector<128xf32>
    %174 = vector.shape_cast %173 : vector<128xf32> to vector<1x1x128xf32>
    %175 = vector.broadcast %174 : vector<1x1x128xf32> to vector<4x4x128xf32>
    %176 = arith.mulf %171, %175 : vector<4x4x128xf32>
    %c0_60 = arith.constant 0 : index
    %c0_61 = arith.constant 0 : index
    %177 = vector.load %arg10[%c0_60, %c0_61] : memref<1x128xf32, #tpu.memory_space<vmem>>, vector<1x128xf32>
    %178 = vector.shape_cast %177 : vector<1x128xf32> to vector<128xf32>
    %179 = vector.shape_cast %178 : vector<128xf32> to vector<1x1x128xf32>
    %180 = vector.broadcast %179 : vector<1x1x128xf32> to vector<4x4x128xf32>
    %181 = arith.addf %176, %180 : vector<4x4x128xf32>
    %cst_62 = arith.constant 0.000000e+00 : f32
    %cst_63 = arith.constant 6.000000e+00 : f32
    %182 = vector.broadcast %cst_62 : f32 to vector<4x4x128xf32>
    %183 = arith.maximumf %182, %181 : vector<4x4x128xf32>
    %184 = vector.broadcast %cst_63 : f32 to vector<4x4x128xf32>
    %185 = arith.minimumf %184, %183 : vector<4x4x128xf32>
    %186 = vector.shape_cast %185 : vector<4x4x128xf32> to vector<16x128xf32>
    %c0_64 = arith.constant 0 : index
    %c0_65 = arith.constant 0 : index
    %187 = vector.load %arg11[%c0_64, %c0_65] : memref<128x128xf32, #tpu.memory_space<vmem>>, vector<128x128xf32>
    %cst_66 = arith.constant dense<0.000000e+00> : vector<16x128xf32>
    %188 = tpu.matmul %186, %187, %cst_66 {dimension_numbers = #tpu.dot_dimension_numbers<[1], [0], [0], [1], [0, 0, 1, 1], [], []>} : vector<16x128xf32>, vector<128x128xf32>, vector<16x128xf32> -> vector<16x128xf32>
    %c0_67 = arith.constant 0 : index
    %c0_68 = arith.constant 0 : index
    %189 = vector.load %arg12[%c0_67, %c0_68] : memref<1x128xf32, #tpu.memory_space<vmem>>, vector<1x128xf32>
    %190 = vector.broadcast %189 : vector<1x128xf32> to vector<16x128xf32>
    %191 = arith.mulf %188, %190 : vector<16x128xf32>
    %c0_69 = arith.constant 0 : index
    %c0_70 = arith.constant 0 : index
    %192 = vector.load %arg13[%c0_69, %c0_70] : memref<1x128xf32, #tpu.memory_space<vmem>>, vector<1x128xf32>
    %193 = vector.broadcast %192 : vector<1x128xf32> to vector<16x128xf32>
    %194 = arith.addf %191, %193 : vector<16x128xf32>
    %cst_71 = arith.constant 0.000000e+00 : f32
    %cst_72 = arith.constant 6.000000e+00 : f32
    %195 = vector.broadcast %cst_71 : f32 to vector<16x128xf32>
    %196 = arith.maximumf %195, %194 : vector<16x128xf32>
    %197 = vector.broadcast %cst_72 : f32 to vector<16x128xf32>
    %198 = arith.minimumf %197, %196 : vector<16x128xf32>
    %c0_73 = arith.constant 0 : index
    %c0_74 = arith.constant 0 : index
    %199 = vector.load %arg14[%c0_73, %c0_74] : memref<1x128xf32, #tpu.memory_space<vmem>>, vector<1x128xf32>
    %200 = vector.broadcast %199 : vector<1x128xf32> to vector<16x128xf32>
    %201 = arith.mulf %198, %200 : vector<16x128xf32>
    %cst_75 = arith.constant dense<0.000000e+00> : vector<16xf32>
    %202 = vector.multi_reduction <add>, %201, %cst_75 [1] : vector<16x128xf32> to vector<16xf32>
    %203 = vector.shape_cast %202 : vector<16xf32> to vector<16x1xf32>
    %c0_76 = arith.constant 0 : index
    %c0_77 = arith.constant 0 : index
    %204 = vector.load %arg15[%c0_76, %c0_77] : memref<1x1xf32, #tpu.memory_space<vmem>>, vector<1x1xf32>
    %205 = vector.broadcast %204 : vector<1x1xf32> to vector<16x1xf32>
    %206 = arith.addf %203, %205 : vector<16x1xf32>
    %207 = arith.negf %206 : vector<16x1xf32>
    %208 = math.exp %207 : vector<16x1xf32>
    %cst_78 = arith.constant 1.000000e+00 : f32
    %209 = vector.broadcast %cst_78 : f32 to vector<16x1xf32>
    %210 = arith.addf %209, %208 : vector<16x1xf32>
    %211 = arith.divf %209, %210 : vector<16x1xf32>
    %212 = vector.broadcast %211 : vector<16x1xf32> to vector<16x128xf32>
    %213 = arith.mulf %198, %212 : vector<16x128xf32>
    %cst_79 = arith.constant dense<0.000000e+00> : vector<128xf32>
    %214 = vector.multi_reduction <add>, %213, %cst_79 [0] : vector<16x128xf32> to vector<128xf32>
    %215 = vector.shape_cast %214 : vector<128xf32> to vector<1x128xf32>
    %cst_80 = arith.constant 1.600000e+01 : f32
    %216 = vector.broadcast %cst_80 : f32 to vector<1x128xf32>
    %217 = arith.divf %215, %216 : vector<1x128xf32>
    %cst_81 = arith.constant dense<0xFF800000> : vector<128xf32>
    %218 = vector.multi_reduction <maximumf>, %213, %cst_81 [0] : vector<16x128xf32> to vector<128xf32>
    %219 = vector.shape_cast %218 : vector<128xf32> to vector<1x128xf32>
    %220 = tpu.concatenate %217, %219 in 0 : vector<1x128xf32>, vector<1x128xf32> -> vector<2x128xf32>
    %c0_82 = arith.constant 0 : index
    %c0_83 = arith.constant 0 : index
    %221 = vector.load %arg16[%c0_82, %c0_83] : memref<128x16xf32, #tpu.memory_space<vmem>>, vector<128x16xf32>
    %cst_84 = arith.constant dense<0.000000e+00> : vector<2x16xf32>
    %222 = tpu.matmul %220, %221, %cst_84 {dimension_numbers = #tpu.dot_dimension_numbers<[1], [0], [0], [1], [0, 0, 1, 1], [], []>} : vector<2x128xf32>, vector<128x16xf32>, vector<2x16xf32> -> vector<2x16xf32>
    %cst_85 = arith.constant 0.000000e+00 : f32
    %223 = vector.broadcast %cst_85 : f32 to vector<2x16xf32>
    %224 = arith.maximumf %222, %223 : vector<2x16xf32>
    %c0_86 = arith.constant 0 : index
    %c0_87 = arith.constant 0 : index
    %225 = vector.load %arg17[%c0_86, %c0_87] : memref<16x128xf32, #tpu.memory_space<vmem>>, vector<16x128xf32>
    %cst_88 = arith.constant dense<0.000000e+00> : vector<2x128xf32>
    %226 = tpu.matmul %224, %225, %cst_88 {dimension_numbers = #tpu.dot_dimension_numbers<[1], [0], [0], [1], [0, 0, 1, 1], [], []>} : vector<2x16xf32>, vector<16x128xf32>, vector<2x128xf32> -> vector<2x128xf32>
    %227 = vector.extract_strided_slice %226 {offsets = [0, 0], sizes = [1, 128], strides = [1, 1]} : vector<2x128xf32> to vector<1x128xf32>
    %228 = vector.extract_strided_slice %226 {offsets = [1, 0], sizes = [1, 128], strides = [1, 1]} : vector<2x128xf32> to vector<1x128xf32>
    %229 = arith.addf %227, %228 : vector<1x128xf32>
    %230 = arith.negf %229 : vector<1x128xf32>
    %231 = math.exp %230 : vector<1x128xf32>
    %cst_89 = arith.constant 1.000000e+00 : f32
    %232 = vector.broadcast %cst_89 : f32 to vector<1x128xf32>
    %233 = arith.addf %232, %231 : vector<1x128xf32>
    %234 = arith.divf %232, %233 : vector<1x128xf32>
    %235 = vector.broadcast %234 : vector<1x128xf32> to vector<16x128xf32>
    %236 = arith.mulf %213, %235 : vector<16x128xf32>
    %c0_90 = arith.constant 0 : index
    %c0_91 = arith.constant 0 : index
    %c0_92 = arith.constant 0 : index
    %237 = vector.load %arg18[%c0_90, %c0_91, %c0_92] : memref<1x16x128xf32, #tpu.memory_space<vmem>>, vector<1x16x128xf32>
    %238 = vector.shape_cast %237 : vector<1x16x128xf32> to vector<16x128xf32>
    %239 = vector.shape_cast %236 : vector<16x128xf32> to vector<1x16x128xf32>
    tpu.vector_store %arg18[%c0_90, %c0_91, %c0_92], %239 {strides = array<i32>} : memref<1x16x128xf32, #tpu.memory_space<vmem>>, vector<1x16x128xf32>,
    return
  }
  func.func @transform_0(%arg0: i32) -> (i32, i32, i32, i32, i32) {
    %c0_i32 = arith.constant 0 : i32
    %c0_i32_0 = arith.constant 0 : i32
    %c0_i32_1 = arith.constant 0 : i32
    %c0_i32_2 = arith.constant 0 : i32
    %c0_i32_3 = arith.constant 0 : i32
    return %arg0, %c0_i32, %c0_i32_0, %c0_i32_1, %c0_i32_2 : i32, i32, i32, i32, i32
  }
  func.func @transform_1(%arg0: i32) -> (i32, i32, i32) {
    %c0_i32 = arith.constant 0 : i32
    %c0_i32_0 = arith.constant 0 : i32
    %c0_i32_1 = arith.constant 0 : i32
    %c0_i32_2 = arith.constant 0 : i32
    return %c0_i32, %c0_i32_0, %c0_i32_1 : i32, i32, i32
  }
  func.func @transform_2(%arg0: i32) -> (i32, i32) {
    %c0_i32 = arith.constant 0 : i32
    %c0_i32_0 = arith.constant 0 : i32
    %c0_i32_1 = arith.constant 0 : i32
    return %c0_i32, %c0_i32_0 : i32, i32
  }
  func.func @transform_3(%arg0: i32) -> (i32, i32) {
    %c0_i32 = arith.constant 0 : i32
    %c0_i32_0 = arith.constant 0 : i32
    %c0_i32_1 = arith.constant 0 : i32
    return %c0_i32, %c0_i32_0 : i32, i32
  }
  func.func @transform_4(%arg0: i32) -> (i32, i32) {
    %c0_i32 = arith.constant 0 : i32
    %c0_i32_0 = arith.constant 0 : i32
    %c0_i32_1 = arith.constant 0 : i32
    return %c0_i32, %c0_i32_0 : i32, i32
  }
  func.func @transform_5(%arg0: i32) -> (i32, i32) {
    %c0_i32 = arith.constant 0 : i32
    %c0_i32_0 = arith.constant 0 : i32
    %c0_i32_1 = arith.constant 0 : i32
    return %c0_i32, %c0_i32_0 : i32, i32
  }
  func.func @transform_6(%arg0: i32) -> (i32, i32) {
    %c0_i32 = arith.constant 0 : i32
    %c0_i32_0 = arith.constant 0 : i32
    %c0_i32_1 = arith.constant 0 : i32
    return %c0_i32, %c0_i32_0 : i32, i32
  }
  func.func @transform_7(%arg0: i32) -> (i32, i32, i32) {
    %c0_i32 = arith.constant 0 : i32
    %c0_i32_0 = arith.constant 0 : i32
    %c0_i32_1 = arith.constant 0 : i32
    %c0_i32_2 = arith.constant 0 : i32
    return %c0_i32, %c0_i32_0, %c0_i32_1 : i32, i32, i32
  }
  func.func @transform_8(%arg0: i32) -> (i32, i32) {
    %c0_i32 = arith.constant 0 : i32
    %c0_i32_0 = arith.constant 0 : i32
    %c0_i32_1 = arith.constant 0 : i32
    return %c0_i32, %c0_i32_0 : i32, i32
  }
  func.func @transform_9(%arg0: i32) -> (i32, i32) {
    %c0_i32 = arith.constant 0 : i32
    %c0_i32_0 = arith.constant 0 : i32
    %c0_i32_1 = arith.constant 0 : i32
    return %c0_i32, %c0_i32_0 : i32, i32
  }
  func.func @transform_10(%arg0: i32) -> (i32, i32) {
    %c0_i32 = arith.constant 0 : i32
    %c0_i32_0 = arith.constant 0 : i32
    %c0_i32_1 = arith.constant 0 : i32
    return %c0_i32, %c0_i32_0 : i32, i32
  }
  func.func @transform_11(%arg0: i32) -> (i32, i32) {
    %c0_i32 = arith.constant 0 : i32
    %c0_i32_0 = arith.constant 0 : i32
    %c0_i32_1 = arith.constant 0 : i32
    return %c0_i32, %c0_i32_0 : i32, i32
  }
  func.func @transform_12(%arg0: i32) -> (i32, i32) {
    %c0_i32 = arith.constant 0 : i32
    %c0_i32_0 = arith.constant 0 : i32
    %c0_i32_1 = arith.constant 0 : i32
    return %c0_i32, %c0_i32_0 : i32, i32
  }
  func.func @transform_13(%arg0: i32) -> (i32, i32) {
    %c0_i32 = arith.constant 0 : i32
    %c0_i32_0 = arith.constant 0 : i32
    %c0_i32_1 = arith.constant 0 : i32
    return %c0_i32, %c0_i32_0 : i32, i32
  }
  func.func @transform_14(%arg0: i32) -> (i32, i32) {
    %c0_i32 = arith.constant 0 : i32
    %c0_i32_0 = arith.constant 0 : i32
    %c0_i32_1 = arith.constant 0 : i32
    return %c0_i32, %c0_i32_0 : i32, i32
  }
  func.func @transform_15(%arg0: i32) -> (i32, i32) {
    %c0_i32 = arith.constant 0 : i32
    %c0_i32_0 = arith.constant 0 : i32
    %c0_i32_1 = arith.constant 0 : i32
    return %c0_i32, %c0_i32_0 : i32, i32
  }
  func.func @transform_16(%arg0: i32) -> (i32, i32) {
    %c0_i32 = arith.constant 0 : i32
    %c0_i32_0 = arith.constant 0 : i32
    %c0_i32_1 = arith.constant 0 : i32
    return %c0_i32, %c0_i32_0 : i32, i32
  }
  func.func @transform_17(%arg0: i32) -> (i32, i32, i32) {
    %c0_i32 = arith.constant 0 : i32
    %c0_i32_0 = arith.constant 0 : i32
    %c0_i32_1 = arith.constant 0 : i32
    return %arg0, %c0_i32, %c0_i32_0 : i32, i32, i32
  }
}

module attributes {stable_mosaic.version = 11 : i64} {
  func.func @_block_stam_kernel(%arg0: i32, %arg1: memref<1x4x3x3x128xf32, #tpu.memory_space<vmem>>, %arg2: memref<3x3x128xf32, #tpu.memory_space<vmem>>, %arg3: memref<1x128xf32, #tpu.memory_space<vmem>>, %arg4: memref<1x128xf32, #tpu.memory_space<vmem>>, %arg5: memref<128x256xf32, #tpu.memory_space<vmem>>, %arg6: memref<1x256xf32, #tpu.memory_space<vmem>>, %arg7: memref<1x256xf32, #tpu.memory_space<vmem>>, %arg8: memref<3x3x256xf32, #tpu.memory_space<vmem>>, %arg9: memref<1x256xf32, #tpu.memory_space<vmem>>, %arg10: memref<1x256xf32, #tpu.memory_space<vmem>>, %arg11: memref<256x256xf32, #tpu.memory_space<vmem>>, %arg12: memref<1x256xf32, #tpu.memory_space<vmem>>, %arg13: memref<1x256xf32, #tpu.memory_space<vmem>>, %arg14: memref<1x256xf32, #tpu.memory_space<vmem>>, %arg15: memref<1x1xf32, #tpu.memory_space<vmem>>, %arg16: memref<256x32xf32, #tpu.memory_space<vmem>>, %arg17: memref<32x256xf32, #tpu.memory_space<vmem>>, %arg18: memref<1x4x256xf32, #tpu.memory_space<vmem>>, %arg19: memref<4x4x256xf32, #tpu.memory_space<vmem>>) attributes {dimension_semantics = [#tpu.dimension_semantics<parallel>], iteration_bounds = array<i64: 2>, scalar_prefetch = 0 : i64, scratch_operands = 1 : i64, tpu.core_type = #tpu.core_type<tc>, window_params = [{transform_indices = @transform_0, window_bounds = array<i64: 1, 4, 3, 3, 128>}, {pipeline_mode = #tpu.pipeline_mode<synchronous>, transform_indices = @transform_1, window_bounds = array<i64: 3, 3, 128>}, {pipeline_mode = #tpu.pipeline_mode<synchronous>, transform_indices = @transform_2, window_bounds = array<i64: 1, 128>}, {pipeline_mode = #tpu.pipeline_mode<synchronous>, transform_indices = @transform_3, window_bounds = array<i64: 1, 128>}, {pipeline_mode = #tpu.pipeline_mode<synchronous>, transform_indices = @transform_4, window_bounds = array<i64: 128, 256>}, {pipeline_mode = #tpu.pipeline_mode<synchronous>, transform_indices = @transform_5, window_bounds = array<i64: 1, 256>}, {pipeline_mode = #tpu.pipeline_mode<synchronous>, transform_indices = @transform_6, window_bounds = array<i64: 1, 256>}, {pipeline_mode = #tpu.pipeline_mode<synchronous>, transform_indices = @transform_7, window_bounds = array<i64: 3, 3, 256>}, {pipeline_mode = #tpu.pipeline_mode<synchronous>, transform_indices = @transform_8, window_bounds = array<i64: 1, 256>}, {pipeline_mode = #tpu.pipeline_mode<synchronous>, transform_indices = @transform_9, window_bounds = array<i64: 1, 256>}, {pipeline_mode = #tpu.pipeline_mode<synchronous>, transform_indices = @transform_10, window_bounds = array<i64: 256, 256>}, {pipeline_mode = #tpu.pipeline_mode<synchronous>, transform_indices = @transform_11, window_bounds = array<i64: 1, 256>}, {pipeline_mode = #tpu.pipeline_mode<synchronous>, transform_indices = @transform_12, window_bounds = array<i64: 1, 256>}, {pipeline_mode = #tpu.pipeline_mode<synchronous>, transform_indices = @transform_13, window_bounds = array<i64: 1, 256>}, {pipeline_mode = #tpu.pipeline_mode<synchronous>, transform_indices = @transform_14, window_bounds = array<i64: 1, 1>}, {pipeline_mode = #tpu.pipeline_mode<synchronous>, transform_indices = @transform_15, window_bounds = array<i64: 256, 32>}, {pipeline_mode = #tpu.pipeline_mode<synchronous>, transform_indices = @transform_16, window_bounds = array<i64: 32, 256>}, {transform_indices = @transform_17, window_bounds = array<i64: 1, 4, 256>}]} {
    %c0 = arith.constant 0 : index
    %c0_0 = arith.constant 0 : index
    %c0_1 = arith.constant 0 : index
    %c0_2 = arith.constant 0 : index
    %c0_3 = arith.constant 0 : index
    %0 = vector.load %arg1[%c0, %c0_0, %c0_1, %c0_2, %c0_3] : memref<1x4x3x3x128xf32, #tpu.memory_space<vmem>>, vector<1x4x3x3x128xf32>
    %1 = vector.shape_cast %0 : vector<1x4x3x3x128xf32> to vector<4x3x3x128xf32>
    %c0_4 = arith.constant 0 : index
    %c0_5 = arith.constant 0 : index
    %c0_6 = arith.constant 0 : index
    %2 = vector.load %arg2[%c0_4, %c0_5, %c0_6] : memref<3x3x128xf32, #tpu.memory_space<vmem>>, vector<3x3x128xf32>
    %cst = arith.constant 0.000000e+00 : f32
    %3 = vector.broadcast %cst : f32 to vector<2x2x128xf32>
    %4 = vector.extract_strided_slice %1 {offsets = [0, 0, 0, 0], sizes = [1, 2, 2, 128], strides = [1, 1, 1, 1]} : vector<4x3x3x128xf32> to vector<1x2x2x128xf32>
    %5 = vector.shape_cast %4 : vector<1x2x2x128xf32> to vector<2x2x128xf32>
    %6 = vector.extract_strided_slice %2 {offsets = [0, 0, 0], sizes = [1, 1, 128], strides = [1, 1, 1]} : vector<3x3x128xf32> to vector<1x1x128xf32>
    %7 = vector.shape_cast %6 : vector<1x1x128xf32> to vector<128xf32>
    %8 = vector.shape_cast %7 : vector<128xf32> to vector<1x1x128xf32>
    %9 = vector.broadcast %8 : vector<1x1x128xf32> to vector<2x2x128xf32>
    %10 = arith.mulf %5, %9 : vector<2x2x128xf32>
    %11 = arith.addf %3, %10 : vector<2x2x128xf32>
    %12 = vector.extract_strided_slice %1 {offsets = [1, 0, 0, 0], sizes = [1, 2, 2, 128], strides = [1, 1, 1, 1]} : vector<4x3x3x128xf32> to vector<1x2x2x128xf32>
    %13 = vector.shape_cast %12 : vector<1x2x2x128xf32> to vector<2x2x128xf32>
    %14 = vector.extract_strided_slice %2 {offsets = [0, 1, 0], sizes = [1, 1, 128], strides = [1, 1, 1]} : vector<3x3x128xf32> to vector<1x1x128xf32>
    %15 = vector.shape_cast %14 : vector<1x1x128xf32> to vector<128xf32>
    %16 = vector.shape_cast %15 : vector<128xf32> to vector<1x1x128xf32>
    %17 = vector.broadcast %16 : vector<1x1x128xf32> to vector<2x2x128xf32>
    %18 = arith.mulf %13, %17 : vector<2x2x128xf32>
    %19 = arith.addf %11, %18 : vector<2x2x128xf32>
    %20 = vector.extract_strided_slice %1 {offsets = [0, 0, 1, 0], sizes = [1, 2, 2, 128], strides = [1, 1, 1, 1]} : vector<4x3x3x128xf32> to vector<1x2x2x128xf32>
    %21 = vector.shape_cast %20 : vector<1x2x2x128xf32> to vector<2x2x128xf32>
    %22 = vector.extract_strided_slice %2 {offsets = [0, 2, 0], sizes = [1, 1, 128], strides = [1, 1, 1]} : vector<3x3x128xf32> to vector<1x1x128xf32>
    %23 = vector.shape_cast %22 : vector<1x1x128xf32> to vector<128xf32>
    %24 = vector.shape_cast %23 : vector<128xf32> to vector<1x1x128xf32>
    %25 = vector.broadcast %24 : vector<1x1x128xf32> to vector<2x2x128xf32>
    %26 = arith.mulf %21, %25 : vector<2x2x128xf32>
    %27 = arith.addf %19, %26 : vector<2x2x128xf32>
    %28 = vector.extract_strided_slice %1 {offsets = [2, 0, 0, 0], sizes = [1, 2, 2, 128], strides = [1, 1, 1, 1]} : vector<4x3x3x128xf32> to vector<1x2x2x128xf32>
    %29 = vector.shape_cast %28 : vector<1x2x2x128xf32> to vector<2x2x128xf32>
    %30 = vector.extract_strided_slice %2 {offsets = [1, 0, 0], sizes = [1, 1, 128], strides = [1, 1, 1]} : vector<3x3x128xf32> to vector<1x1x128xf32>
    %31 = vector.shape_cast %30 : vector<1x1x128xf32> to vector<128xf32>
    %32 = vector.shape_cast %31 : vector<128xf32> to vector<1x1x128xf32>
    %33 = vector.broadcast %32 : vector<1x1x128xf32> to vector<2x2x128xf32>
    %34 = arith.mulf %29, %33 : vector<2x2x128xf32>
    %35 = arith.addf %27, %34 : vector<2x2x128xf32>
    %36 = vector.extract_strided_slice %1 {offsets = [3, 0, 0, 0], sizes = [1, 2, 2, 128], strides = [1, 1, 1, 1]} : vector<4x3x3x128xf32> to vector<1x2x2x128xf32>
    %37 = vector.shape_cast %36 : vector<1x2x2x128xf32> to vector<2x2x128xf32>
    %38 = vector.extract_strided_slice %2 {offsets = [1, 1, 0], sizes = [1, 1, 128], strides = [1, 1, 1]} : vector<3x3x128xf32> to vector<1x1x128xf32>
    %39 = vector.shape_cast %38 : vector<1x1x128xf32> to vector<128xf32>
    %40 = vector.shape_cast %39 : vector<128xf32> to vector<1x1x128xf32>
    %41 = vector.broadcast %40 : vector<1x1x128xf32> to vector<2x2x128xf32>
    %42 = arith.mulf %37, %41 : vector<2x2x128xf32>
    %43 = arith.addf %35, %42 : vector<2x2x128xf32>
    %44 = vector.extract_strided_slice %1 {offsets = [2, 0, 1, 0], sizes = [1, 2, 2, 128], strides = [1, 1, 1, 1]} : vector<4x3x3x128xf32> to vector<1x2x2x128xf32>
    %45 = vector.shape_cast %44 : vector<1x2x2x128xf32> to vector<2x2x128xf32>
    %46 = vector.extract_strided_slice %2 {offsets = [1, 2, 0], sizes = [1, 1, 128], strides = [1, 1, 1]} : vector<3x3x128xf32> to vector<1x1x128xf32>
    %47 = vector.shape_cast %46 : vector<1x1x128xf32> to vector<128xf32>
    %48 = vector.shape_cast %47 : vector<128xf32> to vector<1x1x128xf32>
    %49 = vector.broadcast %48 : vector<1x1x128xf32> to vector<2x2x128xf32>
    %50 = arith.mulf %45, %49 : vector<2x2x128xf32>
    %51 = arith.addf %43, %50 : vector<2x2x128xf32>
    %52 = vector.extract_strided_slice %1 {offsets = [0, 1, 0, 0], sizes = [1, 2, 2, 128], strides = [1, 1, 1, 1]} : vector<4x3x3x128xf32> to vector<1x2x2x128xf32>
    %53 = vector.shape_cast %52 : vector<1x2x2x128xf32> to vector<2x2x128xf32>
    %54 = vector.extract_strided_slice %2 {offsets = [2, 0, 0], sizes = [1, 1, 128], strides = [1, 1, 1]} : vector<3x3x128xf32> to vector<1x1x128xf32>
    %55 = vector.shape_cast %54 : vector<1x1x128xf32> to vector<128xf32>
    %56 = vector.shape_cast %55 : vector<128xf32> to vector<1x1x128xf32>
    %57 = vector.broadcast %56 : vector<1x1x128xf32> to vector<2x2x128xf32>
    %58 = arith.mulf %53, %57 : vector<2x2x128xf32>
    %59 = arith.addf %51, %58 : vector<2x2x128xf32>
    %60 = vector.extract_strided_slice %1 {offsets = [1, 1, 0, 0], sizes = [1, 2, 2, 128], strides = [1, 1, 1, 1]} : vector<4x3x3x128xf32> to vector<1x2x2x128xf32>
    %61 = vector.shape_cast %60 : vector<1x2x2x128xf32> to vector<2x2x128xf32>
    %62 = vector.extract_strided_slice %2 {offsets = [2, 1, 0], sizes = [1, 1, 128], strides = [1, 1, 1]} : vector<3x3x128xf32> to vector<1x1x128xf32>
    %63 = vector.shape_cast %62 : vector<1x1x128xf32> to vector<128xf32>
    %64 = vector.shape_cast %63 : vector<128xf32> to vector<1x1x128xf32>
    %65 = vector.broadcast %64 : vector<1x1x128xf32> to vector<2x2x128xf32>
    %66 = arith.mulf %61, %65 : vector<2x2x128xf32>
    %67 = arith.addf %59, %66 : vector<2x2x128xf32>
    %68 = vector.extract_strided_slice %1 {offsets = [0, 1, 1, 0], sizes = [1, 2, 2, 128], strides = [1, 1, 1, 1]} : vector<4x3x3x128xf32> to vector<1x2x2x128xf32>
    %69 = vector.shape_cast %68 : vector<1x2x2x128xf32> to vector<2x2x128xf32>
    %70 = vector.extract_strided_slice %2 {offsets = [2, 2, 0], sizes = [1, 1, 128], strides = [1, 1, 1]} : vector<3x3x128xf32> to vector<1x1x128xf32>
    %71 = vector.shape_cast %70 : vector<1x1x128xf32> to vector<128xf32>
    %72 = vector.shape_cast %71 : vector<128xf32> to vector<1x1x128xf32>
    %73 = vector.broadcast %72 : vector<1x1x128xf32> to vector<2x2x128xf32>
    %74 = arith.mulf %69, %73 : vector<2x2x128xf32>
    %75 = arith.addf %67, %74 : vector<2x2x128xf32>
    %c0_7 = arith.constant 0 : index
    %c0_8 = arith.constant 0 : index
    %76 = vector.load %arg3[%c0_7, %c0_8] : memref<1x128xf32, #tpu.memory_space<vmem>>, vector<1x128xf32>
    %77 = vector.shape_cast %76 : vector<1x128xf32> to vector<128xf32>
    %78 = vector.shape_cast %77 : vector<128xf32> to vector<1x1x128xf32>
    %79 = vector.broadcast %78 : vector<1x1x128xf32> to vector<2x2x128xf32>
    %80 = arith.mulf %75, %79 : vector<2x2x128xf32>
    %c0_9 = arith.constant 0 : index
    %c0_10 = arith.constant 0 : index
    %81 = vector.load %arg4[%c0_9, %c0_10] : memref<1x128xf32, #tpu.memory_space<vmem>>, vector<1x128xf32>
    %82 = vector.shape_cast %81 : vector<1x128xf32> to vector<128xf32>
    %83 = vector.shape_cast %82 : vector<128xf32> to vector<1x1x128xf32>
    %84 = vector.broadcast %83 : vector<1x1x128xf32> to vector<2x2x128xf32>
    %85 = arith.addf %80, %84 : vector<2x2x128xf32>
    %cst_11 = arith.constant 0.000000e+00 : f32
    %cst_12 = arith.constant 6.000000e+00 : f32
    %86 = vector.broadcast %cst_11 : f32 to vector<2x2x128xf32>
    %87 = arith.maximumf %86, %85 : vector<2x2x128xf32>
    %88 = vector.broadcast %cst_12 : f32 to vector<2x2x128xf32>
    %89 = arith.minimumf %88, %87 : vector<2x2x128xf32>
    %c0_13 = arith.constant 0 : index
    %c0_14 = arith.constant 0 : index
    %90 = vector.load %arg5[%c0_13, %c0_14] : memref<128x256xf32, #tpu.memory_space<vmem>>, vector<128x256xf32>
    %91 = vector.shape_cast %89 : vector<2x2x128xf32> to vector<4x128xf32>
    %cst_15 = arith.constant dense<0.000000e+00> : vector<4x256xf32>
    %92 = tpu.matmul %91, %90, %cst_15 {dimension_numbers = #tpu.dot_dimension_numbers<[1], [0], [0], [1], [0, 0, 1, 1], [], []>} : vector<4x128xf32>, vector<128x256xf32>, vector<4x256xf32> -> vector<4x256xf32>
    %c0_16 = arith.constant 0 : index
    %c0_17 = arith.constant 0 : index
    %93 = vector.load %arg6[%c0_16, %c0_17] : memref<1x256xf32, #tpu.memory_space<vmem>>, vector<1x256xf32>
    %94 = vector.broadcast %93 : vector<1x256xf32> to vector<4x256xf32>
    %95 = arith.mulf %92, %94 : vector<4x256xf32>
    %c0_18 = arith.constant 0 : index
    %c0_19 = arith.constant 0 : index
    %96 = vector.load %arg7[%c0_18, %c0_19] : memref<1x256xf32, #tpu.memory_space<vmem>>, vector<1x256xf32>
    %97 = vector.broadcast %96 : vector<1x256xf32> to vector<4x256xf32>
    %98 = arith.addf %95, %97 : vector<4x256xf32>
    %cst_20 = arith.constant 0.000000e+00 : f32
    %cst_21 = arith.constant 6.000000e+00 : f32
    %99 = vector.broadcast %cst_20 : f32 to vector<4x256xf32>
    %100 = arith.maximumf %99, %98 : vector<4x256xf32>
    %101 = vector.broadcast %cst_21 : f32 to vector<4x256xf32>
    %102 = arith.minimumf %101, %100 : vector<4x256xf32>
    %cst_22 = arith.constant 0.000000e+00 : f32
    %103 = vector.broadcast %cst_22 : f32 to vector<4x4x256xf32>
    %c0_23 = arith.constant 0 : index
    %c0_24 = arith.constant 0 : index
    %c0_25 = arith.constant 0 : index
    %104 = vector.load %arg19[%c0_23, %c0_24, %c0_25] : memref<4x4x256xf32, #tpu.memory_space<vmem>>, vector<4x4x256xf32>
    tpu.vector_store %arg19[%c0_23, %c0_24, %c0_25], %103 {strides = array<i32>} : memref<4x4x256xf32, #tpu.memory_space<vmem>>, vector<4x4x256xf32>,
    %105 = vector.shape_cast %102 : vector<4x256xf32> to vector<2x2x256xf32>
    %c1 = arith.constant 1 : index
    %c1_26 = arith.constant 1 : index
    %c0_27 = arith.constant 0 : index
    %106 = vector.load %arg19[%c1, %c1_26, %c0_27] : memref<4x4x256xf32, #tpu.memory_space<vmem>>, vector<2x2x256xf32>
    tpu.vector_store %arg19[%c1, %c1_26, %c0_27], %105 {strides = array<i32>} : memref<4x4x256xf32, #tpu.memory_space<vmem>>, vector<2x2x256xf32>,
    %c0_28 = arith.constant 0 : index
    %c0_29 = arith.constant 0 : index
    %c0_30 = arith.constant 0 : index
    %107 = vector.load %arg8[%c0_28, %c0_29, %c0_30] : memref<3x3x256xf32, #tpu.memory_space<vmem>>, vector<3x3x256xf32>
    %cst_31 = arith.constant 0.000000e+00 : f32
    %108 = vector.broadcast %cst_31 : f32 to vector<2x2x256xf32>
    %c0_32 = arith.constant 0 : index
    %c0_33 = arith.constant 0 : index
    %c0_34 = arith.constant 0 : index
    %109 = vector.load %arg19[%c0_32, %c0_33, %c0_34] : memref<4x4x256xf32, #tpu.memory_space<vmem>>, vector<2x2x256xf32>
    %110 = vector.extract_strided_slice %107 {offsets = [0, 0, 0], sizes = [1, 1, 256], strides = [1, 1, 1]} : vector<3x3x256xf32> to vector<1x1x256xf32>
    %111 = vector.shape_cast %110 : vector<1x1x256xf32> to vector<256xf32>
    %112 = vector.shape_cast %111 : vector<256xf32> to vector<1x1x256xf32>
    %113 = vector.broadcast %112 : vector<1x1x256xf32> to vector<2x2x256xf32>
    %114 = arith.mulf %109, %113 : vector<2x2x256xf32>
    %115 = arith.addf %108, %114 : vector<2x2x256xf32>
    %c0_35 = arith.constant 0 : index
    %c1_36 = arith.constant 1 : index
    %c0_37 = arith.constant 0 : index
    %116 = vector.load %arg19[%c0_35, %c1_36, %c0_37] : memref<4x4x256xf32, #tpu.memory_space<vmem>>, vector<2x2x256xf32>
    %117 = vector.extract_strided_slice %107 {offsets = [0, 1, 0], sizes = [1, 1, 256], strides = [1, 1, 1]} : vector<3x3x256xf32> to vector<1x1x256xf32>
    %118 = vector.shape_cast %117 : vector<1x1x256xf32> to vector<256xf32>
    %119 = vector.shape_cast %118 : vector<256xf32> to vector<1x1x256xf32>
    %120 = vector.broadcast %119 : vector<1x1x256xf32> to vector<2x2x256xf32>
    %121 = arith.mulf %116, %120 : vector<2x2x256xf32>
    %122 = arith.addf %115, %121 : vector<2x2x256xf32>
    %c0_38 = arith.constant 0 : index
    %c2 = arith.constant 2 : index
    %c0_39 = arith.constant 0 : index
    %123 = vector.load %arg19[%c0_38, %c2, %c0_39] : memref<4x4x256xf32, #tpu.memory_space<vmem>>, vector<2x2x256xf32>
    %124 = vector.extract_strided_slice %107 {offsets = [0, 2, 0], sizes = [1, 1, 256], strides = [1, 1, 1]} : vector<3x3x256xf32> to vector<1x1x256xf32>
    %125 = vector.shape_cast %124 : vector<1x1x256xf32> to vector<256xf32>
    %126 = vector.shape_cast %125 : vector<256xf32> to vector<1x1x256xf32>
    %127 = vector.broadcast %126 : vector<1x1x256xf32> to vector<2x2x256xf32>
    %128 = arith.mulf %123, %127 : vector<2x2x256xf32>
    %129 = arith.addf %122, %128 : vector<2x2x256xf32>
    %c1_40 = arith.constant 1 : index
    %c0_41 = arith.constant 0 : index
    %c0_42 = arith.constant 0 : index
    %130 = vector.load %arg19[%c1_40, %c0_41, %c0_42] : memref<4x4x256xf32, #tpu.memory_space<vmem>>, vector<2x2x256xf32>
    %131 = vector.extract_strided_slice %107 {offsets = [1, 0, 0], sizes = [1, 1, 256], strides = [1, 1, 1]} : vector<3x3x256xf32> to vector<1x1x256xf32>
    %132 = vector.shape_cast %131 : vector<1x1x256xf32> to vector<256xf32>
    %133 = vector.shape_cast %132 : vector<256xf32> to vector<1x1x256xf32>
    %134 = vector.broadcast %133 : vector<1x1x256xf32> to vector<2x2x256xf32>
    %135 = arith.mulf %130, %134 : vector<2x2x256xf32>
    %136 = arith.addf %129, %135 : vector<2x2x256xf32>
    %c1_43 = arith.constant 1 : index
    %c1_44 = arith.constant 1 : index
    %c0_45 = arith.constant 0 : index
    %137 = vector.load %arg19[%c1_43, %c1_44, %c0_45] : memref<4x4x256xf32, #tpu.memory_space<vmem>>, vector<2x2x256xf32>
    %138 = vector.extract_strided_slice %107 {offsets = [1, 1, 0], sizes = [1, 1, 256], strides = [1, 1, 1]} : vector<3x3x256xf32> to vector<1x1x256xf32>
    %139 = vector.shape_cast %138 : vector<1x1x256xf32> to vector<256xf32>
    %140 = vector.shape_cast %139 : vector<256xf32> to vector<1x1x256xf32>
    %141 = vector.broadcast %140 : vector<1x1x256xf32> to vector<2x2x256xf32>
    %142 = arith.mulf %137, %141 : vector<2x2x256xf32>
    %143 = arith.addf %136, %142 : vector<2x2x256xf32>
    %c1_46 = arith.constant 1 : index
    %c2_47 = arith.constant 2 : index
    %c0_48 = arith.constant 0 : index
    %144 = vector.load %arg19[%c1_46, %c2_47, %c0_48] : memref<4x4x256xf32, #tpu.memory_space<vmem>>, vector<2x2x256xf32>
    %145 = vector.extract_strided_slice %107 {offsets = [1, 2, 0], sizes = [1, 1, 256], strides = [1, 1, 1]} : vector<3x3x256xf32> to vector<1x1x256xf32>
    %146 = vector.shape_cast %145 : vector<1x1x256xf32> to vector<256xf32>
    %147 = vector.shape_cast %146 : vector<256xf32> to vector<1x1x256xf32>
    %148 = vector.broadcast %147 : vector<1x1x256xf32> to vector<2x2x256xf32>
    %149 = arith.mulf %144, %148 : vector<2x2x256xf32>
    %150 = arith.addf %143, %149 : vector<2x2x256xf32>
    %c2_49 = arith.constant 2 : index
    %c0_50 = arith.constant 0 : index
    %c0_51 = arith.constant 0 : index
    %151 = vector.load %arg19[%c2_49, %c0_50, %c0_51] : memref<4x4x256xf32, #tpu.memory_space<vmem>>, vector<2x2x256xf32>
    %152 = vector.extract_strided_slice %107 {offsets = [2, 0, 0], sizes = [1, 1, 256], strides = [1, 1, 1]} : vector<3x3x256xf32> to vector<1x1x256xf32>
    %153 = vector.shape_cast %152 : vector<1x1x256xf32> to vector<256xf32>
    %154 = vector.shape_cast %153 : vector<256xf32> to vector<1x1x256xf32>
    %155 = vector.broadcast %154 : vector<1x1x256xf32> to vector<2x2x256xf32>
    %156 = arith.mulf %151, %155 : vector<2x2x256xf32>
    %157 = arith.addf %150, %156 : vector<2x2x256xf32>
    %c2_52 = arith.constant 2 : index
    %c1_53 = arith.constant 1 : index
    %c0_54 = arith.constant 0 : index
    %158 = vector.load %arg19[%c2_52, %c1_53, %c0_54] : memref<4x4x256xf32, #tpu.memory_space<vmem>>, vector<2x2x256xf32>
    %159 = vector.extract_strided_slice %107 {offsets = [2, 1, 0], sizes = [1, 1, 256], strides = [1, 1, 1]} : vector<3x3x256xf32> to vector<1x1x256xf32>
    %160 = vector.shape_cast %159 : vector<1x1x256xf32> to vector<256xf32>
    %161 = vector.shape_cast %160 : vector<256xf32> to vector<1x1x256xf32>
    %162 = vector.broadcast %161 : vector<1x1x256xf32> to vector<2x2x256xf32>
    %163 = arith.mulf %158, %162 : vector<2x2x256xf32>
    %164 = arith.addf %157, %163 : vector<2x2x256xf32>
    %c2_55 = arith.constant 2 : index
    %c2_56 = arith.constant 2 : index
    %c0_57 = arith.constant 0 : index
    %165 = vector.load %arg19[%c2_55, %c2_56, %c0_57] : memref<4x4x256xf32, #tpu.memory_space<vmem>>, vector<2x2x256xf32>
    %166 = vector.extract_strided_slice %107 {offsets = [2, 2, 0], sizes = [1, 1, 256], strides = [1, 1, 1]} : vector<3x3x256xf32> to vector<1x1x256xf32>
    %167 = vector.shape_cast %166 : vector<1x1x256xf32> to vector<256xf32>
    %168 = vector.shape_cast %167 : vector<256xf32> to vector<1x1x256xf32>
    %169 = vector.broadcast %168 : vector<1x1x256xf32> to vector<2x2x256xf32>
    %170 = arith.mulf %165, %169 : vector<2x2x256xf32>
    %171 = arith.addf %164, %170 : vector<2x2x256xf32>
    %c0_58 = arith.constant 0 : index
    %c0_59 = arith.constant 0 : index
    %172 = vector.load %arg9[%c0_58, %c0_59] : memref<1x256xf32, #tpu.memory_space<vmem>>, vector<1x256xf32>
    %173 = vector.shape_cast %172 : vector<1x256xf32> to vector<256xf32>
    %174 = vector.shape_cast %173 : vector<256xf32> to vector<1x1x256xf32>
    %175 = vector.broadcast %174 : vector<1x1x256xf32> to vector<2x2x256xf32>
    %176 = arith.mulf %171, %175 : vector<2x2x256xf32>
    %c0_60 = arith.constant 0 : index
    %c0_61 = arith.constant 0 : index
    %177 = vector.load %arg10[%c0_60, %c0_61] : memref<1x256xf32, #tpu.memory_space<vmem>>, vector<1x256xf32>
    %178 = vector.shape_cast %177 : vector<1x256xf32> to vector<256xf32>
    %179 = vector.shape_cast %178 : vector<256xf32> to vector<1x1x256xf32>
    %180 = vector.broadcast %179 : vector<1x1x256xf32> to vector<2x2x256xf32>
    %181 = arith.addf %176, %180 : vector<2x2x256xf32>
    %cst_62 = arith.constant 0.000000e+00 : f32
    %cst_63 = arith.constant 6.000000e+00 : f32
    %182 = vector.broadcast %cst_62 : f32 to vector<2x2x256xf32>
    %183 = arith.maximumf %182, %181 : vector<2x2x256xf32>
    %184 = vector.broadcast %cst_63 : f32 to vector<2x2x256xf32>
    %185 = arith.minimumf %184, %183 : vector<2x2x256xf32>
    %186 = vector.shape_cast %185 : vector<2x2x256xf32> to vector<4x256xf32>
    %c0_64 = arith.constant 0 : index
    %c0_65 = arith.constant 0 : index
    %187 = vector.load %arg11[%c0_64, %c0_65] : memref<256x256xf32, #tpu.memory_space<vmem>>, vector<256x256xf32>
    %cst_66 = arith.constant dense<0.000000e+00> : vector<4x256xf32>
    %188 = tpu.matmul %186, %187, %cst_66 {dimension_numbers = #tpu.dot_dimension_numbers<[1], [0], [0], [1], [0, 0, 1, 1], [], []>} : vector<4x256xf32>, vector<256x256xf32>, vector<4x256xf32> -> vector<4x256xf32>
    %c0_67 = arith.constant 0 : index
    %c0_68 = arith.constant 0 : index
    %189 = vector.load %arg12[%c0_67, %c0_68] : memref<1x256xf32, #tpu.memory_space<vmem>>, vector<1x256xf32>
    %190 = vector.broadcast %189 : vector<1x256xf32> to vector<4x256xf32>
    %191 = arith.mulf %188, %190 : vector<4x256xf32>
    %c0_69 = arith.constant 0 : index
    %c0_70 = arith.constant 0 : index
    %192 = vector.load %arg13[%c0_69, %c0_70] : memref<1x256xf32, #tpu.memory_space<vmem>>, vector<1x256xf32>
    %193 = vector.broadcast %192 : vector<1x256xf32> to vector<4x256xf32>
    %194 = arith.addf %191, %193 : vector<4x256xf32>
    %cst_71 = arith.constant 0.000000e+00 : f32
    %cst_72 = arith.constant 6.000000e+00 : f32
    %195 = vector.broadcast %cst_71 : f32 to vector<4x256xf32>
    %196 = arith.maximumf %195, %194 : vector<4x256xf32>
    %197 = vector.broadcast %cst_72 : f32 to vector<4x256xf32>
    %198 = arith.minimumf %197, %196 : vector<4x256xf32>
    %c0_73 = arith.constant 0 : index
    %c0_74 = arith.constant 0 : index
    %199 = vector.load %arg14[%c0_73, %c0_74] : memref<1x256xf32, #tpu.memory_space<vmem>>, vector<1x256xf32>
    %200 = vector.broadcast %199 : vector<1x256xf32> to vector<4x256xf32>
    %201 = arith.mulf %198, %200 : vector<4x256xf32>
    %cst_75 = arith.constant dense<0.000000e+00> : vector<4xf32>
    %202 = vector.multi_reduction <add>, %201, %cst_75 [1] : vector<4x256xf32> to vector<4xf32>
    %203 = vector.shape_cast %202 : vector<4xf32> to vector<4x1xf32>
    %c0_76 = arith.constant 0 : index
    %c0_77 = arith.constant 0 : index
    %204 = vector.load %arg15[%c0_76, %c0_77] : memref<1x1xf32, #tpu.memory_space<vmem>>, vector<1x1xf32>
    %205 = vector.broadcast %204 : vector<1x1xf32> to vector<4x1xf32>
    %206 = arith.addf %203, %205 : vector<4x1xf32>
    %207 = arith.negf %206 : vector<4x1xf32>
    %208 = math.exp %207 : vector<4x1xf32>
    %cst_78 = arith.constant 1.000000e+00 : f32
    %209 = vector.broadcast %cst_78 : f32 to vector<4x1xf32>
    %210 = arith.addf %209, %208 : vector<4x1xf32>
    %211 = arith.divf %209, %210 : vector<4x1xf32>
    %212 = vector.broadcast %211 : vector<4x1xf32> to vector<4x256xf32>
    %213 = arith.mulf %198, %212 : vector<4x256xf32>
    %cst_79 = arith.constant dense<0.000000e+00> : vector<256xf32>
    %214 = vector.multi_reduction <add>, %213, %cst_79 [0] : vector<4x256xf32> to vector<256xf32>
    %215 = vector.shape_cast %214 : vector<256xf32> to vector<1x256xf32>
    %cst_80 = arith.constant 4.000000e+00 : f32
    %216 = vector.broadcast %cst_80 : f32 to vector<1x256xf32>
    %217 = arith.divf %215, %216 : vector<1x256xf32>
    %cst_81 = arith.constant dense<0xFF800000> : vector<256xf32>
    %218 = vector.multi_reduction <maximumf>, %213, %cst_81 [0] : vector<4x256xf32> to vector<256xf32>
    %219 = vector.shape_cast %218 : vector<256xf32> to vector<1x256xf32>
    %220 = tpu.concatenate %217, %219 in 0 : vector<1x256xf32>, vector<1x256xf32> -> vector<2x256xf32>
    %c0_82 = arith.constant 0 : index
    %c0_83 = arith.constant 0 : index
    %221 = vector.load %arg16[%c0_82, %c0_83] : memref<256x32xf32, #tpu.memory_space<vmem>>, vector<256x32xf32>
    %cst_84 = arith.constant dense<0.000000e+00> : vector<2x32xf32>
    %222 = tpu.matmul %220, %221, %cst_84 {dimension_numbers = #tpu.dot_dimension_numbers<[1], [0], [0], [1], [0, 0, 1, 1], [], []>} : vector<2x256xf32>, vector<256x32xf32>, vector<2x32xf32> -> vector<2x32xf32>
    %cst_85 = arith.constant 0.000000e+00 : f32
    %223 = vector.broadcast %cst_85 : f32 to vector<2x32xf32>
    %224 = arith.maximumf %222, %223 : vector<2x32xf32>
    %c0_86 = arith.constant 0 : index
    %c0_87 = arith.constant 0 : index
    %225 = vector.load %arg17[%c0_86, %c0_87] : memref<32x256xf32, #tpu.memory_space<vmem>>, vector<32x256xf32>
    %cst_88 = arith.constant dense<0.000000e+00> : vector<2x256xf32>
    %226 = tpu.matmul %224, %225, %cst_88 {dimension_numbers = #tpu.dot_dimension_numbers<[1], [0], [0], [1], [0, 0, 1, 1], [], []>} : vector<2x32xf32>, vector<32x256xf32>, vector<2x256xf32> -> vector<2x256xf32>
    %227 = vector.extract_strided_slice %226 {offsets = [0, 0], sizes = [1, 256], strides = [1, 1]} : vector<2x256xf32> to vector<1x256xf32>
    %228 = vector.extract_strided_slice %226 {offsets = [1, 0], sizes = [1, 256], strides = [1, 1]} : vector<2x256xf32> to vector<1x256xf32>
    %229 = arith.addf %227, %228 : vector<1x256xf32>
    %230 = arith.negf %229 : vector<1x256xf32>
    %231 = math.exp %230 : vector<1x256xf32>
    %cst_89 = arith.constant 1.000000e+00 : f32
    %232 = vector.broadcast %cst_89 : f32 to vector<1x256xf32>
    %233 = arith.addf %232, %231 : vector<1x256xf32>
    %234 = arith.divf %232, %233 : vector<1x256xf32>
    %235 = vector.broadcast %234 : vector<1x256xf32> to vector<4x256xf32>
    %236 = arith.mulf %213, %235 : vector<4x256xf32>
    %c0_90 = arith.constant 0 : index
    %c0_91 = arith.constant 0 : index
    %c0_92 = arith.constant 0 : index
    %237 = vector.load %arg18[%c0_90, %c0_91, %c0_92] : memref<1x4x256xf32, #tpu.memory_space<vmem>>, vector<1x4x256xf32>
    %238 = vector.shape_cast %237 : vector<1x4x256xf32> to vector<4x256xf32>
    %239 = vector.shape_cast %236 : vector<4x256xf32> to vector<1x4x256xf32>
    tpu.vector_store %arg18[%c0_90, %c0_91, %c0_92], %239 {strides = array<i32>} : memref<1x4x256xf32, #tpu.memory_space<vmem>>, vector<1x4x256xf32>,
    return
  }
  func.func @transform_0(%arg0: i32) -> (i32, i32, i32, i32, i32) {
    %c0_i32 = arith.constant 0 : i32
    %c0_i32_0 = arith.constant 0 : i32
    %c0_i32_1 = arith.constant 0 : i32
    %c0_i32_2 = arith.constant 0 : i32
    %c0_i32_3 = arith.constant 0 : i32
    return %arg0, %c0_i32, %c0_i32_0, %c0_i32_1, %c0_i32_2 : i32, i32, i32, i32, i32
  }
  func.func @transform_1(%arg0: i32) -> (i32, i32, i32) {
    %c0_i32 = arith.constant 0 : i32
    %c0_i32_0 = arith.constant 0 : i32
    %c0_i32_1 = arith.constant 0 : i32
    %c0_i32_2 = arith.constant 0 : i32
    return %c0_i32, %c0_i32_0, %c0_i32_1 : i32, i32, i32
  }
  func.func @transform_2(%arg0: i32) -> (i32, i32) {
    %c0_i32 = arith.constant 0 : i32
    %c0_i32_0 = arith.constant 0 : i32
    %c0_i32_1 = arith.constant 0 : i32
    return %c0_i32, %c0_i32_0 : i32, i32
  }
  func.func @transform_3(%arg0: i32) -> (i32, i32) {
    %c0_i32 = arith.constant 0 : i32
    %c0_i32_0 = arith.constant 0 : i32
    %c0_i32_1 = arith.constant 0 : i32
    return %c0_i32, %c0_i32_0 : i32, i32
  }
  func.func @transform_4(%arg0: i32) -> (i32, i32) {
    %c0_i32 = arith.constant 0 : i32
    %c0_i32_0 = arith.constant 0 : i32
    %c0_i32_1 = arith.constant 0 : i32
    return %c0_i32, %c0_i32_0 : i32, i32
  }
  func.func @transform_5(%arg0: i32) -> (i32, i32) {
    %c0_i32 = arith.constant 0 : i32
    %c0_i32_0 = arith.constant 0 : i32
    %c0_i32_1 = arith.constant 0 : i32
    return %c0_i32, %c0_i32_0 : i32, i32
  }
  func.func @transform_6(%arg0: i32) -> (i32, i32) {
    %c0_i32 = arith.constant 0 : i32
    %c0_i32_0 = arith.constant 0 : i32
    %c0_i32_1 = arith.constant 0 : i32
    return %c0_i32, %c0_i32_0 : i32, i32
  }
  func.func @transform_7(%arg0: i32) -> (i32, i32, i32) {
    %c0_i32 = arith.constant 0 : i32
    %c0_i32_0 = arith.constant 0 : i32
    %c0_i32_1 = arith.constant 0 : i32
    %c0_i32_2 = arith.constant 0 : i32
    return %c0_i32, %c0_i32_0, %c0_i32_1 : i32, i32, i32
  }
  func.func @transform_8(%arg0: i32) -> (i32, i32) {
    %c0_i32 = arith.constant 0 : i32
    %c0_i32_0 = arith.constant 0 : i32
    %c0_i32_1 = arith.constant 0 : i32
    return %c0_i32, %c0_i32_0 : i32, i32
  }
  func.func @transform_9(%arg0: i32) -> (i32, i32) {
    %c0_i32 = arith.constant 0 : i32
    %c0_i32_0 = arith.constant 0 : i32
    %c0_i32_1 = arith.constant 0 : i32
    return %c0_i32, %c0_i32_0 : i32, i32
  }
  func.func @transform_10(%arg0: i32) -> (i32, i32) {
    %c0_i32 = arith.constant 0 : i32
    %c0_i32_0 = arith.constant 0 : i32
    %c0_i32_1 = arith.constant 0 : i32
    return %c0_i32, %c0_i32_0 : i32, i32
  }
  func.func @transform_11(%arg0: i32) -> (i32, i32) {
    %c0_i32 = arith.constant 0 : i32
    %c0_i32_0 = arith.constant 0 : i32
    %c0_i32_1 = arith.constant 0 : i32
    return %c0_i32, %c0_i32_0 : i32, i32
  }
  func.func @transform_12(%arg0: i32) -> (i32, i32) {
    %c0_i32 = arith.constant 0 : i32
    %c0_i32_0 = arith.constant 0 : i32
    %c0_i32_1 = arith.constant 0 : i32
    return %c0_i32, %c0_i32_0 : i32, i32
  }
  func.func @transform_13(%arg0: i32) -> (i32, i32) {
    %c0_i32 = arith.constant 0 : i32
    %c0_i32_0 = arith.constant 0 : i32
    %c0_i32_1 = arith.constant 0 : i32
    return %c0_i32, %c0_i32_0 : i32, i32
  }
  func.func @transform_14(%arg0: i32) -> (i32, i32) {
    %c0_i32 = arith.constant 0 : i32
    %c0_i32_0 = arith.constant 0 : i32
    %c0_i32_1 = arith.constant 0 : i32
    return %c0_i32, %c0_i32_0 : i32, i32
  }
  func.func @transform_15(%arg0: i32) -> (i32, i32) {
    %c0_i32 = arith.constant 0 : i32
    %c0_i32_0 = arith.constant 0 : i32
    %c0_i32_1 = arith.constant 0 : i32
    return %c0_i32, %c0_i32_0 : i32, i32
  }
  func.func @transform_16(%arg0: i32) -> (i32, i32) {
    %c0_i32 = arith.constant 0 : i32
    %c0_i32_0 = arith.constant 0 : i32
    %c0_i32_1 = arith.constant 0 : i32
    return %c0_i32, %c0_i32_0 : i32, i32
  }
  func.func @transform_17(%arg0: i32) -> (i32, i32, i32) {
    %c0_i32 = arith.constant 0 : i32
    %c0_i32_0 = arith.constant 0 : i32
    %c0_i32_1 = arith.constant 0 : i32
    return %arg0, %c0_i32, %c0_i32_0 : i32, i32, i32
  }
}

</mosaic_0001>

<llo_original>
// kernel: lightweight_cnn_forward.4
$region0: #{lightweight_cnn_forward.4}
  #allocation0 [shape = 'u32[]', space=smem, size = 0x4, offset = 0x4, fixed_abs, tag = 'smem constant byte address 0x4 - core index']
  #allocation1 [shape = 'u32[144,128]{1,0:T(1,128)}', space=vmem, size = 0x12000, scoped, tag = 'internal scratch']
  %s0 = inlined_call_operand.vmem [shape: f32[2,256,27], index: 0, kind: input, shape index: {}]
  %s1 = inlined_call_operand.vmem [shape: f32[27,32], index: 1, kind: input, shape index: {}]
  %s2 = inlined_call_operand.vmem [shape: f32[1,32], index: 2, kind: input, shape index: {}]
  %s3 = inlined_call_operand.vmem [shape: f32[1,32], index: 3, kind: input, shape index: {}]
  %s4 = inlined_call_operand.vmem [shape: f32[2,256,32], index: 4, kind: output, shape index: {}]
  %s5 = sld [smem:[#allocation0]]
  $region49: #{lightweight_cnn_forward.4} parent=0
    _
  %s7 = ssub.s32 1, %s5
  %s8 = scalar_select 0, %s7, %s5
  loop: start=0, step=1, limit=4
  $region2: #{lightweight_cnn_forward.4} parent=0 // loop_pre_header
    _
  $region3: #{lightweight_cnn_forward.4} parent=0 // loop_header
    %s10 = sphi 0, %s14
    %p11 = scmp.ge.s32.totalorder %s10, 4
    %s20 = sphi 0, %s22
    %s23 = sphi 0, %s20
    %s24 = sphi 0, %s23
    %s40 = sphi 0, %s24
    %s44 = sphi 0, %s44
    %s46 = sphi 0, %s44
    %s47 = sphi 0, %s46
    %s61 = sphi 0, %s47
    %s65 = sphi 0, %s65
    %s67 = sphi 0, %s65
    %s68 = sphi 0, %s67
    %s82 = sphi 0, %s68
    %s86 = sphi 0, %s86
    %s88 = sphi 0, %s86
    %s89 = sphi 0, %s88
    %s103 = sphi 0, %s89
    %s109 = sphi 0, %s111
    %s112 = sphi 0, %s109
    %s113 = sphi 0, %s112
    %s129 = sphi 0, %s113
  $region4: #{lightweight_cnn_forward.4} parent=0 // loop_header_branch
    %13 = sbr.rel (%p11) target = $region8
  $region5: #{lightweight_cnn_forward.4} parent=0 // loop_body
    %s15 = ssub.s32 %s10, 1
    %s16 = ssub.s32 %s10, 2
    %s17 = sadd.s32 %s10, 1
    %s18 = ssub.s32 %s10, %s17
    %p19 = scmp.eq.s32.totalorder %s18, 0
    %s21 = sadd.s32 %s20, 1
    %s22 = scalar_select %p19, %s20, %s21
    %p25 = pneg %p19
    %p26 = scmp.eq.s32.totalorder %s10, 1
    %p27 = por %p25, %p26
    %p28 = scmp.ne.s32.totalorder %s20, %s23
    %p29 = scmp.eq.s32.totalorder %s10, 0
    %p30 = por %p28, %p29
    %p31 = scmp.ne.s32.totalorder %s20, %s23
    %p32 = scmp.eq.s32.totalorder %s15, 1
    %p33 = por %p31, %p32
    %p34 = scmp.ne.s32.totalorder %s23, %s24
    %p35 = scmp.eq.s32.totalorder %s15, 0
    %p36 = por %p34, %p35
    %p37 = scmp.ne.s32.totalorder %s23, %s24
    %p38 = scmp.eq.s32.totalorder %s16, 1
    %p39 = por %p37, %p38
    %p41 = scmp.ne.s32.totalorder %s24, %s40
    %p42 = scmp.eq.s32.totalorder %s16, 0
    %p43 = por %p41, %p42
    %s45 = sadd.s32 %s44, 1
    %p48 = scmp.eq.s32.totalorder %s10, 1
    %p49 = scmp.ne.s32.totalorder %s44, %s46
    %p50 = scmp.eq.s32.totalorder %s10, 0
    %p51 = por %p49, %p50
    %p52 = scmp.ne.s32.totalorder %s44, %s46
    %p53 = scmp.eq.s32.totalorder %s15, 1
    %p54 = por %p52, %p53
    %p55 = scmp.ne.s32.totalorder %s46, %s47
    %p56 = scmp.eq.s32.totalorder %s15, 0
    %p57 = por %p55, %p56
    %p58 = scmp.ne.s32.totalorder %s46, %s47
    %p59 = scmp.eq.s32.totalorder %s16, 1
    %p60 = por %p58, %p59
    %p62 = scmp.ne.s32.totalorder %s47, %s61
    %p63 = scmp.eq.s32.totalorder %s16, 0
    %p64 = por %p62, %p63
    %s66 = sadd.s32 %s65, 1
    %p69 = scmp.eq.s32.totalorder %s10, 1
    %p70 = scmp.ne.s32.totalorder %s65, %s67
    %p71 = scmp.eq.s32.totalorder %s10, 0
    %p72 = por %p70, %p71
    %p73 = scmp.ne.s32.totalorder %s65, %s67
    %p74 = scmp.eq.s32.totalorder %s15, 1
    %p75 = por %p73, %p74
    %p76 = scmp.ne.s32.totalorder %s67, %s68
    %p77 = scmp.eq.s32.totalorder %s15, 0
    %p78 = por %p76, %p77
    %p79 = scmp.ne.s32.totalorder %s67, %s68
    %p80 = scmp.eq.s32.totalorder %s16, 1
    %p81 = por %p79, %p80
    %p83 = scmp.ne.s32.totalorder %s68, %s82
    %p84 = scmp.eq.s32.totalorder %s16, 0
    %p85 = por %p83, %p84
    %s87 = sadd.s32 %s86, 1
    %p90 = scmp.eq.s32.totalorder %s10, 1
    %p91 = scmp.ne.s32.totalorder %s86, %s88
    %p92 = scmp.eq.s32.totalorder %s10, 0
    %p93 = por %p91, %p92
    %p94 = scmp.ne.s32.totalorder %s86, %s88
    %p95 = scmp.eq.s32.totalorder %s15, 1
    %p96 = por %p94, %p95
    %p97 = scmp.ne.s32.totalorder %s88, %s89
    %p98 = scmp.eq.s32.totalorder %s15, 0
    %p99 = por %p97, %p98
    %p100 = scmp.ne.s32.totalorder %s88, %s89
    %p101 = scmp.eq.s32.totalorder %s16, 1
    %p102 = por %p100, %p101
    %p104 = scmp.ne.s32.totalorder %s89, %s103
    %p105 = scmp.eq.s32.totalorder %s16, 0
    %p106 = por %p104, %p105
    %s107 = ssub.s32 %s10, %s17
    %p108 = scmp.eq.s32.totalorder %s107, 0
    %s110 = sadd.s32 %s109, 1
    %s111 = scalar_select %p108, %s109, %s110
    %p114 = pneg %p108
    %p115 = scmp.eq.s32.totalorder %s10, 1
    %p116 = por %p114, %p115
    %p117 = scmp.ne.s32.totalorder %s109, %s112
    %p118 = scmp.eq.s32.totalorder %s10, 0
    %p119 = por %p117, %p118
    %p120 = scmp.ne.s32.totalorder %s109, %s112
    %p121 = scmp.eq.s32.totalorder %s15, 1
    %p122 = por %p120, %p121
    %p123 = scmp.ne.s32.totalorder %s112, %s113
    %p124 = scmp.eq.s32.totalorder %s15, 0
    %p125 = por %p123, %p124
    %p126 = scmp.ne.s32.totalorder %s112, %s113
    %p127 = scmp.eq.s32.totalorder %s16, 1
    %p128 = por %p126, %p127
    %p130 = scmp.ne.s32.totalorder %s113, %s129
    %p131 = scmp.eq.s32.totalorder %s16, 0
    %p132 = por %p130, %p131
    %p133 = scmp.le.s32.totalorder 1, %s10
    %p134 = scmp.lt.s32.totalorder %s10, 3
    %p135 = pnand %p133, %p134
    %p136 = pneg %p135
    // Predicated region
    $region9: #{lightweight_cnn_forward.4} parent=5 // pred_check
      _
    $region10: #{lightweight_cnn_forward.4} parent=5 // pred_check_branch
      %138 = sbr.rel (%p135) target = $region12
    $region11: #{lightweight_cnn_forward.4} parent=5 // pred_region
      %s139 = ssub.s32 %s10, 1
      // Predicated region
      $region13: #{lightweight_cnn_forward.4} parent=11 // pred_check
        %p140 = pneg %p57
      $region14: #{lightweight_cnn_forward.4} parent=11 // pred_check_branch
        %142 = sbr.rel (%p140) target = $region16
      $region15: #{lightweight_cnn_forward.4} parent=11 // pred_region
        _
      $region16: #{lightweight_cnn_forward.4} parent=11 // pred_fallthru
        _
      // Predicated region
      $region17: #{lightweight_cnn_forward.4} parent=11 // pred_check
        %p143 = pneg %p78
      $region18: #{lightweight_cnn_forward.4} parent=11 // pred_check_branch
        %145 = sbr.rel (%p143) target = $region20
      $region19: #{lightweight_cnn_forward.4} parent=11 // pred_region
        _
      $region20: #{lightweight_cnn_forward.4} parent=11 // pred_fallthru
        _
      // Predicated region
      $region21: #{lightweight_cnn_forward.4} parent=11 // pred_check
        %p146 = pneg %p99
      $region22: #{lightweight_cnn_forward.4} parent=11 // pred_check_branch
        %148 = sbr.rel (%p146) target = $region24
      $region23: #{lightweight_cnn_forward.4} parent=11 // pred_region
        _
      $region24: #{lightweight_cnn_forward.4} parent=11 // pred_fallthru
        _
    $region12: #{lightweight_cnn_forward.4} parent=5 // pred_fallthru
      _
    %p149 = scmp.lt.s32.totalorder %s10, 2
    // Predicated region
    $region25: #{lightweight_cnn_forward.4} parent=5 // pred_check
      %p150 = pneg %p149
    $region26: #{lightweight_cnn_forward.4} parent=5 // pred_check_branch
      %152 = sbr.rel (%p150) target = $region28
    $region27: #{lightweight_cnn_forward.4} parent=5 // pred_region
      // Predicated region
      $region29: #{lightweight_cnn_forward.4} parent=27 // pred_check
        %p153 = pneg %p30
      $region30: #{lightweight_cnn_forward.4} parent=27 // pred_check_branch
        %155 = sbr.rel (%p153) target = $region32
      $region31: #{lightweight_cnn_forward.4} parent=27 // pred_region
        %p156 = scmp.lt.s32.totalorder %s10, 1
        %s157 = scalar_select %p156, %s10, 1
        %s158 = smul.addr %s157, 32
        %s159 = smul.addr %s158, 8
        %s160 = scalar_lea.vmem %s0, %s159
      $region32: #{lightweight_cnn_forward.4} parent=27 // pred_fallthru
        _
    $region28: #{lightweight_cnn_forward.4} parent=5 // pred_fallthru
      _
    %p161 = scmp.le.s32.totalorder 1, %s10
    %p162 = scmp.lt.s32.totalorder %s10, 3
    %p163 = pnand %p161, %p162
    %p164 = pneg %p163
    // Predicated region
    $region33: #{lightweight_cnn_forward.4} parent=5 // pred_check
      _
    $region34: #{lightweight_cnn_forward.4} parent=5 // pred_check_branch
      %166 = sbr.rel (%p163) target = $region36
    $region35: #{lightweight_cnn_forward.4} parent=5 // pred_region
      %s167 = ssub.s32 %s10, 1
      %p168 = scmp.lt.s32.totalorder %s15, 1
      %s169 = scalar_select %p168, %s15, 1
      %s170 = smul.addr %s169, 32
      %s171 = smul.addr %s170, 8
      %s172 = scalar_lea.vmem %s0, %s171
      %p173 = pneg %p36
      %p174 = pneg %p33
      %p175 = pneg %p57
      %p176 = pneg %p54
      %p177 = pneg %p78
      %p178 = pneg %p75
      %p179 = pneg %p99
      %p180 = pneg %p96
      %p181 = pneg %p125
      %p182 = pneg %p122
      %p183 = scmp.lt.s32.totalorder %s15, 1
      %s184 = scalar_select %p183, %s15, 1
      %s185 = smul.addr %s184, 32
      %s186 = smul.addr %s185, 8
      %s187 = scalar_lea.vmem %s4, %s186
      %p188 = scmp.lt.s32.totalorder %s15, 1
      %s189 = scalar_select %p188, %s15, 1
      %s190 = smul.addr %s189, 32
      %s191 = smul.addr %s190, 8
      %s192 = scalar_lea.vmem %s0, %s191
      %p193 = scmp.lt.s32.totalorder %s15, 1
      %s194 = scalar_select %p193, %s15, 1
      %s195 = smul.addr %s194, 32
      %s196 = smul.addr %s195, 8
      %s197 = scalar_lea.vmem %s4, %s196
      %v198 = vld [vmem:[%s192] sm:$0xff]
      %v199 = vld [vmem:[%s192 + $0x8] sm:$0xff]
      %v200 = vld [vmem:[%s192 + $0x10] sm:$0xff]
      %v201 = vld [vmem:[%s192 + $0x18] sm:$0xff]
      %v202 = vld [vmem:[%s192 + $0x20] sm:$0xff]
      %v203 = vld [vmem:[%s192 + $0x28] sm:$0xff]
      %v204 = vld [vmem:[%s192 + $0x30] sm:$0xff]
      %v205 = vld [vmem:[%s192 + $0x38] sm:$0xff]
      %v206 = vld [vmem:[%s192 + $0x40] sm:$0xff]
      %v207 = vld [vmem:[%s192 + $0x48] sm:$0xff]
      %v208 = vld [vmem:[%s192 + $0x50] sm:$0xff]
      %v209 = vld [vmem:[%s192 + $0x58] sm:$0xff]
      %v210 = vld [vmem:[%s192 + $0x60] sm:$0xff]
      %v211 = vld [vmem:[%s192 + $0x68] sm:$0xff]
      %v212 = vld [vmem:[%s192 + $0x70] sm:$0xff]
      %v213 = vld [vmem:[%s192 + $0x78] sm:$0xff]
      %v214 = vld [vmem:[%s192 + $0x80] sm:$0xff]
      %v215 = vld [vmem:[%s192 + $0x88] sm:$0xff]
      %v216 = vld [vmem:[%s192 + $0x90] sm:$0xff]
      %v217 = vld [vmem:[%s192 + $0x98] sm:$0xff]
      %v218 = vld [vmem:[%s192 + $0xa0] sm:$0xff]
      %v219 = vld [vmem:[%s192 + $0xa8] sm:$0xff]
      %v220 = vld [vmem:[%s192 + $0xb0] sm:$0xff]
      %v221 = vld [vmem:[%s192 + $0xb8] sm:$0xff]
      %v222 = vld [vmem:[%s192 + $0xc0] sm:$0xff]
      %v223 = vld [vmem:[%s192 + $0xc8] sm:$0xff]
      %v224 = vld [vmem:[%s192 + $0xd0] sm:$0xff]
      %v225 = vld [vmem:[%s192 + $0xd8] sm:$0xff]
      %v226 = vld [vmem:[%s192 + $0xe0] sm:$0xff]
      %v227 = vld [vmem:[%s192 + $0xe8] sm:$0xff]
      %v228 = vld [vmem:[%s192 + $0xf0] sm:$0xff]
      %v229 = vld [vmem:[%s192 + $0xf8] sm:$0xff]
      %v230 = vld [vmem:[%s1] sm:$0xff]
      %v231 = vld [vmem:[%s1 + $0x8] sm:$0xff]
      %v232 = vld [vmem:[%s1 + $0x10] sm:$0xff]
      %v233 = vld [vmem:[%s1 + $0x18] sm:$0x7]
      %vm234 = vcmask 220160
      %v236 = vsel %vm234, %v198, 0
      %v239 = vsel %vm234, %v199, 0
      %v242 = vsel %vm234, %v200, 0
      %v245 = vsel %vm234, %v201, 0
      %v248 = vsel %vm234, %v202, 0
      %v251 = vsel %vm234, %v203, 0
      %v254 = vsel %vm234, %v204, 0
      %v257 = vsel %vm234, %v205, 0
      %v260 = vsel %vm234, %v206, 0
      %v263 = vsel %vm234, %v207, 0
      %v266 = vsel %vm234, %v208, 0
      %v269 = vsel %vm234, %v209, 0
      %v272 = vsel %vm234, %v210, 0
      %v275 = vsel %vm234, %v211, 0
      %v278 = vsel %vm234, %v212, 0
      %v281 = vsel %vm234, %v213, 0
      %v284 = vsel %vm234, %v214, 0
      %v287 = vsel %vm234, %v215, 0
      %v290 = vsel %vm234, %v216, 0
      %v293 = vsel %vm234, %v217, 0
      %v296 = vsel %vm234, %v218, 0
      %v299 = vsel %vm234, %v219, 0
      %v302 = vsel %vm234, %v220, 0
      %v305 = vsel %vm234, %v221, 0
      %v308 = vsel %vm234, %v222, 0
      %v311 = vsel %vm234, %v223, 0
      %v314 = vsel %vm234, %v224, 0
      %v317 = vsel %vm234, %v225, 0
      %v320 = vsel %vm234, %v226, 0
      %v323 = vsel %vm234, %v227, 0
      %v326 = vsel %vm234, %v228, 0
      %v329 = vsel %vm234, %v229, 0
      %vm331 = vcmask 1042432
      %v333 = vsel %vm331, %v233, 0
      %335 = vmatprep.subr.mxu0 0.0
      %336 = vmatpush1.msra.mxu0 %v230
      %337 = vmatprep.subr.mxu0 0.0
      %338 = vmatpush1.msra.mxu0 %v231
      %339 = vmatprep.subr.mxu0 0.0
      %340 = vmatpush1.msra.mxu0 %v232
      %341 = vmatprep.subr.mxu0 0.0
      %342 = vmatpush1.msra.mxu0 %v333
      %343 = vmatprep.subr.mxu0 0.0
      %344 = vmatpush1.msra.mxu0 0.0
      %345 = vmatprep.subr.mxu0 0.0
      %346 = vmatpush1.msra.mxu0 0.0
      %347 = vmatprep.subr.mxu0 0.0
      %348 = vmatpush1.msra.mxu0 0.0
      %349 = vmatprep.subr.mxu0 0.0
      %350 = vmatpush1.msra.mxu0 0.0
      %351 = vmatprep.subr.mxu0 0.0
      %352 = vmatpush1.msra.mxu0 0.0
      %353 = vmatprep.subr.mxu0 0.0
      %354 = vmatpush1.msra.mxu0 0.0
      %355 = vmatprep.subr.mxu0 0.0
      %356 = vmatpush1.msra.mxu0 0.0
      %357 = vmatprep.subr.mxu0 0.0
      %358 = vmatpush1.msra.mxu0 0.0
      %359 = vmatprep.subr.mxu0 0.0
      %360 = vmatpush1.msra.mxu0 0.0
      %361 = vmatprep.subr.mxu0 0.0
      %362 = vmatpush1.msra.mxu0 0.0
      %363 = vmatprep.subr.mxu0 0.0
      %364 = vmatpush1.msra.mxu0 0.0
      %365 = vmatprep.subr.mxu0 0.0
      %366 = vmatpush1.msra.mxu0 0.0
      %367 = vmatprep.subr.mxu0 0.0
      %368 = vmatpush1.msra.mxu0 0.0
      %369 = vmatprep.subr.mxu0 0.0
      %370 = vmatpush1.msra.mxu0 0.0
      %371 = vmatprep.subr.mxu0 0.0
      %372 = vmatpush1.msra.mxu0 0.0
      %373 = vmatprep.subr.mxu0 0.0
      %374 = vmatpush1.msra.mxu0 0.0
      %375 = vmatprep.subr.mxu0 0.0
      %376 = vmatpush1.msra.mxu0 0.0
      %377 = vmatprep.subr.mxu0 0.0
      %378 = vmatpush1.msra.mxu0 0.0
      %379 = vmatprep.subr.mxu0 0.0
      %380 = vmatpush1.msra.mxu0 0.0
      %381 = vmatprep.subr.mxu0 0.0
      %382 = vmatpush1.msra.mxu0 0.0
      %383 = vmatprep.subr.mxu0 0.0
      %384 = vmatpush1.msra.mxu0 0.0
      %385 = vmatprep.subr.mxu0 0.0
      %386 = vmatpush1.msra.mxu0 0.0
      %387 = vmatprep.subr.mxu0 0.0
      %388 = vmatpush1.msra.mxu0 0.0
      %389 = vmatprep.subr.mxu0 0.0
      %390 = vmatpush1.msra.mxu0 0.0
      %391 = vmatprep.subr.mxu0 0.0
      %392 = vmatpush1.msra.mxu0 0.0
      %393 = vmatprep.subr.mxu0 0.0
      %394 = vmatpush1.msra.mxu0 0.0
      %395 = vmatprep.subr.mxu0 0.0
      %396 = vmatpush1.msra.mxu0 0.0
      %397 = vmatprep.subr.mxu0 0.0
      %398 = vmatpush1.msra.mxu0 0.0
      %399 = vmatprep.mubr.f32.mxu0 0.0
      %400 = vmatmul.mubr.f32.gmra.mrb[0].mxu0 %v236
      %v401 = vpop.f32.mrb[0].mxu0
      %v402 = vadd.f32 0.0, %v401
      %v403 = vpop.f32.mrb[0].mxu0
      %404 = vmatprep.mubr.f32.mxu0 0.0
      %405 = vmatmul.mubr.f32.gmra.mrb[0].mxu0 %v239
      %v406 = vpop.f32.mrb[0].mxu0
      %v407 = vadd.f32 0.0, %v406
      %v408 = vpop.f32.mrb[0].mxu0
      %409 = vmatprep.mubr.f32.mxu0 0.0
      %410 = vmatmul.mubr.f32.gmra.mrb[0].mxu0 %v242
      %v411 = vpop.f32.mrb[0].mxu0
      %v412 = vadd.f32 0.0, %v411
      %v413 = vpop.f32.mrb[0].mxu0
      %414 = vmatprep.mubr.f32.mxu0 0.0
      %415 = vmatmul.mubr.f32.gmra.mrb[0].mxu0 %v245
      %v416 = vpop.f32.mrb[0].mxu0
      %v417 = vadd.f32 0.0, %v416
      %v418 = vpop.f32.mrb[0].mxu0
      %419 = vmatprep.mubr.f32.mxu0 0.0
      %420 = vmatmul.mubr.f32.gmra.mrb[0].mxu0 %v248
      %v421 = vpop.f32.mrb[0].mxu0
      %v422 = vadd.f32 0.0, %v421
      %v423 = vpop.f32.mrb[0].mxu0
      %424 = vmatprep.mubr.f32.mxu0 0.0
      %425 = vmatmul.mubr.f32.gmra.mrb[0].mxu0 %v251
      %v426 = vpop.f32.mrb[0].mxu0
      %v427 = vadd.f32 0.0, %v426
      %v428 = vpop.f32.mrb[0].mxu0
      %429 = vmatprep.mubr.f32.mxu0 0.0
      %430 = vmatmul.mubr.f32.gmra.mrb[0].mxu0 %v254
      %v431 = vpop.f32.mrb[0].mxu0
      %v432 = vadd.f32 0.0, %v431
      %v433 = vpop.f32.mrb[0].mxu0
      %434 = vmatprep.mubr.f32.mxu0 0.0
      %435 = vmatmul.mubr.f32.gmra.mrb[0].mxu0 %v257
      %v436 = vpop.f32.mrb[0].mxu0
      %v437 = vadd.f32 0.0, %v436
      %v438 = vpop.f32.mrb[0].mxu0
      %439 = vmatprep.mubr.f32.mxu0 0.0
      %440 = vmatmul.mubr.f32.gmra.mrb[0].mxu0 %v260
      %v441 = vpop.f32.mrb[0].mxu0
      %v442 = vadd.f32 0.0, %v441
      %v443 = vpop.f32.mrb[0].mxu0
      %444 = vmatprep.mubr.f32.mxu0 0.0
      %445 = vmatmul.mubr.f32.gmra.mrb[0].mxu0 %v263
      %v446 = vpop.f32.mrb[0].mxu0
      %v447 = vadd.f32 0.0, %v446
      %v448 = vpop.f32.mrb[0].mxu0
      %449 = vmatprep.mubr.f32.mxu0 0.0
      %450 = vmatmul.mubr.f32.gmra.mrb[0].mxu0 %v266
      %v451 = vpop.f32.mrb[0].mxu0
      %v452 = vadd.f32 0.0, %v451
      %v453 = vpop.f32.mrb[0].mxu0
      %454 = vmatprep.mubr.f32.mxu0 0.0
      %455 = vmatmul.mubr.f32.gmra.mrb[0].mxu0 %v269
      %v456 = vpop.f32.mrb[0].mxu0
      %v457 = vadd.f32 0.0, %v456
      %v458 = vpop.f32.mrb[0].mxu0
      %459 = vmatprep.mubr.f32.mxu0 0.0
      %460 = vmatmul.mubr.f32.gmra.mrb[0].mxu0 %v272
      %v461 = vpop.f32.mrb[0].mxu0
      %v462 = vadd.f32 0.0, %v461
      %v463 = vpop.f32.mrb[0].mxu0
      %464 = vmatprep.mubr.f32.mxu0 0.0
      %465 = vmatmul.mubr.f32.gmra.mrb[0].mxu0 %v275
      %v466 = vpop.f32.mrb[0].mxu0
      %v467 = vadd.f32 0.0, %v466
      %v468 = vpop.f32.mrb[0].mxu0
      %469 = vmatprep.mubr.f32.mxu0 0.0
      %470 = vmatmul.mubr.f32.gmra.mrb[0].mxu0 %v278
      %v471 = vpop.f32.mrb[0].mxu0
      %v472 = vadd.f32 0.0, %v471
      %v473 = vpop.f32.mrb[0].mxu0
      %474 = vmatprep.mubr.f32.mxu0 0.0
      %475 = vmatmul.mubr.f32.gmra.mrb[0].mxu0 %v281
      %v476 = vpop.f32.mrb[0].mxu0
      %v477 = vadd.f32 0.0, %v476
      %v478 = vpop.f32.mrb[0].mxu0
      %479 = vmatprep.mubr.f32.mxu0 0.0
      %480 = vmatmul.mubr.f32.gmra.mrb[0].mxu0 %v284
      %v481 = vpop.f32.mrb[0].mxu0
      %v482 = vadd.f32 0.0, %v481
      %v483 = vpop.f32.mrb[0].mxu0
      %484 = vmatprep.mubr.f32.mxu0 0.0
      %485 = vmatmul.mubr.f32.gmra.mrb[0].mxu0 %v287
      %v486 = vpop.f32.mrb[0].mxu0
      %v487 = vadd.f32 0.0, %v486
      %v488 = vpop.f32.mrb[0].mxu0
      %489 = vmatprep.mubr.f32.mxu0 0.0
      %490 = vmatmul.mubr.f32.gmra.mrb[0].mxu0 %v290
      %v491 = vpop.f32.mrb[0].mxu0
      %v492 = vadd.f32 0.0, %v491
      %v493 = vpop.f32.mrb[0].mxu0
      %494 = vmatprep.mubr.f32.mxu0 0.0
      %495 = vmatmul.mubr.f32.gmra.mrb[0].mxu0 %v293
      %v496 = vpop.f32.mrb[0].mxu0
      %v497 = vadd.f32 0.0, %v496
      %v498 = vpop.f32.mrb[0].mxu0
      %499 = vmatprep.mubr.f32.mxu0 0.0
      %500 = vmatmul.mubr.f32.gmra.mrb[0].mxu0 %v296
      %v501 = vpop.f32.mrb[0].mxu0
      %v502 = vadd.f32 0.0, %v501
      %v503 = vpop.f32.mrb[0].mxu0
      %504 = vmatprep.mubr.f32.mxu0 0.0
      %505 = vmatmul.mubr.f32.gmra.mrb[0].mxu0 %v299
      %v506 = vpop.f32.mrb[0].mxu0
      %v507 = vadd.f32 0.0, %v506
      %v508 = vpop.f32.mrb[0].mxu0
      %509 = vmatprep.mubr.f32.mxu0 0.0
      %510 = vmatmul.mubr.f32.gmra.mrb[0].mxu0 %v302
      %v511 = vpop.f32.mrb[0].mxu0
      %v512 = vadd.f32 0.0, %v511
      %v513 = vpop.f32.mrb[0].mxu0
      %514 = vmatprep.mubr.f32.mxu0 0.0
      %515 = vmatmul.mubr.f32.gmra.mrb[0].mxu0 %v305
      %v516 = vpop.f32.mrb[0].mxu0
      %v517 = vadd.f32 0.0, %v516
      %v518 = vpop.f32.mrb[0].mxu0
      %519 = vmatprep.mubr.f32.mxu0 0.0
      %520 = vmatmul.mubr.f32.gmra.mrb[0].mxu0 %v308
      %v521 = vpop.f32.mrb[0].mxu0
      %v522 = vadd.f32 0.0, %v521
      %v523 = vpop.f32.mrb[0].mxu0
      %524 = vmatprep.mubr.f32.mxu0 0.0
      %525 = vmatmul.mubr.f32.gmra.mrb[0].mxu0 %v311
      %v526 = vpop.f32.mrb[0].mxu0
      %v527 = vadd.f32 0.0, %v526
      %v528 = vpop.f32.mrb[0].mxu0
      %529 = vmatprep.mubr.f32.mxu0 0.0
      %530 = vmatmul.mubr.f32.gmra.mrb[0].mxu0 %v314
      %v531 = vpop.f32.mrb[0].mxu0
      %v532 = vadd.f32 0.0, %v531
      %v533 = vpop.f32.mrb[0].mxu0
      %534 = vmatprep.mubr.f32.mxu0 0.0
      %535 = vmatmul.mubr.f32.gmra.mrb[0].mxu0 %v317
      %v536 = vpop.f32.mrb[0].mxu0
      %v537 = vadd.f32 0.0, %v536
      %v538 = vpop.f32.mrb[0].mxu0
      %539 = vmatprep.mubr.f32.mxu0 0.0
      %540 = vmatmul.mubr.f32.gmra.mrb[0].mxu0 %v320
      %v541 = vpop.f32.mrb[0].mxu0
      %v542 = vadd.f32 0.0, %v541
      %v543 = vpop.f32.mrb[0].mxu0
      %544 = vmatprep.mubr.f32.mxu0 0.0
      %545 = vmatmul.mubr.f32.gmra.mrb[0].mxu0 %v323
      %v546 = vpop.f32.mrb[0].mxu0
      %v547 = vadd.f32 0.0, %v546
      %v548 = vpop.f32.mrb[0].mxu0
      %549 = vmatprep.mubr.f32.mxu0 0.0
      %550 = vmatmul.mubr.f32.gmra.mrb[0].mxu0 %v326
      %v551 = vpop.f32.mrb[0].mxu0
      %v552 = vadd.f32 0.0, %v551
      %v553 = vpop.f32.mrb[0].mxu0
      %554 = vmatprep.mubr.f32.mxu0 0.0
      %555 = vmatmul.mubr.f32.gmra.mrb[0].mxu0 %v329
      %v556 = vpop.f32.mrb[0].mxu0
      %v557 = vadd.f32 0.0, %v556
      %v558 = vpop.f32.mrb[0].mxu0
      %559 = vdwg.mxu0
      %v560 = vld [vmem:[%s2] sm:$0x1]
      %v562 = vlaneseq
      %v563 = vshrl.u32 %v562, 7
      %v564 = vsub.s32 0, %v563
      %v565 = vrot.slane %v560, %v564
      %v567 = vmul.f32 %v402, %v565
      %v568 = vmul.f32 %v407, %v565
      %v569 = vmul.f32 %v412, %v565
      %v570 = vmul.f32 %v417, %v565
      %v571 = vmul.f32 %v422, %v565
      %v572 = vmul.f32 %v427, %v565
      %v573 = vmul.f32 %v432, %v565
      %v574 = vmul.f32 %v437, %v565
      %v575 = vmul.f32 %v442, %v565
      %v576 = vmul.f32 %v447, %v565
      %v577 = vmul.f32 %v452, %v565
      %v578 = vmul.f32 %v457, %v565
      %v579 = vmul.f32 %v462, %v565
      %v580 = vmul.f32 %v467, %v565
      %v581 = vmul.f32 %v472, %v565
      %v582 = vmul.f32 %v477, %v565
      %v583 = vmul.f32 %v482, %v565
      %v584 = vmul.f32 %v487, %v565
      %v585 = vmul.f32 %v492, %v565
      %v586 = vmul.f32 %v497, %v565
      %v587 = vmul.f32 %v502, %v565
      %v588 = vmul.f32 %v507, %v565
      %v589 = vmul.f32 %v512, %v565
      %v590 = vmul.f32 %v517, %v565
      %v591 = vmul.f32 %v522, %v565
      %v592 = vmul.f32 %v527, %v565
      %v593 = vmul.f32 %v532, %v565
      %v594 = vmul.f32 %v537, %v565
      %v595 = vmul.f32 %v542, %v565
      %v596 = vmul.f32 %v547, %v565
      %v597 = vmul.f32 %v552, %v565
      %v598 = vmul.f32 %v557, %v565
      %v599 = vld [vmem:[%s3] sm:$0x1]
      %v601 = vlaneseq
      %v602 = vshrl.u32 %v601, 7
      %v603 = vsub.s32 0, %v602
      %v604 = vrot.slane %v599, %v603
      %v606 = vadd.f32 %v567, %v604
      %v607 = vadd.f32 %v568, %v604
      %v608 = vadd.f32 %v569, %v604
      %v609 = vadd.f32 %v570, %v604
      %v610 = vadd.f32 %v571, %v604
      %v611 = vadd.f32 %v572, %v604
      %v612 = vadd.f32 %v573, %v604
      %v613 = vadd.f32 %v574, %v604
      %v614 = vadd.f32 %v575, %v604
      %v615 = vadd.f32 %v576, %v604
      %v616 = vadd.f32 %v577, %v604
      %v617 = vadd.f32 %v578, %v604
      %v618 = vadd.f32 %v579, %v604
      %v619 = vadd.f32 %v580, %v604
      %v620 = vadd.f32 %v581, %v604
      %v621 = vadd.f32 %v582, %v604
      %v622 = vadd.f32 %v583, %v604
      %v623 = vadd.f32 %v584, %v604
      %v624 = vadd.f32 %v585, %v604
      %v625 = vadd.f32 %v586, %v604
      %v626 = vadd.f32 %v587, %v604
      %v627 = vadd.f32 %v588, %v604
      %v628 = vadd.f32 %v589, %v604
      %v629 = vadd.f32 %v590, %v604
      %v630 = vadd.f32 %v591, %v604
      %v631 = vadd.f32 %v592, %v604
      %v632 = vadd.f32 %v593, %v604
      %v633 = vadd.f32 %v594, %v604
      %v634 = vadd.f32 %v595, %v604
      %v635 = vadd.f32 %v596, %v604
      %v636 = vadd.f32 %v597, %v604
      %v637 = vadd.f32 %v598, %v604
      %v638 = vmax.f32 %v606, 0.0
      %v639 = vmax.f32 %v607, 0.0
      %v640 = vmax.f32 %v608, 0.0
      %v641 = vmax.f32 %v609, 0.0
      %v642 = vmax.f32 %v610, 0.0
      %v643 = vmax.f32 %v611, 0.0
      %v644 = vmax.f32 %v612, 0.0
      %v645 = vmax.f32 %v613, 0.0
      %v646 = vmax.f32 %v614, 0.0
      %v647 = vmax.f32 %v615, 0.0
      %v648 = vmax.f32 %v616, 0.0
      %v649 = vmax.f32 %v617, 0.0
      %v650 = vmax.f32 %v618, 0.0
      %v651 = vmax.f32 %v619, 0.0
      %v652 = vmax.f32 %v620, 0.0
      %v653 = vmax.f32 %v621, 0.0
      %v654 = vmax.f32 %v622, 0.0
      %v655 = vmax.f32 %v623, 0.0
      %v656 = vmax.f32 %v624, 0.0
      %v657 = vmax.f32 %v625, 0.0
      %v658 = vmax.f32 %v626, 0.0
      %v659 = vmax.f32 %v627, 0.0
      %v660 = vmax.f32 %v628, 0.0
      %v661 = vmax.f32 %v629, 0.0
      %v662 = vmax.f32 %v630, 0.0
      %v663 = vmax.f32 %v631, 0.0
      %v664 = vmax.f32 %v632, 0.0
      %v665 = vmax.f32 %v633, 0.0
      %v666 = vmax.f32 %v634, 0.0
      %v667 = vmax.f32 %v635, 0.0
      %v668 = vmax.f32 %v636, 0.0
      %v669 = vmax.f32 %v637, 0.0
      %v670 = vmin.f32 %v638, 6.0
      %v671 = vmin.f32 %v639, 6.0
      %v672 = vmin.f32 %v640, 6.0
      %v673 = vmin.f32 %v641, 6.0
      %v674 = vmin.f32 %v642, 6.0
      %v675 = vmin.f32 %v643, 6.0
      %v676 = vmin.f32 %v644, 6.0
      %v677 = vmin.f32 %v645, 6.0
      %v678 = vmin.f32 %v646, 6.0
      %v679 = vmin.f32 %v647, 6.0
      %v680 = vmin.f32 %v648, 6.0
      %v681 = vmin.f32 %v649, 6.0
      %v682 = vmin.f32 %v650, 6.0
      %v683 = vmin.f32 %v651, 6.0
      %v684 = vmin.f32 %v652, 6.0
      %v685 = vmin.f32 %v653, 6.0
      %v686 = vmin.f32 %v654, 6.0
      %v687 = vmin.f32 %v655, 6.0
      %v688 = vmin.f32 %v656, 6.0
      %v689 = vmin.f32 %v657, 6.0
      %v690 = vmin.f32 %v658, 6.0
      %v691 = vmin.f32 %v659, 6.0
      %v692 = vmin.f32 %v660, 6.0
      %v693 = vmin.f32 %v661, 6.0
      %v694 = vmin.f32 %v662, 6.0
      %v695 = vmin.f32 %v663, 6.0
      %v696 = vmin.f32 %v664, 6.0
      %v697 = vmin.f32 %v665, 6.0
      %v698 = vmin.f32 %v666, 6.0
      %v699 = vmin.f32 %v667, 6.0
      %v700 = vmin.f32 %v668, 6.0
      %v701 = vmin.f32 %v669, 6.0
      %vm702 = vcmask 261120
      %703 = vst.msk [vmem:[%s197] sm:$0xff] %vm702, %v670
      %704 = vst.msk [vmem:[%s197 + $0x8] sm:$0xff] %vm702, %v671
      %705 = vst.msk [vmem:[%s197 + $0x10] sm:$0xff] %vm702, %v672
      %706 = vst.msk [vmem:[%s197 + $0x18] sm:$0xff] %vm702, %v673
      %707 = vst.msk [vmem:[%s197 + $0x20] sm:$0xff] %vm702, %v674
      %708 = vst.msk [vmem:[%s197 + $0x28] sm:$0xff] %vm702, %v675
      %709 = vst.msk [vmem:[%s197 + $0x30] sm:$0xff] %vm702, %v676
      %710 = vst.msk [vmem:[%s197 + $0x38] sm:$0xff] %vm702, %v677
      %711 = vst.msk [vmem:[%s197 + $0x40] sm:$0xff] %vm702, %v678
      %712 = vst.msk [vmem:[%s197 + $0x48] sm:$0xff] %vm702, %v679
      %713 = vst.msk [vmem:[%s197 + $0x50] sm:$0xff] %vm702, %v680
      %714 = vst.msk [vmem:[%s197 + $0x58] sm:$0xff] %vm702, %v681
      %715 = vst.msk [vmem:[%s197 + $0x60] sm:$0xff] %vm702, %v682
      %716 = vst.msk [vmem:[%s197 + $0x68] sm:$0xff] %vm702, %v683
      %717 = vst.msk [vmem:[%s197 + $0x70] sm:$0xff] %vm702, %v684
      %718 = vst.msk [vmem:[%s197 + $0x78] sm:$0xff] %vm702, %v685
      %719 = vst.msk [vmem:[%s197 + $0x80] sm:$0xff] %vm702, %v686
      %720 = vst.msk [vmem:[%s197 + $0x88] sm:$0xff] %vm702, %v687
      %721 = vst.msk [vmem:[%s197 + $0x90] sm:$0xff] %vm702, %v688
      %722 = vst.msk [vmem:[%s197 + $0x98] sm:$0xff] %vm702, %v689
      %723 = vst.msk [vmem:[%s197 + $0xa0] sm:$0xff] %vm702, %v690
      %724 = vst.msk [vmem:[%s197 + $0xa8] sm:$0xff] %vm702, %v691
      %725 = vst.msk [vmem:[%s197 + $0xb0] sm:$0xff] %vm702, %v692
      %726 = vst.msk [vmem:[%s197 + $0xb8] sm:$0xff] %vm702, %v693
      %727 = vst.msk [vmem:[%s197 + $0xc0] sm:$0xff] %vm702, %v694
      %728 = vst.msk [vmem:[%s197 + $0xc8] sm:$0xff] %vm702, %v695
      %729 = vst.msk [vmem:[%s197 + $0xd0] sm:$0xff] %vm702, %v696
      %730 = vst.msk [vmem:[%s197 + $0xd8] sm:$0xff] %vm702, %v697
      %731 = vst.msk [vmem:[%s197 + $0xe0] sm:$0xff] %vm702, %v698
      %732 = vst.msk [vmem:[%s197 + $0xe8] sm:$0xff] %vm702, %v699
      %733 = vst.msk [vmem:[%s197 + $0xf0] sm:$0xff] %vm702, %v700
      %734 = vst.msk [vmem:[%s197 + $0xf8] sm:$0xff] %vm702, %v701
      %p735 = scmp.lt.s32.totalorder %s15, 1
      %s736 = scalar_select %p735, %s15, 1
      %s737 = smul.addr %s736, 32
      %s738 = smul.addr %s737, 8
      %s739 = scalar_lea.vmem %s4, %s738
      // Predicated region
      $region37: #{lightweight_cnn_forward.4} parent=35 // pred_check
        %p740 = pneg %p122
      $region38: #{lightweight_cnn_forward.4} parent=35 // pred_check_branch
        %742 = sbr.rel (%p740) target = $region40
      $region39: #{lightweight_cnn_forward.4} parent=35 // pred_region
        _
      $region40: #{lightweight_cnn_forward.4} parent=35 // pred_fallthru
        _
    $region36: #{lightweight_cnn_forward.4} parent=5 // pred_fallthru
      _
    %p743 = scmp.le.s32.totalorder 2, %s10
    // Predicated region
    $region41: #{lightweight_cnn_forward.4} parent=5 // pred_check
      %p744 = pneg %p743
    $region42: #{lightweight_cnn_forward.4} parent=5 // pred_check_branch
      %746 = sbr.rel (%p744) target = $region44
    $region43: #{lightweight_cnn_forward.4} parent=5 // pred_region
      %s747 = ssub.s32 %s10, 2
      // Predicated region
      $region45: #{lightweight_cnn_forward.4} parent=43 // pred_check
        %p748 = pneg %p128
      $region46: #{lightweight_cnn_forward.4} parent=43 // pred_check_branch
        %750 = sbr.rel (%p748) target = $region48
      $region47: #{lightweight_cnn_forward.4} parent=43 // pred_region
        %p751 = scmp.lt.s32.totalorder %s16, 1
        %s752 = scalar_select %p751, %s16, 1
        %s753 = smul.addr %s752, 32
        %s754 = smul.addr %s753, 8
        %s755 = scalar_lea.vmem %s4, %s754
      $region48: #{lightweight_cnn_forward.4} parent=43 // pred_fallthru
        _
    $region44: #{lightweight_cnn_forward.4} parent=5 // pred_fallthru
      _
  $region6: #{lightweight_cnn_forward.4} parent=0 // loop_footer
    %s14 = sadd.s32 1, %s10
  $region7: #{lightweight_cnn_forward.4} parent=0 // loop_footer_branch
    %9 = sbr.rel target = $region3
  $region8: #{lightweight_cnn_forward.4} parent=0 // loop_exit
    _

// kernel: lightweight_cnn_forward.5
$region0: #{lightweight_cnn_forward.5}
  #allocation0 [shape = 'u32[]', space=smem, size = 0x4, offset = 0x4, fixed_abs, tag = 'smem constant byte address 0x4 - core index']
  #allocation1 [shape = 'u32[144,128]{1,0:T(1,128)}', space=vmem, size = 0x12000, scoped, tag = 'internal scratch']
  #allocation2 [shape = 'f32[10,10,64]{2,1,0:T(8,128)}', space=vmem, size = 0x14000, scoped, tag = 'scratch operand']
  #allocation3 [shape = 'f32[1,1]{1,0:T(1,128)S(1)}', space=vmem, size = 0x200, scoped, tag = 'scoped memory for lightweight_cnn_forward.5']
  %s0 = inlined_call_operand.vmem [shape: f32[2,4,9,9,32], index: 0, kind: input, shape index: {}]
  %s1 = inlined_call_operand.vmem [shape: f32[3,3,32], index: 1, kind: input, shape index: {}]
  %s2 = inlined_call_operand.vmem [shape: f32[1,32], index: 2, kind: input, shape index: {}]
  %s3 = inlined_call_operand.vmem [shape: f32[1,32], index: 3, kind: input, shape index: {}]
  %s4 = inlined_call_operand.vmem [shape: f32[32,64], index: 4, kind: input, shape index: {}]
  %s5 = inlined_call_operand.vmem [shape: f32[1,64], index: 5, kind: input, shape index: {}]
  %s6 = inlined_call_operand.vmem [shape: f32[1,64], index: 6, kind: input, shape index: {}]
  %s7 = inlined_call_operand.vmem [shape: f32[3,3,64], index: 7, kind: input, shape index: {}]
  %s8 = inlined_call_operand.vmem [shape: f32[1,64], index: 8, kind: input, shape index: {}]
  %s9 = inlined_call_operand.vmem [shape: f32[1,64], index: 9, kind: input, shape index: {}]
  %s10 = inlined_call_operand.vmem [shape: f32[64,64], index: 10, kind: input, shape index: {}]
  %s11 = inlined_call_operand.vmem [shape: f32[1,64], index: 11, kind: input, shape index: {}]
  %s12 = inlined_call_operand.vmem [shape: f32[1,64], index: 12, kind: input, shape index: {}]
  %s13 = inlined_call_operand.vmem [shape: f32[1,64], index: 13, kind: input, shape index: {}]
  %s14 = inlined_call_operand.<no memory space> [shape: f32[1,1], index: 14, kind: input, shape index: {}]
  %s15 = inlined_call_operand.vmem [shape: f32[64,8], index: 15, kind: input, shape index: {}]
  %s16 = inlined_call_operand.vmem [shape: f32[8,64], index: 16, kind: input, shape index: {}]
  %s17 = inlined_call_operand.vmem [shape: f32[2,64,64], index: 17, kind: output, shape index: {}]
  %s18 = sld [smem:[#allocation0]]
  $region101: #{lightweight_cnn_forward.5} parent=0
    _
  %s20 = ssub.s32 1, %s18
  %s21 = scalar_select 0, %s20, %s18
  %v22 = vstv %s14
  %23 = vst [vmem:[#allocation3] sm:$0x1] %v22
  loop: start=0, step=1, limit=4
  $region2: #{lightweight_cnn_forward.5} parent=0 // loop_pre_header
    _
  $region3: #{lightweight_cnn_forward.5} parent=0 // loop_header
    %s25 = sphi 0, %s29
    %p26 = scmp.ge.s32.totalorder %s25, 4
    %s35 = sphi 0, %s37
    %s38 = sphi 0, %s35
    %s39 = sphi 0, %s38
    %s55 = sphi 0, %s39
    %s59 = sphi 0, %s59
    %s61 = sphi 0, %s59
    %s62 = sphi 0, %s61
    %s76 = sphi 0, %s62
    %s80 = sphi 0, %s80
    %s82 = sphi 0, %s80
    %s83 = sphi 0, %s82
    %s97 = sphi 0, %s83
    %s101 = sphi 0, %s101
    %s103 = sphi 0, %s101
    %s104 = sphi 0, %s103
    %s118 = sphi 0, %s104
    %s122 = sphi 0, %s122
    %s124 = sphi 0, %s122
    %s125 = sphi 0, %s124
    %s139 = sphi 0, %s125
    %s143 = sphi 0, %s143
    %s145 = sphi 0, %s143
    %s146 = sphi 0, %s145
    %s160 = sphi 0, %s146
    %s164 = sphi 0, %s164
    %s166 = sphi 0, %s164
    %s167 = sphi 0, %s166
    %s181 = sphi 0, %s167
    %s185 = sphi 0, %s185
    %s187 = sphi 0, %s185
    %s188 = sphi 0, %s187
    %s202 = sphi 0, %s188
    %s206 = sphi 0, %s206
    %s208 = sphi 0, %s206
    %s209 = sphi 0, %s208
    %s223 = sphi 0, %s209
    %s227 = sphi 0, %s227
    %s229 = sphi 0, %s227
    %s230 = sphi 0, %s229
    %s244 = sphi 0, %s230
    %s248 = sphi 0, %s248
    %s250 = sphi 0, %s248
    %s251 = sphi 0, %s250
    %s265 = sphi 0, %s251
    %s269 = sphi 0, %s269
    %s271 = sphi 0, %s269
    %s272 = sphi 0, %s271
    %s286 = sphi 0, %s272
    %s290 = sphi 0, %s290
    %s292 = sphi 0, %s290
    %s293 = sphi 0, %s292
    %s307 = sphi 0, %s293
    %s311 = sphi 0, %s311
    %s313 = sphi 0, %s311
    %s314 = sphi 0, %s313
    %s328 = sphi 0, %s314
    %s332 = sphi 0, %s332
    %s334 = sphi 0, %s332
    %s335 = sphi 0, %s334
    %s349 = sphi 0, %s335
    %s353 = sphi 0, %s353
    %s355 = sphi 0, %s353
    %s356 = sphi 0, %s355
    %s370 = sphi 0, %s356
    %s374 = sphi 0, %s374
    %s376 = sphi 0, %s374
    %s377 = sphi 0, %s376
    %s391 = sphi 0, %s377
    %s397 = sphi 0, %s399
    %s400 = sphi 0, %s397
    %s401 = sphi 0, %s400
    %s417 = sphi 0, %s401
  $region4: #{lightweight_cnn_forward.5} parent=0 // loop_header_branch
    %28 = sbr.rel (%p26) target = $region8
  $region5: #{lightweight_cnn_forward.5} parent=0 // loop_body
    %s30 = ssub.s32 %s25, 1
    %s31 = ssub.s32 %s25, 2
    %s32 = sadd.s32 %s25, 1
    %s33 = ssub.s32 %s25, %s32
    %p34 = scmp.eq.s32.totalorder %s33, 0
    %s36 = sadd.s32 %s35, 1
    %s37 = scalar_select %p34, %s35, %s36
    %p40 = pneg %p34
    %p41 = scmp.eq.s32.totalorder %s25, 1
    %p42 = por %p40, %p41
    %p43 = scmp.ne.s32.totalorder %s35, %s38
    %p44 = scmp.eq.s32.totalorder %s25, 0
    %p45 = por %p43, %p44
    %p46 = scmp.ne.s32.totalorder %s35, %s38
    %p47 = scmp.eq.s32.totalorder %s30, 1
    %p48 = por %p46, %p47
    %p49 = scmp.ne.s32.totalorder %s38, %s39
    %p50 = scmp.eq.s32.totalorder %s30, 0
    %p51 = por %p49, %p50
    %p52 = scmp.ne.s32.totalorder %s38, %s39
    %p53 = scmp.eq.s32.totalorder %s31, 1
    %p54 = por %p52, %p53
    %p56 = scmp.ne.s32.totalorder %s39, %s55
    %p57 = scmp.eq.s32.totalorder %s31, 0
    %p58 = por %p56, %p57
    %s60 = sadd.s32 %s59, 1
    %p63 = scmp.eq.s32.totalorder %s25, 1
    %p64 = scmp.ne.s32.totalorder %s59, %s61
    %p65 = scmp.eq.s32.totalorder %s25, 0
    %p66 = por %p64, %p65
    %p67 = scmp.ne.s32.totalorder %s59, %s61
    %p68 = scmp.eq.s32.totalorder %s30, 1
    %p69 = por %p67, %p68
    %p70 = scmp.ne.s32.totalorder %s61, %s62
    %p71 = scmp.eq.s32.totalorder %s30, 0
    %p72 = por %p70, %p71
    %p73 = scmp.ne.s32.totalorder %s61, %s62
    %p74 = scmp.eq.s32.totalorder %s31, 1
    %p75 = por %p73, %p74
    %p77 = scmp.ne.s32.totalorder %s62, %s76
    %p78 = scmp.eq.s32.totalorder %s31, 0
    %p79 = por %p77, %p78
    %s81 = sadd.s32 %s80, 1
    %p84 = scmp.eq.s32.totalorder %s25, 1
    %p85 = scmp.ne.s32.totalorder %s80, %s82
    %p86 = scmp.eq.s32.totalorder %s25, 0
    %p87 = por %p85, %p86
    %p88 = scmp.ne.s32.totalorder %s80, %s82
    %p89 = scmp.eq.s32.totalorder %s30, 1
    %p90 = por %p88, %p89
    %p91 = scmp.ne.s32.totalorder %s82, %s83
    %p92 = scmp.eq.s32.totalorder %s30, 0
    %p93 = por %p91, %p92
    %p94 = scmp.ne.s32.totalorder %s82, %s83
    %p95 = scmp.eq.s32.totalorder %s31, 1
    %p96 = por %p94, %p95
    %p98 = scmp.ne.s32.totalorder %s83, %s97
    %p99 = scmp.eq.s32.totalorder %s31, 0
    %p100 = por %p98, %p99
    %s102 = sadd.s32 %s101, 1
    %p105 = scmp.eq.s32.totalorder %s25, 1
    %p106 = scmp.ne.s32.totalorder %s101, %s103
    %p107 = scmp.eq.s32.totalorder %s25, 0
    %p108 = por %p106, %p107
    %p109 = scmp.ne.s32.totalorder %s101, %s103
    %p110 = scmp.eq.s32.totalorder %s30, 1
    %p111 = por %p109, %p110
    %p112 = scmp.ne.s32.totalorder %s103, %s104
    %p113 = scmp.eq.s32.totalorder %s30, 0
    %p114 = por %p112, %p113
    %p115 = scmp.ne.s32.totalorder %s103, %s104
    %p116 = scmp.eq.s32.totalorder %s31, 1
    %p117 = por %p115, %p116
    %p119 = scmp.ne.s32.totalorder %s104, %s118
    %p120 = scmp.eq.s32.totalorder %s31, 0
    %p121 = por %p119, %p120
    %s123 = sadd.s32 %s122, 1
    %p126 = scmp.eq.s32.totalorder %s25, 1
    %p127 = scmp.ne.s32.totalorder %s122, %s124
    %p128 = scmp.eq.s32.totalorder %s25, 0
    %p129 = por %p127, %p128
    %p130 = scmp.ne.s32.totalorder %s122, %s124
    %p131 = scmp.eq.s32.totalorder %s30, 1
    %p132 = por %p130, %p131
    %p133 = scmp.ne.s32.totalorder %s124, %s125
    %p134 = scmp.eq.s32.totalorder %s30, 0
    %p135 = por %p133, %p134
    %p136 = scmp.ne.s32.totalorder %s124, %s125
    %p137 = scmp.eq.s32.totalorder %s31, 1
    %p138 = por %p136, %p137
    %p140 = scmp.ne.s32.totalorder %s125, %s139
    %p141 = scmp.eq.s32.totalorder %s31, 0
    %p142 = por %p140, %p141
    %s144 = sadd.s32 %s143, 1
    %p147 = scmp.eq.s32.totalorder %s25, 1
    %p148 = scmp.ne.s32.totalorder %s143, %s145
    %p149 = scmp.eq.s32.totalorder %s25, 0
    %p150 = por %p148, %p149
    %p151 = scmp.ne.s32.totalorder %s143, %s145
    %p152 = scmp.eq.s32.totalorder %s30, 1
    %p153 = por %p151, %p152
    %p154 = scmp.ne.s32.totalorder %s145, %s146
    %p155 = scmp.eq.s32.totalorder %s30, 0
    %p156 = por %p154, %p155
    %p157 = scmp.ne.s32.totalorder %s145, %s146
    %p158 = scmp.eq.s32.totalorder %s31, 1
    %p159 = por %p157, %p158
    %p161 = scmp.ne.s32.totalorder %s146, %s160
    %p162 = scmp.eq.s32.totalorder %s31, 0
    %p163 = por %p161, %p162
    %s165 = sadd.s32 %s164, 1
    %p168 = scmp.eq.s32.totalorder %s25, 1
    %p169 = scmp.ne.s32.totalorder %s164, %s166
    %p170 = scmp.eq.s32.totalorder %s25, 0
    %p171 = por %p169, %p170
    %p172 = scmp.ne.s32.totalorder %s164, %s166
    %p173 = scmp.eq.s32.totalorder %s30, 1
    %p174 = por %p172, %p173
    %p175 = scmp.ne.s32.totalorder %s166, %s167
    %p176 = scmp.eq.s32.totalorder %s30, 0
    %p177 = por %p175, %p176
    %p178 = scmp.ne.s32.totalorder %s166, %s167
    %p179 = scmp.eq.s32.totalorder %s31, 1
    %p180 = por %p178, %p179
    %p182 = scmp.ne.s32.totalorder %s167, %s181
    %p183 = scmp.eq.s32.totalorder %s31, 0
    %p184 = por %p182, %p183
    %s186 = sadd.s32 %s185, 1
    %p189 = scmp.eq.s32.totalorder %s25, 1
    %p190 = scmp.ne.s32.totalorder %s185, %s187
    %p191 = scmp.eq.s32.totalorder %s25, 0
    %p192 = por %p190, %p191
    %p193 = scmp.ne.s32.totalorder %s185, %s187
    %p194 = scmp.eq.s32.totalorder %s30, 1
    %p195 = por %p193, %p194
    %p196 = scmp.ne.s32.totalorder %s187, %s188
    %p197 = scmp.eq.s32.totalorder %s30, 0
    %p198 = por %p196, %p197
    %p199 = scmp.ne.s32.totalorder %s187, %s188
    %p200 = scmp.eq.s32.totalorder %s31, 1
    %p201 = por %p199, %p200
    %p203 = scmp.ne.s32.totalorder %s188, %s202
    %p204 = scmp.eq.s32.totalorder %s31, 0
    %p205 = por %p203, %p204
    %s207 = sadd.s32 %s206, 1
    %p210 = scmp.eq.s32.totalorder %s25, 1
    %p211 = scmp.ne.s32.totalorder %s206, %s208
    %p212 = scmp.eq.s32.totalorder %s25, 0
    %p213 = por %p211, %p212
    %p214 = scmp.ne.s32.totalorder %s206, %s208
    %p215 = scmp.eq.s32.totalorder %s30, 1
    %p216 = por %p214, %p215
    %p217 = scmp.ne.s32.totalorder %s208, %s209
    %p218 = scmp.eq.s32.totalorder %s30, 0
    %p219 = por %p217, %p218
    %p220 = scmp.ne.s32.totalorder %s208, %s209
    %p221 = scmp.eq.s32.totalorder %s31, 1
    %p222 = por %p220, %p221
    %p224 = scmp.ne.s32.totalorder %s209, %s223
    %p225 = scmp.eq.s32.totalorder %s31, 0
    %p226 = por %p224, %p225
    %s228 = sadd.s32 %s227, 1
    %p231 = scmp.eq.s32.totalorder %s25, 1
    %p232 = scmp.ne.s32.totalorder %s227, %s229
    %p233 = scmp.eq.s32.totalorder %s25, 0
    %p234 = por %p232, %p233
    %p235 = scmp.ne.s32.totalorder %s227, %s229
    %p236 = scmp.eq.s32.totalorder %s30, 1
    %p237 = por %p235, %p236
    %p238 = scmp.ne.s32.totalorder %s229, %s230
    %p239 = scmp.eq.s32.totalorder %s30, 0
    %p240 = por %p238, %p239
    %p241 = scmp.ne.s32.totalorder %s229, %s230
    %p242 = scmp.eq.s32.totalorder %s31, 1
    %p243 = por %p241, %p242
    %p245 = scmp.ne.s32.totalorder %s230, %s244
    %p246 = scmp.eq.s32.totalorder %s31, 0
    %p247 = por %p245, %p246
    %s249 = sadd.s32 %s248, 1
    %p252 = scmp.eq.s32.totalorder %s25, 1
    %p253 = scmp.ne.s32.totalorder %s248, %s250
    %p254 = scmp.eq.s32.totalorder %s25, 0
    %p255 = por %p253, %p254
    %p256 = scmp.ne.s32.totalorder %s248, %s250
    %p257 = scmp.eq.s32.totalorder %s30, 1
    %p258 = por %p256, %p257
    %p259 = scmp.ne.s32.totalorder %s250, %s251
    %p260 = scmp.eq.s32.totalorder %s30, 0
    %p261 = por %p259, %p260
    %p262 = scmp.ne.s32.totalorder %s250, %s251
    %p263 = scmp.eq.s32.totalorder %s31, 1
    %p264 = por %p262, %p263
    %p266 = scmp.ne.s32.totalorder %s251, %s265
    %p267 = scmp.eq.s32.totalorder %s31, 0
    %p268 = por %p266, %p267
    %s270 = sadd.s32 %s269, 1
    %p273 = scmp.eq.s32.totalorder %s25, 1
    %p274 = scmp.ne.s32.totalorder %s269, %s271
    %p275 = scmp.eq.s32.totalorder %s25, 0
    %p276 = por %p274, %p275
    %p277 = scmp.ne.s32.totalorder %s269, %s271
    %p278 = scmp.eq.s32.totalorder %s30, 1
    %p279 = por %p277, %p278
    %p280 = scmp.ne.s32.totalorder %s271, %s272
    %p281 = scmp.eq.s32.totalorder %s30, 0
    %p282 = por %p280, %p281
    %p283 = scmp.ne.s32.totalorder %s271, %s272
    %p284 = scmp.eq.s32.totalorder %s31, 1
    %p285 = por %p283, %p284
    %p287 = scmp.ne.s32.totalorder %s272, %s286
    %p288 = scmp.eq.s32.totalorder %s31, 0
    %p289 = por %p287, %p288
    %s291 = sadd.s32 %s290, 1
    %p294 = scmp.eq.s32.totalorder %s25, 1
    %p295 = scmp.ne.s32.totalorder %s290, %s292
    %p296 = scmp.eq.s32.totalorder %s25, 0
    %p297 = por %p295, %p296
    %p298 = scmp.ne.s32.totalorder %s290, %s292
    %p299 = scmp.eq.s32.totalorder %s30, 1
    %p300 = por %p298, %p299
    %p301 = scmp.ne.s32.totalorder %s292, %s293
    %p302 = scmp.eq.s32.totalorder %s30, 0
    %p303 = por %p301, %p302
    %p304 = scmp.ne.s32.totalorder %s292, %s293
    %p305 = scmp.eq.s32.totalorder %s31, 1
    %p306 = por %p304, %p305
    %p308 = scmp.ne.s32.totalorder %s293, %s307
    %p309 = scmp.eq.s32.totalorder %s31, 0
    %p310 = por %p308, %p309
    %s312 = sadd.s32 %s311, 1
    %p315 = scmp.eq.s32.totalorder %s25, 1
    %p316 = scmp.ne.s32.totalorder %s311, %s313
    %p317 = scmp.eq.s32.totalorder %s25, 0
    %p318 = por %p316, %p317
    %p319 = scmp.ne.s32.totalorder %s311, %s313
    %p320 = scmp.eq.s32.totalorder %s30, 1
    %p321 = por %p319, %p320
    %p322 = scmp.ne.s32.totalorder %s313, %s314
    %p323 = scmp.eq.s32.totalorder %s30, 0
    %p324 = por %p322, %p323
    %p325 = scmp.ne.s32.totalorder %s313, %s314
    %p326 = scmp.eq.s32.totalorder %s31, 1
    %p327 = por %p325, %p326
    %p329 = scmp.ne.s32.totalorder %s314, %s328
    %p330 = scmp.eq.s32.totalorder %s31, 0
    %p331 = por %p329, %p330
    %s333 = sadd.s32 %s332, 1
    %p336 = scmp.eq.s32.totalorder %s25, 1
    %p337 = scmp.ne.s32.totalorder %s332, %s334
    %p338 = scmp.eq.s32.totalorder %s25, 0
    %p339 = por %p337, %p338
    %p340 = scmp.ne.s32.totalorder %s332, %s334
    %p341 = scmp.eq.s32.totalorder %s30, 1
    %p342 = por %p340, %p341
    %p343 = scmp.ne.s32.totalorder %s334, %s335
    %p344 = scmp.eq.s32.totalorder %s30, 0
    %p345 = por %p343, %p344
    %p346 = scmp.ne.s32.totalorder %s334, %s335
    %p347 = scmp.eq.s32.totalorder %s31, 1
    %p348 = por %p346, %p347
    %p350 = scmp.ne.s32.totalorder %s335, %s349
    %p351 = scmp.eq.s32.totalorder %s31, 0
    %p352 = por %p350, %p351
    %s354 = sadd.s32 %s353, 1
    %p357 = scmp.eq.s32.totalorder %s25, 1
    %p358 = scmp.ne.s32.totalorder %s353, %s355
    %p359 = scmp.eq.s32.totalorder %s25, 0
    %p360 = por %p358, %p359
    %p361 = scmp.ne.s32.totalorder %s353, %s355
    %p362 = scmp.eq.s32.totalorder %s30, 1
    %p363 = por %p361, %p362
    %p364 = scmp.ne.s32.totalorder %s355, %s356
    %p365 = scmp.eq.s32.totalorder %s30, 0
    %p366 = por %p364, %p365
    %p367 = scmp.ne.s32.totalorder %s355, %s356
    %p368 = scmp.eq.s32.totalorder %s31, 1
    %p369 = por %p367, %p368
    %p371 = scmp.ne.s32.totalorder %s356, %s370
    %p372 = scmp.eq.s32.totalorder %s31, 0
    %p373 = por %p371, %p372
    %s375 = sadd.s32 %s374, 1
    %p378 = scmp.eq.s32.totalorder %s25, 1
    %p379 = scmp.ne.s32.totalorder %s374, %s376
    %p380 = scmp.eq.s32.totalorder %s25, 0
    %p381 = por %p379, %p380
    %p382 = scmp.ne.s32.totalorder %s374, %s376
    %p383 = scmp.eq.s32.totalorder %s30, 1
    %p384 = por %p382, %p383
    %p385 = scmp.ne.s32.totalorder %s376, %s377
    %p386 = scmp.eq.s32.totalorder %s30, 0
    %p387 = por %p385, %p386
    %p388 = scmp.ne.s32.totalorder %s376, %s377
    %p389 = scmp.eq.s32.totalorder %s31, 1
    %p390 = por %p388, %p389
    %p392 = scmp.ne.s32.totalorder %s377, %s391
    %p393 = scmp.eq.s32.totalorder %s31, 0
    %p394 = por %p392, %p393
    %s395 = ssub.s32 %s25, %s32
    %p396 = scmp.eq.s32.totalorder %s395, 0
    %s398 = sadd.s32 %s397, 1
    %s399 = scalar_select %p396, %s397, %s398
    %p402 = pneg %p396
    %p403 = scmp.eq.s32.totalorder %s25, 1
    %p404 = por %p402, %p403
    %p405 = scmp.ne.s32.totalorder %s397, %s400
    %p406 = scmp.eq.s32.totalorder %s25, 0
    %p407 = por %p405, %p406
    %p408 = scmp.ne.s32.totalorder %s397, %s400
    %p409 = scmp.eq.s32.totalorder %s30, 1
    %p410 = por %p408, %p409
    %p411 = scmp.ne.s32.totalorder %s400, %s401
    %p412 = scmp.eq.s32.totalorder %s30, 0
    %p413 = por %p411, %p412
    %p414 = scmp.ne.s32.totalorder %s400, %s401
    %p415 = scmp.eq.s32.totalorder %s31, 1
    %p416 = por %p414, %p415
    %p418 = scmp.ne.s32.totalorder %s401, %s417
    %p419 = scmp.eq.s32.totalorder %s31, 0
    %p420 = por %p418, %p419
    %p421 = scmp.le.s32.totalorder 1, %s25
    %p422 = scmp.lt.s32.totalorder %s25, 3
    %p423 = pnand %p421, %p422
    %p424 = pneg %p423
    // Predicated region
    $region9: #{lightweight_cnn_forward.5} parent=5 // pred_check
      _
    $region10: #{lightweight_cnn_forward.5} parent=5 // pred_check_branch
      %426 = sbr.rel (%p423) target = $region12
    $region11: #{lightweight_cnn_forward.5} parent=5 // pred_region
      %s427 = ssub.s32 %s25, 1
      // Predicated region
      $region13: #{lightweight_cnn_forward.5} parent=11 // pred_check
        %p428 = pneg %p72
      $region14: #{lightweight_cnn_forward.5} parent=11 // pred_check_branch
        %430 = sbr.rel (%p428) target = $region16
      $region15: #{lightweight_cnn_forward.5} parent=11 // pred_region
        _
      $region16: #{lightweight_cnn_forward.5} parent=11 // pred_fallthru
        _
      // Predicated region
      $region17: #{lightweight_cnn_forward.5} parent=11 // pred_check
        %p431 = pneg %p93
      $region18: #{lightweight_cnn_forward.5} parent=11 // pred_check_branch
        %433 = sbr.rel (%p431) target = $region20
      $region19: #{lightweight_cnn_forward.5} parent=11 // pred_region
        _
      $region20: #{lightweight_cnn_forward.5} parent=11 // pred_fallthru
        _
      // Predicated region
      $region21: #{lightweight_cnn_forward.5} parent=11 // pred_check
        %p434 = pneg %p114
      $region22: #{lightweight_cnn_forward.5} parent=11 // pred_check_branch
        %436 = sbr.rel (%p434) target = $region24
      $region23: #{lightweight_cnn_forward.5} parent=11 // pred_region
        _
      $region24: #{lightweight_cnn_forward.5} parent=11 // pred_fallthru
        _
      // Predicated region
      $region25: #{lightweight_cnn_forward.5} parent=11 // pred_check
        %p437 = pneg %p135
      $region26: #{lightweight_cnn_forward.5} parent=11 // pred_check_branch
        %439 = sbr.rel (%p437) target = $region28
      $region27: #{lightweight_cnn_forward.5} parent=11 // pred_region
        _
      $region28: #{lightweight_cnn_forward.5} parent=11 // pred_fallthru
        _
      // Predicated region
      $region29: #{lightweight_cnn_forward.5} parent=11 // pred_check
        %p440 = pneg %p156
      $region30: #{lightweight_cnn_forward.5} parent=11 // pred_check_branch
        %442 = sbr.rel (%p440) target = $region32
      $region31: #{lightweight_cnn_forward.5} parent=11 // pred_region
        _
      $region32: #{lightweight_cnn_forward.5} parent=11 // pred_fallthru
        _
      // Predicated region
      $region33: #{lightweight_cnn_forward.5} parent=11 // pred_check
        %p443 = pneg %p177
      $region34: #{lightweight_cnn_forward.5} parent=11 // pred_check_branch
        %445 = sbr.rel (%p443) target = $region36
      $region35: #{lightweight_cnn_forward.5} parent=11 // pred_region
        _
      $region36: #{lightweight_cnn_forward.5} parent=11 // pred_fallthru
        _
      // Predicated region
      $region37: #{lightweight_cnn_forward.5} parent=11 // pred_check
        %p446 = pneg %p198
      $region38: #{lightweight_cnn_forward.5} parent=11 // pred_check_branch
        %448 = sbr.rel (%p446) target = $region40
      $region39: #{lightweight_cnn_forward.5} parent=11 // pred_region
        _
      $region40: #{lightweight_cnn_forward.5} parent=11 // pred_fallthru
        _
      // Predicated region
      $region41: #{lightweight_cnn_forward.5} parent=11 // pred_check
        %p449 = pneg %p219
      $region42: #{lightweight_cnn_forward.5} parent=11 // pred_check_branch
        %451 = sbr.rel (%p449) target = $region44
      $region43: #{lightweight_cnn_forward.5} parent=11 // pred_region
        _
      $region44: #{lightweight_cnn_forward.5} parent=11 // pred_fallthru
        _
      // Predicated region
      $region45: #{lightweight_cnn_forward.5} parent=11 // pred_check
        %p452 = pneg %p240
      $region46: #{lightweight_cnn_forward.5} parent=11 // pred_check_branch
        %454 = sbr.rel (%p452) target = $region48
      $region47: #{lightweight_cnn_forward.5} parent=11 // pred_region
        _
      $region48: #{lightweight_cnn_forward.5} parent=11 // pred_fallthru
        _
      // Predicated region
      $region49: #{lightweight_cnn_forward.5} parent=11 // pred_check
        %p455 = pneg %p261
      $region50: #{lightweight_cnn_forward.5} parent=11 // pred_check_branch
        %457 = sbr.rel (%p455) target = $region52
      $region51: #{lightweight_cnn_forward.5} parent=11 // pred_region
        _
      $region52: #{lightweight_cnn_forward.5} parent=11 // pred_fallthru
        _
      // Predicated region
      $region53: #{lightweight_cnn_forward.5} parent=11 // pred_check
        %p458 = pneg %p282
      $region54: #{lightweight_cnn_forward.5} parent=11 // pred_check_branch
        %460 = sbr.rel (%p458) target = $region56
      $region55: #{lightweight_cnn_forward.5} parent=11 // pred_region
        _
      $region56: #{lightweight_cnn_forward.5} parent=11 // pred_fallthru
        _
      // Predicated region
      $region57: #{lightweight_cnn_forward.5} parent=11 // pred_check
        %p461 = pneg %p303
      $region58: #{lightweight_cnn_forward.5} parent=11 // pred_check_branch
        %463 = sbr.rel (%p461) target = $region60
      $region59: #{lightweight_cnn_forward.5} parent=11 // pred_region
        _
      $region60: #{lightweight_cnn_forward.5} parent=11 // pred_fallthru
        _
      // Predicated region
      $region61: #{lightweight_cnn_forward.5} parent=11 // pred_check
        %p464 = pneg %p324
      $region62: #{lightweight_cnn_forward.5} parent=11 // pred_check_branch
        %466 = sbr.rel (%p464) target = $region64
      $region63: #{lightweight_cnn_forward.5} parent=11 // pred_region
        _
      $region64: #{lightweight_cnn_forward.5} parent=11 // pred_fallthru
        _
      // Predicated region
      $region65: #{lightweight_cnn_forward.5} parent=11 // pred_check
        %p467 = pneg %p345
      $region66: #{lightweight_cnn_forward.5} parent=11 // pred_check_branch
        %469 = sbr.rel (%p467) target = $region68
      $region67: #{lightweight_cnn_forward.5} parent=11 // pred_region
        _
      $region68: #{lightweight_cnn_forward.5} parent=11 // pred_fallthru
        _
      // Predicated region
      $region69: #{lightweight_cnn_forward.5} parent=11 // pred_check
        %p470 = pneg %p366
      $region70: #{lightweight_cnn_forward.5} parent=11 // pred_check_branch
        %472 = sbr.rel (%p470) target = $region72
      $region71: #{lightweight_cnn_forward.5} parent=11 // pred_region
        _
      $region72: #{lightweight_cnn_forward.5} parent=11 // pred_fallthru
        _
      // Predicated region
      $region73: #{lightweight_cnn_forward.5} parent=11 // pred_check
        %p473 = pneg %p387
      $region74: #{lightweight_cnn_forward.5} parent=11 // pred_check_branch
        %475 = sbr.rel (%p473) target = $region76
      $region75: #{lightweight_cnn_forward.5} parent=11 // pred_region
        _
      $region76: #{lightweight_cnn_forward.5} parent=11 // pred_fallthru
        _
    $region12: #{lightweight_cnn_forward.5} parent=5 // pred_fallthru
      _
    %p476 = scmp.lt.s32.totalorder %s25, 2
    // Predicated region
    $region77: #{lightweight_cnn_forward.5} parent=5 // pred_check
      %p477 = pneg %p476
    $region78: #{lightweight_cnn_forward.5} parent=5 // pred_check_branch
      %479 = sbr.rel (%p477) target = $region80
    $region79: #{lightweight_cnn_forward.5} parent=5 // pred_region
      // Predicated region
      $region81: #{lightweight_cnn_forward.5} parent=79 // pred_check
        %p480 = pneg %p45
      $region82: #{lightweight_cnn_forward.5} parent=79 // pred_check_branch
        %482 = sbr.rel (%p480) target = $region84
      $region83: #{lightweight_cnn_forward.5} parent=79 // pred_region
        %p483 = scmp.lt.s32.totalorder %s25, 1
        %s484 = scalar_select %p483, %s25, 1
        %s485 = smul.addr %s484, 72
        %s486 = smul.addr %s485, 8
        %s487 = scalar_lea.vmem %s0, %s486
      $region84: #{lightweight_cnn_forward.5} parent=79 // pred_fallthru
        _
    $region80: #{lightweight_cnn_forward.5} parent=5 // pred_fallthru
      _
    %p488 = scmp.le.s32.totalorder 1, %s25
    %p489 = scmp.lt.s32.totalorder %s25, 3
    %p490 = pnand %p488, %p489
    %p491 = pneg %p490
    // Predicated region
    $region85: #{lightweight_cnn_forward.5} parent=5 // pred_check
      _
    $region86: #{lightweight_cnn_forward.5} parent=5 // pred_check_branch
      %493 = sbr.rel (%p490) target = $region88
    $region87: #{lightweight_cnn_forward.5} parent=5 // pred_region
      %s494 = ssub.s32 %s25, 1
      %p495 = scmp.lt.s32.totalorder %s30, 1
      %s496 = scalar_select %p495, %s30, 1
      %s497 = smul.addr %s496, 72
      %s498 = smul.addr %s497, 8
      %s499 = scalar_lea.vmem %s0, %s498
      %p500 = pneg %p51
      %p501 = pneg %p48
      %p502 = pneg %p72
      %p503 = pneg %p69
      %p504 = pneg %p93
      %p505 = pneg %p90
      %p506 = pneg %p114
      %p507 = pneg %p111
      %p508 = pneg %p135
      %p509 = pneg %p132
      %p510 = pneg %p156
      %p511 = pneg %p153
      %p512 = pneg %p177
      %p513 = pneg %p174
      %p514 = pneg %p198
      %p515 = pneg %p195
      %p516 = pneg %p219
      %p517 = pneg %p216
      %p518 = pneg %p240
      %p519 = pneg %p237
      %p520 = pneg %p261
      %p521 = pneg %p258
      %p522 = pneg %p282
      %p523 = pneg %p279
      %p524 = pneg %p303
      %p525 = pneg %p300
      %p526 = pneg %p324
      %p527 = pneg %p321
      %p528 = pneg %p345
      %p529 = pneg %p342
      %p530 = pneg %p366
      %p531 = pneg %p363
      %p532 = pneg %p387
      %p533 = pneg %p384
      %p534 = pneg %p413
      %p535 = pneg %p410
      %p536 = scmp.lt.s32.totalorder %s30, 1
      %s537 = scalar_select %p536, %s30, 1
      %s538 = smul.addr %s537, 8
      %s539 = smul.addr %s538, 8
      %s540 = scalar_lea.vmem %s17, %s539
      %p541 = scmp.lt.s32.totalorder %s30, 1
      %s542 = scalar_select %p541, %s30, 1
      %s543 = smul.addr %s542, 72
      %s544 = smul.addr %s543, 8
      %s545 = scalar_lea.vmem %s0, %s544
      %p546 = scmp.lt.s32.totalorder %s30, 1
      %s547 = scalar_select %p546, %s30, 1
      %s548 = smul.addr %s547, 8
      %s549 = smul.addr %s548, 8
      %s550 = scalar_lea.vmem %s17, %s549
      %v551 = vld [vmem:[%s545] sm:$0xff]
      %v552 = vld [vmem:[%s545 + $0x8] sm:$0x1]
      %v553 = vld [vmem:[%s545 + $0x10] sm:$0xff]
      %v554 = vld [vmem:[%s545 + $0x18] sm:$0x1]
      %v555 = vld [vmem:[%s545 + $0x20] sm:$0xff]
      %v556 = vld [vmem:[%s545 + $0x28] sm:$0x1]
      %v557 = vld [vmem:[%s545 + $0x30] sm:$0xff]
      %v558 = vld [vmem:[%s545 + $0x38] sm:$0x1]
      %v559 = vld [vmem:[%s545 + $0x40] sm:$0xff]
      %v560 = vld [vmem:[%s545 + $0x48] sm:$0x1]
      %v561 = vld [vmem:[%s545 + $0x50] sm:$0xff]
      %v562 = vld [vmem:[%s545 + $0x58] sm:$0x1]
      %v563 = vld [vmem:[%s545 + $0x60] sm:$0xff]
      %v564 = vld [vmem:[%s545 + $0x68] sm:$0x1]
      %v565 = vld [vmem:[%s545 + $0x70] sm:$0xff]
      %v566 = vld [vmem:[%s545 + $0x78] sm:$0x1]
      %v567 = vld [vmem:[%s545 + $0x80] sm:$0xff]
      %v568 = vld [vmem:[%s545 + $0x88] sm:$0x1]
      %v569 = vld [vmem:[%s545 + $0x90] sm:$0xff]
      %v570 = vld [vmem:[%s545 + $0xa0] sm:$0xff]
      %v571 = vld [vmem:[%s545 + $0xb0] sm:$0xff]
      %v572 = vld [vmem:[%s545 + $0xc0] sm:$0xff]
      %v573 = vld [vmem:[%s545 + $0xd0] sm:$0xff]
      %v574 = vld [vmem:[%s545 + $0xe0] sm:$0xff]
      %v575 = vld [vmem:[%s545 + $0xf0] sm:$0xff]
      %v576 = vld [vmem:[%s545 + $0x100] sm:$0xff]
      %v577 = vld [vmem:[%s545 + $0x110] sm:$0xff]
      %v578 = vld [vmem:[%s545 + $0x120] sm:$0xff]
      %v579 = vld [vmem:[%s545 + $0x128] sm:$0x1]
      %v580 = vld [vmem:[%s545 + $0x130] sm:$0xff]
      %v581 = vld [vmem:[%s545 + $0x138] sm:$0x1]
      %v582 = vld [vmem:[%s545 + $0x140] sm:$0xff]
      %v583 = vld [vmem:[%s545 + $0x148] sm:$0x1]
      %v584 = vld [vmem:[%s545 + $0x150] sm:$0xff]
      %v585 = vld [vmem:[%s545 + $0x158] sm:$0x1]
      %v586 = vld [vmem:[%s545 + $0x160] sm:$0xff]
      %v587 = vld [vmem:[%s545 + $0x168] sm:$0x1]
      %v588 = vld [vmem:[%s545 + $0x170] sm:$0xff]
      %v589 = vld [vmem:[%s545 + $0x178] sm:$0x1]
      %v590 = vld [vmem:[%s545 + $0x180] sm:$0xff]
      %v591 = vld [vmem:[%s545 + $0x188] sm:$0x1]
      %v592 = vld [vmem:[%s545 + $0x190] sm:$0xff]
      %v593 = vld [vmem:[%s545 + $0x198] sm:$0x1]
      %v594 = vld [vmem:[%s545 + $0x1b0] sm:$0xff]
      %v595 = vld [vmem:[%s545 + $0x1c0] sm:$0xff]
      %v596 = vld [vmem:[%s545 + $0x1d0] sm:$0xff]
      %v597 = vld [vmem:[%s545 + $0x1e0] sm:$0xff]
      %v598 = vld [vmem:[%s545 + $0x1f0] sm:$0xff]
      %v599 = vld [vmem:[%s545 + $0x200] sm:$0xff]
      %v600 = vld [vmem:[%s545 + $0x210] sm:$0xff]
      %v601 = vld [vmem:[%s545 + $0x220] sm:$0xff]
      %v602 = vld [vmem:[%s1] sm:$0x7]
      %v603 = vld [vmem:[%s1 + $0x4] sm:$0x7]
      %v604 = vld [vmem:[%s1 + $0x8] sm:$0x7]
      %v605 = vlaneseq
      %v606 = vshrl.u32 %v605, 7
      %v607 = vsub.s32 0, %v606
      %v608 = vrot.slane %v602, %v607
      %v609 = vmul.f32 %v551, %v608
      %v610 = vmul.f32 %v553, %v608
      %v611 = vmul.f32 %v555, %v608
      %v612 = vmul.f32 %v557, %v608
      %v613 = vmul.f32 %v559, %v608
      %v614 = vmul.f32 %v561, %v608
      %v615 = vmul.f32 %v563, %v608
      %v616 = vmul.f32 %v565, %v608
      %v617 = vadd.f32 %v609, 0.0
      %v618 = vadd.f32 %v610, 0.0
      %v619 = vadd.f32 %v611, 0.0
      %v620 = vadd.f32 %v612, 0.0
      %v621 = vadd.f32 %v613, 0.0
      %v622 = vadd.f32 %v614, 0.0
      %v623 = vadd.f32 %v615, 0.0
      %v624 = vadd.f32 %v616, 0.0
      %v625 = vlaneseq
      %v626 = vshrl.u32 %v625, 7
      %v627 = vsub.s32 1, %v626
      %v628 = vrot.slane %v602, %v627
      %v629 = vmul.f32 %v569, %v628
      %v630 = vmul.f32 %v570, %v628
      %v631 = vmul.f32 %v571, %v628
      %v632 = vmul.f32 %v572, %v628
      %v633 = vmul.f32 %v573, %v628
      %v634 = vmul.f32 %v574, %v628
      %v635 = vmul.f32 %v575, %v628
      %v636 = vmul.f32 %v576, %v628
      %v637 = vadd.f32 %v617, %v629
      %v638 = vadd.f32 %v618, %v630
      %v639 = vadd.f32 %v619, %v631
      %v640 = vadd.f32 %v620, %v632
      %v641 = vadd.f32 %v621, %v633
      %v642 = vadd.f32 %v622, %v634
      %v643 = vadd.f32 %v623, %v635
      %v644 = vadd.f32 %v624, %v636
      %v645 = vlaneseq
      %v646 = vshrl.u32 %v645, 7
      %v647 = vsub.s32 2, %v646
      %v648 = vrot.slane %v602, %v647
      %v649 = vmul.f32 %v551, %v648
      %v650 = vmul.f32 %v552, %v648
      %v651 = vmul.f32 %v553, %v648
      %v652 = vmul.f32 %v554, %v648
      %v653 = vmul.f32 %v555, %v648
      %v654 = vmul.f32 %v556, %v648
      %v655 = vmul.f32 %v557, %v648
      %v656 = vmul.f32 %v558, %v648
      %v657 = vmul.f32 %v559, %v648
      %v658 = vmul.f32 %v560, %v648
      %v659 = vmul.f32 %v561, %v648
      %v660 = vmul.f32 %v562, %v648
      %v661 = vmul.f32 %v563, %v648
      %v662 = vmul.f32 %v564, %v648
      %v663 = vmul.f32 %v565, %v648
      %v664 = vmul.f32 %v566, %v648
      %vm681 = vcmask 1046528
      %v682 = vrot.slane %v649, 1
      %v683 = vrot.slane %v650, 1
      %v684 = vsel %vm681, %v682, %v683
      %v685 = vrot.slane %v651, 1
      %v686 = vrot.slane %v652, 1
      %v687 = vsel %vm681, %v685, %v686
      %v688 = vrot.slane %v653, 1
      %v689 = vrot.slane %v654, 1
      %v690 = vsel %vm681, %v688, %v689
      %v691 = vrot.slane %v655, 1
      %v692 = vrot.slane %v656, 1
      %v693 = vsel %vm681, %v691, %v692
      %v694 = vrot.slane %v657, 1
      %v695 = vrot.slane %v658, 1
      %v696 = vsel %vm681, %v694, %v695
      %v697 = vrot.slane %v659, 1
      %v698 = vrot.slane %v660, 1
      %v699 = vsel %vm681, %v697, %v698
      %v700 = vrot.slane %v661, 1
      %v701 = vrot.slane %v662, 1
      %v702 = vsel %vm681, %v700, %v701
      %v703 = vrot.slane %v663, 1
      %v704 = vrot.slane %v664, 1
      %v705 = vsel %vm681, %v703, %v704
      %v714 = vadd.f32 %v637, %v684
      %v715 = vadd.f32 %v638, %v687
      %v716 = vadd.f32 %v639, %v690
      %v717 = vadd.f32 %v640, %v693
      %v718 = vadd.f32 %v641, %v696
      %v719 = vadd.f32 %v642, %v699
      %v720 = vadd.f32 %v643, %v702
      %v721 = vadd.f32 %v644, %v705
      %v722 = vlaneseq
      %v723 = vshrl.u32 %v722, 7
      %v724 = vsub.s32 0, %v723
      %v725 = vrot.slane %v603, %v724
      %v726 = vmul.f32 %v578, %v725
      %v727 = vmul.f32 %v580, %v725
      %v728 = vmul.f32 %v582, %v725
      %v729 = vmul.f32 %v584, %v725
      %v730 = vmul.f32 %v586, %v725
      %v731 = vmul.f32 %v588, %v725
      %v732 = vmul.f32 %v590, %v725
      %v733 = vmul.f32 %v592, %v725
      %v734 = vadd.f32 %v714, %v726
      %v735 = vadd.f32 %v715, %v727
      %v736 = vadd.f32 %v716, %v728
      %v737 = vadd.f32 %v717, %v729
      %v738 = vadd.f32 %v718, %v730
      %v739 = vadd.f32 %v719, %v731
      %v740 = vadd.f32 %v720, %v732
      %v741 = vadd.f32 %v721, %v733
      %v742 = vlaneseq
      %v743 = vshrl.u32 %v742, 7
      %v744 = vsub.s32 1, %v743
      %v745 = vrot.slane %v603, %v744
      %v746 = vmul.f32 %v594, %v745
      %v747 = vmul.f32 %v595, %v745
      %v748 = vmul.f32 %v596, %v745
      %v749 = vmul.f32 %v597, %v745
      %v750 = vmul.f32 %v598, %v745
      %v751 = vmul.f32 %v599, %v745
      %v752 = vmul.f32 %v600, %v745
      %v753 = vmul.f32 %v601, %v745
      %v754 = vadd.f32 %v734, %v746
      %v755 = vadd.f32 %v735, %v747
      %v756 = vadd.f32 %v736, %v748
      %v757 = vadd.f32 %v737, %v749
      %v758 = vadd.f32 %v738, %v750
      %v759 = vadd.f32 %v739, %v751
      %v760 = vadd.f32 %v740, %v752
      %v761 = vadd.f32 %v741, %v753
      %v762 = vlaneseq
      %v763 = vshrl.u32 %v762, 7
      %v764 = vsub.s32 2, %v763
      %v765 = vrot.slane %v603, %v764
      %v766 = vmul.f32 %v578, %v765
      %v767 = vmul.f32 %v579, %v765
      %v768 = vmul.f32 %v580, %v765
      %v769 = vmul.f32 %v581, %v765
      %v770 = vmul.f32 %v582, %v765
      %v771 = vmul.f32 %v583, %v765
      %v772 = vmul.f32 %v584, %v765
      %v773 = vmul.f32 %v585, %v765
      %v774 = vmul.f32 %v586, %v765
      %v775 = vmul.f32 %v587, %v765
      %v776 = vmul.f32 %v588, %v765
      %v777 = vmul.f32 %v589, %v765
      %v778 = vmul.f32 %v590, %v765
      %v779 = vmul.f32 %v591, %v765
      %v780 = vmul.f32 %v592, %v765
      %v781 = vmul.f32 %v593, %v765
      %v798 = vrot.slane %v766, 1
      %v799 = vrot.slane %v767, 1
      %v800 = vsel %vm681, %v798, %v799
      %v801 = vrot.slane %v768, 1
      %v802 = vrot.slane %v769, 1
      %v803 = vsel %vm681, %v801, %v802
      %v804 = vrot.slane %v770, 1
      %v805 = vrot.slane %v771, 1
      %v806 = vsel %vm681, %v804, %v805
      %v807 = vrot.slane %v772, 1
      %v808 = vrot.slane %v773, 1
      %v809 = vsel %vm681, %v807, %v808
      %v810 = vrot.slane %v774, 1
      %v811 = vrot.slane %v775, 1
      %v812 = vsel %vm681, %v810, %v811
      %v813 = vrot.slane %v776, 1
      %v814 = vrot.slane %v777, 1
      %v815 = vsel %vm681, %v813, %v814
      %v816 = vrot.slane %v778, 1
      %v817 = vrot.slane %v779, 1
      %v818 = vsel %vm681, %v816, %v817
      %v819 = vrot.slane %v780, 1
      %v820 = vrot.slane %v781, 1
      %v821 = vsel %vm681, %v819, %v820
      %v830 = vadd.f32 %v754, %v800
      %v831 = vadd.f32 %v755, %v803
      %v832 = vadd.f32 %v756, %v806
      %v833 = vadd.f32 %v757, %v809
      %v834 = vadd.f32 %v758, %v812
      %v835 = vadd.f32 %v759, %v815
      %v836 = vadd.f32 %v760, %v818
      %v837 = vadd.f32 %v761, %v821
      %v838 = vlaneseq
      %v839 = vshrl.u32 %v838, 7
      %v840 = vsub.s32 0, %v839
      %v841 = vrot.slane %v604, %v840
      %v842 = vmul.f32 %v553, %v841
      %v843 = vmul.f32 %v555, %v841
      %v844 = vmul.f32 %v557, %v841
      %v845 = vmul.f32 %v559, %v841
      %v846 = vmul.f32 %v561, %v841
      %v847 = vmul.f32 %v563, %v841
      %v848 = vmul.f32 %v565, %v841
      %v849 = vmul.f32 %v567, %v841
      %v850 = vadd.f32 %v830, %v842
      %v851 = vadd.f32 %v831, %v843
      %v852 = vadd.f32 %v832, %v844
      %v853 = vadd.f32 %v833, %v845
      %v854 = vadd.f32 %v834, %v846
      %v855 = vadd.f32 %v835, %v847
      %v856 = vadd.f32 %v836, %v848
      %v857 = vadd.f32 %v837, %v849
      %v858 = vlaneseq
      %v859 = vshrl.u32 %v858, 7
      %v860 = vsub.s32 1, %v859
      %v861 = vrot.slane %v604, %v860
      %v862 = vmul.f32 %v570, %v861
      %v863 = vmul.f32 %v571, %v861
      %v864 = vmul.f32 %v572, %v861
      %v865 = vmul.f32 %v573, %v861
      %v866 = vmul.f32 %v574, %v861
      %v867 = vmul.f32 %v575, %v861
      %v868 = vmul.f32 %v576, %v861
      %v869 = vmul.f32 %v577, %v861
      %v870 = vadd.f32 %v850, %v862
      %v871 = vadd.f32 %v851, %v863
      %v872 = vadd.f32 %v852, %v864
      %v873 = vadd.f32 %v853, %v865
      %v874 = vadd.f32 %v854, %v866
      %v875 = vadd.f32 %v855, %v867
      %v876 = vadd.f32 %v856, %v868
      %v877 = vadd.f32 %v857, %v869
      %v878 = vlaneseq
      %v879 = vshrl.u32 %v878, 7
      %v880 = vsub.s32 2, %v879
      %v881 = vrot.slane %v604, %v880
      %v882 = vmul.f32 %v553, %v881
      %v883 = vmul.f32 %v554, %v881
      %v884 = vmul.f32 %v555, %v881
      %v885 = vmul.f32 %v556, %v881
      %v886 = vmul.f32 %v557, %v881
      %v887 = vmul.f32 %v558, %v881
      %v888 = vmul.f32 %v559, %v881
      %v889 = vmul.f32 %v560, %v881
      %v890 = vmul.f32 %v561, %v881
      %v891 = vmul.f32 %v562, %v881
      %v892 = vmul.f32 %v563, %v881
      %v893 = vmul.f32 %v564, %v881
      %v894 = vmul.f32 %v565, %v881
      %v895 = vmul.f32 %v566, %v881
      %v896 = vmul.f32 %v567, %v881
      %v897 = vmul.f32 %v568, %v881
      %v914 = vrot.slane %v882, 1
      %v915 = vrot.slane %v883, 1
      %v916 = vsel %vm681, %v914, %v915
      %v917 = vrot.slane %v884, 1
      %v918 = vrot.slane %v885, 1
      %v919 = vsel %vm681, %v917, %v918
      %v920 = vrot.slane %v886, 1
      %v921 = vrot.slane %v887, 1
      %v922 = vsel %vm681, %v920, %v921
      %v923 = vrot.slane %v888, 1
      %v924 = vrot.slane %v889, 1
      %v925 = vsel %vm681, %v923, %v924
      %v926 = vrot.slane %v890, 1
      %v927 = vrot.slane %v891, 1
      %v928 = vsel %vm681, %v926, %v927
      %v929 = vrot.slane %v892, 1
      %v930 = vrot.slane %v893, 1
      %v931 = vsel %vm681, %v929, %v930
      %v932 = vrot.slane %v894, 1
      %v933 = vrot.slane %v895, 1
      %v934 = vsel %vm681, %v932, %v933
      %v935 = vrot.slane %v896, 1
      %v936 = vrot.slane %v897, 1
      %v937 = vsel %vm681, %v935, %v936
      %v946 = vadd.f32 %v870, %v916
      %v947 = vadd.f32 %v871, %v919
      %v948 = vadd.f32 %v872, %v922
      %v949 = vadd.f32 %v873, %v925
      %v950 = vadd.f32 %v874, %v928
      %v951 = vadd.f32 %v875, %v931
      %v952 = vadd.f32 %v876, %v934
      %v953 = vadd.f32 %v877, %v937
      %v954 = vld [vmem:[%s2] sm:$0x1]
      %v956 = vlaneseq
      %v957 = vshrl.u32 %v956, 7
      %v958 = vsub.s32 0, %v957
      %v959 = vrot.slane %v954, %v958
      %v961 = vmul.f32 %v946, %v959
      %v962 = vmul.f32 %v947, %v959
      %v963 = vmul.f32 %v948, %v959
      %v964 = vmul.f32 %v949, %v959
      %v965 = vmul.f32 %v950, %v959
      %v966 = vmul.f32 %v951, %v959
      %v967 = vmul.f32 %v952, %v959
      %v968 = vmul.f32 %v953, %v959
      %v969 = vld [vmem:[%s3] sm:$0x1]
      %v971 = vlaneseq
      %v972 = vshrl.u32 %v971, 7
      %v973 = vsub.s32 0, %v972
      %v974 = vrot.slane %v969, %v973
      %v976 = vadd.f32 %v961, %v974
      %v977 = vadd.f32 %v962, %v974
      %v978 = vadd.f32 %v963, %v974
      %v979 = vadd.f32 %v964, %v974
      %v980 = vadd.f32 %v965, %v974
      %v981 = vadd.f32 %v966, %v974
      %v982 = vadd.f32 %v967, %v974
      %v983 = vadd.f32 %v968, %v974
      %v984 = vmax.f32 %v976, 0.0
      %v985 = vmax.f32 %v977, 0.0
      %v986 = vmax.f32 %v978, 0.0
      %v987 = vmax.f32 %v979, 0.0
      %v988 = vmax.f32 %v980, 0.0
      %v989 = vmax.f32 %v981, 0.0
      %v990 = vmax.f32 %v982, 0.0
      %v991 = vmax.f32 %v983, 0.0
      %v992 = vmin.f32 %v984, 6.0
      %v993 = vmin.f32 %v985, 6.0
      %v994 = vmin.f32 %v986, 6.0
      %v995 = vmin.f32 %v987, 6.0
      %v996 = vmin.f32 %v988, 6.0
      %v997 = vmin.f32 %v989, 6.0
      %v998 = vmin.f32 %v990, 6.0
      %v999 = vmin.f32 %v991, 6.0
      %v1000 = vld [vmem:[%s4] sm:$0xff]
      %v1001 = vld [vmem:[%s4 + $0x8] sm:$0xff]
      %v1002 = vld [vmem:[%s4 + $0x10] sm:$0xff]
      %v1003 = vld [vmem:[%s4 + $0x18] sm:$0xff]
      %vm1004 = vcmask 261120
      %v1006 = vsel %vm1004, %v992, 0
      %v1009 = vsel %vm1004, %v993, 0
      %v1012 = vsel %vm1004, %v994, 0
      %v1015 = vsel %vm1004, %v995, 0
      %v1018 = vsel %vm1004, %v996, 0
      %v1021 = vsel %vm1004, %v997, 0
      %v1024 = vsel %vm1004, %v998, 0
      %v1027 = vsel %vm1004, %v999, 0
      %1029 = vmatprep.subr.mxu0 0.0
      %1030 = vmatpush1.msra.mxu0 %v1000
      %1031 = vmatprep.subr.mxu0 0.0
      %1032 = vmatpush1.msra.mxu0 %v1001
      %1033 = vmatprep.subr.mxu0 0.0
      %1034 = vmatpush1.msra.mxu0 %v1002
      %1035 = vmatprep.subr.mxu0 0.0
      %1036 = vmatpush1.msra.mxu0 %v1003
      %1037 = vmatprep.subr.mxu0 0.0
      %1038 = vmatpush1.msra.mxu0 0.0
      %1039 = vmatprep.subr.mxu0 0.0
      %1040 = vmatpush1.msra.mxu0 0.0
      %1041 = vmatprep.subr.mxu0 0.0
      %1042 = vmatpush1.msra.mxu0 0.0
      %1043 = vmatprep.subr.mxu0 0.0
      %1044 = vmatpush1.msra.mxu0 0.0
      %1045 = vmatprep.subr.mxu0 0.0
      %1046 = vmatpush1.msra.mxu0 0.0
      %1047 = vmatprep.subr.mxu0 0.0
      %1048 = vmatpush1.msra.mxu0 0.0
      %1049 = vmatprep.subr.mxu0 0.0
      %1050 = vmatpush1.msra.mxu0 0.0
      %1051 = vmatprep.subr.mxu0 0.0
      %1052 = vmatpush1.msra.mxu0 0.0
      %1053 = vmatprep.subr.mxu0 0.0
      %1054 = vmatpush1.msra.mxu0 0.0
      %1055 = vmatprep.subr.mxu0 0.0
      %1056 = vmatpush1.msra.mxu0 0.0
      %1057 = vmatprep.subr.mxu0 0.0
      %1058 = vmatpush1.msra.mxu0 0.0
      %1059 = vmatprep.subr.mxu0 0.0
      %1060 = vmatpush1.msra.mxu0 0.0
      %1061 = vmatprep.subr.mxu0 0.0
      %1062 = vmatpush1.msra.mxu0 0.0
      %1063 = vmatprep.subr.mxu0 0.0
      %1064 = vmatpush1.msra.mxu0 0.0
      %1065 = vmatprep.subr.mxu0 0.0
      %1066 = vmatpush1.msra.mxu0 0.0
      %1067 = vmatprep.subr.mxu0 0.0
      %1068 = vmatpush1.msra.mxu0 0.0
      %1069 = vmatprep.subr.mxu0 0.0
      %1070 = vmatpush1.msra.mxu0 0.0
      %1071 = vmatprep.subr.mxu0 0.0
      %1072 = vmatpush1.msra.mxu0 0.0
      %1073 = vmatprep.subr.mxu0 0.0
      %1074 = vmatpush1.msra.mxu0 0.0
      %1075 = vmatprep.subr.mxu0 0.0
      %1076 = vmatpush1.msra.mxu0 0.0
      %1077 = vmatprep.subr.mxu0 0.0
      %1078 = vmatpush1.msra.mxu0 0.0
      %1079 = vmatprep.subr.mxu0 0.0
      %1080 = vmatpush1.msra.mxu0 0.0
      %1081 = vmatprep.subr.mxu0 0.0
      %1082 = vmatpush1.msra.mxu0 0.0
      %1083 = vmatprep.subr.mxu0 0.0
      %1084 = vmatpush1.msra.mxu0 0.0
      %1085 = vmatprep.subr.mxu0 0.0
      %1086 = vmatpush1.msra.mxu0 0.0
      %1087 = vmatprep.subr.mxu0 0.0
      %1088 = vmatpush1.msra.mxu0 0.0
      %1089 = vmatprep.subr.mxu0 0.0
      %1090 = vmatpush1.msra.mxu0 0.0
      %1091 = vmatprep.subr.mxu0 0.0
      %1092 = vmatpush1.msra.mxu0 0.0
      %1093 = vmatprep.mubr.f32.mxu0 0.0
      %1094 = vmatmul.mubr.f32.gmra.mrb[0].mxu0 %v1006
      %v1095 = vpop.f32.mrb[0].mxu0
      %v1096 = vadd.f32 0.0, %v1095
      %v1097 = vpop.f32.mrb[0].mxu0
      %1098 = vmatprep.mubr.f32.mxu0 0.0
      %1099 = vmatmul.mubr.f32.gmra.mrb[0].mxu0 %v1009
      %v1100 = vpop.f32.mrb[0].mxu0
      %v1101 = vadd.f32 0.0, %v1100
      %v1102 = vpop.f32.mrb[0].mxu0
      %1103 = vmatprep.mubr.f32.mxu0 0.0
      %1104 = vmatmul.mubr.f32.gmra.mrb[0].mxu0 %v1012
      %v1105 = vpop.f32.mrb[0].mxu0
      %v1106 = vadd.f32 0.0, %v1105
      %v1107 = vpop.f32.mrb[0].mxu0
      %1108 = vmatprep.mubr.f32.mxu0 0.0
      %1109 = vmatmul.mubr.f32.gmra.mrb[0].mxu0 %v1015
      %v1110 = vpop.f32.mrb[0].mxu0
      %v1111 = vadd.f32 0.0, %v1110
      %v1112 = vpop.f32.mrb[0].mxu0
      %1113 = vmatprep.mubr.f32.mxu0 0.0
      %1114 = vmatmul.mubr.f32.gmra.mrb[0].mxu0 %v1018
      %v1115 = vpop.f32.mrb[0].mxu0
      %v1116 = vadd.f32 0.0, %v1115
      %v1117 = vpop.f32.mrb[0].mxu0
      %1118 = vmatprep.mubr.f32.mxu0 0.0
      %1119 = vmatmul.mubr.f32.gmra.mrb[0].mxu0 %v1021
      %v1120 = vpop.f32.mrb[0].mxu0
      %v1121 = vadd.f32 0.0, %v1120
      %v1122 = vpop.f32.mrb[0].mxu0
      %1123 = vmatprep.mubr.f32.mxu0 0.0
      %1124 = vmatmul.mubr.f32.gmra.mrb[0].mxu0 %v1024
      %v1125 = vpop.f32.mrb[0].mxu0
      %v1126 = vadd.f32 0.0, %v1125
      %v1127 = vpop.f32.mrb[0].mxu0
      %1128 = vmatprep.mubr.f32.mxu0 0.0
      %1129 = vmatmul.mubr.f32.gmra.mrb[0].mxu0 %v1027
      %v1130 = vpop.f32.mrb[0].mxu0
      %v1131 = vadd.f32 0.0, %v1130
      %v1132 = vpop.f32.mrb[0].mxu0
      %1133 = vdwg.mxu0
      %v1134 = vld [vmem:[%s5] sm:$0x1]
      %v1136 = vlaneseq
      %v1137 = vshrl.u32 %v1136, 7
      %v1138 = vsub.s32 0, %v1137
      %v1139 = vrot.slane %v1134, %v1138
      %v1141 = vmul.f32 %v1096, %v1139
      %v1142 = vmul.f32 %v1101, %v1139
      %v1143 = vmul.f32 %v1106, %v1139
      %v1144 = vmul.f32 %v1111, %v1139
      %v1145 = vmul.f32 %v1116, %v1139
      %v1146 = vmul.f32 %v1121, %v1139
      %v1147 = vmul.f32 %v1126, %v1139
      %v1148 = vmul.f32 %v1131, %v1139
      %v1149 = vld [vmem:[%s6] sm:$0x1]
      %v1151 = vlaneseq
      %v1152 = vshrl.u32 %v1151, 7
      %v1153 = vsub.s32 0, %v1152
      %v1154 = vrot.slane %v1149, %v1153
      %v1156 = vadd.f32 %v1141, %v1154
      %v1157 = vadd.f32 %v1142, %v1154
      %v1158 = vadd.f32 %v1143, %v1154
      %v1159 = vadd.f32 %v1144, %v1154
      %v1160 = vadd.f32 %v1145, %v1154
      %v1161 = vadd.f32 %v1146, %v1154
      %v1162 = vadd.f32 %v1147, %v1154
      %v1163 = vadd.f32 %v1148, %v1154
      %v1164 = vmax.f32 %v1156, 0.0
      %v1165 = vmax.f32 %v1157, 0.0
      %v1166 = vmax.f32 %v1158, 0.0
      %v1167 = vmax.f32 %v1159, 0.0
      %v1168 = vmax.f32 %v1160, 0.0
      %v1169 = vmax.f32 %v1161, 0.0
      %v1170 = vmax.f32 %v1162, 0.0
      %v1171 = vmax.f32 %v1163, 0.0
      %v1172 = vmin.f32 %v1164, 6.0
      %v1173 = vmin.f32 %v1165, 6.0
      %v1174 = vmin.f32 %v1166, 6.0
      %v1175 = vmin.f32 %v1167, 6.0
      %v1176 = vmin.f32 %v1168, 6.0
      %v1177 = vmin.f32 %v1169, 6.0
      %v1178 = vmin.f32 %v1170, 6.0
      %v1179 = vmin.f32 %v1171, 6.0
      %vm1180 = vcmask 523264
      %1181 = vst.msk [vmem:[#allocation2] sm:$0xff] %vm1180, 0.0
      %vm1182 = vcmask 517120
      %1183 = vst.msk [vmem:[#allocation2 + $0x8] sm:$0x3] %vm1182, 0.0
      %1184 = vst.msk [vmem:[#allocation2 + $0x10] sm:$0xff] %vm1180, 0.0
      %1185 = vst.msk [vmem:[#allocation2 + $0x18] sm:$0x3] %vm1182, 0.0
      %1186 = vst.msk [vmem:[#allocation2 + $0x20] sm:$0xff] %vm1180, 0.0
      %1187 = vst.msk [vmem:[#allocation2 + $0x28] sm:$0x3] %vm1182, 0.0
      %1188 = vst.msk [vmem:[#allocation2 + $0x30] sm:$0xff] %vm1180, 0.0
      %1189 = vst.msk [vmem:[#allocation2 + $0x38] sm:$0x3] %vm1182, 0.0
      %1190 = vst.msk [vmem:[#allocation2 + $0x40] sm:$0xff] %vm1180, 0.0
      %1191 = vst.msk [vmem:[#allocation2 + $0x48] sm:$0x3] %vm1182, 0.0
      %1192 = vst.msk [vmem:[#allocation2 + $0x50] sm:$0xff] %vm1180, 0.0
      %1193 = vst.msk [vmem:[#allocation2 + $0x58] sm:$0x3] %vm1182, 0.0
      %1194 = vst.msk [vmem:[#allocation2 + $0x60] sm:$0xff] %vm1180, 0.0
      %1195 = vst.msk [vmem:[#allocation2 + $0x68] sm:$0x3] %vm1182, 0.0
      %1196 = vst.msk [vmem:[#allocation2 + $0x70] sm:$0xff] %vm1180, 0.0
      %1197 = vst.msk [vmem:[#allocation2 + $0x78] sm:$0x3] %vm1182, 0.0
      %1198 = vst.msk [vmem:[#allocation2 + $0x80] sm:$0xff] %vm1180, 0.0
      %1199 = vst.msk [vmem:[#allocation2 + $0x88] sm:$0x3] %vm1182, 0.0
      %1200 = vst.msk [vmem:[#allocation2 + $0x90] sm:$0xff] %vm1180, 0.0
      %1201 = vst.msk [vmem:[#allocation2 + $0x98] sm:$0x3] %vm1182, 0.0
      %s1202 = scalar_lea.vmem [#allocation2], 16
      %1203 = vst.msk [vmem:[%s1202 + $0x1] sm:$0xff] %vm1180, %v1172
      %1204 = vst.msk [vmem:[%s1202 + $0x11] sm:$0xff] %vm1180, %v1173
      %1205 = vst.msk [vmem:[%s1202 + $0x21] sm:$0xff] %vm1180, %v1174
      %1206 = vst.msk [vmem:[%s1202 + $0x31] sm:$0xff] %vm1180, %v1175
      %1207 = vst.msk [vmem:[%s1202 + $0x41] sm:$0xff] %vm1180, %v1176
      %1208 = vst.msk [vmem:[%s1202 + $0x51] sm:$0xff] %vm1180, %v1177
      %1209 = vst.msk [vmem:[%s1202 + $0x61] sm:$0xff] %vm1180, %v1178
      %1210 = vst.msk [vmem:[%s1202 + $0x71] sm:$0xff] %vm1180, %v1179
      %v1211 = vld [vmem:[%s7] sm:$0x7]
      %v1212 = vld [vmem:[%s7 + $0x4] sm:$0x7]
      %v1213 = vld [vmem:[%s7 + $0x8] sm:$0x7]
      %v1214 = vld [vmem:[#allocation2] sm:$0xff]
      %v1215 = vld [vmem:[#allocation2 + $0x10] sm:$0xff]
      %v1216 = vld [vmem:[#allocation2 + $0x20] sm:$0xff]
      %v1217 = vld [vmem:[#allocation2 + $0x30] sm:$0xff]
      %v1218 = vld [vmem:[#allocation2 + $0x40] sm:$0xff]
      %v1219 = vld [vmem:[#allocation2 + $0x50] sm:$0xff]
      %v1220 = vld [vmem:[#allocation2 + $0x60] sm:$0xff]
      %v1221 = vld [vmem:[#allocation2 + $0x70] sm:$0xff]
      %v1222 = vlaneseq
      %v1223 = vshrl.u32 %v1222, 7
      %v1224 = vsub.s32 0, %v1223
      %v1225 = vrot.slane %v1211, %v1224
      %v1226 = vmul.f32 %v1214, %v1225
      %v1227 = vmul.f32 %v1215, %v1225
      %v1228 = vmul.f32 %v1216, %v1225
      %v1229 = vmul.f32 %v1217, %v1225
      %v1230 = vmul.f32 %v1218, %v1225
      %v1231 = vmul.f32 %v1219, %v1225
      %v1232 = vmul.f32 %v1220, %v1225
      %v1233 = vmul.f32 %v1221, %v1225
      %v1234 = vadd.f32 %v1226, 0.0
      %v1235 = vadd.f32 %v1227, 0.0
      %v1236 = vadd.f32 %v1228, 0.0
      %v1237 = vadd.f32 %v1229, 0.0
      %v1238 = vadd.f32 %v1230, 0.0
      %v1239 = vadd.f32 %v1231, 0.0
      %v1240 = vadd.f32 %v1232, 0.0
      %v1241 = vadd.f32 %v1233, 0.0
      %v1242 = vld [vmem:[#allocation2 + $0x1] sm:$0xff]
      %v1243 = vld [vmem:[#allocation2 + $0x11] sm:$0xff]
      %v1244 = vld [vmem:[#allocation2 + $0x21] sm:$0xff]
      %v1245 = vld [vmem:[#allocation2 + $0x31] sm:$0xff]
      %v1246 = vld [vmem:[#allocation2 + $0x41] sm:$0xff]
      %v1247 = vld [vmem:[#allocation2 + $0x51] sm:$0xff]
      %v1248 = vld [vmem:[#allocation2 + $0x61] sm:$0xff]
      %v1249 = vld [vmem:[#allocation2 + $0x71] sm:$0xff]
      %v1250 = vlaneseq
      %v1251 = vshrl.u32 %v1250, 7
      %v1252 = vsub.s32 1, %v1251
      %v1253 = vrot.slane %v1211, %v1252
      %v1254 = vmul.f32 %v1242, %v1253
      %v1255 = vmul.f32 %v1243, %v1253
      %v1256 = vmul.f32 %v1244, %v1253
      %v1257 = vmul.f32 %v1245, %v1253
      %v1258 = vmul.f32 %v1246, %v1253
      %v1259 = vmul.f32 %v1247, %v1253
      %v1260 = vmul.f32 %v1248, %v1253
      %v1261 = vmul.f32 %v1249, %v1253
      %v1262 = vadd.f32 %v1234, %v1254
      %v1263 = vadd.f32 %v1235, %v1255
      %v1264 = vadd.f32 %v1236, %v1256
      %v1265 = vadd.f32 %v1237, %v1257
      %v1266 = vadd.f32 %v1238, %v1258
      %v1267 = vadd.f32 %v1239, %v1259
      %v1268 = vadd.f32 %v1240, %v1260
      %v1269 = vadd.f32 %v1241, %v1261
      %v1270 = vld [vmem:[#allocation2 + $0x2] sm:$0xff]
      %v1271 = vld [vmem:[#allocation2 + $0x12] sm:$0xff]
      %v1272 = vld [vmem:[#allocation2 + $0x22] sm:$0xff]
      %v1273 = vld [vmem:[#allocation2 + $0x32] sm:$0xff]
      %v1274 = vld [vmem:[#allocation2 + $0x42] sm:$0xff]
      %v1275 = vld [vmem:[#allocation2 + $0x52] sm:$0xff]
      %v1276 = vld [vmem:[#allocation2 + $0x62] sm:$0xff]
      %v1277 = vld [vmem:[#allocation2 + $0x72] sm:$0xff]
      %v1278 = vlaneseq
      %v1279 = vshrl.u32 %v1278, 7
      %v1280 = vsub.s32 2, %v1279
      %v1281 = vrot.slane %v1211, %v1280
      %v1282 = vmul.f32 %v1270, %v1281
      %v1283 = vmul.f32 %v1271, %v1281
      %v1284 = vmul.f32 %v1272, %v1281
      %v1285 = vmul.f32 %v1273, %v1281
      %v1286 = vmul.f32 %v1274, %v1281
      %v1287 = vmul.f32 %v1275, %v1281
      %v1288 = vmul.f32 %v1276, %v1281
      %v1289 = vmul.f32 %v1277, %v1281
      %v1290 = vadd.f32 %v1262, %v1282
      %v1291 = vadd.f32 %v1263, %v1283
      %v1292 = vadd.f32 %v1264, %v1284
      %v1293 = vadd.f32 %v1265, %v1285
      %v1294 = vadd.f32 %v1266, %v1286
      %v1295 = vadd.f32 %v1267, %v1287
      %v1296 = vadd.f32 %v1268, %v1288
      %v1297 = vadd.f32 %v1269, %v1289
      %v1298 = vld [vmem:[%s1202] sm:$0xff]
      %v1299 = vld [vmem:[%s1202 + $0x10] sm:$0xff]
      %v1300 = vld [vmem:[%s1202 + $0x20] sm:$0xff]
      %v1301 = vld [vmem:[%s1202 + $0x30] sm:$0xff]
      %v1302 = vld [vmem:[%s1202 + $0x40] sm:$0xff]
      %v1303 = vld [vmem:[%s1202 + $0x50] sm:$0xff]
      %v1304 = vld [vmem:[%s1202 + $0x60] sm:$0xff]
      %v1305 = vld [vmem:[%s1202 + $0x70] sm:$0xff]
      %v1306 = vlaneseq
      %v1307 = vshrl.u32 %v1306, 7
      %v1308 = vsub.s32 0, %v1307
      %v1309 = vrot.slane %v1212, %v1308
      %v1310 = vmul.f32 %v1298, %v1309
      %v1311 = vmul.f32 %v1299, %v1309
      %v1312 = vmul.f32 %v1300, %v1309
      %v1313 = vmul.f32 %v1301, %v1309
      %v1314 = vmul.f32 %v1302, %v1309
      %v1315 = vmul.f32 %v1303, %v1309
      %v1316 = vmul.f32 %v1304, %v1309
      %v1317 = vmul.f32 %v1305, %v1309
      %v1318 = vadd.f32 %v1290, %v1310
      %v1319 = vadd.f32 %v1291, %v1311
      %v1320 = vadd.f32 %v1292, %v1312
      %v1321 = vadd.f32 %v1293, %v1313
      %v1322 = vadd.f32 %v1294, %v1314
      %v1323 = vadd.f32 %v1295, %v1315
      %v1324 = vadd.f32 %v1296, %v1316
      %v1325 = vadd.f32 %v1297, %v1317
      %v1326 = vld [vmem:[%s1202 + $0x1] sm:$0xff]
      %v1327 = vld [vmem:[%s1202 + $0x11] sm:$0xff]
      %v1328 = vld [vmem:[%s1202 + $0x21] sm:$0xff]
      %v1329 = vld [vmem:[%s1202 + $0x31] sm:$0xff]
      %v1330 = vld [vmem:[%s1202 + $0x41] sm:$0xff]
      %v1331 = vld [vmem:[%s1202 + $0x51] sm:$0xff]
      %v1332 = vld [vmem:[%s1202 + $0x61] sm:$0xff]
      %v1333 = vld [vmem:[%s1202 + $0x71] sm:$0xff]
      %v1334 = vlaneseq
      %v1335 = vshrl.u32 %v1334, 7
      %v1336 = vsub.s32 1, %v1335
      %v1337 = vrot.slane %v1212, %v1336
      %v1338 = vmul.f32 %v1326, %v1337
      %v1339 = vmul.f32 %v1327, %v1337
      %v1340 = vmul.f32 %v1328, %v1337
      %v1341 = vmul.f32 %v1329, %v1337
      %v1342 = vmul.f32 %v1330, %v1337
      %v1343 = vmul.f32 %v1331, %v1337
      %v1344 = vmul.f32 %v1332, %v1337
      %v1345 = vmul.f32 %v1333, %v1337
      %v1346 = vadd.f32 %v1318, %v1338
      %v1347 = vadd.f32 %v1319, %v1339
      %v1348 = vadd.f32 %v1320, %v1340
      %v1349 = vadd.f32 %v1321, %v1341
      %v1350 = vadd.f32 %v1322, %v1342
      %v1351 = vadd.f32 %v1323, %v1343
      %v1352 = vadd.f32 %v1324, %v1344
      %v1353 = vadd.f32 %v1325, %v1345
      %v1354 = vld [vmem:[%s1202 + $0x2] sm:$0xff]
      %v1355 = vld [vmem:[%s1202 + $0x12] sm:$0xff]
      %v1356 = vld [vmem:[%s1202 + $0x22] sm:$0xff]
      %v1357 = vld [vmem:[%s1202 + $0x32] sm:$0xff]
      %v1358 = vld [vmem:[%s1202 + $0x42] sm:$0xff]
      %v1359 = vld [vmem:[%s1202 + $0x52] sm:$0xff]
      %v1360 = vld [vmem:[%s1202 + $0x62] sm:$0xff]
      %v1361 = vld [vmem:[%s1202 + $0x72] sm:$0xff]
      %v1362 = vlaneseq
      %v1363 = vshrl.u32 %v1362, 7
      %v1364 = vsub.s32 2, %v1363
      %v1365 = vrot.slane %v1212, %v1364
      %v1366 = vmul.f32 %v1354, %v1365
      %v1367 = vmul.f32 %v1355, %v1365
      %v1368 = vmul.f32 %v1356, %v1365
      %v1369 = vmul.f32 %v1357, %v1365
      %v1370 = vmul.f32 %v1358, %v1365
      %v1371 = vmul.f32 %v1359, %v1365
      %v1372 = vmul.f32 %v1360, %v1365
      %v1373 = vmul.f32 %v1361, %v1365
      %v1374 = vadd.f32 %v1346, %v1366
      %v1375 = vadd.f32 %v1347, %v1367
      %v1376 = vadd.f32 %v1348, %v1368
      %v1377 = vadd.f32 %v1349, %v1369
      %v1378 = vadd.f32 %v1350, %v1370
      %v1379 = vadd.f32 %v1351, %v1371
      %v1380 = vadd.f32 %v1352, %v1372
      %v1381 = vadd.f32 %v1353, %v1373
      %s1382 = scalar_lea.vmem [#allocation2], 32
      %v1383 = vld [vmem:[%s1382] sm:$0xff]
      %v1384 = vld [vmem:[%s1382 + $0x10] sm:$0xff]
      %v1385 = vld [vmem:[%s1382 + $0x20] sm:$0xff]
      %v1386 = vld [vmem:[%s1382 + $0x30] sm:$0xff]
      %v1387 = vld [vmem:[%s1382 + $0x40] sm:$0xff]
      %v1388 = vld [vmem:[%s1382 + $0x50] sm:$0xff]
      %v1389 = vld [vmem:[%s1382 + $0x60] sm:$0xff]
      %v1390 = vld [vmem:[%s1382 + $0x70] sm:$0xff]
      %v1391 = vlaneseq
      %v1392 = vshrl.u32 %v1391, 7
      %v1393 = vsub.s32 0, %v1392
      %v1394 = vrot.slane %v1213, %v1393
      %v1395 = vmul.f32 %v1383, %v1394
      %v1396 = vmul.f32 %v1384, %v1394
      %v1397 = vmul.f32 %v1385, %v1394
      %v1398 = vmul.f32 %v1386, %v1394
      %v1399 = vmul.f32 %v1387, %v1394
      %v1400 = vmul.f32 %v1388, %v1394
      %v1401 = vmul.f32 %v1389, %v1394
      %v1402 = vmul.f32 %v1390, %v1394
      %v1403 = vadd.f32 %v1374, %v1395
      %v1404 = vadd.f32 %v1375, %v1396
      %v1405 = vadd.f32 %v1376, %v1397
      %v1406 = vadd.f32 %v1377, %v1398
      %v1407 = vadd.f32 %v1378, %v1399
      %v1408 = vadd.f32 %v1379, %v1400
      %v1409 = vadd.f32 %v1380, %v1401
      %v1410 = vadd.f32 %v1381, %v1402
      %v1411 = vld [vmem:[%s1382 + $0x1] sm:$0xff]
      %v1412 = vld [vmem:[%s1382 + $0x11] sm:$0xff]
      %v1413 = vld [vmem:[%s1382 + $0x21] sm:$0xff]
      %v1414 = vld [vmem:[%s1382 + $0x31] sm:$0xff]
      %v1415 = vld [vmem:[%s1382 + $0x41] sm:$0xff]
      %v1416 = vld [vmem:[%s1382 + $0x51] sm:$0xff]
      %v1417 = vld [vmem:[%s1382 + $0x61] sm:$0xff]
      %v1418 = vld [vmem:[%s1382 + $0x71] sm:$0xff]
      %v1419 = vlaneseq
      %v1420 = vshrl.u32 %v1419, 7
      %v1421 = vsub.s32 1, %v1420
      %v1422 = vrot.slane %v1213, %v1421
      %v1423 = vmul.f32 %v1411, %v1422
      %v1424 = vmul.f32 %v1412, %v1422
      %v1425 = vmul.f32 %v1413, %v1422
      %v1426 = vmul.f32 %v1414, %v1422
      %v1427 = vmul.f32 %v1415, %v1422
      %v1428 = vmul.f32 %v1416, %v1422
      %v1429 = vmul.f32 %v1417, %v1422
      %v1430 = vmul.f32 %v1418, %v1422
      %v1431 = vadd.f32 %v1403, %v1423
      %v1432 = vadd.f32 %v1404, %v1424
      %v1433 = vadd.f32 %v1405, %v1425
      %v1434 = vadd.f32 %v1406, %v1426
      %v1435 = vadd.f32 %v1407, %v1427
      %v1436 = vadd.f32 %v1408, %v1428
      %v1437 = vadd.f32 %v1409, %v1429
      %v1438 = vadd.f32 %v1410, %v1430
      %v1439 = vld [vmem:[%s1382 + $0x2] sm:$0xff]
      %v1440 = vld [vmem:[%s1382 + $0x12] sm:$0xff]
      %v1441 = vld [vmem:[%s1382 + $0x22] sm:$0xff]
      %v1442 = vld [vmem:[%s1382 + $0x32] sm:$0xff]
      %v1443 = vld [vmem:[%s1382 + $0x42] sm:$0xff]
      %v1444 = vld [vmem:[%s1382 + $0x52] sm:$0xff]
      %v1445 = vld [vmem:[%s1382 + $0x62] sm:$0xff]
      %v1446 = vld [vmem:[%s1382 + $0x72] sm:$0xff]
      %v1447 = vlaneseq
      %v1448 = vshrl.u32 %v1447, 7
      %v1449 = vsub.s32 2, %v1448
      %v1450 = vrot.slane %v1213, %v1449
      %v1451 = vmul.f32 %v1439, %v1450
      %v1452 = vmul.f32 %v1440, %v1450
      %v1453 = vmul.f32 %v1441, %v1450
      %v1454 = vmul.f32 %v1442, %v1450
      %v1455 = vmul.f32 %v1443, %v1450
      %v1456 = vmul.f32 %v1444, %v1450
      %v1457 = vmul.f32 %v1445, %v1450
      %v1458 = vmul.f32 %v1446, %v1450
      %v1459 = vadd.f32 %v1431, %v1451
      %v1460 = vadd.f32 %v1432, %v1452
      %v1461 = vadd.f32 %v1433, %v1453
      %v1462 = vadd.f32 %v1434, %v1454
      %v1463 = vadd.f32 %v1435, %v1455
      %v1464 = vadd.f32 %v1436, %v1456
      %v1465 = vadd.f32 %v1437, %v1457
      %v1466 = vadd.f32 %v1438, %v1458
      %v1467 = vld [vmem:[%s8] sm:$0x1]
      %v1469 = vlaneseq
      %v1470 = vshrl.u32 %v1469, 7
      %v1471 = vsub.s32 0, %v1470
      %v1472 = vrot.slane %v1467, %v1471
      %v1474 = vmul.f32 %v1459, %v1472
      %v1475 = vmul.f32 %v1460, %v1472
      %v1476 = vmul.f32 %v1461, %v1472
      %v1477 = vmul.f32 %v1462, %v1472
      %v1478 = vmul.f32 %v1463, %v1472
      %v1479 = vmul.f32 %v1464, %v1472
      %v1480 = vmul.f32 %v1465, %v1472
      %v1481 = vmul.f32 %v1466, %v1472
      %v1482 = vld [vmem:[%s9] sm:$0x1]
      %v1484 = vlaneseq
      %v1485 = vshrl.u32 %v1484, 7
      %v1486 = vsub.s32 0, %v1485
      %v1487 = vrot.slane %v1482, %v1486
      %v1489 = vadd.f32 %v1474, %v1487
      %v1490 = vadd.f32 %v1475, %v1487
      %v1491 = vadd.f32 %v1476, %v1487
      %v1492 = vadd.f32 %v1477, %v1487
      %v1493 = vadd.f32 %v1478, %v1487
      %v1494 = vadd.f32 %v1479, %v1487
      %v1495 = vadd.f32 %v1480, %v1487
      %v1496 = vadd.f32 %v1481, %v1487
      %v1497 = vmax.f32 %v1489, 0.0
      %v1498 = vmax.f32 %v1490, 0.0
      %v1499 = vmax.f32 %v1491, 0.0
      %v1500 = vmax.f32 %v1492, 0.0
      %v1501 = vmax.f32 %v1493, 0.0
      %v1502 = vmax.f32 %v1494, 0.0
      %v1503 = vmax.f32 %v1495, 0.0
      %v1504 = vmax.f32 %v1496, 0.0
      %v1505 = vmin.f32 %v1497, 6.0
      %v1506 = vmin.f32 %v1498, 6.0
      %v1507 = vmin.f32 %v1499, 6.0
      %v1508 = vmin.f32 %v1500, 6.0
      %v1509 = vmin.f32 %v1501, 6.0
      %v1510 = vmin.f32 %v1502, 6.0
      %v1511 = vmin.f32 %v1503, 6.0
      %v1512 = vmin.f32 %v1504, 6.0
      %v1513 = vld [vmem:[%s10] sm:$0xff]
      %v1514 = vld [vmem:[%s10 + $0x8] sm:$0xff]
      %v1515 = vld [vmem:[%s10 + $0x10] sm:$0xff]
      %v1516 = vld [vmem:[%s10 + $0x18] sm:$0xff]
      %v1517 = vld [vmem:[%s10 + $0x20] sm:$0xff]
      %v1518 = vld [vmem:[%s10 + $0x28] sm:$0xff]
      %v1519 = vld [vmem:[%s10 + $0x30] sm:$0xff]
      %v1520 = vld [vmem:[%s10 + $0x38] sm:$0xff]
      %v1522 = vsel %vm1180, %v1505, 0
      %v1525 = vsel %vm1180, %v1506, 0
      %v1528 = vsel %vm1180, %v1507, 0
      %v1531 = vsel %vm1180, %v1508, 0
      %v1534 = vsel %vm1180, %v1509, 0
      %v1537 = vsel %vm1180, %v1510, 0
      %v1540 = vsel %vm1180, %v1511, 0
      %v1543 = vsel %vm1180, %v1512, 0
      %1545 = vmatprep.subr.mxu0 0.0
      %1546 = vmatpush1.msra.mxu0 %v1513
      %1547 = vmatprep.subr.mxu0 0.0
      %1548 = vmatpush1.msra.mxu0 %v1514
      %1549 = vmatprep.subr.mxu0 0.0
      %1550 = vmatpush1.msra.mxu0 %v1515
      %1551 = vmatprep.subr.mxu0 0.0
      %1552 = vmatpush1.msra.mxu0 %v1516
      %1553 = vmatprep.subr.mxu0 0.0
      %1554 = vmatpush1.msra.mxu0 %v1517
      %1555 = vmatprep.subr.mxu0 0.0
      %1556 = vmatpush1.msra.mxu0 %v1518
      %1557 = vmatprep.subr.mxu0 0.0
      %1558 = vmatpush1.msra.mxu0 %v1519
      %1559 = vmatprep.subr.mxu0 0.0
      %1560 = vmatpush1.msra.mxu0 %v1520
      %1561 = vmatprep.subr.mxu0 0.0
      %1562 = vmatpush1.msra.mxu0 0.0
      %1563 = vmatprep.subr.mxu0 0.0
      %1564 = vmatpush1.msra.mxu0 0.0
      %1565 = vmatprep.subr.mxu0 0.0
      %1566 = vmatpush1.msra.mxu0 0.0
      %1567 = vmatprep.subr.mxu0 0.0
      %1568 = vmatpush1.msra.mxu0 0.0
      %1569 = vmatprep.subr.mxu0 0.0
      %1570 = vmatpush1.msra.mxu0 0.0
      %1571 = vmatprep.subr.mxu0 0.0
      %1572 = vmatpush1.msra.mxu0 0.0
      %1573 = vmatprep.subr.mxu0 0.0
      %1574 = vmatpush1.msra.mxu0 0.0
      %1575 = vmatprep.subr.mxu0 0.0
      %1576 = vmatpush1.msra.mxu0 0.0
      %1577 = vmatprep.subr.mxu0 0.0
      %1578 = vmatpush1.msra.mxu0 0.0
      %1579 = vmatprep.subr.mxu0 0.0
      %1580 = vmatpush1.msra.mxu0 0.0
      %1581 = vmatprep.subr.mxu0 0.0
      %1582 = vmatpush1.msra.mxu0 0.0
      %1583 = vmatprep.subr.mxu0 0.0
      %1584 = vmatpush1.msra.mxu0 0.0
      %1585 = vmatprep.subr.mxu0 0.0
      %1586 = vmatpush1.msra.mxu0 0.0
      %1587 = vmatprep.subr.mxu0 0.0
      %1588 = vmatpush1.msra.mxu0 0.0
      %1589 = vmatprep.subr.mxu0 0.0
      %1590 = vmatpush1.msra.mxu0 0.0
      %1591 = vmatprep.subr.mxu0 0.0
      %1592 = vmatpush1.msra.mxu0 0.0
      %1593 = vmatprep.subr.mxu0 0.0
      %1594 = vmatpush1.msra.mxu0 0.0
      %1595 = vmatprep.subr.mxu0 0.0
      %1596 = vmatpush1.msra.mxu0 0.0
      %1597 = vmatprep.subr.mxu0 0.0
      %1598 = vmatpush1.msra.mxu0 0.0
      %1599 = vmatprep.subr.mxu0 0.0
      %1600 = vmatpush1.msra.mxu0 0.0
      %1601 = vmatprep.subr.mxu0 0.0
      %1602 = vmatpush1.msra.mxu0 0.0
      %1603 = vmatprep.subr.mxu0 0.0
      %1604 = vmatpush1.msra.mxu0 0.0
      %1605 = vmatprep.subr.mxu0 0.0
      %1606 = vmatpush1.msra.mxu0 0.0
      %1607 = vmatprep.subr.mxu0 0.0
      %1608 = vmatpush1.msra.mxu0 0.0
      %1609 = vmatprep.mubr.f32.mxu0 0.0
      %1610 = vmatmul.mubr.f32.gmra.mrb[0].mxu0 %v1522
      %v1611 = vpop.f32.mrb[0].mxu0
      %v1612 = vadd.f32 0.0, %v1611
      %v1613 = vpop.f32.mrb[0].mxu0
      %1614 = vmatprep.mubr.f32.mxu0 0.0
      %1615 = vmatmul.mubr.f32.gmra.mrb[0].mxu0 %v1525
      %v1616 = vpop.f32.mrb[0].mxu0
      %v1617 = vadd.f32 0.0, %v1616
      %v1618 = vpop.f32.mrb[0].mxu0
      %1619 = vmatprep.mubr.f32.mxu0 0.0
      %1620 = vmatmul.mubr.f32.gmra.mrb[0].mxu0 %v1528
      %v1621 = vpop.f32.mrb[0].mxu0
      %v1622 = vadd.f32 0.0, %v1621
      %v1623 = vpop.f32.mrb[0].mxu0
      %1624 = vmatprep.mubr.f32.mxu0 0.0
      %1625 = vmatmul.mubr.f32.gmra.mrb[0].mxu0 %v1531
      %v1626 = vpop.f32.mrb[0].mxu0
      %v1627 = vadd.f32 0.0, %v1626
      %v1628 = vpop.f32.mrb[0].mxu0
      %1629 = vmatprep.mubr.f32.mxu0 0.0
      %1630 = vmatmul.mubr.f32.gmra.mrb[0].mxu0 %v1534
      %v1631 = vpop.f32.mrb[0].mxu0
      %v1632 = vadd.f32 0.0, %v1631
      %v1633 = vpop.f32.mrb[0].mxu0
      %1634 = vmatprep.mubr.f32.mxu0 0.0
      %1635 = vmatmul.mubr.f32.gmra.mrb[0].mxu0 %v1537
      %v1636 = vpop.f32.mrb[0].mxu0
      %v1637 = vadd.f32 0.0, %v1636
      %v1638 = vpop.f32.mrb[0].mxu0
      %1639 = vmatprep.mubr.f32.mxu0 0.0
      %1640 = vmatmul.mubr.f32.gmra.mrb[0].mxu0 %v1540
      %v1641 = vpop.f32.mrb[0].mxu0
      %v1642 = vadd.f32 0.0, %v1641
      %v1643 = vpop.f32.mrb[0].mxu0
      %1644 = vmatprep.mubr.f32.mxu0 0.0
      %1645 = vmatmul.mubr.f32.gmra.mrb[0].mxu0 %v1543
      %v1646 = vpop.f32.mrb[0].mxu0
      %v1647 = vadd.f32 0.0, %v1646
      %v1648 = vpop.f32.mrb[0].mxu0
      %1649 = vdwg.mxu0
      %v1650 = vld [vmem:[%s11] sm:$0x1]
      %v1652 = vlaneseq
      %v1653 = vshrl.u32 %v1652, 7
      %v1654 = vsub.s32 0, %v1653
      %v1655 = vrot.slane %v1650, %v1654
      %v1657 = vmul.f32 %v1612, %v1655
      %v1658 = vmul.f32 %v1617, %v1655
      %v1659 = vmul.f32 %v1622, %v1655
      %v1660 = vmul.f32 %v1627, %v1655
      %v1661 = vmul.f32 %v1632, %v1655
      %v1662 = vmul.f32 %v1637, %v1655
      %v1663 = vmul.f32 %v1642, %v1655
      %v1664 = vmul.f32 %v1647, %v1655
      %v1665 = vld [vmem:[%s12] sm:$0x1]
      %v1667 = vlaneseq
      %v1668 = vshrl.u32 %v1667, 7
      %v1669 = vsub.s32 0, %v1668
      %v1670 = vrot.slane %v1665, %v1669
      %v1672 = vadd.f32 %v1657, %v1670
      %v1673 = vadd.f32 %v1658, %v1670
      %v1674 = vadd.f32 %v1659, %v1670
      %v1675 = vadd.f32 %v1660, %v1670
      %v1676 = vadd.f32 %v1661, %v1670
      %v1677 = vadd.f32 %v1662, %v1670
      %v1678 = vadd.f32 %v1663, %v1670
      %v1679 = vadd.f32 %v1664, %v1670
      %v1680 = vmax.f32 %v1672, 0.0
      %v1681 = vmax.f32 %v1673, 0.0
      %v1682 = vmax.f32 %v1674, 0.0
      %v1683 = vmax.f32 %v1675, 0.0
      %v1684 = vmax.f32 %v1676, 0.0
      %v1685 = vmax.f32 %v1677, 0.0
      %v1686 = vmax.f32 %v1678, 0.0
      %v1687 = vmax.f32 %v1679, 0.0
      %v1688 = vmin.f32 %v1680, 6.0
      %v1689 = vmin.f32 %v1681, 6.0
      %v1690 = vmin.f32 %v1682, 6.0
      %v1691 = vmin.f32 %v1683, 6.0
      %v1692 = vmin.f32 %v1684, 6.0
      %v1693 = vmin.f32 %v1685, 6.0
      %v1694 = vmin.f32 %v1686, 6.0
      %v1695 = vmin.f32 %v1687, 6.0
      %v1696 = vld [vmem:[%s13] sm:$0x1]
      %v1698 = vlaneseq
      %v1699 = vshrl.u32 %v1698, 7
      %v1700 = vsub.s32 0, %v1699
      %v1701 = vrot.slane %v1696, %v1700
      %v1703 = vmul.f32 %v1688, %v1701
      %v1704 = vmul.f32 %v1689, %v1701
      %v1705 = vmul.f32 %v1690, %v1701
      %v1706 = vmul.f32 %v1691, %v1701
      %v1707 = vmul.f32 %v1692, %v1701
      %v1708 = vmul.f32 %v1693, %v1701
      %v1709 = vmul.f32 %v1694, %v1701
      %v1710 = vmul.f32 %v1695, %v1701
      %v1711 = vsel %vm1180, %v1703, 0.0
      %1712 = vadd.xlane.f32.xlu0 %v1711
      %v1713 = vpop.xlane.xlu0 %1712
      %v1714 = vsel %vm1180, %v1704, 0.0
      %1715 = vadd.xlane.f32.xlu0 %v1714
      %v1716 = vpop.xlane.xlu0 %1715
      %v1717 = vsel %vm1180, %v1705, 0.0
      %1718 = vadd.xlane.f32.xlu0 %v1717
      %v1719 = vpop.xlane.xlu0 %1718
      %v1720 = vsel %vm1180, %v1706, 0.0
      %1721 = vadd.xlane.f32.xlu0 %v1720
      %v1722 = vpop.xlane.xlu0 %1721
      %v1723 = vsel %vm1180, %v1707, 0.0
      %1724 = vadd.xlane.f32.xlu0 %v1723
      %v1725 = vpop.xlane.xlu0 %1724
      %v1726 = vsel %vm1180, %v1708, 0.0
      %1727 = vadd.xlane.f32.xlu0 %v1726
      %v1728 = vpop.xlane.xlu0 %1727
      %v1729 = vsel %vm1180, %v1709, 0.0
      %1730 = vadd.xlane.f32.xlu0 %v1729
      %v1731 = vpop.xlane.xlu0 %1730
      %v1732 = vsel %vm1180, %v1710, 0.0
      %1733 = vadd.xlane.f32.xlu0 %v1732
      %v1734 = vpop.xlane.xlu0 %1733
      %v1735 = vld [vmem:[#allocation3] sm:$0x1]
      %v1737 = vlaneseq
      %v1738 = vshrl.u32 %v1737, 7
      %v1739 = vsub.s32 0, %v1738
      %v1740 = vrot.slane %v1735, %v1739
      %v1742 = vadd.f32 %v1713, %v1740
      %v1743 = vadd.f32 %v1716, %v1740
      %v1744 = vadd.f32 %v1719, %v1740
      %v1745 = vadd.f32 %v1722, %v1740
      %v1746 = vadd.f32 %v1725, %v1740
      %v1747 = vadd.f32 %v1728, %v1740
      %v1748 = vadd.f32 %v1731, %v1740
      %v1749 = vadd.f32 %v1734, %v1740
      %v1750 = vxor.u32 %v1742, 2147483648
      %v1751 = vxor.u32 %v1743, 2147483648
      %v1752 = vxor.u32 %v1744, 2147483648
      %v1753 = vxor.u32 %v1745, 2147483648
      %v1754 = vxor.u32 %v1746, 2147483648
      %v1755 = vxor.u32 %v1747, 2147483648
      %v1756 = vxor.u32 %v1748, 2147483648
      %v1757 = vxor.u32 %v1749, 2147483648
      %v1758 = vmul.f32 %v1750, 1.442695
      %v1759 = vpow.pop %v1758
      %v1760 = vmul.f32 %v1751, 1.442695
      %v1761 = vpow.pop %v1760
      %v1762 = vmul.f32 %v1752, 1.442695
      %v1763 = vpow.pop %v1762
      %v1764 = vmul.f32 %v1753, 1.442695
      %v1765 = vpow.pop %v1764
      %v1766 = vmul.f32 %v1754, 1.442695
      %v1767 = vpow.pop %v1766
      %v1768 = vmul.f32 %v1755, 1.442695
      %v1769 = vpow.pop %v1768
      %v1770 = vmul.f32 %v1756, 1.442695
      %v1771 = vpow.pop %v1770
      %v1772 = vmul.f32 %v1757, 1.442695
      %v1773 = vpow.pop %v1772
      %v1774 = vadd.f32 %v1759, 1.0
      %v1775 = vadd.f32 %v1761, 1.0
      %v1776 = vadd.f32 %v1763, 1.0
      %v1777 = vadd.f32 %v1765, 1.0
      %v1778 = vadd.f32 %v1767, 1.0
      %v1779 = vadd.f32 %v1769, 1.0
      %v1780 = vadd.f32 %v1771, 1.0
      %v1781 = vadd.f32 %v1773, 1.0
      %v1782 = vrcp.pop %v1774
      %v1783 = vmul.f32 1.0, %v1782
      %v1784 = vrcp.pop %v1775
      %v1785 = vmul.f32 1.0, %v1784
      %v1786 = vrcp.pop %v1776
      %v1787 = vmul.f32 1.0, %v1786
      %v1788 = vrcp.pop %v1777
      %v1789 = vmul.f32 1.0, %v1788
      %v1790 = vrcp.pop %v1778
      %v1791 = vmul.f32 1.0, %v1790
      %v1792 = vrcp.pop %v1779
      %v1793 = vmul.f32 1.0, %v1792
      %v1794 = vrcp.pop %v1780
      %v1795 = vmul.f32 1.0, %v1794
      %v1796 = vrcp.pop %v1781
      %v1797 = vmul.f32 1.0, %v1796
      %1799 = vset.pattern.permute.xlu0 0
      %1800 = vperm.xlu0 %1799, %v1783
      %v1801 = vpop.permute.xlu0 %1800
      %1804 = vset.pattern.permute.xlu0 0
      %1805 = vperm.xlu0 %1804, %v1785
      %v1806 = vpop.permute.xlu0 %1805
      %1809 = vset.pattern.permute.xlu0 0
      %1810 = vperm.xlu0 %1809, %v1787
      %v1811 = vpop.permute.xlu0 %1810
      %1814 = vset.pattern.permute.xlu0 0
      %1815 = vperm.xlu0 %1814, %v1789
      %v1816 = vpop.permute.xlu0 %1815
      %1819 = vset.pattern.permute.xlu0 0
      %1820 = vperm.xlu0 %1819, %v1791
      %v1821 = vpop.permute.xlu0 %1820
      %1824 = vset.pattern.permute.xlu0 0
      %1825 = vperm.xlu0 %1824, %v1793
      %v1826 = vpop.permute.xlu0 %1825
      %1829 = vset.pattern.permute.xlu0 0
      %1830 = vperm.xlu0 %1829, %v1795
      %v1831 = vpop.permute.xlu0 %1830
      %1834 = vset.pattern.permute.xlu0 0
      %1835 = vperm.xlu0 %1834, %v1797
      %v1836 = vpop.permute.xlu0 %1835
      %v1838 = vmul.f32 %v1688, %v1801
      %v1839 = vmul.f32 %v1689, %v1806
      %v1840 = vmul.f32 %v1690, %v1811
      %v1841 = vmul.f32 %v1691, %v1816
      %v1842 = vmul.f32 %v1692, %v1821
      %v1843 = vmul.f32 %v1693, %v1826
      %v1844 = vmul.f32 %v1694, %v1831
      %v1845 = vmul.f32 %v1695, %v1836
      %v1846 = vsel %vm1180, %v1838, 0.0
      %v1847 = vsel %vm1180, %v1839, 0.0
      %v1848 = vadd.f32 %v1846, %v1847
      %v1849 = vsel %vm1180, %v1840, 0.0
      %v1850 = vadd.f32 %v1848, %v1849
      %v1851 = vsel %vm1180, %v1841, 0.0
      %v1852 = vadd.f32 %v1850, %v1851
      %v1853 = vsel %vm1180, %v1842, 0.0
      %v1854 = vadd.f32 %v1852, %v1853
      %v1855 = vsel %vm1180, %v1843, 0.0
      %v1856 = vadd.f32 %v1854, %v1855
      %v1857 = vsel %vm1180, %v1844, 0.0
      %v1858 = vadd.f32 %v1856, %v1857
      %v1859 = vsel %vm1180, %v1845, 0.0
      %v1860 = vadd.f32 %v1858, %v1859
      %v1861 = vrot.slane %v1860, 4
      %v1862 = vadd.f32 %v1860, %v1861
      %v1863 = vrot.slane %v1862, 2
      %v1864 = vadd.f32 %v1862, %v1863
      %v1865 = vrot.slane %v1864, 1
      %v1866 = vadd.f32 %v1864, %v1865
      %v1867 = vrcp.pop 64.0
      %v1868 = vmul.f32 %v1866, %v1867
      %v1869 = vsel %vm1180, %v1838, -inf
      %v1870 = vsel %vm1180, %v1839, -inf
      %v1871 = vsel %vm1180, %v1840, -inf
      %v1872 = vsel %vm1180, %v1841, -inf
      %v1873 = vsel %vm1180, %v1842, -inf
      %v1874 = vmax.f32 %v1869, %v1873
      %v1875 = vsel %vm1180, %v1843, -inf
      %v1876 = vmax.f32 %v1870, %v1875
      %v1877 = vsel %vm1180, %v1844, -inf
      %v1878 = vmax.f32 %v1871, %v1877
      %v1879 = vsel %vm1180, %v1845, -inf
      %v1880 = vmax.f32 %v1872, %v1879
      %v1881 = vmax.f32 %v1874, %v1876
      %v1882 = vmax.f32 %v1878, %v1880
      %v1883 = vmax.f32 %v1881, %v1882
      %v1884 = vrot.slane %v1883, 4
      %v1885 = vmax.f32 %v1883, %v1884
      %v1886 = vrot.slane %v1885, 2
      %v1887 = vmax.f32 %v1885, %v1886
      %v1888 = vrot.slane %v1887, 1
      %v1889 = vmax.f32 %v1887, %v1888
      %vm1890 = vcmask 1040384
      %v1891 = vsel %vm1890, %v1868, %v1889
      %v1892 = vld [vmem:[%s15] sm:$0xff]
      %v1893 = vld [vmem:[%s15 + $0x8] sm:$0xff]
      %v1894 = vld [vmem:[%s15 + $0x10] sm:$0xff]
      %v1895 = vld [vmem:[%s15 + $0x18] sm:$0xff]
      %v1896 = vld [vmem:[%s15 + $0x20] sm:$0xff]
      %v1897 = vld [vmem:[%s15 + $0x28] sm:$0xff]
      %v1898 = vld [vmem:[%s15 + $0x30] sm:$0xff]
      %v1899 = vld [vmem:[%s15 + $0x38] sm:$0xff]
      %v1901 = vsel %vm1180, %v1891, 0
      %1903 = vmatprep.subr.mxu0 0.0
      %1904 = vmatpush1.msra.mxu0 %v1892
      %1905 = vmatprep.subr.mxu0 0.0
      %1906 = vmatpush1.msra.mxu0 %v1893
      %1907 = vmatprep.subr.mxu0 0.0
      %1908 = vmatpush1.msra.mxu0 %v1894
      %1909 = vmatprep.subr.mxu0 0.0
      %1910 = vmatpush1.msra.mxu0 %v1895
      %1911 = vmatprep.subr.mxu0 0.0
      %1912 = vmatpush1.msra.mxu0 %v1896
      %1913 = vmatprep.subr.mxu0 0.0
      %1914 = vmatpush1.msra.mxu0 %v1897
      %1915 = vmatprep.subr.mxu0 0.0
      %1916 = vmatpush1.msra.mxu0 %v1898
      %1917 = vmatprep.subr.mxu0 0.0
      %1918 = vmatpush1.msra.mxu0 %v1899
      %1919 = vmatprep.subr.mxu0 0.0
      %1920 = vmatpush1.msra.mxu0 0.0
      %1921 = vmatprep.subr.mxu0 0.0
      %1922 = vmatpush1.msra.mxu0 0.0
      %1923 = vmatprep.subr.mxu0 0.0
      %1924 = vmatpush1.msra.mxu0 0.0
      %1925 = vmatprep.subr.mxu0 0.0
      %1926 = vmatpush1.msra.mxu0 0.0
      %1927 = vmatprep.subr.mxu0 0.0
      %1928 = vmatpush1.msra.mxu0 0.0
      %1929 = vmatprep.subr.mxu0 0.0
      %1930 = vmatpush1.msra.mxu0 0.0
      %1931 = vmatprep.subr.mxu0 0.0
      %1932 = vmatpush1.msra.mxu0 0.0
      %1933 = vmatprep.subr.mxu0 0.0
      %1934 = vmatpush1.msra.mxu0 0.0
      %1935 = vmatprep.subr.mxu0 0.0
      %1936 = vmatpush1.msra.mxu0 0.0
      %1937 = vmatprep.subr.mxu0 0.0
      %1938 = vmatpush1.msra.mxu0 0.0
      %1939 = vmatprep.subr.mxu0 0.0
      %1940 = vmatpush1.msra.mxu0 0.0
      %1941 = vmatprep.subr.mxu0 0.0
      %1942 = vmatpush1.msra.mxu0 0.0
      %1943 = vmatprep.subr.mxu0 0.0
      %1944 = vmatpush1.msra.mxu0 0.0
      %1945 = vmatprep.subr.mxu0 0.0
      %1946 = vmatpush1.msra.mxu0 0.0
      %1947 = vmatprep.subr.mxu0 0.0
      %1948 = vmatpush1.msra.mxu0 0.0
      %1949 = vmatprep.subr.mxu0 0.0
      %1950 = vmatpush1.msra.mxu0 0.0
      %1951 = vmatprep.subr.mxu0 0.0
      %1952 = vmatpush1.msra.mxu0 0.0
      %1953 = vmatprep.subr.mxu0 0.0
      %1954 = vmatpush1.msra.mxu0 0.0
      %1955 = vmatprep.subr.mxu0 0.0
      %1956 = vmatpush1.msra.mxu0 0.0
      %1957 = vmatprep.subr.mxu0 0.0
      %1958 = vmatpush1.msra.mxu0 0.0
      %1959 = vmatprep.subr.mxu0 0.0
      %1960 = vmatpush1.msra.mxu0 0.0
      %1961 = vmatprep.subr.mxu0 0.0
      %1962 = vmatpush1.msra.mxu0 0.0
      %1963 = vmatprep.subr.mxu0 0.0
      %1964 = vmatpush1.msra.mxu0 0.0
      %1965 = vmatprep.subr.mxu0 0.0
      %1966 = vmatpush1.msra.mxu0 0.0
      %1967 = vmatprep.mubr.f32.mxu0 0.0
      %1968 = vmatmul.mubr.f32.gmra.mrb[0].mxu0 %v1901
      %v1969 = vpop.f32.mrb[0].mxu0
      %v1970 = vadd.f32 0.0, %v1969
      %v1971 = vpop.f32.mrb[0].mxu0
      %1972 = vdwg.mxu0
      %v1973 = vmax.f32 %v1970, 0.0
      %v1974 = vld [vmem:[%s16] sm:$0xff]
      %vm1975 = vcmask 64512
      %v1977 = vsel %vm1975, %v1973, 0
      %1979 = vmatprep.subr.mxu0 0.0
      %1980 = vmatpush1.msra.mxu0 %v1974
      %1981 = vmatprep.subr.mxu0 0.0
      %1982 = vmatpush1.msra.mxu0 0.0
      %1983 = vmatprep.subr.mxu0 0.0
      %1984 = vmatpush1.msra.mxu0 0.0
      %1985 = vmatprep.subr.mxu0 0.0
      %1986 = vmatpush1.msra.mxu0 0.0
      %1987 = vmatprep.subr.mxu0 0.0
      %1988 = vmatpush1.msra.mxu0 0.0
      %1989 = vmatprep.subr.mxu0 0.0
      %1990 = vmatpush1.msra.mxu0 0.0
      %1991 = vmatprep.subr.mxu0 0.0
      %1992 = vmatpush1.msra.mxu0 0.0
      %1993 = vmatprep.subr.mxu0 0.0
      %1994 = vmatpush1.msra.mxu0 0.0
      %1995 = vmatprep.subr.mxu0 0.0
      %1996 = vmatpush1.msra.mxu0 0.0
      %1997 = vmatprep.subr.mxu0 0.0
      %1998 = vmatpush1.msra.mxu0 0.0
      %1999 = vmatprep.subr.mxu0 0.0
      %2000 = vmatpush1.msra.mxu0 0.0
      %2001 = vmatprep.subr.mxu0 0.0
      %2002 = vmatpush1.msra.mxu0 0.0
      %2003 = vmatprep.subr.mxu0 0.0
      %2004 = vmatpush1.msra.mxu0 0.0
      %2005 = vmatprep.subr.mxu0 0.0
      %2006 = vmatpush1.msra.mxu0 0.0
      %2007 = vmatprep.subr.mxu0 0.0
      %2008 = vmatpush1.msra.mxu0 0.0
      %2009 = vmatprep.subr.mxu0 0.0
      %2010 = vmatpush1.msra.mxu0 0.0
      %2011 = vmatprep.subr.mxu0 0.0
      %2012 = vmatpush1.msra.mxu0 0.0
      %2013 = vmatprep.subr.mxu0 0.0
      %2014 = vmatpush1.msra.mxu0 0.0
      %2015 = vmatprep.subr.mxu0 0.0
      %2016 = vmatpush1.msra.mxu0 0.0
      %2017 = vmatprep.subr.mxu0 0.0
      %2018 = vmatpush1.msra.mxu0 0.0
      %2019 = vmatprep.subr.mxu0 0.0
      %2020 = vmatpush1.msra.mxu0 0.0
      %2021 = vmatprep.subr.mxu0 0.0
      %2022 = vmatpush1.msra.mxu0 0.0
      %2023 = vmatprep.subr.mxu0 0.0
      %2024 = vmatpush1.msra.mxu0 0.0
      %2025 = vmatprep.subr.mxu0 0.0
      %2026 = vmatpush1.msra.mxu0 0.0
      %2027 = vmatprep.subr.mxu0 0.0
      %2028 = vmatpush1.msra.mxu0 0.0
      %2029 = vmatprep.subr.mxu0 0.0
      %2030 = vmatpush1.msra.mxu0 0.0
      %2031 = vmatprep.subr.mxu0 0.0
      %2032 = vmatpush1.msra.mxu0 0.0
      %2033 = vmatprep.subr.mxu0 0.0
      %2034 = vmatpush1.msra.mxu0 0.0
      %2035 = vmatprep.subr.mxu0 0.0
      %2036 = vmatpush1.msra.mxu0 0.0
      %2037 = vmatprep.subr.mxu0 0.0
      %2038 = vmatpush1.msra.mxu0 0.0
      %2039 = vmatprep.subr.mxu0 0.0
      %2040 = vmatpush1.msra.mxu0 0.0
      %2041 = vmatprep.subr.mxu0 0.0
      %2042 = vmatpush1.msra.mxu0 0.0
      %2043 = vmatprep.mubr.f32.mxu0 0.0
      %2044 = vmatmul.mubr.f32.gmra.mrb[0].mxu0 %v1977
      %v2045 = vpop.f32.mrb[0].mxu0
      %v2046 = vadd.f32 0.0, %v2045
      %v2047 = vpop.f32.mrb[0].mxu0
      %2048 = vdwg.mxu0
      %v2050 = vrot.slane %v2046, 1
      %v2052 = vadd.f32 %v2046, %v2050
      %v2053 = vxor.u32 %v2052, 2147483648
      %v2054 = vmul.f32 %v2053, 1.442695
      %v2055 = vpow.pop %v2054
      %v2056 = vadd.f32 %v2055, 1.0
      %v2057 = vrcp.pop %v2056
      %v2058 = vmul.f32 1.0, %v2057
      %v2059 = vlaneseq
      %v2060 = vshrl.u32 %v2059, 7
      %v2061 = vsub.s32 0, %v2060
      %v2062 = vrot.slane %v2058, %v2061
      %v2063 = vmul.f32 %v1838, %v2062
      %v2064 = vmul.f32 %v1839, %v2062
      %v2065 = vmul.f32 %v1840, %v2062
      %v2066 = vmul.f32 %v1841, %v2062
      %v2067 = vmul.f32 %v1842, %v2062
      %v2068 = vmul.f32 %v1843, %v2062
      %v2069 = vmul.f32 %v1844, %v2062
      %v2070 = vmul.f32 %v1845, %v2062
      %2071 = vst.msk [vmem:[%s550] sm:$0xff] %vm1180, %v2063
      %2072 = vst.msk [vmem:[%s550 + $0x8] sm:$0xff] %vm1180, %v2064
      %2073 = vst.msk [vmem:[%s550 + $0x10] sm:$0xff] %vm1180, %v2065
      %2074 = vst.msk [vmem:[%s550 + $0x18] sm:$0xff] %vm1180, %v2066
      %2075 = vst.msk [vmem:[%s550 + $0x20] sm:$0xff] %vm1180, %v2067
      %2076 = vst.msk [vmem:[%s550 + $0x28] sm:$0xff] %vm1180, %v2068
      %2077 = vst.msk [vmem:[%s550 + $0x30] sm:$0xff] %vm1180, %v2069
      %2078 = vst.msk [vmem:[%s550 + $0x38] sm:$0xff] %vm1180, %v2070
      %p2079 = scmp.lt.s32.totalorder %s30, 1
      %s2080 = scalar_select %p2079, %s30, 1
      %s2081 = smul.addr %s2080, 8
      %s2082 = smul.addr %s2081, 8
      %s2083 = scalar_lea.vmem %s17, %s2082
      // Predicated region
      $region89: #{lightweight_cnn_forward.5} parent=87 // pred_check
        %p2084 = pneg %p410
      $region90: #{lightweight_cnn_forward.5} parent=87 // pred_check_branch
        %2086 = sbr.rel (%p2084) target = $region92
      $region91: #{lightweight_cnn_forward.5} parent=87 // pred_region
        _
      $region92: #{lightweight_cnn_forward.5} parent=87 // pred_fallthru
        _
    $region88: #{lightweight_cnn_forward.5} parent=5 // pred_fallthru
      _
    %p2087 = scmp.le.s32.totalorder 2, %s25
    // Predicated region
    $region93: #{lightweight_cnn_forward.5} parent=5 // pred_check
      %p2088 = pneg %p2087
    $region94: #{lightweight_cnn_forward.5} parent=5 // pred_check_branch
      %2090 = sbr.rel (%p2088) target = $region96
    $region95: #{lightweight_cnn_forward.5} parent=5 // pred_region
      %s2091 = ssub.s32 %s25, 2
      // Predicated region
      $region97: #{lightweight_cnn_forward.5} parent=95 // pred_check
        %p2092 = pneg %p416
      $region98: #{lightweight_cnn_forward.5} parent=95 // pred_check_branch
        %2094 = sbr.rel (%p2092) target = $region100
      $region99: #{lightweight_cnn_forward.5} parent=95 // pred_region
        %p2095 = scmp.lt.s32.totalorder %s31, 1
        %s2096 = scalar_select %p2095, %s31, 1
        %s2097 = smul.addr %s2096, 8
        %s2098 = smul.addr %s2097, 8
        %s2099 = scalar_lea.vmem %s17, %s2098
      $region100: #{lightweight_cnn_forward.5} parent=95 // pred_fallthru
        _
    $region96: #{lightweight_cnn_forward.5} parent=5 // pred_fallthru
      _
  $region6: #{lightweight_cnn_forward.5} parent=0 // loop_footer
    %s29 = sadd.s32 1, %s25
  $region7: #{lightweight_cnn_forward.5} parent=0 // loop_footer_branch
    %24 = sbr.rel target = $region3
  $region8: #{lightweight_cnn_forward.5} parent=0 // loop_exit
    _

// kernel: lightweight_cnn_forward.6
$region0: #{lightweight_cnn_forward.6}
  #allocation0 [shape = 'u32[]', space=smem, size = 0x4, offset = 0x4, fixed_abs, tag = 'smem constant byte address 0x4 - core index']
  #allocation1 [shape = 'u32[144,128]{1,0:T(1,128)}', space=vmem, size = 0x12000, scoped, tag = 'internal scratch']
  #allocation2 [shape = 'f32[6,6,128]{2,1,0:T(8,128)}', space=vmem, size = 0x6000, scoped, tag = 'scratch operand']
  #allocation3 [shape = 'f32[1,1]{1,0:T(1,128)S(1)}', space=vmem, size = 0x200, scoped, tag = 'scoped memory for lightweight_cnn_forward.6']
  %s0 = inlined_call_operand.vmem [shape: f32[2,4,5,5,64], index: 0, kind: input, shape index: {}]
  %s1 = inlined_call_operand.vmem [shape: f32[3,3,64], index: 1, kind: input, shape index: {}]
  %s2 = inlined_call_operand.vmem [shape: f32[1,64], index: 2, kind: input, shape index: {}]
  %s3 = inlined_call_operand.vmem [shape: f32[1,64], index: 3, kind: input, shape index: {}]
  %s4 = inlined_call_operand.vmem [shape: f32[64,128], index: 4, kind: input, shape index: {}]
  %s5 = inlined_call_operand.vmem [shape: f32[1,128], index: 5, kind: input, shape index: {}]
  %s6 = inlined_call_operand.vmem [shape: f32[1,128], index: 6, kind: input, shape index: {}]
  %s7 = inlined_call_operand.vmem [shape: f32[3,3,128], index: 7, kind: input, shape index: {}]
  %s8 = inlined_call_operand.vmem [shape: f32[1,128], index: 8, kind: input, shape index: {}]
  %s9 = inlined_call_operand.vmem [shape: f32[1,128], index: 9, kind: input, shape index: {}]
  %s10 = inlined_call_operand.vmem [shape: f32[128,128], index: 10, kind: input, shape index: {}]
  %s11 = inlined_call_operand.vmem [shape: f32[1,128], index: 11, kind: input, shape index: {}]
  %s12 = inlined_call_operand.vmem [shape: f32[1,128], index: 12, kind: input, shape index: {}]
  %s13 = inlined_call_operand.vmem [shape: f32[1,128], index: 13, kind: input, shape index: {}]
  %s14 = inlined_call_operand.<no memory space> [shape: f32[1,1], index: 14, kind: input, shape index: {}]
  %s15 = inlined_call_operand.vmem [shape: f32[128,16], index: 15, kind: input, shape index: {}]
  %s16 = inlined_call_operand.vmem [shape: f32[16,128], index: 16, kind: input, shape index: {}]
  %s17 = inlined_call_operand.vmem [shape: f32[2,16,128], index: 17, kind: output, shape index: {}]
  %s18 = sld [smem:[#allocation0]]
  $region101: #{lightweight_cnn_forward.6} parent=0
    _
  %s20 = ssub.s32 1, %s18
  %s21 = scalar_select 0, %s20, %s18
  %v22 = vstv %s14
  %23 = vst [vmem:[#allocation3] sm:$0x1] %v22
  loop: start=0, step=1, limit=4
  $region2: #{lightweight_cnn_forward.6} parent=0 // loop_pre_header
    _
  $region3: #{lightweight_cnn_forward.6} parent=0 // loop_header
    %s25 = sphi 0, %s29
    %p26 = scmp.ge.s32.totalorder %s25, 4
    %s35 = sphi 0, %s37
    %s38 = sphi 0, %s35
    %s39 = sphi 0, %s38
    %s55 = sphi 0, %s39
    %s59 = sphi 0, %s59
    %s61 = sphi 0, %s59
    %s62 = sphi 0, %s61
    %s76 = sphi 0, %s62
    %s80 = sphi 0, %s80
    %s82 = sphi 0, %s80
    %s83 = sphi 0, %s82
    %s97 = sphi 0, %s83
    %s101 = sphi 0, %s101
    %s103 = sphi 0, %s101
    %s104 = sphi 0, %s103
    %s118 = sphi 0, %s104
    %s122 = sphi 0, %s122
    %s124 = sphi 0, %s122
    %s125 = sphi 0, %s124
    %s139 = sphi 0, %s125
    %s143 = sphi 0, %s143
    %s145 = sphi 0, %s143
    %s146 = sphi 0, %s145
    %s160 = sphi 0, %s146
    %s164 = sphi 0, %s164
    %s166 = sphi 0, %s164
    %s167 = sphi 0, %s166
    %s181 = sphi 0, %s167
    %s185 = sphi 0, %s185
    %s187 = sphi 0, %s185
    %s188 = sphi 0, %s187
    %s202 = sphi 0, %s188
    %s206 = sphi 0, %s206
    %s208 = sphi 0, %s206
    %s209 = sphi 0, %s208
    %s223 = sphi 0, %s209
    %s227 = sphi 0, %s227
    %s229 = sphi 0, %s227
    %s230 = sphi 0, %s229
    %s244 = sphi 0, %s230
    %s248 = sphi 0, %s248
    %s250 = sphi 0, %s248
    %s251 = sphi 0, %s250
    %s265 = sphi 0, %s251
    %s269 = sphi 0, %s269
    %s271 = sphi 0, %s269
    %s272 = sphi 0, %s271
    %s286 = sphi 0, %s272
    %s290 = sphi 0, %s290
    %s292 = sphi 0, %s290
    %s293 = sphi 0, %s292
    %s307 = sphi 0, %s293
    %s311 = sphi 0, %s311
    %s313 = sphi 0, %s311
    %s314 = sphi 0, %s313
    %s328 = sphi 0, %s314
    %s332 = sphi 0, %s332
    %s334 = sphi 0, %s332
    %s335 = sphi 0, %s334
    %s349 = sphi 0, %s335
    %s353 = sphi 0, %s353
    %s355 = sphi 0, %s353
    %s356 = sphi 0, %s355
    %s370 = sphi 0, %s356
    %s374 = sphi 0, %s374
    %s376 = sphi 0, %s374
    %s377 = sphi 0, %s376
    %s391 = sphi 0, %s377
    %s397 = sphi 0, %s399
    %s400 = sphi 0, %s397
    %s401 = sphi 0, %s400
    %s417 = sphi 0, %s401
  $region4: #{lightweight_cnn_forward.6} parent=0 // loop_header_branch
    %28 = sbr.rel (%p26) target = $region8
  $region5: #{lightweight_cnn_forward.6} parent=0 // loop_body
    %s30 = ssub.s32 %s25, 1
    %s31 = ssub.s32 %s25, 2
    %s32 = sadd.s32 %s25, 1
    %s33 = ssub.s32 %s25, %s32
    %p34 = scmp.eq.s32.totalorder %s33, 0
    %s36 = sadd.s32 %s35, 1
    %s37 = scalar_select %p34, %s35, %s36
    %p40 = pneg %p34
    %p41 = scmp.eq.s32.totalorder %s25, 1
    %p42 = por %p40, %p41
    %p43 = scmp.ne.s32.totalorder %s35, %s38
    %p44 = scmp.eq.s32.totalorder %s25, 0
    %p45 = por %p43, %p44
    %p46 = scmp.ne.s32.totalorder %s35, %s38
    %p47 = scmp.eq.s32.totalorder %s30, 1
    %p48 = por %p46, %p47
    %p49 = scmp.ne.s32.totalorder %s38, %s39
    %p50 = scmp.eq.s32.totalorder %s30, 0
    %p51 = por %p49, %p50
    %p52 = scmp.ne.s32.totalorder %s38, %s39
    %p53 = scmp.eq.s32.totalorder %s31, 1
    %p54 = por %p52, %p53
    %p56 = scmp.ne.s32.totalorder %s39, %s55
    %p57 = scmp.eq.s32.totalorder %s31, 0
    %p58 = por %p56, %p57
    %s60 = sadd.s32 %s59, 1
    %p63 = scmp.eq.s32.totalorder %s25, 1
    %p64 = scmp.ne.s32.totalorder %s59, %s61
    %p65 = scmp.eq.s32.totalorder %s25, 0
    %p66 = por %p64, %p65
    %p67 = scmp.ne.s32.totalorder %s59, %s61
    %p68 = scmp.eq.s32.totalorder %s30, 1
    %p69 = por %p67, %p68
    %p70 = scmp.ne.s32.totalorder %s61, %s62
    %p71 = scmp.eq.s32.totalorder %s30, 0
    %p72 = por %p70, %p71
    %p73 = scmp.ne.s32.totalorder %s61, %s62
    %p74 = scmp.eq.s32.totalorder %s31, 1
    %p75 = por %p73, %p74
    %p77 = scmp.ne.s32.totalorder %s62, %s76
    %p78 = scmp.eq.s32.totalorder %s31, 0
    %p79 = por %p77, %p78
    %s81 = sadd.s32 %s80, 1
    %p84 = scmp.eq.s32.totalorder %s25, 1
    %p85 = scmp.ne.s32.totalorder %s80, %s82
    %p86 = scmp.eq.s32.totalorder %s25, 0
    %p87 = por %p85, %p86
    %p88 = scmp.ne.s32.totalorder %s80, %s82
    %p89 = scmp.eq.s32.totalorder %s30, 1
    %p90 = por %p88, %p89
    %p91 = scmp.ne.s32.totalorder %s82, %s83
    %p92 = scmp.eq.s32.totalorder %s30, 0
    %p93 = por %p91, %p92
    %p94 = scmp.ne.s32.totalorder %s82, %s83
    %p95 = scmp.eq.s32.totalorder %s31, 1
    %p96 = por %p94, %p95
    %p98 = scmp.ne.s32.totalorder %s83, %s97
    %p99 = scmp.eq.s32.totalorder %s31, 0
    %p100 = por %p98, %p99
    %s102 = sadd.s32 %s101, 1
    %p105 = scmp.eq.s32.totalorder %s25, 1
    %p106 = scmp.ne.s32.totalorder %s101, %s103
    %p107 = scmp.eq.s32.totalorder %s25, 0
    %p108 = por %p106, %p107
    %p109 = scmp.ne.s32.totalorder %s101, %s103
    %p110 = scmp.eq.s32.totalorder %s30, 1
    %p111 = por %p109, %p110
    %p112 = scmp.ne.s32.totalorder %s103, %s104
    %p113 = scmp.eq.s32.totalorder %s30, 0
    %p114 = por %p112, %p113
    %p115 = scmp.ne.s32.totalorder %s103, %s104
    %p116 = scmp.eq.s32.totalorder %s31, 1
    %p117 = por %p115, %p116
    %p119 = scmp.ne.s32.totalorder %s104, %s118
    %p120 = scmp.eq.s32.totalorder %s31, 0
    %p121 = por %p119, %p120
    %s123 = sadd.s32 %s122, 1
    %p126 = scmp.eq.s32.totalorder %s25, 1
    %p127 = scmp.ne.s32.totalorder %s122, %s124
    %p128 = scmp.eq.s32.totalorder %s25, 0
    %p129 = por %p127, %p128
    %p130 = scmp.ne.s32.totalorder %s122, %s124
    %p131 = scmp.eq.s32.totalorder %s30, 1
    %p132 = por %p130, %p131
    %p133 = scmp.ne.s32.totalorder %s124, %s125
    %p134 = scmp.eq.s32.totalorder %s30, 0
    %p135 = por %p133, %p134
    %p136 = scmp.ne.s32.totalorder %s124, %s125
    %p137 = scmp.eq.s32.totalorder %s31, 1
    %p138 = por %p136, %p137
    %p140 = scmp.ne.s32.totalorder %s125, %s139
    %p141 = scmp.eq.s32.totalorder %s31, 0
    %p142 = por %p140, %p141
    %s144 = sadd.s32 %s143, 1
    %p147 = scmp.eq.s32.totalorder %s25, 1
    %p148 = scmp.ne.s32.totalorder %s143, %s145
    %p149 = scmp.eq.s32.totalorder %s25, 0
    %p150 = por %p148, %p149
    %p151 = scmp.ne.s32.totalorder %s143, %s145
    %p152 = scmp.eq.s32.totalorder %s30, 1
    %p153 = por %p151, %p152
    %p154 = scmp.ne.s32.totalorder %s145, %s146
    %p155 = scmp.eq.s32.totalorder %s30, 0
    %p156 = por %p154, %p155
    %p157 = scmp.ne.s32.totalorder %s145, %s146
    %p158 = scmp.eq.s32.totalorder %s31, 1
    %p159 = por %p157, %p158
    %p161 = scmp.ne.s32.totalorder %s146, %s160
    %p162 = scmp.eq.s32.totalorder %s31, 0
    %p163 = por %p161, %p162
    %s165 = sadd.s32 %s164, 1
    %p168 = scmp.eq.s32.totalorder %s25, 1
    %p169 = scmp.ne.s32.totalorder %s164, %s166
    %p170 = scmp.eq.s32.totalorder %s25, 0
    %p171 = por %p169, %p170
    %p172 = scmp.ne.s32.totalorder %s164, %s166
    %p173 = scmp.eq.s32.totalorder %s30, 1
    %p174 = por %p172, %p173
    %p175 = scmp.ne.s32.totalorder %s166, %s167
    %p176 = scmp.eq.s32.totalorder %s30, 0
    %p177 = por %p175, %p176
    %p178 = scmp.ne.s32.totalorder %s166, %s167
    %p179 = scmp.eq.s32.totalorder %s31, 1
    %p180 = por %p178, %p179
    %p182 = scmp.ne.s32.totalorder %s167, %s181
    %p183 = scmp.eq.s32.totalorder %s31, 0
    %p184 = por %p182, %p183
    %s186 = sadd.s32 %s185, 1
    %p189 = scmp.eq.s32.totalorder %s25, 1
    %p190 = scmp.ne.s32.totalorder %s185, %s187
    %p191 = scmp.eq.s32.totalorder %s25, 0
    %p192 = por %p190, %p191
    %p193 = scmp.ne.s32.totalorder %s185, %s187
    %p194 = scmp.eq.s32.totalorder %s30, 1
    %p195 = por %p193, %p194
    %p196 = scmp.ne.s32.totalorder %s187, %s188
    %p197 = scmp.eq.s32.totalorder %s30, 0
    %p198 = por %p196, %p197
    %p199 = scmp.ne.s32.totalorder %s187, %s188
    %p200 = scmp.eq.s32.totalorder %s31, 1
    %p201 = por %p199, %p200
    %p203 = scmp.ne.s32.totalorder %s188, %s202
    %p204 = scmp.eq.s32.totalorder %s31, 0
    %p205 = por %p203, %p204
    %s207 = sadd.s32 %s206, 1
    %p210 = scmp.eq.s32.totalorder %s25, 1
    %p211 = scmp.ne.s32.totalorder %s206, %s208
    %p212 = scmp.eq.s32.totalorder %s25, 0
    %p213 = por %p211, %p212
    %p214 = scmp.ne.s32.totalorder %s206, %s208
    %p215 = scmp.eq.s32.totalorder %s30, 1
    %p216 = por %p214, %p215
    %p217 = scmp.ne.s32.totalorder %s208, %s209
    %p218 = scmp.eq.s32.totalorder %s30, 0
    %p219 = por %p217, %p218
    %p220 = scmp.ne.s32.totalorder %s208, %s209
    %p221 = scmp.eq.s32.totalorder %s31, 1
    %p222 = por %p220, %p221
    %p224 = scmp.ne.s32.totalorder %s209, %s223
    %p225 = scmp.eq.s32.totalorder %s31, 0
    %p226 = por %p224, %p225
    %s228 = sadd.s32 %s227, 1
    %p231 = scmp.eq.s32.totalorder %s25, 1
    %p232 = scmp.ne.s32.totalorder %s227, %s229
    %p233 = scmp.eq.s32.totalorder %s25, 0
    %p234 = por %p232, %p233
    %p235 = scmp.ne.s32.totalorder %s227, %s229
    %p236 = scmp.eq.s32.totalorder %s30, 1
    %p237 = por %p235, %p236
    %p238 = scmp.ne.s32.totalorder %s229, %s230
    %p239 = scmp.eq.s32.totalorder %s30, 0
    %p240 = por %p238, %p239
    %p241 = scmp.ne.s32.totalorder %s229, %s230
    %p242 = scmp.eq.s32.totalorder %s31, 1
    %p243 = por %p241, %p242
    %p245 = scmp.ne.s32.totalorder %s230, %s244
    %p246 = scmp.eq.s32.totalorder %s31, 0
    %p247 = por %p245, %p246
    %s249 = sadd.s32 %s248, 1
    %p252 = scmp.eq.s32.totalorder %s25, 1
    %p253 = scmp.ne.s32.totalorder %s248, %s250
    %p254 = scmp.eq.s32.totalorder %s25, 0
    %p255 = por %p253, %p254
    %p256 = scmp.ne.s32.totalorder %s248, %s250
    %p257 = scmp.eq.s32.totalorder %s30, 1
    %p258 = por %p256, %p257
    %p259 = scmp.ne.s32.totalorder %s250, %s251
    %p260 = scmp.eq.s32.totalorder %s30, 0
    %p261 = por %p259, %p260
    %p262 = scmp.ne.s32.totalorder %s250, %s251
    %p263 = scmp.eq.s32.totalorder %s31, 1
    %p264 = por %p262, %p263
    %p266 = scmp.ne.s32.totalorder %s251, %s265
    %p267 = scmp.eq.s32.totalorder %s31, 0
    %p268 = por %p266, %p267
    %s270 = sadd.s32 %s269, 1
    %p273 = scmp.eq.s32.totalorder %s25, 1
    %p274 = scmp.ne.s32.totalorder %s269, %s271
    %p275 = scmp.eq.s32.totalorder %s25, 0
    %p276 = por %p274, %p275
    %p277 = scmp.ne.s32.totalorder %s269, %s271
    %p278 = scmp.eq.s32.totalorder %s30, 1
    %p279 = por %p277, %p278
    %p280 = scmp.ne.s32.totalorder %s271, %s272
    %p281 = scmp.eq.s32.totalorder %s30, 0
    %p282 = por %p280, %p281
    %p283 = scmp.ne.s32.totalorder %s271, %s272
    %p284 = scmp.eq.s32.totalorder %s31, 1
    %p285 = por %p283, %p284
    %p287 = scmp.ne.s32.totalorder %s272, %s286
    %p288 = scmp.eq.s32.totalorder %s31, 0
    %p289 = por %p287, %p288
    %s291 = sadd.s32 %s290, 1
    %p294 = scmp.eq.s32.totalorder %s25, 1
    %p295 = scmp.ne.s32.totalorder %s290, %s292
    %p296 = scmp.eq.s32.totalorder %s25, 0
    %p297 = por %p295, %p296
    %p298 = scmp.ne.s32.totalorder %s290, %s292
    %p299 = scmp.eq.s32.totalorder %s30, 1
    %p300 = por %p298, %p299
    %p301 = scmp.ne.s32.totalorder %s292, %s293
    %p302 = scmp.eq.s32.totalorder %s30, 0
    %p303 = por %p301, %p302
    %p304 = scmp.ne.s32.totalorder %s292, %s293
    %p305 = scmp.eq.s32.totalorder %s31, 1
    %p306 = por %p304, %p305
    %p308 = scmp.ne.s32.totalorder %s293, %s307
    %p309 = scmp.eq.s32.totalorder %s31, 0
    %p310 = por %p308, %p309
    %s312 = sadd.s32 %s311, 1
    %p315 = scmp.eq.s32.totalorder %s25, 1
    %p316 = scmp.ne.s32.totalorder %s311, %s313
    %p317 = scmp.eq.s32.totalorder %s25, 0
    %p318 = por %p316, %p317
    %p319 = scmp.ne.s32.totalorder %s311, %s313
    %p320 = scmp.eq.s32.totalorder %s30, 1
    %p321 = por %p319, %p320
    %p322 = scmp.ne.s32.totalorder %s313, %s314
    %p323 = scmp.eq.s32.totalorder %s30, 0
    %p324 = por %p322, %p323
    %p325 = scmp.ne.s32.totalorder %s313, %s314
    %p326 = scmp.eq.s32.totalorder %s31, 1
    %p327 = por %p325, %p326
    %p329 = scmp.ne.s32.totalorder %s314, %s328
    %p330 = scmp.eq.s32.totalorder %s31, 0
    %p331 = por %p329, %p330
    %s333 = sadd.s32 %s332, 1
    %p336 = scmp.eq.s32.totalorder %s25, 1
    %p337 = scmp.ne.s32.totalorder %s332, %s334
    %p338 = scmp.eq.s32.totalorder %s25, 0
    %p339 = por %p337, %p338
    %p340 = scmp.ne.s32.totalorder %s332, %s334
    %p341 = scmp.eq.s32.totalorder %s30, 1
    %p342 = por %p340, %p341
    %p343 = scmp.ne.s32.totalorder %s334, %s335
    %p344 = scmp.eq.s32.totalorder %s30, 0
    %p345 = por %p343, %p344
    %p346 = scmp.ne.s32.totalorder %s334, %s335
    %p347 = scmp.eq.s32.totalorder %s31, 1
    %p348 = por %p346, %p347
    %p350 = scmp.ne.s32.totalorder %s335, %s349
    %p351 = scmp.eq.s32.totalorder %s31, 0
    %p352 = por %p350, %p351
    %s354 = sadd.s32 %s353, 1
    %p357 = scmp.eq.s32.totalorder %s25, 1
    %p358 = scmp.ne.s32.totalorder %s353, %s355
    %p359 = scmp.eq.s32.totalorder %s25, 0
    %p360 = por %p358, %p359
    %p361 = scmp.ne.s32.totalorder %s353, %s355
    %p362 = scmp.eq.s32.totalorder %s30, 1
    %p363 = por %p361, %p362
    %p364 = scmp.ne.s32.totalorder %s355, %s356
    %p365 = scmp.eq.s32.totalorder %s30, 0
    %p366 = por %p364, %p365
    %p367 = scmp.ne.s32.totalorder %s355, %s356
    %p368 = scmp.eq.s32.totalorder %s31, 1
    %p369 = por %p367, %p368
    %p371 = scmp.ne.s32.totalorder %s356, %s370
    %p372 = scmp.eq.s32.totalorder %s31, 0
    %p373 = por %p371, %p372
    %s375 = sadd.s32 %s374, 1
    %p378 = scmp.eq.s32.totalorder %s25, 1
    %p379 = scmp.ne.s32.totalorder %s374, %s376
    %p380 = scmp.eq.s32.totalorder %s25, 0
    %p381 = por %p379, %p380
    %p382 = scmp.ne.s32.totalorder %s374, %s376
    %p383 = scmp.eq.s32.totalorder %s30, 1
    %p384 = por %p382, %p383
    %p385 = scmp.ne.s32.totalorder %s376, %s377
    %p386 = scmp.eq.s32.totalorder %s30, 0
    %p387 = por %p385, %p386
    %p388 = scmp.ne.s32.totalorder %s376, %s377
    %p389 = scmp.eq.s32.totalorder %s31, 1
    %p390 = por %p388, %p389
    %p392 = scmp.ne.s32.totalorder %s377, %s391
    %p393 = scmp.eq.s32.totalorder %s31, 0
    %p394 = por %p392, %p393
    %s395 = ssub.s32 %s25, %s32
    %p396 = scmp.eq.s32.totalorder %s395, 0
    %s398 = sadd.s32 %s397, 1
    %s399 = scalar_select %p396, %s397, %s398
    %p402 = pneg %p396
    %p403 = scmp.eq.s32.totalorder %s25, 1
    %p404 = por %p402, %p403
    %p405 = scmp.ne.s32.totalorder %s397, %s400
    %p406 = scmp.eq.s32.totalorder %s25, 0
    %p407 = por %p405, %p406
    %p408 = scmp.ne.s32.totalorder %s397, %s400
    %p409 = scmp.eq.s32.totalorder %s30, 1
    %p410 = por %p408, %p409
    %p411 = scmp.ne.s32.totalorder %s400, %s401
    %p412 = scmp.eq.s32.totalorder %s30, 0
    %p413 = por %p411, %p412
    %p414 = scmp.ne.s32.totalorder %s400, %s401
    %p415 = scmp.eq.s32.totalorder %s31, 1
    %p416 = por %p414, %p415
    %p418 = scmp.ne.s32.totalorder %s401, %s417
    %p419 = scmp.eq.s32.totalorder %s31, 0
    %p420 = por %p418, %p419
    %p421 = scmp.le.s32.totalorder 1, %s25
    %p422 = scmp.lt.s32.totalorder %s25, 3
    %p423 = pnand %p421, %p422
    %p424 = pneg %p423
    // Predicated region
    $region9: #{lightweight_cnn_forward.6} parent=5 // pred_check
      _
    $region10: #{lightweight_cnn_forward.6} parent=5 // pred_check_branch
      %426 = sbr.rel (%p423) target = $region12
    $region11: #{lightweight_cnn_forward.6} parent=5 // pred_region
      %s427 = ssub.s32 %s25, 1
      // Predicated region
      $region13: #{lightweight_cnn_forward.6} parent=11 // pred_check
        %p428 = pneg %p72
      $region14: #{lightweight_cnn_forward.6} parent=11 // pred_check_branch
        %430 = sbr.rel (%p428) target = $region16
      $region15: #{lightweight_cnn_forward.6} parent=11 // pred_region
        _
      $region16: #{lightweight_cnn_forward.6} parent=11 // pred_fallthru
        _
      // Predicated region
      $region17: #{lightweight_cnn_forward.6} parent=11 // pred_check
        %p431 = pneg %p93
      $region18: #{lightweight_cnn_forward.6} parent=11 // pred_check_branch
        %433 = sbr.rel (%p431) target = $region20
      $region19: #{lightweight_cnn_forward.6} parent=11 // pred_region
        _
      $region20: #{lightweight_cnn_forward.6} parent=11 // pred_fallthru
        _
      // Predicated region
      $region21: #{lightweight_cnn_forward.6} parent=11 // pred_check
        %p434 = pneg %p114
      $region22: #{lightweight_cnn_forward.6} parent=11 // pred_check_branch
        %436 = sbr.rel (%p434) target = $region24
      $region23: #{lightweight_cnn_forward.6} parent=11 // pred_region
        _
      $region24: #{lightweight_cnn_forward.6} parent=11 // pred_fallthru
        _
      // Predicated region
      $region25: #{lightweight_cnn_forward.6} parent=11 // pred_check
        %p437 = pneg %p135
      $region26: #{lightweight_cnn_forward.6} parent=11 // pred_check_branch
        %439 = sbr.rel (%p437) target = $region28
      $region27: #{lightweight_cnn_forward.6} parent=11 // pred_region
        _
      $region28: #{lightweight_cnn_forward.6} parent=11 // pred_fallthru
        _
      // Predicated region
      $region29: #{lightweight_cnn_forward.6} parent=11 // pred_check
        %p440 = pneg %p156
      $region30: #{lightweight_cnn_forward.6} parent=11 // pred_check_branch
        %442 = sbr.rel (%p440) target = $region32
      $region31: #{lightweight_cnn_forward.6} parent=11 // pred_region
        _
      $region32: #{lightweight_cnn_forward.6} parent=11 // pred_fallthru
        _
      // Predicated region
      $region33: #{lightweight_cnn_forward.6} parent=11 // pred_check
        %p443 = pneg %p177
      $region34: #{lightweight_cnn_forward.6} parent=11 // pred_check_branch
        %445 = sbr.rel (%p443) target = $region36
      $region35: #{lightweight_cnn_forward.6} parent=11 // pred_region
        _
      $region36: #{lightweight_cnn_forward.6} parent=11 // pred_fallthru
        _
      // Predicated region
      $region37: #{lightweight_cnn_forward.6} parent=11 // pred_check
        %p446 = pneg %p198
      $region38: #{lightweight_cnn_forward.6} parent=11 // pred_check_branch
        %448 = sbr.rel (%p446) target = $region40
      $region39: #{lightweight_cnn_forward.6} parent=11 // pred_region
        _
      $region40: #{lightweight_cnn_forward.6} parent=11 // pred_fallthru
        _
      // Predicated region
      $region41: #{lightweight_cnn_forward.6} parent=11 // pred_check
        %p449 = pneg %p219
      $region42: #{lightweight_cnn_forward.6} parent=11 // pred_check_branch
        %451 = sbr.rel (%p449) target = $region44
      $region43: #{lightweight_cnn_forward.6} parent=11 // pred_region
        _
      $region44: #{lightweight_cnn_forward.6} parent=11 // pred_fallthru
        _
      // Predicated region
      $region45: #{lightweight_cnn_forward.6} parent=11 // pred_check
        %p452 = pneg %p240
      $region46: #{lightweight_cnn_forward.6} parent=11 // pred_check_branch
        %454 = sbr.rel (%p452) target = $region48
      $region47: #{lightweight_cnn_forward.6} parent=11 // pred_region
        _
      $region48: #{lightweight_cnn_forward.6} parent=11 // pred_fallthru
        _
      // Predicated region
      $region49: #{lightweight_cnn_forward.6} parent=11 // pred_check
        %p455 = pneg %p261
      $region50: #{lightweight_cnn_forward.6} parent=11 // pred_check_branch
        %457 = sbr.rel (%p455) target = $region52
      $region51: #{lightweight_cnn_forward.6} parent=11 // pred_region
        _
      $region52: #{lightweight_cnn_forward.6} parent=11 // pred_fallthru
        _
      // Predicated region
      $region53: #{lightweight_cnn_forward.6} parent=11 // pred_check
        %p458 = pneg %p282
      $region54: #{lightweight_cnn_forward.6} parent=11 // pred_check_branch
        %460 = sbr.rel (%p458) target = $region56
      $region55: #{lightweight_cnn_forward.6} parent=11 // pred_region
        _
      $region56: #{lightweight_cnn_forward.6} parent=11 // pred_fallthru
        _
      // Predicated region
      $region57: #{lightweight_cnn_forward.6} parent=11 // pred_check
        %p461 = pneg %p303
      $region58: #{lightweight_cnn_forward.6} parent=11 // pred_check_branch
        %463 = sbr.rel (%p461) target = $region60
      $region59: #{lightweight_cnn_forward.6} parent=11 // pred_region
        _
      $region60: #{lightweight_cnn_forward.6} parent=11 // pred_fallthru
        _
      // Predicated region
      $region61: #{lightweight_cnn_forward.6} parent=11 // pred_check
        %p464 = pneg %p324
      $region62: #{lightweight_cnn_forward.6} parent=11 // pred_check_branch
        %466 = sbr.rel (%p464) target = $region64
      $region63: #{lightweight_cnn_forward.6} parent=11 // pred_region
        _
      $region64: #{lightweight_cnn_forward.6} parent=11 // pred_fallthru
        _
      // Predicated region
      $region65: #{lightweight_cnn_forward.6} parent=11 // pred_check
        %p467 = pneg %p345
      $region66: #{lightweight_cnn_forward.6} parent=11 // pred_check_branch
        %469 = sbr.rel (%p467) target = $region68
      $region67: #{lightweight_cnn_forward.6} parent=11 // pred_region
        _
      $region68: #{lightweight_cnn_forward.6} parent=11 // pred_fallthru
        _
      // Predicated region
      $region69: #{lightweight_cnn_forward.6} parent=11 // pred_check
        %p470 = pneg %p366
      $region70: #{lightweight_cnn_forward.6} parent=11 // pred_check_branch
        %472 = sbr.rel (%p470) target = $region72
      $region71: #{lightweight_cnn_forward.6} parent=11 // pred_region
        _
      $region72: #{lightweight_cnn_forward.6} parent=11 // pred_fallthru
        _
      // Predicated region
      $region73: #{lightweight_cnn_forward.6} parent=11 // pred_check
        %p473 = pneg %p387
      $region74: #{lightweight_cnn_forward.6} parent=11 // pred_check_branch
        %475 = sbr.rel (%p473) target = $region76
      $region75: #{lightweight_cnn_forward.6} parent=11 // pred_region
        _
      $region76: #{lightweight_cnn_forward.6} parent=11 // pred_fallthru
        _
    $region12: #{lightweight_cnn_forward.6} parent=5 // pred_fallthru
      _
    %p476 = scmp.lt.s32.totalorder %s25, 2
    // Predicated region
    $region77: #{lightweight_cnn_forward.6} parent=5 // pred_check
      %p477 = pneg %p476
    $region78: #{lightweight_cnn_forward.6} parent=5 // pred_check_branch
      %479 = sbr.rel (%p477) target = $region80
    $region79: #{lightweight_cnn_forward.6} parent=5 // pred_region
      // Predicated region
      $region81: #{lightweight_cnn_forward.6} parent=79 // pred_check
        %p480 = pneg %p45
      $region82: #{lightweight_cnn_forward.6} parent=79 // pred_check_branch
        %482 = sbr.rel (%p480) target = $region84
      $region83: #{lightweight_cnn_forward.6} parent=79 // pred_region
        %p483 = scmp.lt.s32.totalorder %s25, 1
        %s484 = scalar_select %p483, %s25, 1
        %s485 = smul.addr %s484, 20
        %s486 = smul.addr %s485, 8
        %s487 = scalar_lea.vmem %s0, %s486
      $region84: #{lightweight_cnn_forward.6} parent=79 // pred_fallthru
        _
    $region80: #{lightweight_cnn_forward.6} parent=5 // pred_fallthru
      _
    %p488 = scmp.le.s32.totalorder 1, %s25
    %p489 = scmp.lt.s32.totalorder %s25, 3
    %p490 = pnand %p488, %p489
    %p491 = pneg %p490
    // Predicated region
    $region85: #{lightweight_cnn_forward.6} parent=5 // pred_check
      _
    $region86: #{lightweight_cnn_forward.6} parent=5 // pred_check_branch
      %493 = sbr.rel (%p490) target = $region88
    $region87: #{lightweight_cnn_forward.6} parent=5 // pred_region
      %s494 = ssub.s32 %s25, 1
      %p495 = scmp.lt.s32.totalorder %s30, 1
      %s496 = scalar_select %p495, %s30, 1
      %s497 = smul.addr %s496, 20
      %s498 = smul.addr %s497, 8
      %s499 = scalar_lea.vmem %s0, %s498
      %p500 = pneg %p51
      %p501 = pneg %p48
      %p502 = pneg %p72
      %p503 = pneg %p69
      %p504 = pneg %p93
      %p505 = pneg %p90
      %p506 = pneg %p114
      %p507 = pneg %p111
      %p508 = pneg %p135
      %p509 = pneg %p132
      %p510 = pneg %p156
      %p511 = pneg %p153
      %p512 = pneg %p177
      %p513 = pneg %p174
      %p514 = pneg %p198
      %p515 = pneg %p195
      %p516 = pneg %p219
      %p517 = pneg %p216
      %p518 = pneg %p240
      %p519 = pneg %p237
      %p520 = pneg %p261
      %p521 = pneg %p258
      %p522 = pneg %p282
      %p523 = pneg %p279
      %p524 = pneg %p303
      %p525 = pneg %p300
      %p526 = pneg %p324
      %p527 = pneg %p321
      %p528 = pneg %p345
      %p529 = pneg %p342
      %p530 = pneg %p366
      %p531 = pneg %p363
      %p532 = pneg %p387
      %p533 = pneg %p384
      %p534 = pneg %p413
      %p535 = pneg %p410
      %p536 = scmp.lt.s32.totalorder %s30, 1
      %s537 = scalar_select %p536, %s30, 1
      %s538 = smul.addr %s537, 2
      %s539 = smul.addr %s538, 8
      %s540 = scalar_lea.vmem %s17, %s539
      %p541 = scmp.lt.s32.totalorder %s30, 1
      %s542 = scalar_select %p541, %s30, 1
      %s543 = smul.addr %s542, 20
      %s544 = smul.addr %s543, 8
      %s545 = scalar_lea.vmem %s0, %s544
      %p546 = scmp.lt.s32.totalorder %s30, 1
      %s547 = scalar_select %p546, %s30, 1
      %s548 = smul.addr %s547, 2
      %s549 = smul.addr %s548, 8
      %s550 = scalar_lea.vmem %s17, %s549
      %v551 = vld [vmem:[%s545] sm:$0x1f]
      %v552 = vld [vmem:[%s545 + $0x8] sm:$0x1f]
      %v553 = vld [vmem:[%s545 + $0x10] sm:$0x1f]
      %v554 = vld [vmem:[%s545 + $0x18] sm:$0x1f]
      %v555 = vld [vmem:[%s545 + $0x20] sm:$0x1f]
      %v556 = vld [vmem:[%s545 + $0x28] sm:$0x1f]
      %v557 = vld [vmem:[%s545 + $0x30] sm:$0x1f]
      %v558 = vld [vmem:[%s545 + $0x38] sm:$0x1f]
      %v559 = vld [vmem:[%s545 + $0x40] sm:$0x1f]
      %v560 = vld [vmem:[%s545 + $0x48] sm:$0x1f]
      %v561 = vld [vmem:[%s545 + $0x50] sm:$0x1f]
      %v562 = vld [vmem:[%s545 + $0x58] sm:$0x1f]
      %v563 = vld [vmem:[%s545 + $0x60] sm:$0x1f]
      %v564 = vld [vmem:[%s545 + $0x68] sm:$0x1f]
      %v565 = vld [vmem:[%s545 + $0x78] sm:$0x1f]
      %v566 = vld [vmem:[%s545 + $0x80] sm:$0x1f]
      %v567 = vld [vmem:[%s545 + $0x88] sm:$0x1f]
      %v568 = vld [vmem:[%s545 + $0x90] sm:$0x1f]
      %v569 = vld [vmem:[%s1] sm:$0x7]
      %v570 = vld [vmem:[%s1 + $0x4] sm:$0x7]
      %v571 = vld [vmem:[%s1 + $0x8] sm:$0x7]
      %v572 = vlaneseq
      %v573 = vshrl.u32 %v572, 7
      %v574 = vsub.s32 0, %v573
      %v575 = vrot.slane %v569, %v574
      %v576 = vmul.f32 %v551, %v575
      %v577 = vmul.f32 %v552, %v575
      %v578 = vmul.f32 %v553, %v575
      %v579 = vmul.f32 %v554, %v575
      %v580 = vadd.f32 %v576, 0.0
      %v581 = vadd.f32 %v577, 0.0
      %v582 = vadd.f32 %v578, 0.0
      %v583 = vadd.f32 %v579, 0.0
      %v584 = vlaneseq
      %v585 = vshrl.u32 %v584, 7
      %v586 = vsub.s32 1, %v585
      %v587 = vrot.slane %v569, %v586
      %v588 = vmul.f32 %v556, %v587
      %v589 = vmul.f32 %v557, %v587
      %v590 = vmul.f32 %v558, %v587
      %v591 = vmul.f32 %v559, %v587
      %v592 = vadd.f32 %v580, %v588
      %v593 = vadd.f32 %v581, %v589
      %v594 = vadd.f32 %v582, %v590
      %v595 = vadd.f32 %v583, %v591
      %v596 = vlaneseq
      %v597 = vshrl.u32 %v596, 7
      %v598 = vsub.s32 2, %v597
      %v599 = vrot.slane %v569, %v598
      %v600 = vmul.f32 %v551, %v599
      %v601 = vmul.f32 %v552, %v599
      %v602 = vmul.f32 %v553, %v599
      %v603 = vmul.f32 %v554, %v599
      %v608 = vrot.slane %v600, 1
      %v609 = vrot.slane %v601, 1
      %v610 = vrot.slane %v602, 1
      %v611 = vrot.slane %v603, 1
      %v616 = vadd.f32 %v592, %v608
      %v617 = vadd.f32 %v593, %v609
      %v618 = vadd.f32 %v594, %v610
      %v619 = vadd.f32 %v595, %v611
      %v620 = vlaneseq
      %v621 = vshrl.u32 %v620, 7
      %v622 = vsub.s32 0, %v621
      %v623 = vrot.slane %v570, %v622
      %v624 = vmul.f32 %v561, %v623
      %v625 = vmul.f32 %v562, %v623
      %v626 = vmul.f32 %v563, %v623
      %v627 = vmul.f32 %v564, %v623
      %v628 = vadd.f32 %v616, %v624
      %v629 = vadd.f32 %v617, %v625
      %v630 = vadd.f32 %v618, %v626
      %v631 = vadd.f32 %v619, %v627
      %v632 = vlaneseq
      %v633 = vshrl.u32 %v632, 7
      %v634 = vsub.s32 1, %v633
      %v635 = vrot.slane %v570, %v634
      %v636 = vmul.f32 %v565, %v635
      %v637 = vmul.f32 %v566, %v635
      %v638 = vmul.f32 %v567, %v635
      %v639 = vmul.f32 %v568, %v635
      %v640 = vadd.f32 %v628, %v636
      %v641 = vadd.f32 %v629, %v637
      %v642 = vadd.f32 %v630, %v638
      %v643 = vadd.f32 %v631, %v639
      %v644 = vlaneseq
      %v645 = vshrl.u32 %v644, 7
      %v646 = vsub.s32 2, %v645
      %v647 = vrot.slane %v570, %v646
      %v648 = vmul.f32 %v561, %v647
      %v649 = vmul.f32 %v562, %v647
      %v650 = vmul.f32 %v563, %v647
      %v651 = vmul.f32 %v564, %v647
      %v656 = vrot.slane %v648, 1
      %v657 = vrot.slane %v649, 1
      %v658 = vrot.slane %v650, 1
      %v659 = vrot.slane %v651, 1
      %v664 = vadd.f32 %v640, %v656
      %v665 = vadd.f32 %v641, %v657
      %v666 = vadd.f32 %v642, %v658
      %v667 = vadd.f32 %v643, %v659
      %v668 = vlaneseq
      %v669 = vshrl.u32 %v668, 7
      %v670 = vsub.s32 0, %v669
      %v671 = vrot.slane %v571, %v670
      %v672 = vmul.f32 %v552, %v671
      %v673 = vmul.f32 %v553, %v671
      %v674 = vmul.f32 %v554, %v671
      %v675 = vmul.f32 %v555, %v671
      %v676 = vadd.f32 %v664, %v672
      %v677 = vadd.f32 %v665, %v673
      %v678 = vadd.f32 %v666, %v674
      %v679 = vadd.f32 %v667, %v675
      %v680 = vlaneseq
      %v681 = vshrl.u32 %v680, 7
      %v682 = vsub.s32 1, %v681
      %v683 = vrot.slane %v571, %v682
      %v684 = vmul.f32 %v557, %v683
      %v685 = vmul.f32 %v558, %v683
      %v686 = vmul.f32 %v559, %v683
      %v687 = vmul.f32 %v560, %v683
      %v688 = vadd.f32 %v676, %v684
      %v689 = vadd.f32 %v677, %v685
      %v690 = vadd.f32 %v678, %v686
      %v691 = vadd.f32 %v679, %v687
      %v692 = vlaneseq
      %v693 = vshrl.u32 %v692, 7
      %v694 = vsub.s32 2, %v693
      %v695 = vrot.slane %v571, %v694
      %v696 = vmul.f32 %v552, %v695
      %v697 = vmul.f32 %v553, %v695
      %v698 = vmul.f32 %v554, %v695
      %v699 = vmul.f32 %v555, %v695
      %v704 = vrot.slane %v696, 1
      %v705 = vrot.slane %v697, 1
      %v706 = vrot.slane %v698, 1
      %v707 = vrot.slane %v699, 1
      %v712 = vadd.f32 %v688, %v704
      %v713 = vadd.f32 %v689, %v705
      %v714 = vadd.f32 %v690, %v706
      %v715 = vadd.f32 %v691, %v707
      %v716 = vld [vmem:[%s2] sm:$0x1]
      %v718 = vlaneseq
      %v719 = vshrl.u32 %v718, 7
      %v720 = vsub.s32 0, %v719
      %v721 = vrot.slane %v716, %v720
      %v723 = vmul.f32 %v712, %v721
      %v724 = vmul.f32 %v713, %v721
      %v725 = vmul.f32 %v714, %v721
      %v726 = vmul.f32 %v715, %v721
      %v727 = vld [vmem:[%s3] sm:$0x1]
      %v729 = vlaneseq
      %v730 = vshrl.u32 %v729, 7
      %v731 = vsub.s32 0, %v730
      %v732 = vrot.slane %v727, %v731
      %v734 = vadd.f32 %v723, %v732
      %v735 = vadd.f32 %v724, %v732
      %v736 = vadd.f32 %v725, %v732
      %v737 = vadd.f32 %v726, %v732
      %v738 = vmax.f32 %v734, 0.0
      %v739 = vmax.f32 %v735, 0.0
      %v740 = vmax.f32 %v736, 0.0
      %v741 = vmax.f32 %v737, 0.0
      %v742 = vmin.f32 %v738, 6.0
      %v743 = vmin.f32 %v739, 6.0
      %v744 = vmin.f32 %v740, 6.0
      %v745 = vmin.f32 %v741, 6.0
      %v746 = vld [vmem:[%s4] sm:$0xff]
      %v747 = vld [vmem:[%s4 + $0x8] sm:$0xff]
      %v748 = vld [vmem:[%s4 + $0x10] sm:$0xff]
      %v749 = vld [vmem:[%s4 + $0x18] sm:$0xff]
      %v750 = vld [vmem:[%s4 + $0x20] sm:$0xff]
      %v751 = vld [vmem:[%s4 + $0x28] sm:$0xff]
      %v752 = vld [vmem:[%s4 + $0x30] sm:$0xff]
      %v753 = vld [vmem:[%s4 + $0x38] sm:$0xff]
      %v758 = vcombine.low %v742, %v743
      %v759 = vcombine.low %v744, %v745
      %vm760 = vcmask 523264
      %v761 = vsel %vm760, %v758, 0
      %v763 = vsel %vm760, %v759, 0
      %765 = vmatprep.subr.mxu0 0.0
      %766 = vmatpush1.msra.mxu0 %v746
      %767 = vmatprep.subr.mxu0 0.0
      %768 = vmatpush1.msra.mxu0 %v747
      %769 = vmatprep.subr.mxu0 0.0
      %770 = vmatpush1.msra.mxu0 %v748
      %771 = vmatprep.subr.mxu0 0.0
      %772 = vmatpush1.msra.mxu0 %v749
      %773 = vmatprep.subr.mxu0 0.0
      %774 = vmatpush1.msra.mxu0 %v750
      %775 = vmatprep.subr.mxu0 0.0
      %776 = vmatpush1.msra.mxu0 %v751
      %777 = vmatprep.subr.mxu0 0.0
      %778 = vmatpush1.msra.mxu0 %v752
      %779 = vmatprep.subr.mxu0 0.0
      %780 = vmatpush1.msra.mxu0 %v753
      %781 = vmatprep.subr.mxu0 0.0
      %782 = vmatpush1.msra.mxu0 0.0
      %783 = vmatprep.subr.mxu0 0.0
      %784 = vmatpush1.msra.mxu0 0.0
      %785 = vmatprep.subr.mxu0 0.0
      %786 = vmatpush1.msra.mxu0 0.0
      %787 = vmatprep.subr.mxu0 0.0
      %788 = vmatpush1.msra.mxu0 0.0
      %789 = vmatprep.subr.mxu0 0.0
      %790 = vmatpush1.msra.mxu0 0.0
      %791 = vmatprep.subr.mxu0 0.0
      %792 = vmatpush1.msra.mxu0 0.0
      %793 = vmatprep.subr.mxu0 0.0
      %794 = vmatpush1.msra.mxu0 0.0
      %795 = vmatprep.subr.mxu0 0.0
      %796 = vmatpush1.msra.mxu0 0.0
      %797 = vmatprep.subr.mxu0 0.0
      %798 = vmatpush1.msra.mxu0 0.0
      %799 = vmatprep.subr.mxu0 0.0
      %800 = vmatpush1.msra.mxu0 0.0
      %801 = vmatprep.subr.mxu0 0.0
      %802 = vmatpush1.msra.mxu0 0.0
      %803 = vmatprep.subr.mxu0 0.0
      %804 = vmatpush1.msra.mxu0 0.0
      %805 = vmatprep.subr.mxu0 0.0
      %806 = vmatpush1.msra.mxu0 0.0
      %807 = vmatprep.subr.mxu0 0.0
      %808 = vmatpush1.msra.mxu0 0.0
      %809 = vmatprep.subr.mxu0 0.0
      %810 = vmatpush1.msra.mxu0 0.0
      %811 = vmatprep.subr.mxu0 0.0
      %812 = vmatpush1.msra.mxu0 0.0
      %813 = vmatprep.subr.mxu0 0.0
      %814 = vmatpush1.msra.mxu0 0.0
      %815 = vmatprep.subr.mxu0 0.0
      %816 = vmatpush1.msra.mxu0 0.0
      %817 = vmatprep.subr.mxu0 0.0
      %818 = vmatpush1.msra.mxu0 0.0
      %819 = vmatprep.subr.mxu0 0.0
      %820 = vmatpush1.msra.mxu0 0.0
      %821 = vmatprep.subr.mxu0 0.0
      %822 = vmatpush1.msra.mxu0 0.0
      %823 = vmatprep.subr.mxu0 0.0
      %824 = vmatpush1.msra.mxu0 0.0
      %825 = vmatprep.subr.mxu0 0.0
      %826 = vmatpush1.msra.mxu0 0.0
      %827 = vmatprep.subr.mxu0 0.0
      %828 = vmatpush1.msra.mxu0 0.0
      %829 = vmatprep.mubr.f32.mxu0 0.0
      %830 = vmatmul.mubr.f32.gmra.mrb[0].mxu0 %v761
      %v831 = vpop.f32.mrb[0].mxu0
      %v832 = vadd.f32 0.0, %v831
      %v833 = vpop.f32.mrb[0].mxu0
      %834 = vmatprep.mubr.f32.mxu0 0.0
      %835 = vmatmul.mubr.f32.gmra.mrb[0].mxu0 %v763
      %v836 = vpop.f32.mrb[0].mxu0
      %v837 = vadd.f32 0.0, %v836
      %v838 = vpop.f32.mrb[0].mxu0
      %839 = vdwg.mxu0
      %v840 = vld [vmem:[%s5] sm:$0x1]
      %v842 = vlaneseq
      %v843 = vshrl.u32 %v842, 7
      %v844 = vsub.s32 0, %v843
      %v845 = vrot.slane %v840, %v844
      %v847 = vmul.f32 %v832, %v845
      %v848 = vmul.f32 %v837, %v845
      %v849 = vld [vmem:[%s6] sm:$0x1]
      %v851 = vlaneseq
      %v852 = vshrl.u32 %v851, 7
      %v853 = vsub.s32 0, %v852
      %v854 = vrot.slane %v849, %v853
      %v856 = vadd.f32 %v847, %v854
      %v857 = vadd.f32 %v848, %v854
      %v858 = vmax.f32 %v856, 0.0
      %v859 = vmax.f32 %v857, 0.0
      %v860 = vmin.f32 %v858, 6.0
      %v861 = vmin.f32 %v859, 6.0
      %862 = vst [vmem:[#allocation2] sm:$0x3f] 0.0
      %863 = vst [vmem:[#allocation2 + $0x8] sm:$0x3f] 0.0
      %864 = vst [vmem:[#allocation2 + $0x10] sm:$0x3f] 0.0
      %865 = vst [vmem:[#allocation2 + $0x18] sm:$0x3f] 0.0
      %866 = vst [vmem:[#allocation2 + $0x20] sm:$0x3f] 0.0
      %867 = vst [vmem:[#allocation2 + $0x28] sm:$0x3f] 0.0
      %v870 = vcombine.high %v860, %v860
      %v871 = vcombine.high %v861, %v861
      %s874 = scalar_lea.vmem [#allocation2], 8
      %875 = vst [vmem:[%s874 + $0x1] sm:$0xf] %v860
      %876 = vst [vmem:[%s874 + $0x9] sm:$0xf] %v870
      %877 = vst [vmem:[%s874 + $0x11] sm:$0xf] %v861
      %878 = vst [vmem:[%s874 + $0x19] sm:$0xf] %v871
      %v879 = vld [vmem:[%s7] sm:$0x7]
      %v880 = vld [vmem:[%s7 + $0x4] sm:$0x7]
      %v881 = vld [vmem:[%s7 + $0x8] sm:$0x7]
      %v882 = vld [vmem:[#allocation2] sm:$0xf]
      %v883 = vld [vmem:[#allocation2 + $0x8] sm:$0xf]
      %v884 = vld [vmem:[#allocation2 + $0x10] sm:$0xf]
      %v885 = vld [vmem:[#allocation2 + $0x18] sm:$0xf]
      %v886 = vlaneseq
      %v887 = vshrl.u32 %v886, 7
      %v888 = vsub.s32 0, %v887
      %v889 = vrot.slane %v879, %v888
      %v890 = vmul.f32 %v882, %v889
      %v891 = vmul.f32 %v883, %v889
      %v892 = vmul.f32 %v884, %v889
      %v893 = vmul.f32 %v885, %v889
      %v894 = vadd.f32 %v890, 0.0
      %v895 = vadd.f32 %v891, 0.0
      %v896 = vadd.f32 %v892, 0.0
      %v897 = vadd.f32 %v893, 0.0
      %v898 = vld [vmem:[#allocation2 + $0x1] sm:$0xf]
      %v899 = vld [vmem:[#allocation2 + $0x9] sm:$0xf]
      %v900 = vld [vmem:[#allocation2 + $0x11] sm:$0xf]
      %v901 = vld [vmem:[#allocation2 + $0x19] sm:$0xf]
      %v902 = vlaneseq
      %v903 = vshrl.u32 %v902, 7
      %v904 = vsub.s32 1, %v903
      %v905 = vrot.slane %v879, %v904
      %v906 = vmul.f32 %v898, %v905
      %v907 = vmul.f32 %v899, %v905
      %v908 = vmul.f32 %v900, %v905
      %v909 = vmul.f32 %v901, %v905
      %v910 = vadd.f32 %v894, %v906
      %v911 = vadd.f32 %v895, %v907
      %v912 = vadd.f32 %v896, %v908
      %v913 = vadd.f32 %v897, %v909
      %v914 = vld [vmem:[#allocation2 + $0x2] sm:$0xf]
      %v915 = vld [vmem:[#allocation2 + $0xa] sm:$0xf]
      %v916 = vld [vmem:[#allocation2 + $0x12] sm:$0xf]
      %v917 = vld [vmem:[#allocation2 + $0x1a] sm:$0xf]
      %v918 = vlaneseq
      %v919 = vshrl.u32 %v918, 7
      %v920 = vsub.s32 2, %v919
      %v921 = vrot.slane %v879, %v920
      %v922 = vmul.f32 %v914, %v921
      %v923 = vmul.f32 %v915, %v921
      %v924 = vmul.f32 %v916, %v921
      %v925 = vmul.f32 %v917, %v921
      %v926 = vadd.f32 %v910, %v922
      %v927 = vadd.f32 %v911, %v923
      %v928 = vadd.f32 %v912, %v924
      %v929 = vadd.f32 %v913, %v925
      %v930 = vld [vmem:[%s874] sm:$0xf]
      %v931 = vld [vmem:[%s874 + $0x8] sm:$0xf]
      %v932 = vld [vmem:[%s874 + $0x10] sm:$0xf]
      %v933 = vld [vmem:[%s874 + $0x18] sm:$0xf]
      %v934 = vlaneseq
      %v935 = vshrl.u32 %v934, 7
      %v936 = vsub.s32 0, %v935
      %v937 = vrot.slane %v880, %v936
      %v938 = vmul.f32 %v930, %v937
      %v939 = vmul.f32 %v931, %v937
      %v940 = vmul.f32 %v932, %v937
      %v941 = vmul.f32 %v933, %v937
      %v942 = vadd.f32 %v926, %v938
      %v943 = vadd.f32 %v927, %v939
      %v944 = vadd.f32 %v928, %v940
      %v945 = vadd.f32 %v929, %v941
      %v946 = vld [vmem:[%s874 + $0x1] sm:$0xf]
      %v947 = vld [vmem:[%s874 + $0x9] sm:$0xf]
      %v948 = vld [vmem:[%s874 + $0x11] sm:$0xf]
      %v949 = vld [vmem:[%s874 + $0x19] sm:$0xf]
      %v950 = vlaneseq
      %v951 = vshrl.u32 %v950, 7
      %v952 = vsub.s32 1, %v951
      %v953 = vrot.slane %v880, %v952
      %v954 = vmul.f32 %v946, %v953
      %v955 = vmul.f32 %v947, %v953
      %v956 = vmul.f32 %v948, %v953
      %v957 = vmul.f32 %v949, %v953
      %v958 = vadd.f32 %v942, %v954
      %v959 = vadd.f32 %v943, %v955
      %v960 = vadd.f32 %v944, %v956
      %v961 = vadd.f32 %v945, %v957
      %v962 = vld [vmem:[%s874 + $0x2] sm:$0xf]
      %v963 = vld [vmem:[%s874 + $0xa] sm:$0xf]
      %v964 = vld [vmem:[%s874 + $0x12] sm:$0xf]
      %v965 = vld [vmem:[%s874 + $0x1a] sm:$0xf]
      %v966 = vlaneseq
      %v967 = vshrl.u32 %v966, 7
      %v968 = vsub.s32 2, %v967
      %v969 = vrot.slane %v880, %v968
      %v970 = vmul.f32 %v962, %v969
      %v971 = vmul.f32 %v963, %v969
      %v972 = vmul.f32 %v964, %v969
      %v973 = vmul.f32 %v965, %v969
      %v974 = vadd.f32 %v958, %v970
      %v975 = vadd.f32 %v959, %v971
      %v976 = vadd.f32 %v960, %v972
      %v977 = vadd.f32 %v961, %v973
      %s978 = scalar_lea.vmem [#allocation2], 16
      %v979 = vld [vmem:[%s978] sm:$0xf]
      %v980 = vld [vmem:[%s978 + $0x8] sm:$0xf]
      %v981 = vld [vmem:[%s978 + $0x10] sm:$0xf]
      %v982 = vld [vmem:[%s978 + $0x18] sm:$0xf]
      %v983 = vlaneseq
      %v984 = vshrl.u32 %v983, 7
      %v985 = vsub.s32 0, %v984
      %v986 = vrot.slane %v881, %v985
      %v987 = vmul.f32 %v979, %v986
      %v988 = vmul.f32 %v980, %v986
      %v989 = vmul.f32 %v981, %v986
      %v990 = vmul.f32 %v982, %v986
      %v991 = vadd.f32 %v974, %v987
      %v992 = vadd.f32 %v975, %v988
      %v993 = vadd.f32 %v976, %v989
      %v994 = vadd.f32 %v977, %v990
      %v995 = vld [vmem:[%s978 + $0x1] sm:$0xf]
      %v996 = vld [vmem:[%s978 + $0x9] sm:$0xf]
      %v997 = vld [vmem:[%s978 + $0x11] sm:$0xf]
      %v998 = vld [vmem:[%s978 + $0x19] sm:$0xf]
      %v999 = vlaneseq
      %v1000 = vshrl.u32 %v999, 7
      %v1001 = vsub.s32 1, %v1000
      %v1002 = vrot.slane %v881, %v1001
      %v1003 = vmul.f32 %v995, %v1002
      %v1004 = vmul.f32 %v996, %v1002
      %v1005 = vmul.f32 %v997, %v1002
      %v1006 = vmul.f32 %v998, %v1002
      %v1007 = vadd.f32 %v991, %v1003
      %v1008 = vadd.f32 %v992, %v1004
      %v1009 = vadd.f32 %v993, %v1005
      %v1010 = vadd.f32 %v994, %v1006
      %v1011 = vld [vmem:[%s978 + $0x2] sm:$0xf]
      %v1012 = vld [vmem:[%s978 + $0xa] sm:$0xf]
      %v1013 = vld [vmem:[%s978 + $0x12] sm:$0xf]
      %v1014 = vld [vmem:[%s978 + $0x1a] sm:$0xf]
      %v1015 = vlaneseq
      %v1016 = vshrl.u32 %v1015, 7
      %v1017 = vsub.s32 2, %v1016
      %v1018 = vrot.slane %v881, %v1017
      %v1019 = vmul.f32 %v1011, %v1018
      %v1020 = vmul.f32 %v1012, %v1018
      %v1021 = vmul.f32 %v1013, %v1018
      %v1022 = vmul.f32 %v1014, %v1018
      %v1023 = vadd.f32 %v1007, %v1019
      %v1024 = vadd.f32 %v1008, %v1020
      %v1025 = vadd.f32 %v1009, %v1021
      %v1026 = vadd.f32 %v1010, %v1022
      %v1027 = vld [vmem:[%s8] sm:$0x1]
      %v1029 = vlaneseq
      %v1030 = vshrl.u32 %v1029, 7
      %v1031 = vsub.s32 0, %v1030
      %v1032 = vrot.slane %v1027, %v1031
      %v1034 = vmul.f32 %v1023, %v1032
      %v1035 = vmul.f32 %v1024, %v1032
      %v1036 = vmul.f32 %v1025, %v1032
      %v1037 = vmul.f32 %v1026, %v1032
      %v1038 = vld [vmem:[%s9] sm:$0x1]
      %v1040 = vlaneseq
      %v1041 = vshrl.u32 %v1040, 7
      %v1042 = vsub.s32 0, %v1041
      %v1043 = vrot.slane %v1038, %v1042
      %v1045 = vadd.f32 %v1034, %v1043
      %v1046 = vadd.f32 %v1035, %v1043
      %v1047 = vadd.f32 %v1036, %v1043
      %v1048 = vadd.f32 %v1037, %v1043
      %v1049 = vmax.f32 %v1045, 0.0
      %v1050 = vmax.f32 %v1046, 0.0
      %v1051 = vmax.f32 %v1047, 0.0
      %v1052 = vmax.f32 %v1048, 0.0
      %v1053 = vmin.f32 %v1049, 6.0
      %v1054 = vmin.f32 %v1050, 6.0
      %v1055 = vmin.f32 %v1051, 6.0
      %v1056 = vmin.f32 %v1052, 6.0
      %v1057 = vld [vmem:[%s10] sm:$0xff]
      %v1058 = vld [vmem:[%s10 + $0x8] sm:$0xff]
      %v1059 = vld [vmem:[%s10 + $0x10] sm:$0xff]
      %v1060 = vld [vmem:[%s10 + $0x18] sm:$0xff]
      %v1061 = vld [vmem:[%s10 + $0x20] sm:$0xff]
      %v1062 = vld [vmem:[%s10 + $0x28] sm:$0xff]
      %v1063 = vld [vmem:[%s10 + $0x30] sm:$0xff]
      %v1064 = vld [vmem:[%s10 + $0x38] sm:$0xff]
      %v1065 = vld [vmem:[%s10 + $0x40] sm:$0xff]
      %v1066 = vld [vmem:[%s10 + $0x48] sm:$0xff]
      %v1067 = vld [vmem:[%s10 + $0x50] sm:$0xff]
      %v1068 = vld [vmem:[%s10 + $0x58] sm:$0xff]
      %v1069 = vld [vmem:[%s10 + $0x60] sm:$0xff]
      %v1070 = vld [vmem:[%s10 + $0x68] sm:$0xff]
      %v1071 = vld [vmem:[%s10 + $0x70] sm:$0xff]
      %v1072 = vld [vmem:[%s10 + $0x78] sm:$0xff]
      %v1077 = vcombine.low %v1053, %v1054
      %v1078 = vcombine.low %v1055, %v1056
      %1081 = vmatprep.subr.mxu0 0.0
      %1082 = vmatpush1.msra.mxu0 %v1057
      %1083 = vmatprep.subr.mxu0 0.0
      %1084 = vmatpush1.msra.mxu0 %v1058
      %1085 = vmatprep.subr.mxu0 0.0
      %1086 = vmatpush1.msra.mxu0 %v1059
      %1087 = vmatprep.subr.mxu0 0.0
      %1088 = vmatpush1.msra.mxu0 %v1060
      %1089 = vmatprep.subr.mxu0 0.0
      %1090 = vmatpush1.msra.mxu0 %v1061
      %1091 = vmatprep.subr.mxu0 0.0
      %1092 = vmatpush1.msra.mxu0 %v1062
      %1093 = vmatprep.subr.mxu0 0.0
      %1094 = vmatpush1.msra.mxu0 %v1063
      %1095 = vmatprep.subr.mxu0 0.0
      %1096 = vmatpush1.msra.mxu0 %v1064
      %1097 = vmatprep.subr.mxu0 0.0
      %1098 = vmatpush1.msra.mxu0 %v1065
      %1099 = vmatprep.subr.mxu0 0.0
      %1100 = vmatpush1.msra.mxu0 %v1066
      %1101 = vmatprep.subr.mxu0 0.0
      %1102 = vmatpush1.msra.mxu0 %v1067
      %1103 = vmatprep.subr.mxu0 0.0
      %1104 = vmatpush1.msra.mxu0 %v1068
      %1105 = vmatprep.subr.mxu0 0.0
      %1106 = vmatpush1.msra.mxu0 %v1069
      %1107 = vmatprep.subr.mxu0 0.0
      %1108 = vmatpush1.msra.mxu0 %v1070
      %1109 = vmatprep.subr.mxu0 0.0
      %1110 = vmatpush1.msra.mxu0 %v1071
      %1111 = vmatprep.subr.mxu0 0.0
      %1112 = vmatpush1.msra.mxu0 %v1072
      %1113 = vmatprep.subr.mxu0 0.0
      %1114 = vmatpush1.msra.mxu0 0.0
      %1115 = vmatprep.subr.mxu0 0.0
      %1116 = vmatpush1.msra.mxu0 0.0
      %1117 = vmatprep.subr.mxu0 0.0
      %1118 = vmatpush1.msra.mxu0 0.0
      %1119 = vmatprep.subr.mxu0 0.0
      %1120 = vmatpush1.msra.mxu0 0.0
      %1121 = vmatprep.subr.mxu0 0.0
      %1122 = vmatpush1.msra.mxu0 0.0
      %1123 = vmatprep.subr.mxu0 0.0
      %1124 = vmatpush1.msra.mxu0 0.0
      %1125 = vmatprep.subr.mxu0 0.0
      %1126 = vmatpush1.msra.mxu0 0.0
      %1127 = vmatprep.subr.mxu0 0.0
      %1128 = vmatpush1.msra.mxu0 0.0
      %1129 = vmatprep.subr.mxu0 0.0
      %1130 = vmatpush1.msra.mxu0 0.0
      %1131 = vmatprep.subr.mxu0 0.0
      %1132 = vmatpush1.msra.mxu0 0.0
      %1133 = vmatprep.subr.mxu0 0.0
      %1134 = vmatpush1.msra.mxu0 0.0
      %1135 = vmatprep.subr.mxu0 0.0
      %1136 = vmatpush1.msra.mxu0 0.0
      %1137 = vmatprep.subr.mxu0 0.0
      %1138 = vmatpush1.msra.mxu0 0.0
      %1139 = vmatprep.subr.mxu0 0.0
      %1140 = vmatpush1.msra.mxu0 0.0
      %1141 = vmatprep.subr.mxu0 0.0
      %1142 = vmatpush1.msra.mxu0 0.0
      %1143 = vmatprep.subr.mxu0 0.0
      %1144 = vmatpush1.msra.mxu0 0.0
      %1145 = vmatprep.mubr.f32.mxu0 0.0
      %1146 = vmatmul.mubr.f32.gmra.mrb[0].mxu0 %v1077
      %v1147 = vpop.f32.mrb[0].mxu0
      %v1148 = vadd.f32 0.0, %v1147
      %v1149 = vpop.f32.mrb[0].mxu0
      %1150 = vmatprep.mubr.f32.mxu0 0.0
      %1151 = vmatmul.mubr.f32.gmra.mrb[0].mxu0 %v1078
      %v1152 = vpop.f32.mrb[0].mxu0
      %v1153 = vadd.f32 0.0, %v1152
      %v1154 = vpop.f32.mrb[0].mxu0
      %1155 = vdwg.mxu0
      %v1156 = vld [vmem:[%s11] sm:$0x1]
      %v1158 = vlaneseq
      %v1159 = vshrl.u32 %v1158, 7
      %v1160 = vsub.s32 0, %v1159
      %v1161 = vrot.slane %v1156, %v1160
      %v1163 = vmul.f32 %v1148, %v1161
      %v1164 = vmul.f32 %v1153, %v1161
      %v1165 = vld [vmem:[%s12] sm:$0x1]
      %v1167 = vlaneseq
      %v1168 = vshrl.u32 %v1167, 7
      %v1169 = vsub.s32 0, %v1168
      %v1170 = vrot.slane %v1165, %v1169
      %v1172 = vadd.f32 %v1163, %v1170
      %v1173 = vadd.f32 %v1164, %v1170
      %v1174 = vmax.f32 %v1172, 0.0
      %v1175 = vmax.f32 %v1173, 0.0
      %v1176 = vmin.f32 %v1174, 6.0
      %v1177 = vmin.f32 %v1175, 6.0
      %v1178 = vld [vmem:[%s13] sm:$0x1]
      %v1180 = vlaneseq
      %v1181 = vshrl.u32 %v1180, 7
      %v1182 = vsub.s32 0, %v1181
      %v1183 = vrot.slane %v1178, %v1182
      %v1185 = vmul.f32 %v1176, %v1183
      %v1186 = vmul.f32 %v1177, %v1183
      %1187 = vadd.xlane.f32.xlu0 %v1185
      %v1188 = vpop.xlane.xlu0 %1187
      %1189 = vadd.xlane.f32.xlu0 %v1186
      %v1190 = vpop.xlane.xlu0 %1189
      %v1191 = vld [vmem:[#allocation3] sm:$0x1]
      %v1193 = vlaneseq
      %v1194 = vshrl.u32 %v1193, 7
      %v1195 = vsub.s32 0, %v1194
      %v1196 = vrot.slane %v1191, %v1195
      %v1198 = vadd.f32 %v1188, %v1196
      %v1199 = vadd.f32 %v1190, %v1196
      %v1200 = vxor.u32 %v1198, 2147483648
      %v1201 = vxor.u32 %v1199, 2147483648
      %v1202 = vmul.f32 %v1200, 1.442695
      %v1203 = vpow.pop %v1202
      %v1204 = vmul.f32 %v1201, 1.442695
      %v1205 = vpow.pop %v1204
      %v1206 = vadd.f32 %v1203, 1.0
      %v1207 = vadd.f32 %v1205, 1.0
      %v1208 = vrcp.pop %v1206
      %v1209 = vmul.f32 1.0, %v1208
      %v1210 = vrcp.pop %v1207
      %v1211 = vmul.f32 1.0, %v1210
      %1213 = vset.pattern.permute.xlu0 0
      %1214 = vperm.xlu0 %1213, %v1209
      %v1215 = vpop.permute.xlu0 %1214
      %1218 = vset.pattern.permute.xlu0 0
      %1219 = vperm.xlu0 %1218, %v1211
      %v1220 = vpop.permute.xlu0 %1219
      %v1222 = vmul.f32 %v1176, %v1215
      %v1223 = vmul.f32 %v1177, %v1220
      %v1224 = vadd.f32 %v1222, %v1223
      %v1225 = vrot.slane %v1224, 4
      %v1226 = vadd.f32 %v1224, %v1225
      %v1227 = vrot.slane %v1226, 2
      %v1228 = vadd.f32 %v1226, %v1227
      %v1229 = vrot.slane %v1228, 1
      %v1230 = vadd.f32 %v1228, %v1229
      %v1231 = vrcp.pop 16.0
      %v1232 = vmul.f32 %v1230, %v1231
      %v1233 = vmax.f32 %v1222, %v1223
      %v1234 = vrot.slane %v1233, 4
      %v1235 = vmax.f32 %v1233, %v1234
      %v1236 = vrot.slane %v1235, 2
      %v1237 = vmax.f32 %v1235, %v1236
      %v1238 = vrot.slane %v1237, 1
      %v1239 = vmax.f32 %v1237, %v1238
      %vm1240 = vcmask 1040384
      %v1241 = vsel %vm1240, %v1232, %v1239
      %v1242 = vld [vmem:[%s15] sm:$0xff]
      %v1243 = vld [vmem:[%s15 + $0x8] sm:$0xff]
      %v1244 = vld [vmem:[%s15 + $0x10] sm:$0xff]
      %v1245 = vld [vmem:[%s15 + $0x18] sm:$0xff]
      %v1246 = vld [vmem:[%s15 + $0x20] sm:$0xff]
      %v1247 = vld [vmem:[%s15 + $0x28] sm:$0xff]
      %v1248 = vld [vmem:[%s15 + $0x30] sm:$0xff]
      %v1249 = vld [vmem:[%s15 + $0x38] sm:$0xff]
      %v1250 = vld [vmem:[%s15 + $0x40] sm:$0xff]
      %v1251 = vld [vmem:[%s15 + $0x48] sm:$0xff]
      %v1252 = vld [vmem:[%s15 + $0x50] sm:$0xff]
      %v1253 = vld [vmem:[%s15 + $0x58] sm:$0xff]
      %v1254 = vld [vmem:[%s15 + $0x60] sm:$0xff]
      %v1255 = vld [vmem:[%s15 + $0x68] sm:$0xff]
      %v1256 = vld [vmem:[%s15 + $0x70] sm:$0xff]
      %v1257 = vld [vmem:[%s15 + $0x78] sm:$0xff]
      %1258 = vmatprep.subr.mxu0 0.0
      %1259 = vmatpush1.msra.mxu0 %v1242
      %1260 = vmatprep.subr.mxu0 0.0
      %1261 = vmatpush1.msra.mxu0 %v1243
      %1262 = vmatprep.subr.mxu0 0.0
      %1263 = vmatpush1.msra.mxu0 %v1244
      %1264 = vmatprep.subr.mxu0 0.0
      %1265 = vmatpush1.msra.mxu0 %v1245
      %1266 = vmatprep.subr.mxu0 0.0
      %1267 = vmatpush1.msra.mxu0 %v1246
      %1268 = vmatprep.subr.mxu0 0.0
      %1269 = vmatpush1.msra.mxu0 %v1247
      %1270 = vmatprep.subr.mxu0 0.0
      %1271 = vmatpush1.msra.mxu0 %v1248
      %1272 = vmatprep.subr.mxu0 0.0
      %1273 = vmatpush1.msra.mxu0 %v1249
      %1274 = vmatprep.subr.mxu0 0.0
      %1275 = vmatpush1.msra.mxu0 %v1250
      %1276 = vmatprep.subr.mxu0 0.0
      %1277 = vmatpush1.msra.mxu0 %v1251
      %1278 = vmatprep.subr.mxu0 0.0
      %1279 = vmatpush1.msra.mxu0 %v1252
      %1280 = vmatprep.subr.mxu0 0.0
      %1281 = vmatpush1.msra.mxu0 %v1253
      %1282 = vmatprep.subr.mxu0 0.0
      %1283 = vmatpush1.msra.mxu0 %v1254
      %1284 = vmatprep.subr.mxu0 0.0
      %1285 = vmatpush1.msra.mxu0 %v1255
      %1286 = vmatprep.subr.mxu0 0.0
      %1287 = vmatpush1.msra.mxu0 %v1256
      %1288 = vmatprep.subr.mxu0 0.0
      %1289 = vmatpush1.msra.mxu0 %v1257
      %1290 = vmatprep.subr.mxu0 0.0
      %1291 = vmatpush1.msra.mxu0 0.0
      %1292 = vmatprep.subr.mxu0 0.0
      %1293 = vmatpush1.msra.mxu0 0.0
      %1294 = vmatprep.subr.mxu0 0.0
      %1295 = vmatpush1.msra.mxu0 0.0
      %1296 = vmatprep.subr.mxu0 0.0
      %1297 = vmatpush1.msra.mxu0 0.0
      %1298 = vmatprep.subr.mxu0 0.0
      %1299 = vmatpush1.msra.mxu0 0.0
      %1300 = vmatprep.subr.mxu0 0.0
      %1301 = vmatpush1.msra.mxu0 0.0
      %1302 = vmatprep.subr.mxu0 0.0
      %1303 = vmatpush1.msra.mxu0 0.0
      %1304 = vmatprep.subr.mxu0 0.0
      %1305 = vmatpush1.msra.mxu0 0.0
      %1306 = vmatprep.subr.mxu0 0.0
      %1307 = vmatpush1.msra.mxu0 0.0
      %1308 = vmatprep.subr.mxu0 0.0
      %1309 = vmatpush1.msra.mxu0 0.0
      %1310 = vmatprep.subr.mxu0 0.0
      %1311 = vmatpush1.msra.mxu0 0.0
      %1312 = vmatprep.subr.mxu0 0.0
      %1313 = vmatpush1.msra.mxu0 0.0
      %1314 = vmatprep.subr.mxu0 0.0
      %1315 = vmatpush1.msra.mxu0 0.0
      %1316 = vmatprep.subr.mxu0 0.0
      %1317 = vmatpush1.msra.mxu0 0.0
      %1318 = vmatprep.subr.mxu0 0.0
      %1319 = vmatpush1.msra.mxu0 0.0
      %1320 = vmatprep.subr.mxu0 0.0
      %1321 = vmatpush1.msra.mxu0 0.0
      %1322 = vmatprep.mubr.f32.mxu0 0.0
      %1323 = vmatmul.mubr.f32.gmra.mrb[0].mxu0 %v1241
      %v1324 = vpop.f32.mrb[0].mxu0
      %v1325 = vadd.f32 0.0, %v1324
      %v1326 = vpop.f32.mrb[0].mxu0
      %1327 = vdwg.mxu0
      %v1328 = vmax.f32 %v1325, 0.0
      %v1329 = vld [vmem:[%s16] sm:$0xff]
      %v1330 = vld [vmem:[%s16 + $0x8] sm:$0xff]
      %vm1331 = vcmask 130048
      %v1333 = vsel %vm1331, %v1328, 0
      %1335 = vmatprep.subr.mxu0 0.0
      %1336 = vmatpush1.msra.mxu0 %v1329
      %1337 = vmatprep.subr.mxu0 0.0
      %1338 = vmatpush1.msra.mxu0 %v1330
      %1339 = vmatprep.subr.mxu0 0.0
      %1340 = vmatpush1.msra.mxu0 0.0
      %1341 = vmatprep.subr.mxu0 0.0
      %1342 = vmatpush1.msra.mxu0 0.0
      %1343 = vmatprep.subr.mxu0 0.0
      %1344 = vmatpush1.msra.mxu0 0.0
      %1345 = vmatprep.subr.mxu0 0.0
      %1346 = vmatpush1.msra.mxu0 0.0
      %1347 = vmatprep.subr.mxu0 0.0
      %1348 = vmatpush1.msra.mxu0 0.0
      %1349 = vmatprep.subr.mxu0 0.0
      %1350 = vmatpush1.msra.mxu0 0.0
      %1351 = vmatprep.subr.mxu0 0.0
      %1352 = vmatpush1.msra.mxu0 0.0
      %1353 = vmatprep.subr.mxu0 0.0
      %1354 = vmatpush1.msra.mxu0 0.0
      %1355 = vmatprep.subr.mxu0 0.0
      %1356 = vmatpush1.msra.mxu0 0.0
      %1357 = vmatprep.subr.mxu0 0.0
      %1358 = vmatpush1.msra.mxu0 0.0
      %1359 = vmatprep.subr.mxu0 0.0
      %1360 = vmatpush1.msra.mxu0 0.0
      %1361 = vmatprep.subr.mxu0 0.0
      %1362 = vmatpush1.msra.mxu0 0.0
      %1363 = vmatprep.subr.mxu0 0.0
      %1364 = vmatpush1.msra.mxu0 0.0
      %1365 = vmatprep.subr.mxu0 0.0
      %1366 = vmatpush1.msra.mxu0 0.0
      %1367 = vmatprep.subr.mxu0 0.0
      %1368 = vmatpush1.msra.mxu0 0.0
      %1369 = vmatprep.subr.mxu0 0.0
      %1370 = vmatpush1.msra.mxu0 0.0
      %1371 = vmatprep.subr.mxu0 0.0
      %1372 = vmatpush1.msra.mxu0 0.0
      %1373 = vmatprep.subr.mxu0 0.0
      %1374 = vmatpush1.msra.mxu0 0.0
      %1375 = vmatprep.subr.mxu0 0.0
      %1376 = vmatpush1.msra.mxu0 0.0
      %1377 = vmatprep.subr.mxu0 0.0
      %1378 = vmatpush1.msra.mxu0 0.0
      %1379 = vmatprep.subr.mxu0 0.0
      %1380 = vmatpush1.msra.mxu0 0.0
      %1381 = vmatprep.subr.mxu0 0.0
      %1382 = vmatpush1.msra.mxu0 0.0
      %1383 = vmatprep.subr.mxu0 0.0
      %1384 = vmatpush1.msra.mxu0 0.0
      %1385 = vmatprep.subr.mxu0 0.0
      %1386 = vmatpush1.msra.mxu0 0.0
      %1387 = vmatprep.subr.mxu0 0.0
      %1388 = vmatpush1.msra.mxu0 0.0
      %1389 = vmatprep.subr.mxu0 0.0
      %1390 = vmatpush1.msra.mxu0 0.0
      %1391 = vmatprep.subr.mxu0 0.0
      %1392 = vmatpush1.msra.mxu0 0.0
      %1393 = vmatprep.subr.mxu0 0.0
      %1394 = vmatpush1.msra.mxu0 0.0
      %1395 = vmatprep.subr.mxu0 0.0
      %1396 = vmatpush1.msra.mxu0 0.0
      %1397 = vmatprep.subr.mxu0 0.0
      %1398 = vmatpush1.msra.mxu0 0.0
      %1399 = vmatprep.mubr.f32.mxu0 0.0
      %1400 = vmatmul.mubr.f32.gmra.mrb[0].mxu0 %v1333
      %v1401 = vpop.f32.mrb[0].mxu0
      %v1402 = vadd.f32 0.0, %v1401
      %v1403 = vpop.f32.mrb[0].mxu0
      %1404 = vdwg.mxu0
      %v1406 = vrot.slane %v1402, 1
      %v1408 = vadd.f32 %v1402, %v1406
      %v1409 = vxor.u32 %v1408, 2147483648
      %v1410 = vmul.f32 %v1409, 1.442695
      %v1411 = vpow.pop %v1410
      %v1412 = vadd.f32 %v1411, 1.0
      %v1413 = vrcp.pop %v1412
      %v1414 = vmul.f32 1.0, %v1413
      %v1415 = vlaneseq
      %v1416 = vshrl.u32 %v1415, 7
      %v1417 = vsub.s32 0, %v1416
      %v1418 = vrot.slane %v1414, %v1417
      %v1419 = vmul.f32 %v1222, %v1418
      %v1420 = vmul.f32 %v1223, %v1418
      %1421 = vst [vmem:[%s550] sm:$0xff] %v1419
      %1422 = vst [vmem:[%s550 + $0x8] sm:$0xff] %v1420
      %p1423 = scmp.lt.s32.totalorder %s30, 1
      %s1424 = scalar_select %p1423, %s30, 1
      %s1425 = smul.addr %s1424, 2
      %s1426 = smul.addr %s1425, 8
      %s1427 = scalar_lea.vmem %s17, %s1426
      // Predicated region
      $region89: #{lightweight_cnn_forward.6} parent=87 // pred_check
        %p1428 = pneg %p410
      $region90: #{lightweight_cnn_forward.6} parent=87 // pred_check_branch
        %1430 = sbr.rel (%p1428) target = $region92
      $region91: #{lightweight_cnn_forward.6} parent=87 // pred_region
        _
      $region92: #{lightweight_cnn_forward.6} parent=87 // pred_fallthru
        _
    $region88: #{lightweight_cnn_forward.6} parent=5 // pred_fallthru
      _
    %p1431 = scmp.le.s32.totalorder 2, %s25
    // Predicated region
    $region93: #{lightweight_cnn_forward.6} parent=5 // pred_check
      %p1432 = pneg %p1431
    $region94: #{lightweight_cnn_forward.6} parent=5 // pred_check_branch
      %1434 = sbr.rel (%p1432) target = $region96
    $region95: #{lightweight_cnn_forward.6} parent=5 // pred_region
      %s1435 = ssub.s32 %s25, 2
      // Predicated region
      $region97: #{lightweight_cnn_forward.6} parent=95 // pred_check
        %p1436 = pneg %p416
      $region98: #{lightweight_cnn_forward.6} parent=95 // pred_check_branch
        %1438 = sbr.rel (%p1436) target = $region100
      $region99: #{lightweight_cnn_forward.6} parent=95 // pred_region
        %p1439 = scmp.lt.s32.totalorder %s31, 1
        %s1440 = scalar_select %p1439, %s31, 1
        %s1441 = smul.addr %s1440, 2
        %s1442 = smul.addr %s1441, 8
        %s1443 = scalar_lea.vmem %s17, %s1442
      $region100: #{lightweight_cnn_forward.6} parent=95 // pred_fallthru
        _
    $region96: #{lightweight_cnn_forward.6} parent=5 // pred_fallthru
      _
  $region6: #{lightweight_cnn_forward.6} parent=0 // loop_footer
    %s29 = sadd.s32 1, %s25
  $region7: #{lightweight_cnn_forward.6} parent=0 // loop_footer_branch
    %24 = sbr.rel target = $region3
  $region8: #{lightweight_cnn_forward.6} parent=0 // loop_exit
    _

// kernel: lightweight_cnn_forward.7
$region0: #{lightweight_cnn_forward.7}
  #allocation0 [shape = 'u32[]', space=smem, size = 0x4, offset = 0x4, fixed_abs, tag = 'smem constant byte address 0x4 - core index']
  #allocation1 [shape = 'u32[144,128]{1,0:T(1,128)}', space=vmem, size = 0x12000, scoped, tag = 'internal scratch']
  #allocation2 [shape = 'f32[4,4,256]{2,1,0:T(4,128)}', space=vmem, size = 0x4000, scoped, tag = 'scratch operand']
  #allocation3 [shape = 'f32[1,1]{1,0:T(1,128)S(1)}', space=vmem, size = 0x200, scoped, tag = 'scoped memory for lightweight_cnn_forward.7']
  %s0 = inlined_call_operand.vmem [shape: f32[2,4,3,3,128], index: 0, kind: input, shape index: {}]
  %s1 = inlined_call_operand.vmem [shape: f32[3,3,128], index: 1, kind: input, shape index: {}]
  %s2 = inlined_call_operand.vmem [shape: f32[1,128], index: 2, kind: input, shape index: {}]
  %s3 = inlined_call_operand.vmem [shape: f32[1,128], index: 3, kind: input, shape index: {}]
  %s4 = inlined_call_operand.vmem [shape: f32[128,256], index: 4, kind: input, shape index: {}]
  %s5 = inlined_call_operand.vmem [shape: f32[1,256], index: 5, kind: input, shape index: {}]
  %s6 = inlined_call_operand.vmem [shape: f32[1,256], index: 6, kind: input, shape index: {}]
  %s7 = inlined_call_operand.vmem [shape: f32[3,3,256], index: 7, kind: input, shape index: {}]
  %s8 = inlined_call_operand.vmem [shape: f32[1,256], index: 8, kind: input, shape index: {}]
  %s9 = inlined_call_operand.vmem [shape: f32[1,256], index: 9, kind: input, shape index: {}]
  %s10 = inlined_call_operand.vmem [shape: f32[256,256], index: 10, kind: input, shape index: {}]
  %s11 = inlined_call_operand.vmem [shape: f32[1,256], index: 11, kind: input, shape index: {}]
  %s12 = inlined_call_operand.vmem [shape: f32[1,256], index: 12, kind: input, shape index: {}]
  %s13 = inlined_call_operand.vmem [shape: f32[1,256], index: 13, kind: input, shape index: {}]
  %s14 = inlined_call_operand.<no memory space> [shape: f32[1,1], index: 14, kind: input, shape index: {}]
  %s15 = inlined_call_operand.vmem [shape: f32[256,32], index: 15, kind: input, shape index: {}]
  %s16 = inlined_call_operand.vmem [shape: f32[32,256], index: 16, kind: input, shape index: {}]
  %s17 = inlined_call_operand.vmem [shape: f32[2,4,256], index: 17, kind: output, shape index: {}]
  %s18 = sld [smem:[#allocation0]]
  $region101: #{lightweight_cnn_forward.7} parent=0
    _
  %s20 = ssub.s32 1, %s18
  %s21 = scalar_select 0, %s20, %s18
  %v22 = vstv %s14
  %23 = vst [vmem:[#allocation3] sm:$0x1] %v22
  loop: start=0, step=1, limit=4
  $region2: #{lightweight_cnn_forward.7} parent=0 // loop_pre_header
    _
  $region3: #{lightweight_cnn_forward.7} parent=0 // loop_header
    %s25 = sphi 0, %s29
    %p26 = scmp.ge.s32.totalorder %s25, 4
    %s35 = sphi 0, %s37
    %s38 = sphi 0, %s35
    %s39 = sphi 0, %s38
    %s55 = sphi 0, %s39
    %s59 = sphi 0, %s59
    %s61 = sphi 0, %s59
    %s62 = sphi 0, %s61
    %s76 = sphi 0, %s62
    %s80 = sphi 0, %s80
    %s82 = sphi 0, %s80
    %s83 = sphi 0, %s82
    %s97 = sphi 0, %s83
    %s101 = sphi 0, %s101
    %s103 = sphi 0, %s101
    %s104 = sphi 0, %s103
    %s118 = sphi 0, %s104
    %s122 = sphi 0, %s122
    %s124 = sphi 0, %s122
    %s125 = sphi 0, %s124
    %s139 = sphi 0, %s125
    %s143 = sphi 0, %s143
    %s145 = sphi 0, %s143
    %s146 = sphi 0, %s145
    %s160 = sphi 0, %s146
    %s164 = sphi 0, %s164
    %s166 = sphi 0, %s164
    %s167 = sphi 0, %s166
    %s181 = sphi 0, %s167
    %s185 = sphi 0, %s185
    %s187 = sphi 0, %s185
    %s188 = sphi 0, %s187
    %s202 = sphi 0, %s188
    %s206 = sphi 0, %s206
    %s208 = sphi 0, %s206
    %s209 = sphi 0, %s208
    %s223 = sphi 0, %s209
    %s227 = sphi 0, %s227
    %s229 = sphi 0, %s227
    %s230 = sphi 0, %s229
    %s244 = sphi 0, %s230
    %s248 = sphi 0, %s248
    %s250 = sphi 0, %s248
    %s251 = sphi 0, %s250
    %s265 = sphi 0, %s251
    %s269 = sphi 0, %s269
    %s271 = sphi 0, %s269
    %s272 = sphi 0, %s271
    %s286 = sphi 0, %s272
    %s290 = sphi 0, %s290
    %s292 = sphi 0, %s290
    %s293 = sphi 0, %s292
    %s307 = sphi 0, %s293
    %s311 = sphi 0, %s311
    %s313 = sphi 0, %s311
    %s314 = sphi 0, %s313
    %s328 = sphi 0, %s314
    %s332 = sphi 0, %s332
    %s334 = sphi 0, %s332
    %s335 = sphi 0, %s334
    %s349 = sphi 0, %s335
    %s353 = sphi 0, %s353
    %s355 = sphi 0, %s353
    %s356 = sphi 0, %s355
    %s370 = sphi 0, %s356
    %s374 = sphi 0, %s374
    %s376 = sphi 0, %s374
    %s377 = sphi 0, %s376
    %s391 = sphi 0, %s377
    %s397 = sphi 0, %s399
    %s400 = sphi 0, %s397
    %s401 = sphi 0, %s400
    %s417 = sphi 0, %s401
  $region4: #{lightweight_cnn_forward.7} parent=0 // loop_header_branch
    %28 = sbr.rel (%p26) target = $region8
  $region5: #{lightweight_cnn_forward.7} parent=0 // loop_body
    %s30 = ssub.s32 %s25, 1
    %s31 = ssub.s32 %s25, 2
    %s32 = sadd.s32 %s25, 1
    %s33 = ssub.s32 %s25, %s32
    %p34 = scmp.eq.s32.totalorder %s33, 0
    %s36 = sadd.s32 %s35, 1
    %s37 = scalar_select %p34, %s35, %s36
    %p40 = pneg %p34
    %p41 = scmp.eq.s32.totalorder %s25, 1
    %p42 = por %p40, %p41
    %p43 = scmp.ne.s32.totalorder %s35, %s38
    %p44 = scmp.eq.s32.totalorder %s25, 0
    %p45 = por %p43, %p44
    %p46 = scmp.ne.s32.totalorder %s35, %s38
    %p47 = scmp.eq.s32.totalorder %s30, 1
    %p48 = por %p46, %p47
    %p49 = scmp.ne.s32.totalorder %s38, %s39
    %p50 = scmp.eq.s32.totalorder %s30, 0
    %p51 = por %p49, %p50
    %p52 = scmp.ne.s32.totalorder %s38, %s39
    %p53 = scmp.eq.s32.totalorder %s31, 1
    %p54 = por %p52, %p53
    %p56 = scmp.ne.s32.totalorder %s39, %s55
    %p57 = scmp.eq.s32.totalorder %s31, 0
    %p58 = por %p56, %p57
    %s60 = sadd.s32 %s59, 1
    %p63 = scmp.eq.s32.totalorder %s25, 1
    %p64 = scmp.ne.s32.totalorder %s59, %s61
    %p65 = scmp.eq.s32.totalorder %s25, 0
    %p66 = por %p64, %p65
    %p67 = scmp.ne.s32.totalorder %s59, %s61
    %p68 = scmp.eq.s32.totalorder %s30, 1
    %p69 = por %p67, %p68
    %p70 = scmp.ne.s32.totalorder %s61, %s62
    %p71 = scmp.eq.s32.totalorder %s30, 0
    %p72 = por %p70, %p71
    %p73 = scmp.ne.s32.totalorder %s61, %s62
    %p74 = scmp.eq.s32.totalorder %s31, 1
    %p75 = por %p73, %p74
    %p77 = scmp.ne.s32.totalorder %s62, %s76
    %p78 = scmp.eq.s32.totalorder %s31, 0
    %p79 = por %p77, %p78
    %s81 = sadd.s32 %s80, 1
    %p84 = scmp.eq.s32.totalorder %s25, 1
    %p85 = scmp.ne.s32.totalorder %s80, %s82
    %p86 = scmp.eq.s32.totalorder %s25, 0
    %p87 = por %p85, %p86
    %p88 = scmp.ne.s32.totalorder %s80, %s82
    %p89 = scmp.eq.s32.totalorder %s30, 1
    %p90 = por %p88, %p89
    %p91 = scmp.ne.s32.totalorder %s82, %s83
    %p92 = scmp.eq.s32.totalorder %s30, 0
    %p93 = por %p91, %p92
    %p94 = scmp.ne.s32.totalorder %s82, %s83
    %p95 = scmp.eq.s32.totalorder %s31, 1
    %p96 = por %p94, %p95
    %p98 = scmp.ne.s32.totalorder %s83, %s97
    %p99 = scmp.eq.s32.totalorder %s31, 0
    %p100 = por %p98, %p99
    %s102 = sadd.s32 %s101, 1
    %p105 = scmp.eq.s32.totalorder %s25, 1
    %p106 = scmp.ne.s32.totalorder %s101, %s103
    %p107 = scmp.eq.s32.totalorder %s25, 0
    %p108 = por %p106, %p107
    %p109 = scmp.ne.s32.totalorder %s101, %s103
    %p110 = scmp.eq.s32.totalorder %s30, 1
    %p111 = por %p109, %p110
    %p112 = scmp.ne.s32.totalorder %s103, %s104
    %p113 = scmp.eq.s32.totalorder %s30, 0
    %p114 = por %p112, %p113
    %p115 = scmp.ne.s32.totalorder %s103, %s104
    %p116 = scmp.eq.s32.totalorder %s31, 1
    %p117 = por %p115, %p116
    %p119 = scmp.ne.s32.totalorder %s104, %s118
    %p120 = scmp.eq.s32.totalorder %s31, 0
    %p121 = por %p119, %p120
    %s123 = sadd.s32 %s122, 1
    %p126 = scmp.eq.s32.totalorder %s25, 1
    %p127 = scmp.ne.s32.totalorder %s122, %s124
    %p128 = scmp.eq.s32.totalorder %s25, 0
    %p129 = por %p127, %p128
    %p130 = scmp.ne.s32.totalorder %s122, %s124
    %p131 = scmp.eq.s32.totalorder %s30, 1
    %p132 = por %p130, %p131
    %p133 = scmp.ne.s32.totalorder %s124, %s125
    %p134 = scmp.eq.s32.totalorder %s30, 0
    %p135 = por %p133, %p134
    %p136 = scmp.ne.s32.totalorder %s124, %s125
    %p137 = scmp.eq.s32.totalorder %s31, 1
    %p138 = por %p136, %p137
    %p140 = scmp.ne.s32.totalorder %s125, %s139
    %p141 = scmp.eq.s32.totalorder %s31, 0
    %p142 = por %p140, %p141
    %s144 = sadd.s32 %s143, 1
    %p147 = scmp.eq.s32.totalorder %s25, 1
    %p148 = scmp.ne.s32.totalorder %s143, %s145
    %p149 = scmp.eq.s32.totalorder %s25, 0
    %p150 = por %p148, %p149
    %p151 = scmp.ne.s32.totalorder %s143, %s145
    %p152 = scmp.eq.s32.totalorder %s30, 1
    %p153 = por %p151, %p152
    %p154 = scmp.ne.s32.totalorder %s145, %s146
    %p155 = scmp.eq.s32.totalorder %s30, 0
    %p156 = por %p154, %p155
    %p157 = scmp.ne.s32.totalorder %s145, %s146
    %p158 = scmp.eq.s32.totalorder %s31, 1
    %p159 = por %p157, %p158
    %p161 = scmp.ne.s32.totalorder %s146, %s160
    %p162 = scmp.eq.s32.totalorder %s31, 0
    %p163 = por %p161, %p162
    %s165 = sadd.s32 %s164, 1
    %p168 = scmp.eq.s32.totalorder %s25, 1
    %p169 = scmp.ne.s32.totalorder %s164, %s166
    %p170 = scmp.eq.s32.totalorder %s25, 0
    %p171 = por %p169, %p170
    %p172 = scmp.ne.s32.totalorder %s164, %s166
    %p173 = scmp.eq.s32.totalorder %s30, 1
    %p174 = por %p172, %p173
    %p175 = scmp.ne.s32.totalorder %s166, %s167
    %p176 = scmp.eq.s32.totalorder %s30, 0
    %p177 = por %p175, %p176
    %p178 = scmp.ne.s32.totalorder %s166, %s167
    %p179 = scmp.eq.s32.totalorder %s31, 1
    %p180 = por %p178, %p179
    %p182 = scmp.ne.s32.totalorder %s167, %s181
    %p183 = scmp.eq.s32.totalorder %s31, 0
    %p184 = por %p182, %p183
    %s186 = sadd.s32 %s185, 1
    %p189 = scmp.eq.s32.totalorder %s25, 1
    %p190 = scmp.ne.s32.totalorder %s185, %s187
    %p191 = scmp.eq.s32.totalorder %s25, 0
    %p192 = por %p190, %p191
    %p193 = scmp.ne.s32.totalorder %s185, %s187
    %p194 = scmp.eq.s32.totalorder %s30, 1
    %p195 = por %p193, %p194
    %p196 = scmp.ne.s32.totalorder %s187, %s188
    %p197 = scmp.eq.s32.totalorder %s30, 0
    %p198 = por %p196, %p197
    %p199 = scmp.ne.s32.totalorder %s187, %s188
    %p200 = scmp.eq.s32.totalorder %s31, 1
    %p201 = por %p199, %p200
    %p203 = scmp.ne.s32.totalorder %s188, %s202
    %p204 = scmp.eq.s32.totalorder %s31, 0
    %p205 = por %p203, %p204
    %s207 = sadd.s32 %s206, 1
    %p210 = scmp.eq.s32.totalorder %s25, 1
    %p211 = scmp.ne.s32.totalorder %s206, %s208
    %p212 = scmp.eq.s32.totalorder %s25, 0
    %p213 = por %p211, %p212
    %p214 = scmp.ne.s32.totalorder %s206, %s208
    %p215 = scmp.eq.s32.totalorder %s30, 1
    %p216 = por %p214, %p215
    %p217 = scmp.ne.s32.totalorder %s208, %s209
    %p218 = scmp.eq.s32.totalorder %s30, 0
    %p219 = por %p217, %p218
    %p220 = scmp.ne.s32.totalorder %s208, %s209
    %p221 = scmp.eq.s32.totalorder %s31, 1
    %p222 = por %p220, %p221
    %p224 = scmp.ne.s32.totalorder %s209, %s223
    %p225 = scmp.eq.s32.totalorder %s31, 0
    %p226 = por %p224, %p225
    %s228 = sadd.s32 %s227, 1
    %p231 = scmp.eq.s32.totalorder %s25, 1
    %p232 = scmp.ne.s32.totalorder %s227, %s229
    %p233 = scmp.eq.s32.totalorder %s25, 0
    %p234 = por %p232, %p233
    %p235 = scmp.ne.s32.totalorder %s227, %s229
    %p236 = scmp.eq.s32.totalorder %s30, 1
    %p237 = por %p235, %p236
    %p238 = scmp.ne.s32.totalorder %s229, %s230
    %p239 = scmp.eq.s32.totalorder %s30, 0
    %p240 = por %p238, %p239
    %p241 = scmp.ne.s32.totalorder %s229, %s230
    %p242 = scmp.eq.s32.totalorder %s31, 1
    %p243 = por %p241, %p242
    %p245 = scmp.ne.s32.totalorder %s230, %s244
    %p246 = scmp.eq.s32.totalorder %s31, 0
    %p247 = por %p245, %p246
    %s249 = sadd.s32 %s248, 1
    %p252 = scmp.eq.s32.totalorder %s25, 1
    %p253 = scmp.ne.s32.totalorder %s248, %s250
    %p254 = scmp.eq.s32.totalorder %s25, 0
    %p255 = por %p253, %p254
    %p256 = scmp.ne.s32.totalorder %s248, %s250
    %p257 = scmp.eq.s32.totalorder %s30, 1
    %p258 = por %p256, %p257
    %p259 = scmp.ne.s32.totalorder %s250, %s251
    %p260 = scmp.eq.s32.totalorder %s30, 0
    %p261 = por %p259, %p260
    %p262 = scmp.ne.s32.totalorder %s250, %s251
    %p263 = scmp.eq.s32.totalorder %s31, 1
    %p264 = por %p262, %p263
    %p266 = scmp.ne.s32.totalorder %s251, %s265
    %p267 = scmp.eq.s32.totalorder %s31, 0
    %p268 = por %p266, %p267
    %s270 = sadd.s32 %s269, 1
    %p273 = scmp.eq.s32.totalorder %s25, 1
    %p274 = scmp.ne.s32.totalorder %s269, %s271
    %p275 = scmp.eq.s32.totalorder %s25, 0
    %p276 = por %p274, %p275
    %p277 = scmp.ne.s32.totalorder %s269, %s271
    %p278 = scmp.eq.s32.totalorder %s30, 1
    %p279 = por %p277, %p278
    %p280 = scmp.ne.s32.totalorder %s271, %s272
    %p281 = scmp.eq.s32.totalorder %s30, 0
    %p282 = por %p280, %p281
    %p283 = scmp.ne.s32.totalorder %s271, %s272
    %p284 = scmp.eq.s32.totalorder %s31, 1
    %p285 = por %p283, %p284
    %p287 = scmp.ne.s32.totalorder %s272, %s286
    %p288 = scmp.eq.s32.totalorder %s31, 0
    %p289 = por %p287, %p288
    %s291 = sadd.s32 %s290, 1
    %p294 = scmp.eq.s32.totalorder %s25, 1
    %p295 = scmp.ne.s32.totalorder %s290, %s292
    %p296 = scmp.eq.s32.totalorder %s25, 0
    %p297 = por %p295, %p296
    %p298 = scmp.ne.s32.totalorder %s290, %s292
    %p299 = scmp.eq.s32.totalorder %s30, 1
    %p300 = por %p298, %p299
    %p301 = scmp.ne.s32.totalorder %s292, %s293
    %p302 = scmp.eq.s32.totalorder %s30, 0
    %p303 = por %p301, %p302
    %p304 = scmp.ne.s32.totalorder %s292, %s293
    %p305 = scmp.eq.s32.totalorder %s31, 1
    %p306 = por %p304, %p305
    %p308 = scmp.ne.s32.totalorder %s293, %s307
    %p309 = scmp.eq.s32.totalorder %s31, 0
    %p310 = por %p308, %p309
    %s312 = sadd.s32 %s311, 1
    %p315 = scmp.eq.s32.totalorder %s25, 1
    %p316 = scmp.ne.s32.totalorder %s311, %s313
    %p317 = scmp.eq.s32.totalorder %s25, 0
    %p318 = por %p316, %p317
    %p319 = scmp.ne.s32.totalorder %s311, %s313
    %p320 = scmp.eq.s32.totalorder %s30, 1
    %p321 = por %p319, %p320
    %p322 = scmp.ne.s32.totalorder %s313, %s314
    %p323 = scmp.eq.s32.totalorder %s30, 0
    %p324 = por %p322, %p323
    %p325 = scmp.ne.s32.totalorder %s313, %s314
    %p326 = scmp.eq.s32.totalorder %s31, 1
    %p327 = por %p325, %p326
    %p329 = scmp.ne.s32.totalorder %s314, %s328
    %p330 = scmp.eq.s32.totalorder %s31, 0
    %p331 = por %p329, %p330
    %s333 = sadd.s32 %s332, 1
    %p336 = scmp.eq.s32.totalorder %s25, 1
    %p337 = scmp.ne.s32.totalorder %s332, %s334
    %p338 = scmp.eq.s32.totalorder %s25, 0
    %p339 = por %p337, %p338
    %p340 = scmp.ne.s32.totalorder %s332, %s334
    %p341 = scmp.eq.s32.totalorder %s30, 1
    %p342 = por %p340, %p341
    %p343 = scmp.ne.s32.totalorder %s334, %s335
    %p344 = scmp.eq.s32.totalorder %s30, 0
    %p345 = por %p343, %p344
    %p346 = scmp.ne.s32.totalorder %s334, %s335
    %p347 = scmp.eq.s32.totalorder %s31, 1
    %p348 = por %p346, %p347
    %p350 = scmp.ne.s32.totalorder %s335, %s349
    %p351 = scmp.eq.s32.totalorder %s31, 0
    %p352 = por %p350, %p351
    %s354 = sadd.s32 %s353, 1
    %p357 = scmp.eq.s32.totalorder %s25, 1
    %p358 = scmp.ne.s32.totalorder %s353, %s355
    %p359 = scmp.eq.s32.totalorder %s25, 0
    %p360 = por %p358, %p359
    %p361 = scmp.ne.s32.totalorder %s353, %s355
    %p362 = scmp.eq.s32.totalorder %s30, 1
    %p363 = por %p361, %p362
    %p364 = scmp.ne.s32.totalorder %s355, %s356
    %p365 = scmp.eq.s32.totalorder %s30, 0
    %p366 = por %p364, %p365
    %p367 = scmp.ne.s32.totalorder %s355, %s356
    %p368 = scmp.eq.s32.totalorder %s31, 1
    %p369 = por %p367, %p368
    %p371 = scmp.ne.s32.totalorder %s356, %s370
    %p372 = scmp.eq.s32.totalorder %s31, 0
    %p373 = por %p371, %p372
    %s375 = sadd.s32 %s374, 1
    %p378 = scmp.eq.s32.totalorder %s25, 1
    %p379 = scmp.ne.s32.totalorder %s374, %s376
    %p380 = scmp.eq.s32.totalorder %s25, 0
    %p381 = por %p379, %p380
    %p382 = scmp.ne.s32.totalorder %s374, %s376
    %p383 = scmp.eq.s32.totalorder %s30, 1
    %p384 = por %p382, %p383
    %p385 = scmp.ne.s32.totalorder %s376, %s377
    %p386 = scmp.eq.s32.totalorder %s30, 0
    %p387 = por %p385, %p386
    %p388 = scmp.ne.s32.totalorder %s376, %s377
    %p389 = scmp.eq.s32.totalorder %s31, 1
    %p390 = por %p388, %p389
    %p392 = scmp.ne.s32.totalorder %s377, %s391
    %p393 = scmp.eq.s32.totalorder %s31, 0
    %p394 = por %p392, %p393
    %s395 = ssub.s32 %s25, %s32
    %p396 = scmp.eq.s32.totalorder %s395, 0
    %s398 = sadd.s32 %s397, 1
    %s399 = scalar_select %p396, %s397, %s398
    %p402 = pneg %p396
    %p403 = scmp.eq.s32.totalorder %s25, 1
    %p404 = por %p402, %p403
    %p405 = scmp.ne.s32.totalorder %s397, %s400
    %p406 = scmp.eq.s32.totalorder %s25, 0
    %p407 = por %p405, %p406
    %p408 = scmp.ne.s32.totalorder %s397, %s400
    %p409 = scmp.eq.s32.totalorder %s30, 1
    %p410 = por %p408, %p409
    %p411 = scmp.ne.s32.totalorder %s400, %s401
    %p412 = scmp.eq.s32.totalorder %s30, 0
    %p413 = por %p411, %p412
    %p414 = scmp.ne.s32.totalorder %s400, %s401
    %p415 = scmp.eq.s32.totalorder %s31, 1
    %p416 = por %p414, %p415
    %p418 = scmp.ne.s32.totalorder %s401, %s417
    %p419 = scmp.eq.s32.totalorder %s31, 0
    %p420 = por %p418, %p419
    %p421 = scmp.le.s32.totalorder 1, %s25
    %p422 = scmp.lt.s32.totalorder %s25, 3
    %p423 = pnand %p421, %p422
    %p424 = pneg %p423
    // Predicated region
    $region9: #{lightweight_cnn_forward.7} parent=5 // pred_check
      _
    $region10: #{lightweight_cnn_forward.7} parent=5 // pred_check_branch
      %426 = sbr.rel (%p423) target = $region12
    $region11: #{lightweight_cnn_forward.7} parent=5 // pred_region
      %s427 = ssub.s32 %s25, 1
      // Predicated region
      $region13: #{lightweight_cnn_forward.7} parent=11 // pred_check
        %p428 = pneg %p72
      $region14: #{lightweight_cnn_forward.7} parent=11 // pred_check_branch
        %430 = sbr.rel (%p428) target = $region16
      $region15: #{lightweight_cnn_forward.7} parent=11 // pred_region
        _
      $region16: #{lightweight_cnn_forward.7} parent=11 // pred_fallthru
        _
      // Predicated region
      $region17: #{lightweight_cnn_forward.7} parent=11 // pred_check
        %p431 = pneg %p93
      $region18: #{lightweight_cnn_forward.7} parent=11 // pred_check_branch
        %433 = sbr.rel (%p431) target = $region20
      $region19: #{lightweight_cnn_forward.7} parent=11 // pred_region
        _
      $region20: #{lightweight_cnn_forward.7} parent=11 // pred_fallthru
        _
      // Predicated region
      $region21: #{lightweight_cnn_forward.7} parent=11 // pred_check
        %p434 = pneg %p114
      $region22: #{lightweight_cnn_forward.7} parent=11 // pred_check_branch
        %436 = sbr.rel (%p434) target = $region24
      $region23: #{lightweight_cnn_forward.7} parent=11 // pred_region
        _
      $region24: #{lightweight_cnn_forward.7} parent=11 // pred_fallthru
        _
      // Predicated region
      $region25: #{lightweight_cnn_forward.7} parent=11 // pred_check
        %p437 = pneg %p135
      $region26: #{lightweight_cnn_forward.7} parent=11 // pred_check_branch
        %439 = sbr.rel (%p437) target = $region28
      $region27: #{lightweight_cnn_forward.7} parent=11 // pred_region
        _
      $region28: #{lightweight_cnn_forward.7} parent=11 // pred_fallthru
        _
      // Predicated region
      $region29: #{lightweight_cnn_forward.7} parent=11 // pred_check
        %p440 = pneg %p156
      $region30: #{lightweight_cnn_forward.7} parent=11 // pred_check_branch
        %442 = sbr.rel (%p440) target = $region32
      $region31: #{lightweight_cnn_forward.7} parent=11 // pred_region
        _
      $region32: #{lightweight_cnn_forward.7} parent=11 // pred_fallthru
        _
      // Predicated region
      $region33: #{lightweight_cnn_forward.7} parent=11 // pred_check
        %p443 = pneg %p177
      $region34: #{lightweight_cnn_forward.7} parent=11 // pred_check_branch
        %445 = sbr.rel (%p443) target = $region36
      $region35: #{lightweight_cnn_forward.7} parent=11 // pred_region
        _
      $region36: #{lightweight_cnn_forward.7} parent=11 // pred_fallthru
        _
      // Predicated region
      $region37: #{lightweight_cnn_forward.7} parent=11 // pred_check
        %p446 = pneg %p198
      $region38: #{lightweight_cnn_forward.7} parent=11 // pred_check_branch
        %448 = sbr.rel (%p446) target = $region40
      $region39: #{lightweight_cnn_forward.7} parent=11 // pred_region
        _
      $region40: #{lightweight_cnn_forward.7} parent=11 // pred_fallthru
        _
      // Predicated region
      $region41: #{lightweight_cnn_forward.7} parent=11 // pred_check
        %p449 = pneg %p219
      $region42: #{lightweight_cnn_forward.7} parent=11 // pred_check_branch
        %451 = sbr.rel (%p449) target = $region44
      $region43: #{lightweight_cnn_forward.7} parent=11 // pred_region
        _
      $region44: #{lightweight_cnn_forward.7} parent=11 // pred_fallthru
        _
      // Predicated region
      $region45: #{lightweight_cnn_forward.7} parent=11 // pred_check
        %p452 = pneg %p240
      $region46: #{lightweight_cnn_forward.7} parent=11 // pred_check_branch
        %454 = sbr.rel (%p452) target = $region48
      $region47: #{lightweight_cnn_forward.7} parent=11 // pred_region
        _
      $region48: #{lightweight_cnn_forward.7} parent=11 // pred_fallthru
        _
      // Predicated region
      $region49: #{lightweight_cnn_forward.7} parent=11 // pred_check
        %p455 = pneg %p261
      $region50: #{lightweight_cnn_forward.7} parent=11 // pred_check_branch
        %457 = sbr.rel (%p455) target = $region52
      $region51: #{lightweight_cnn_forward.7} parent=11 // pred_region
        _
      $region52: #{lightweight_cnn_forward.7} parent=11 // pred_fallthru
        _
      // Predicated region
      $region53: #{lightweight_cnn_forward.7} parent=11 // pred_check
        %p458 = pneg %p282
      $region54: #{lightweight_cnn_forward.7} parent=11 // pred_check_branch
        %460 = sbr.rel (%p458) target = $region56
      $region55: #{lightweight_cnn_forward.7} parent=11 // pred_region
        _
      $region56: #{lightweight_cnn_forward.7} parent=11 // pred_fallthru
        _
      // Predicated region
      $region57: #{lightweight_cnn_forward.7} parent=11 // pred_check
        %p461 = pneg %p303
      $region58: #{lightweight_cnn_forward.7} parent=11 // pred_check_branch
        %463 = sbr.rel (%p461) target = $region60
      $region59: #{lightweight_cnn_forward.7} parent=11 // pred_region
        _
      $region60: #{lightweight_cnn_forward.7} parent=11 // pred_fallthru
        _
      // Predicated region
      $region61: #{lightweight_cnn_forward.7} parent=11 // pred_check
        %p464 = pneg %p324
      $region62: #{lightweight_cnn_forward.7} parent=11 // pred_check_branch
        %466 = sbr.rel (%p464) target = $region64
      $region63: #{lightweight_cnn_forward.7} parent=11 // pred_region
        _
      $region64: #{lightweight_cnn_forward.7} parent=11 // pred_fallthru
        _
      // Predicated region
      $region65: #{lightweight_cnn_forward.7} parent=11 // pred_check
        %p467 = pneg %p345
      $region66: #{lightweight_cnn_forward.7} parent=11 // pred_check_branch
        %469 = sbr.rel (%p467) target = $region68
      $region67: #{lightweight_cnn_forward.7} parent=11 // pred_region
        _
      $region68: #{lightweight_cnn_forward.7} parent=11 // pred_fallthru
        _
      // Predicated region
      $region69: #{lightweight_cnn_forward.7} parent=11 // pred_check
        %p470 = pneg %p366
      $region70: #{lightweight_cnn_forward.7} parent=11 // pred_check_branch
        %472 = sbr.rel (%p470) target = $region72
      $region71: #{lightweight_cnn_forward.7} parent=11 // pred_region
        _
      $region72: #{lightweight_cnn_forward.7} parent=11 // pred_fallthru
        _
      // Predicated region
      $region73: #{lightweight_cnn_forward.7} parent=11 // pred_check
        %p473 = pneg %p387
      $region74: #{lightweight_cnn_forward.7} parent=11 // pred_check_branch
        %475 = sbr.rel (%p473) target = $region76
      $region75: #{lightweight_cnn_forward.7} parent=11 // pred_region
        _
      $region76: #{lightweight_cnn_forward.7} parent=11 // pred_fallthru
        _
    $region12: #{lightweight_cnn_forward.7} parent=5 // pred_fallthru
      _
    %p476 = scmp.lt.s32.totalorder %s25, 2
    // Predicated region
    $region77: #{lightweight_cnn_forward.7} parent=5 // pred_check
      %p477 = pneg %p476
    $region78: #{lightweight_cnn_forward.7} parent=5 // pred_check_branch
      %479 = sbr.rel (%p477) target = $region80
    $region79: #{lightweight_cnn_forward.7} parent=5 // pred_region
      // Predicated region
      $region81: #{lightweight_cnn_forward.7} parent=79 // pred_check
        %p480 = pneg %p45
      $region82: #{lightweight_cnn_forward.7} parent=79 // pred_check_branch
        %482 = sbr.rel (%p480) target = $region84
      $region83: #{lightweight_cnn_forward.7} parent=79 // pred_region
        %p483 = scmp.lt.s32.totalorder %s25, 1
        %s484 = scalar_select %p483, %s25, 1
        %s485 = smul.addr %s484, 12
        %s486 = smul.addr %s485, 4
        %s487 = scalar_lea.vmem %s0, %s486
      $region84: #{lightweight_cnn_forward.7} parent=79 // pred_fallthru
        _
    $region80: #{lightweight_cnn_forward.7} parent=5 // pred_fallthru
      _
    %p488 = scmp.le.s32.totalorder 1, %s25
    %p489 = scmp.lt.s32.totalorder %s25, 3
    %p490 = pnand %p488, %p489
    %p491 = pneg %p490
    // Predicated region
    $region85: #{lightweight_cnn_forward.7} parent=5 // pred_check
      _
    $region86: #{lightweight_cnn_forward.7} parent=5 // pred_check_branch
      %493 = sbr.rel (%p490) target = $region88
    $region87: #{lightweight_cnn_forward.7} parent=5 // pred_region
      %s494 = ssub.s32 %s25, 1
      %p495 = scmp.lt.s32.totalorder %s30, 1
      %s496 = scalar_select %p495, %s30, 1
      %s497 = smul.addr %s496, 12
      %s498 = smul.addr %s497, 4
      %s499 = scalar_lea.vmem %s0, %s498
      %p500 = pneg %p51
      %p501 = pneg %p48
      %p502 = pneg %p72
      %p503 = pneg %p69
      %p504 = pneg %p93
      %p505 = pneg %p90
      %p506 = pneg %p114
      %p507 = pneg %p111
      %p508 = pneg %p135
      %p509 = pneg %p132
      %p510 = pneg %p156
      %p511 = pneg %p153
      %p512 = pneg %p177
      %p513 = pneg %p174
      %p514 = pneg %p198
      %p515 = pneg %p195
      %p516 = pneg %p219
      %p517 = pneg %p216
      %p518 = pneg %p240
      %p519 = pneg %p237
      %p520 = pneg %p261
      %p521 = pneg %p258
      %p522 = pneg %p282
      %p523 = pneg %p279
      %p524 = pneg %p303
      %p525 = pneg %p300
      %p526 = pneg %p324
      %p527 = pneg %p321
      %p528 = pneg %p345
      %p529 = pneg %p342
      %p530 = pneg %p366
      %p531 = pneg %p363
      %p532 = pneg %p387
      %p533 = pneg %p384
      %p534 = pneg %p413
      %p535 = pneg %p410
      %p536 = scmp.lt.s32.totalorder %s30, 1
      %s537 = scalar_select %p536, %s30, 1
      %s538 = smul.addr %s537, 2
      %s539 = smul.addr %s538, 4
      %s540 = scalar_lea.vmem %s17, %s539
      %p541 = scmp.lt.s32.totalorder %s30, 1
      %s542 = scalar_select %p541, %s30, 1
      %s543 = smul.addr %s542, 12
      %s544 = smul.addr %s543, 4
      %s545 = scalar_lea.vmem %s0, %s544
      %p546 = scmp.lt.s32.totalorder %s30, 1
      %s547 = scalar_select %p546, %s30, 1
      %s548 = smul.addr %s547, 2
      %s549 = smul.addr %s548, 4
      %s550 = scalar_lea.vmem %s17, %s549
      %v551 = vld [vmem:[%s545] sm:$0x7]
      %v552 = vld [vmem:[%s545 + $0x4] sm:$0x7]
      %v553 = vld [vmem:[%s545 + $0x8] sm:$0x7]
      %v554 = vld [vmem:[%s545 + $0xc] sm:$0x7]
      %v555 = vld [vmem:[%s545 + $0x10] sm:$0x7]
      %v556 = vld [vmem:[%s545 + $0x14] sm:$0x7]
      %v557 = vld [vmem:[%s545 + $0x18] sm:$0x7]
      %v558 = vld [vmem:[%s545 + $0x1c] sm:$0x7]
      %v559 = vld [vmem:[%s545 + $0x24] sm:$0x7]
      %v560 = vld [vmem:[%s545 + $0x28] sm:$0x7]
      %v561 = vld [vmem:[%s1] sm:$0x7]
      %v562 = vld [vmem:[%s1 + $0x4] sm:$0x7]
      %v563 = vld [vmem:[%s1 + $0x8] sm:$0x7]
      %v564 = vlaneseq
      %v565 = vshrl.u32 %v564, 7
      %v566 = vsub.s32 0, %v565
      %v567 = vrot.slane %v561, %v566
      %v568 = vmul.f32 %v551, %v567
      %v569 = vmul.f32 %v552, %v567
      %v570 = vadd.f32 %v568, 0.0
      %v571 = vadd.f32 %v569, 0.0
      %v572 = vlaneseq
      %v573 = vshrl.u32 %v572, 7
      %v574 = vsub.s32 1, %v573
      %v575 = vrot.slane %v561, %v574
      %v576 = vmul.f32 %v554, %v575
      %v577 = vmul.f32 %v555, %v575
      %v578 = vadd.f32 %v570, %v576
      %v579 = vadd.f32 %v571, %v577
      %v580 = vlaneseq
      %v581 = vshrl.u32 %v580, 7
      %v582 = vsub.s32 2, %v581
      %v583 = vrot.slane %v561, %v582
      %v584 = vmul.f32 %v551, %v583
      %v585 = vmul.f32 %v552, %v583
      %v588 = vrot.slane %v584, 1
      %v589 = vrot.slane %v585, 1
      %v592 = vadd.f32 %v578, %v588
      %v593 = vadd.f32 %v579, %v589
      %v594 = vlaneseq
      %v595 = vshrl.u32 %v594, 7
      %v596 = vsub.s32 0, %v595
      %v597 = vrot.slane %v562, %v596
      %v598 = vmul.f32 %v557, %v597
      %v599 = vmul.f32 %v558, %v597
      %v600 = vadd.f32 %v592, %v598
      %v601 = vadd.f32 %v593, %v599
      %v602 = vlaneseq
      %v603 = vshrl.u32 %v602, 7
      %v604 = vsub.s32 1, %v603
      %v605 = vrot.slane %v562, %v604
      %v606 = vmul.f32 %v559, %v605
      %v607 = vmul.f32 %v560, %v605
      %v608 = vadd.f32 %v600, %v606
      %v609 = vadd.f32 %v601, %v607
      %v610 = vlaneseq
      %v611 = vshrl.u32 %v610, 7
      %v612 = vsub.s32 2, %v611
      %v613 = vrot.slane %v562, %v612
      %v614 = vmul.f32 %v557, %v613
      %v615 = vmul.f32 %v558, %v613
      %v618 = vrot.slane %v614, 1
      %v619 = vrot.slane %v615, 1
      %v622 = vadd.f32 %v608, %v618
      %v623 = vadd.f32 %v609, %v619
      %v624 = vlaneseq
      %v625 = vshrl.u32 %v624, 7
      %v626 = vsub.s32 0, %v625
      %v627 = vrot.slane %v563, %v626
      %v628 = vmul.f32 %v552, %v627
      %v629 = vmul.f32 %v553, %v627
      %v630 = vadd.f32 %v622, %v628
      %v631 = vadd.f32 %v623, %v629
      %v632 = vlaneseq
      %v633 = vshrl.u32 %v632, 7
      %v634 = vsub.s32 1, %v633
      %v635 = vrot.slane %v563, %v634
      %v636 = vmul.f32 %v555, %v635
      %v637 = vmul.f32 %v556, %v635
      %v638 = vadd.f32 %v630, %v636
      %v639 = vadd.f32 %v631, %v637
      %v640 = vlaneseq
      %v641 = vshrl.u32 %v640, 7
      %v642 = vsub.s32 2, %v641
      %v643 = vrot.slane %v563, %v642
      %v644 = vmul.f32 %v552, %v643
      %v645 = vmul.f32 %v553, %v643
      %v648 = vrot.slane %v644, 1
      %v649 = vrot.slane %v645, 1
      %v652 = vadd.f32 %v638, %v648
      %v653 = vadd.f32 %v639, %v649
      %v654 = vld [vmem:[%s2] sm:$0x1]
      %v656 = vlaneseq
      %v657 = vshrl.u32 %v656, 7
      %v658 = vsub.s32 0, %v657
      %v659 = vrot.slane %v654, %v658
      %v661 = vmul.f32 %v652, %v659
      %v662 = vmul.f32 %v653, %v659
      %v663 = vld [vmem:[%s3] sm:$0x1]
      %v665 = vlaneseq
      %v666 = vshrl.u32 %v665, 7
      %v667 = vsub.s32 0, %v666
      %v668 = vrot.slane %v663, %v667
      %v670 = vadd.f32 %v661, %v668
      %v671 = vadd.f32 %v662, %v668
      %v672 = vmax.f32 %v670, 0.0
      %v673 = vmax.f32 %v671, 0.0
      %v674 = vmin.f32 %v672, 6.0
      %v675 = vmin.f32 %v673, 6.0
      %v676 = vld [vmem:[%s4] sm:$0xff]
      %v677 = vld [vmem:[%s4 + $0x8] sm:$0xff]
      %v678 = vld [vmem:[%s4 + $0x10] sm:$0xff]
      %v679 = vld [vmem:[%s4 + $0x18] sm:$0xff]
      %v680 = vld [vmem:[%s4 + $0x20] sm:$0xff]
      %v681 = vld [vmem:[%s4 + $0x28] sm:$0xff]
      %v682 = vld [vmem:[%s4 + $0x30] sm:$0xff]
      %v683 = vld [vmem:[%s4 + $0x38] sm:$0xff]
      %v684 = vld [vmem:[%s4 + $0x40] sm:$0xff]
      %v685 = vld [vmem:[%s4 + $0x48] sm:$0xff]
      %v686 = vld [vmem:[%s4 + $0x50] sm:$0xff]
      %v687 = vld [vmem:[%s4 + $0x58] sm:$0xff]
      %v688 = vld [vmem:[%s4 + $0x60] sm:$0xff]
      %v689 = vld [vmem:[%s4 + $0x68] sm:$0xff]
      %v690 = vld [vmem:[%s4 + $0x70] sm:$0xff]
      %v691 = vld [vmem:[%s4 + $0x78] sm:$0xff]
      %v692 = vld [vmem:[%s4 + $0x80] sm:$0xff]
      %v693 = vld [vmem:[%s4 + $0x88] sm:$0xff]
      %v694 = vld [vmem:[%s4 + $0x90] sm:$0xff]
      %v695 = vld [vmem:[%s4 + $0x98] sm:$0xff]
      %v696 = vld [vmem:[%s4 + $0xa0] sm:$0xff]
      %v697 = vld [vmem:[%s4 + $0xa8] sm:$0xff]
      %v698 = vld [vmem:[%s4 + $0xb0] sm:$0xff]
      %v699 = vld [vmem:[%s4 + $0xb8] sm:$0xff]
      %v700 = vld [vmem:[%s4 + $0xc0] sm:$0xff]
      %v701 = vld [vmem:[%s4 + $0xc8] sm:$0xff]
      %v702 = vld [vmem:[%s4 + $0xd0] sm:$0xff]
      %v703 = vld [vmem:[%s4 + $0xd8] sm:$0xff]
      %v704 = vld [vmem:[%s4 + $0xe0] sm:$0xff]
      %v705 = vld [vmem:[%s4 + $0xe8] sm:$0xff]
      %v706 = vld [vmem:[%s4 + $0xf0] sm:$0xff]
      %v707 = vld [vmem:[%s4 + $0xf8] sm:$0xff]
      %v710 = vcombine.low %v674, %v675
      %v712 = vunpack.c.l.s4 1983009808
      %v713 = vunpack.c.0.s8 %v712
      %v714 = vlaneseq
      %v715 = vshrl.u32 %v714, 7
      %v716 = vsub.s32 %v713, %v715
      %v717 = vrot.slane %v710, %v716
      %719 = vmatprep.subr.mxu0 %v677
      %720 = vmatpush1.msra.mxu0 %v676
      %721 = vmatprep.subr.mxu0 %v679
      %722 = vmatpush1.msra.mxu0 %v678
      %723 = vmatprep.subr.mxu0 %v681
      %724 = vmatpush1.msra.mxu0 %v680
      %725 = vmatprep.subr.mxu0 %v683
      %726 = vmatpush1.msra.mxu0 %v682
      %727 = vmatprep.subr.mxu0 %v685
      %728 = vmatpush1.msra.mxu0 %v684
      %729 = vmatprep.subr.mxu0 %v687
      %730 = vmatpush1.msra.mxu0 %v686
      %731 = vmatprep.subr.mxu0 %v689
      %732 = vmatpush1.msra.mxu0 %v688
      %733 = vmatprep.subr.mxu0 %v691
      %734 = vmatpush1.msra.mxu0 %v690
      %735 = vmatprep.subr.mxu0 %v693
      %736 = vmatpush1.msra.mxu0 %v692
      %737 = vmatprep.subr.mxu0 %v695
      %738 = vmatpush1.msra.mxu0 %v694
      %739 = vmatprep.subr.mxu0 %v697
      %740 = vmatpush1.msra.mxu0 %v696
      %741 = vmatprep.subr.mxu0 %v699
      %742 = vmatpush1.msra.mxu0 %v698
      %743 = vmatprep.subr.mxu0 %v701
      %744 = vmatpush1.msra.mxu0 %v700
      %745 = vmatprep.subr.mxu0 %v703
      %746 = vmatpush1.msra.mxu0 %v702
      %747 = vmatprep.subr.mxu0 %v705
      %748 = vmatpush1.msra.mxu0 %v704
      %749 = vmatprep.subr.mxu0 %v707
      %750 = vmatpush1.msra.mxu0 %v706
      %751 = vmatprep.subr.mxu0 0.0
      %752 = vmatpush1.msra.mxu0 0.0
      %753 = vmatprep.subr.mxu0 0.0
      %754 = vmatpush1.msra.mxu0 0.0
      %755 = vmatprep.subr.mxu0 0.0
      %756 = vmatpush1.msra.mxu0 0.0
      %757 = vmatprep.subr.mxu0 0.0
      %758 = vmatpush1.msra.mxu0 0.0
      %759 = vmatprep.subr.mxu0 0.0
      %760 = vmatpush1.msra.mxu0 0.0
      %761 = vmatprep.subr.mxu0 0.0
      %762 = vmatpush1.msra.mxu0 0.0
      %763 = vmatprep.subr.mxu0 0.0
      %764 = vmatpush1.msra.mxu0 0.0
      %765 = vmatprep.subr.mxu0 0.0
      %766 = vmatpush1.msra.mxu0 0.0
      %767 = vmatprep.subr.mxu0 0.0
      %768 = vmatpush1.msra.mxu0 0.0
      %769 = vmatprep.subr.mxu0 0.0
      %770 = vmatpush1.msra.mxu0 0.0
      %771 = vmatprep.subr.mxu0 0.0
      %772 = vmatpush1.msra.mxu0 0.0
      %773 = vmatprep.subr.mxu0 0.0
      %774 = vmatpush1.msra.mxu0 0.0
      %775 = vmatprep.subr.mxu0 0.0
      %776 = vmatpush1.msra.mxu0 0.0
      %777 = vmatprep.subr.mxu0 0.0
      %778 = vmatpush1.msra.mxu0 0.0
      %779 = vmatprep.subr.mxu0 0.0
      %780 = vmatpush1.msra.mxu0 0.0
      %781 = vmatprep.subr.mxu0 0.0
      %782 = vmatpush1.msra.mxu0 0.0
      %783 = vmatprep.mubr.f32.mxu0 0.0
      %784 = vmatmul.mubr.f32.gmra.mrb[0].mxu0 %v717
      %v785 = vpop.f32.mrb[0].mxu0
      %v786 = vadd.f32 0.0, %v785
      %v787 = vpop.f32.mrb[0].mxu0
      %v788 = vadd.f32 0.0, %v787
      %789 = vdwg.mxu0
      %v790 = vld [vmem:[%s5] sm:$0x3]
      %v792 = vlaneseq
      %v793 = vshrl.u32 %v792, 7
      %v794 = vsub.s32 0, %v793
      %v795 = vrot.slane %v790, %v794
      %v796 = vlaneseq
      %v797 = vshrl.u32 %v796, 7
      %v798 = vsub.s32 1, %v797
      %v799 = vrot.slane %v790, %v798
      %v802 = vmul.f32 %v786, %v795
      %v803 = vmul.f32 %v788, %v799
      %v804 = vld [vmem:[%s6] sm:$0x3]
      %v806 = vlaneseq
      %v807 = vshrl.u32 %v806, 7
      %v808 = vsub.s32 0, %v807
      %v809 = vrot.slane %v804, %v808
      %v810 = vlaneseq
      %v811 = vshrl.u32 %v810, 7
      %v812 = vsub.s32 1, %v811
      %v813 = vrot.slane %v804, %v812
      %v816 = vadd.f32 %v802, %v809
      %v817 = vadd.f32 %v803, %v813
      %v818 = vmax.f32 %v816, 0.0
      %v819 = vmax.f32 %v817, 0.0
      %v820 = vmin.f32 %v818, 6.0
      %v821 = vmin.f32 %v819, 6.0
      %822 = vst [vmem:[#allocation2] sm:$0xff] 0.0
      %823 = vst [vmem:[#allocation2 + $0x8] sm:$0xff] 0.0
      %824 = vst [vmem:[#allocation2 + $0x10] sm:$0xff] 0.0
      %825 = vst [vmem:[#allocation2 + $0x18] sm:$0xff] 0.0
      %v828 = vcombine.low %v820, %v821
      %v830 = vunpack.c.l.s4 1983009808
      %v831 = vunpack.c.0.s8 %v830
      %v832 = vlaneseq
      %v833 = vshrl.u32 %v832, 7
      %v834 = vsub.s32 %v831, %v833
      %v835 = vrot.slane %v828, %v834
      %v836 = vcombine.high %v835, %v835
      %v838 = vunpack.c.l.s4 1983009808
      %v839 = vunpack.c.0.s8 %v838
      %v840 = vlaneseq
      %v841 = vshrl.u32 %v840, 7
      %v842 = vsub.s32 %v839, %v841
      %v843 = vrot.slane %v835, %v842
      %v845 = vunpack.c.l.s4 1983009808
      %v846 = vunpack.c.0.s8 %v845
      %v847 = vlaneseq
      %v848 = vshrl.u32 %v847, 7
      %v849 = vsub.s32 %v846, %v848
      %v850 = vrot.slane %v836, %v849
      %v851 = vrot.slane %v843, 7
      %v852 = vrot.slane %v850, 7
      %s855 = scalar_lea.vmem [#allocation2], 8
      %856 = vst [vmem:[%s855] sm:$0x66] %v851
      %857 = vst [vmem:[%s855 + $0x8] sm:$0x66] %v852
      %v858 = vld [vmem:[%s7] sm:$0x77]
      %v859 = vld [vmem:[%s7 + $0x8] sm:$0x77]
      %v860 = vld [vmem:[%s7 + $0x10] sm:$0x77]
      %v861 = vld [vmem:[#allocation2] sm:$0x33]
      %v862 = vld [vmem:[#allocation2 + $0x8] sm:$0x33]
      %v864 = vlaneseq
      %v865 = vshrl.u32 %v864, 7
      %v866 = vsub.s32 0, %v865
      %v867 = vrot.slane %v858, %v866
      %v868 = vlaneseq
      %v869 = vshrl.u32 %v868, 7
      %v870 = vsub.s32 4, %v869
      %v871 = vrot.slane %v858, %v870
      %v874 = vlaneseq
      %v875 = vshrl.u32 %v874, 7
      %v876 = vsub.s32 0, %v875
      %v877 = vrot.slane %v867, %v876
      %v878 = vlaneseq
      %v879 = vshrl.u32 %v878, 7
      %v880 = vsub.s32 0, %v879
      %v881 = vrot.slane %v871, %v880
      %v884 = vcombine.low %v877, %v881
      %v886 = vmul.f32 %v861, %v884
      %v887 = vmul.f32 %v862, %v884
      %v888 = vadd.f32 %v886, 0.0
      %v889 = vadd.f32 %v887, 0.0
      %v890 = vld [vmem:[#allocation2] sm:$0x66]
      %v891 = vld [vmem:[#allocation2 + $0x8] sm:$0x66]
      %v892 = vlaneseq
      %v893 = vshrl.u32 %v892, 7
      %v894 = vsub.s32 1, %v893
      %v895 = vrot.slane %v858, %v894
      %v896 = vlaneseq
      %v897 = vshrl.u32 %v896, 7
      %v898 = vsub.s32 5, %v897
      %v899 = vrot.slane %v858, %v898
      %v902 = vlaneseq
      %v903 = vshrl.u32 %v902, 7
      %v904 = vsub.s32 1, %v903
      %v905 = vrot.slane %v895, %v904
      %v906 = vlaneseq
      %v907 = vshrl.u32 %v906, 7
      %v908 = vsub.s32 1, %v907
      %v909 = vrot.slane %v899, %v908
      %v912 = vcombine.low %v905, %v909
      %v913 = vrot.slane %v912, 7
      %v915 = vmul.f32 %v890, %v913
      %v916 = vmul.f32 %v891, %v913
      %v919 = vrot.slane %v915, 5
      %v920 = vrot.slane %v919, 4
      %v921 = vrot.slane %v916, 5
      %v922 = vrot.slane %v921, 4
      %v925 = vadd.f32 %v888, %v920
      %v926 = vadd.f32 %v889, %v922
      %v927 = vld [vmem:[#allocation2] sm:$0xcc]
      %v928 = vld [vmem:[#allocation2 + $0x8] sm:$0xcc]
      %v929 = vlaneseq
      %v930 = vshrl.u32 %v929, 7
      %v931 = vsub.s32 2, %v930
      %v932 = vrot.slane %v858, %v931
      %v933 = vlaneseq
      %v934 = vshrl.u32 %v933, 7
      %v935 = vsub.s32 6, %v934
      %v936 = vrot.slane %v858, %v935
      %v939 = vlaneseq
      %v940 = vshrl.u32 %v939, 7
      %v941 = vsub.s32 2, %v940
      %v942 = vrot.slane %v932, %v941
      %v943 = vlaneseq
      %v944 = vshrl.u32 %v943, 7
      %v945 = vsub.s32 2, %v944
      %v946 = vrot.slane %v936, %v945
      %v949 = vcombine.low %v942, %v946
      %v950 = vrot.slane %v949, 6
      %v952 = vmul.f32 %v927, %v950
      %v953 = vmul.f32 %v928, %v950
      %v956 = vrot.slane %v952, 6
      %v957 = vrot.slane %v956, 4
      %v958 = vrot.slane %v953, 6
      %v959 = vrot.slane %v958, 4
      %v962 = vadd.f32 %v925, %v957
      %v963 = vadd.f32 %v926, %v959
      %v964 = vld [vmem:[%s855] sm:$0x33]
      %v965 = vld [vmem:[%s855 + $0x8] sm:$0x33]
      %v967 = vlaneseq
      %v968 = vshrl.u32 %v967, 7
      %v969 = vsub.s32 0, %v968
      %v970 = vrot.slane %v859, %v969
      %v971 = vlaneseq
      %v972 = vshrl.u32 %v971, 7
      %v973 = vsub.s32 4, %v972
      %v974 = vrot.slane %v859, %v973
      %v977 = vlaneseq
      %v978 = vshrl.u32 %v977, 7
      %v979 = vsub.s32 0, %v978
      %v980 = vrot.slane %v970, %v979
      %v981 = vlaneseq
      %v982 = vshrl.u32 %v981, 7
      %v983 = vsub.s32 0, %v982
      %v984 = vrot.slane %v974, %v983
      %v987 = vcombine.low %v980, %v984
      %v989 = vmul.f32 %v964, %v987
      %v990 = vmul.f32 %v965, %v987
      %v991 = vadd.f32 %v962, %v989
      %v992 = vadd.f32 %v963, %v990
      %v993 = vld [vmem:[%s855] sm:$0x66]
      %v994 = vld [vmem:[%s855 + $0x8] sm:$0x66]
      %v995 = vlaneseq
      %v996 = vshrl.u32 %v995, 7
      %v997 = vsub.s32 1, %v996
      %v998 = vrot.slane %v859, %v997
      %v999 = vlaneseq
      %v1000 = vshrl.u32 %v999, 7
      %v1001 = vsub.s32 5, %v1000
      %v1002 = vrot.slane %v859, %v1001
      %v1005 = vlaneseq
      %v1006 = vshrl.u32 %v1005, 7
      %v1007 = vsub.s32 1, %v1006
      %v1008 = vrot.slane %v998, %v1007
      %v1009 = vlaneseq
      %v1010 = vshrl.u32 %v1009, 7
      %v1011 = vsub.s32 1, %v1010
      %v1012 = vrot.slane %v1002, %v1011
      %v1015 = vcombine.low %v1008, %v1012
      %v1016 = vrot.slane %v1015, 7
      %v1018 = vmul.f32 %v993, %v1016
      %v1019 = vmul.f32 %v994, %v1016
      %v1022 = vrot.slane %v1018, 5
      %v1023 = vrot.slane %v1022, 4
      %v1024 = vrot.slane %v1019, 5
      %v1025 = vrot.slane %v1024, 4
      %v1028 = vadd.f32 %v991, %v1023
      %v1029 = vadd.f32 %v992, %v1025
      %v1030 = vld [vmem:[%s855] sm:$0xcc]
      %v1031 = vld [vmem:[%s855 + $0x8] sm:$0xcc]
      %v1032 = vlaneseq
      %v1033 = vshrl.u32 %v1032, 7
      %v1034 = vsub.s32 2, %v1033
      %v1035 = vrot.slane %v859, %v1034
      %v1036 = vlaneseq
      %v1037 = vshrl.u32 %v1036, 7
      %v1038 = vsub.s32 6, %v1037
      %v1039 = vrot.slane %v859, %v1038
      %v1042 = vlaneseq
      %v1043 = vshrl.u32 %v1042, 7
      %v1044 = vsub.s32 2, %v1043
      %v1045 = vrot.slane %v1035, %v1044
      %v1046 = vlaneseq
      %v1047 = vshrl.u32 %v1046, 7
      %v1048 = vsub.s32 2, %v1047
      %v1049 = vrot.slane %v1039, %v1048
      %v1052 = vcombine.low %v1045, %v1049
      %v1053 = vrot.slane %v1052, 6
      %v1055 = vmul.f32 %v1030, %v1053
      %v1056 = vmul.f32 %v1031, %v1053
      %v1059 = vrot.slane %v1055, 6
      %v1060 = vrot.slane %v1059, 4
      %v1061 = vrot.slane %v1056, 6
      %v1062 = vrot.slane %v1061, 4
      %v1065 = vadd.f32 %v1028, %v1060
      %v1066 = vadd.f32 %v1029, %v1062
      %s1067 = scalar_lea.vmem [#allocation2], 16
      %v1068 = vld [vmem:[%s1067] sm:$0x33]
      %v1069 = vld [vmem:[%s1067 + $0x8] sm:$0x33]
      %v1071 = vlaneseq
      %v1072 = vshrl.u32 %v1071, 7
      %v1073 = vsub.s32 0, %v1072
      %v1074 = vrot.slane %v860, %v1073
      %v1075 = vlaneseq
      %v1076 = vshrl.u32 %v1075, 7
      %v1077 = vsub.s32 4, %v1076
      %v1078 = vrot.slane %v860, %v1077
      %v1081 = vlaneseq
      %v1082 = vshrl.u32 %v1081, 7
      %v1083 = vsub.s32 0, %v1082
      %v1084 = vrot.slane %v1074, %v1083
      %v1085 = vlaneseq
      %v1086 = vshrl.u32 %v1085, 7
      %v1087 = vsub.s32 0, %v1086
      %v1088 = vrot.slane %v1078, %v1087
      %v1091 = vcombine.low %v1084, %v1088
      %v1093 = vmul.f32 %v1068, %v1091
      %v1094 = vmul.f32 %v1069, %v1091
      %v1095 = vadd.f32 %v1065, %v1093
      %v1096 = vadd.f32 %v1066, %v1094
      %v1097 = vld [vmem:[%s1067] sm:$0x66]
      %v1098 = vld [vmem:[%s1067 + $0x8] sm:$0x66]
      %v1099 = vlaneseq
      %v1100 = vshrl.u32 %v1099, 7
      %v1101 = vsub.s32 1, %v1100
      %v1102 = vrot.slane %v860, %v1101
      %v1103 = vlaneseq
      %v1104 = vshrl.u32 %v1103, 7
      %v1105 = vsub.s32 5, %v1104
      %v1106 = vrot.slane %v860, %v1105
      %v1109 = vlaneseq
      %v1110 = vshrl.u32 %v1109, 7
      %v1111 = vsub.s32 1, %v1110
      %v1112 = vrot.slane %v1102, %v1111
      %v1113 = vlaneseq
      %v1114 = vshrl.u32 %v1113, 7
      %v1115 = vsub.s32 1, %v1114
      %v1116 = vrot.slane %v1106, %v1115
      %v1119 = vcombine.low %v1112, %v1116
      %v1120 = vrot.slane %v1119, 7
      %v1122 = vmul.f32 %v1097, %v1120
      %v1123 = vmul.f32 %v1098, %v1120
      %v1126 = vrot.slane %v1122, 5
      %v1127 = vrot.slane %v1126, 4
      %v1128 = vrot.slane %v1123, 5
      %v1129 = vrot.slane %v1128, 4
      %v1132 = vadd.f32 %v1095, %v1127
      %v1133 = vadd.f32 %v1096, %v1129
      %v1134 = vld [vmem:[%s1067] sm:$0xcc]
      %v1135 = vld [vmem:[%s1067 + $0x8] sm:$0xcc]
      %v1136 = vlaneseq
      %v1137 = vshrl.u32 %v1136, 7
      %v1138 = vsub.s32 2, %v1137
      %v1139 = vrot.slane %v860, %v1138
      %v1140 = vlaneseq
      %v1141 = vshrl.u32 %v1140, 7
      %v1142 = vsub.s32 6, %v1141
      %v1143 = vrot.slane %v860, %v1142
      %v1146 = vlaneseq
      %v1147 = vshrl.u32 %v1146, 7
      %v1148 = vsub.s32 2, %v1147
      %v1149 = vrot.slane %v1139, %v1148
      %v1150 = vlaneseq
      %v1151 = vshrl.u32 %v1150, 7
      %v1152 = vsub.s32 2, %v1151
      %v1153 = vrot.slane %v1143, %v1152
      %v1156 = vcombine.low %v1149, %v1153
      %v1157 = vrot.slane %v1156, 6
      %v1159 = vmul.f32 %v1134, %v1157
      %v1160 = vmul.f32 %v1135, %v1157
      %v1163 = vrot.slane %v1159, 6
      %v1164 = vrot.slane %v1163, 4
      %v1165 = vrot.slane %v1160, 6
      %v1166 = vrot.slane %v1165, 4
      %v1169 = vadd.f32 %v1132, %v1164
      %v1170 = vadd.f32 %v1133, %v1166
      %v1171 = vld [vmem:[%s8] sm:$0x3]
      %v1173 = vlaneseq
      %v1174 = vshrl.u32 %v1173, 7
      %v1175 = vsub.s32 0, %v1174
      %v1176 = vrot.slane %v1171, %v1175
      %v1177 = vlaneseq
      %v1178 = vshrl.u32 %v1177, 7
      %v1179 = vsub.s32 1, %v1178
      %v1180 = vrot.slane %v1171, %v1179
      %v1181 = vcombine.low %v1176, %v1180
      %v1183 = vmul.f32 %v1169, %v1181
      %v1184 = vmul.f32 %v1170, %v1181
      %v1185 = vld [vmem:[%s9] sm:$0x3]
      %v1187 = vlaneseq
      %v1188 = vshrl.u32 %v1187, 7
      %v1189 = vsub.s32 0, %v1188
      %v1190 = vrot.slane %v1185, %v1189
      %v1191 = vlaneseq
      %v1192 = vshrl.u32 %v1191, 7
      %v1193 = vsub.s32 1, %v1192
      %v1194 = vrot.slane %v1185, %v1193
      %v1195 = vcombine.low %v1190, %v1194
      %v1197 = vadd.f32 %v1183, %v1195
      %v1198 = vadd.f32 %v1184, %v1195
      %v1199 = vmax.f32 %v1197, 0.0
      %v1200 = vmax.f32 %v1198, 0.0
      %v1201 = vmin.f32 %v1199, 6.0
      %v1202 = vmin.f32 %v1200, 6.0
      %v1206 = vunpack.c.l.s4 1983009808
      %v1207 = vunpack.c.0.s8 %v1206
      %v1208 = vlaneseq
      %v1209 = vshrl.u32 %v1208, 7
      %v1210 = vsub.s32 %v1207, %v1209
      %v1211 = vrot.slane %v1201, %v1210
      %v1213 = vunpack.c.l.s4 1983009808
      %v1214 = vunpack.c.0.s8 %v1213
      %v1215 = vlaneseq
      %v1216 = vshrl.u32 %v1215, 7
      %v1217 = vsub.s32 %v1214, %v1216
      %v1218 = vrot.slane %v1202, %v1217
      %v1219 = vld [vmem:[%s10] sm:$0xff]
      %v1220 = vld [vmem:[%s10 + $0x8] sm:$0xff]
      %v1221 = vld [vmem:[%s10 + $0x10] sm:$0xff]
      %v1222 = vld [vmem:[%s10 + $0x18] sm:$0xff]
      %v1223 = vld [vmem:[%s10 + $0x20] sm:$0xff]
      %v1224 = vld [vmem:[%s10 + $0x28] sm:$0xff]
      %v1225 = vld [vmem:[%s10 + $0x30] sm:$0xff]
      %v1226 = vld [vmem:[%s10 + $0x38] sm:$0xff]
      %v1227 = vld [vmem:[%s10 + $0x40] sm:$0xff]
      %v1228 = vld [vmem:[%s10 + $0x48] sm:$0xff]
      %v1229 = vld [vmem:[%s10 + $0x50] sm:$0xff]
      %v1230 = vld [vmem:[%s10 + $0x58] sm:$0xff]
      %v1231 = vld [vmem:[%s10 + $0x60] sm:$0xff]
      %v1232 = vld [vmem:[%s10 + $0x68] sm:$0xff]
      %v1233 = vld [vmem:[%s10 + $0x70] sm:$0xff]
      %v1234 = vld [vmem:[%s10 + $0x78] sm:$0xff]
      %v1235 = vld [vmem:[%s10 + $0x80] sm:$0xff]
      %v1236 = vld [vmem:[%s10 + $0x88] sm:$0xff]
      %v1237 = vld [vmem:[%s10 + $0x90] sm:$0xff]
      %v1238 = vld [vmem:[%s10 + $0x98] sm:$0xff]
      %v1239 = vld [vmem:[%s10 + $0xa0] sm:$0xff]
      %v1240 = vld [vmem:[%s10 + $0xa8] sm:$0xff]
      %v1241 = vld [vmem:[%s10 + $0xb0] sm:$0xff]
      %v1242 = vld [vmem:[%s10 + $0xb8] sm:$0xff]
      %v1243 = vld [vmem:[%s10 + $0xc0] sm:$0xff]
      %v1244 = vld [vmem:[%s10 + $0xc8] sm:$0xff]
      %v1245 = vld [vmem:[%s10 + $0xd0] sm:$0xff]
      %v1246 = vld [vmem:[%s10 + $0xd8] sm:$0xff]
      %v1247 = vld [vmem:[%s10 + $0xe0] sm:$0xff]
      %v1248 = vld [vmem:[%s10 + $0xe8] sm:$0xff]
      %v1249 = vld [vmem:[%s10 + $0xf0] sm:$0xff]
      %v1250 = vld [vmem:[%s10 + $0xf8] sm:$0xff]
      %v1251 = vld [vmem:[%s10 + $0x100] sm:$0xff]
      %v1252 = vld [vmem:[%s10 + $0x108] sm:$0xff]
      %v1253 = vld [vmem:[%s10 + $0x110] sm:$0xff]
      %v1254 = vld [vmem:[%s10 + $0x118] sm:$0xff]
      %v1255 = vld [vmem:[%s10 + $0x120] sm:$0xff]
      %v1256 = vld [vmem:[%s10 + $0x128] sm:$0xff]
      %v1257 = vld [vmem:[%s10 + $0x130] sm:$0xff]
      %v1258 = vld [vmem:[%s10 + $0x138] sm:$0xff]
      %v1259 = vld [vmem:[%s10 + $0x140] sm:$0xff]
      %v1260 = vld [vmem:[%s10 + $0x148] sm:$0xff]
      %v1261 = vld [vmem:[%s10 + $0x150] sm:$0xff]
      %v1262 = vld [vmem:[%s10 + $0x158] sm:$0xff]
      %v1263 = vld [vmem:[%s10 + $0x160] sm:$0xff]
      %v1264 = vld [vmem:[%s10 + $0x168] sm:$0xff]
      %v1265 = vld [vmem:[%s10 + $0x170] sm:$0xff]
      %v1266 = vld [vmem:[%s10 + $0x178] sm:$0xff]
      %v1267 = vld [vmem:[%s10 + $0x180] sm:$0xff]
      %v1268 = vld [vmem:[%s10 + $0x188] sm:$0xff]
      %v1269 = vld [vmem:[%s10 + $0x190] sm:$0xff]
      %v1270 = vld [vmem:[%s10 + $0x198] sm:$0xff]
      %v1271 = vld [vmem:[%s10 + $0x1a0] sm:$0xff]
      %v1272 = vld [vmem:[%s10 + $0x1a8] sm:$0xff]
      %v1273 = vld [vmem:[%s10 + $0x1b0] sm:$0xff]
      %v1274 = vld [vmem:[%s10 + $0x1b8] sm:$0xff]
      %v1275 = vld [vmem:[%s10 + $0x1c0] sm:$0xff]
      %v1276 = vld [vmem:[%s10 + $0x1c8] sm:$0xff]
      %v1277 = vld [vmem:[%s10 + $0x1d0] sm:$0xff]
      %v1278 = vld [vmem:[%s10 + $0x1d8] sm:$0xff]
      %v1279 = vld [vmem:[%s10 + $0x1e0] sm:$0xff]
      %v1280 = vld [vmem:[%s10 + $0x1e8] sm:$0xff]
      %v1281 = vld [vmem:[%s10 + $0x1f0] sm:$0xff]
      %v1282 = vld [vmem:[%s10 + $0x1f8] sm:$0xff]
      %v1283 = vcombine.low %v1211, %v1218
      %v1285 = vunpack.c.l.s4 1983009808
      %v1286 = vunpack.c.0.s8 %v1285
      %v1287 = vlaneseq
      %v1288 = vshrl.u32 %v1287, 7
      %v1289 = vsub.s32 %v1286, %v1288
      %v1290 = vrot.slane %v1283, %v1289
      %v1291 = vcombine.high %v1290, %v1290
      %1294 = vmatprep.subr.mxu0 %v1220
      %1295 = vmatpush1.msra.mxu0 %v1219
      %1296 = vmatprep.subr.mxu0 %v1222
      %1297 = vmatpush1.msra.mxu0 %v1221
      %1298 = vmatprep.subr.mxu0 %v1224
      %1299 = vmatpush1.msra.mxu0 %v1223
      %1300 = vmatprep.subr.mxu0 %v1226
      %1301 = vmatpush1.msra.mxu0 %v1225
      %1302 = vmatprep.subr.mxu0 %v1228
      %1303 = vmatpush1.msra.mxu0 %v1227
      %1304 = vmatprep.subr.mxu0 %v1230
      %1305 = vmatpush1.msra.mxu0 %v1229
      %1306 = vmatprep.subr.mxu0 %v1232
      %1307 = vmatpush1.msra.mxu0 %v1231
      %1308 = vmatprep.subr.mxu0 %v1234
      %1309 = vmatpush1.msra.mxu0 %v1233
      %1310 = vmatprep.subr.mxu0 %v1236
      %1311 = vmatpush1.msra.mxu0 %v1235
      %1312 = vmatprep.subr.mxu0 %v1238
      %1313 = vmatpush1.msra.mxu0 %v1237
      %1314 = vmatprep.subr.mxu0 %v1240
      %1315 = vmatpush1.msra.mxu0 %v1239
      %1316 = vmatprep.subr.mxu0 %v1242
      %1317 = vmatpush1.msra.mxu0 %v1241
      %1318 = vmatprep.subr.mxu0 %v1244
      %1319 = vmatpush1.msra.mxu0 %v1243
      %1320 = vmatprep.subr.mxu0 %v1246
      %1321 = vmatpush1.msra.mxu0 %v1245
      %1322 = vmatprep.subr.mxu0 %v1248
      %1323 = vmatpush1.msra.mxu0 %v1247
      %1324 = vmatprep.subr.mxu0 %v1250
      %1325 = vmatpush1.msra.mxu0 %v1249
      %1326 = vmatprep.subr.mxu0 %v1252
      %1327 = vmatpush1.msra.mxu0 %v1251
      %1328 = vmatprep.subr.mxu0 %v1254
      %1329 = vmatpush1.msra.mxu0 %v1253
      %1330 = vmatprep.subr.mxu0 %v1256
      %1331 = vmatpush1.msra.mxu0 %v1255
      %1332 = vmatprep.subr.mxu0 %v1258
      %1333 = vmatpush1.msra.mxu0 %v1257
      %1334 = vmatprep.subr.mxu0 %v1260
      %1335 = vmatpush1.msra.mxu0 %v1259
      %1336 = vmatprep.subr.mxu0 %v1262
      %1337 = vmatpush1.msra.mxu0 %v1261
      %1338 = vmatprep.subr.mxu0 %v1264
      %1339 = vmatpush1.msra.mxu0 %v1263
      %1340 = vmatprep.subr.mxu0 %v1266
      %1341 = vmatpush1.msra.mxu0 %v1265
      %1342 = vmatprep.subr.mxu0 %v1268
      %1343 = vmatpush1.msra.mxu0 %v1267
      %1344 = vmatprep.subr.mxu0 %v1270
      %1345 = vmatpush1.msra.mxu0 %v1269
      %1346 = vmatprep.subr.mxu0 %v1272
      %1347 = vmatpush1.msra.mxu0 %v1271
      %1348 = vmatprep.subr.mxu0 %v1274
      %1349 = vmatpush1.msra.mxu0 %v1273
      %1350 = vmatprep.subr.mxu0 %v1276
      %1351 = vmatpush1.msra.mxu0 %v1275
      %1352 = vmatprep.subr.mxu0 %v1278
      %1353 = vmatpush1.msra.mxu0 %v1277
      %1354 = vmatprep.subr.mxu0 %v1280
      %1355 = vmatpush1.msra.mxu0 %v1279
      %1356 = vmatprep.subr.mxu0 %v1282
      %1357 = vmatpush1.msra.mxu0 %v1281
      %1358 = vmatprep.mubr.f32.mxu0 %v1291
      %1359 = vmatmul.mubr.f32.gmra.mrb[0].mxu0 %v1290
      %v1360 = vpop.f32.mrb[0].mxu0
      %v1361 = vadd.f32 0.0, %v1360
      %v1362 = vpop.f32.mrb[0].mxu0
      %v1363 = vadd.f32 0.0, %v1362
      %1364 = vdwg.mxu0
      %v1365 = vld [vmem:[%s11] sm:$0x3]
      %v1367 = vlaneseq
      %v1368 = vshrl.u32 %v1367, 7
      %v1369 = vsub.s32 0, %v1368
      %v1370 = vrot.slane %v1365, %v1369
      %v1371 = vlaneseq
      %v1372 = vshrl.u32 %v1371, 7
      %v1373 = vsub.s32 1, %v1372
      %v1374 = vrot.slane %v1365, %v1373
      %v1377 = vmul.f32 %v1361, %v1370
      %v1378 = vmul.f32 %v1363, %v1374
      %v1379 = vld [vmem:[%s12] sm:$0x3]
      %v1381 = vlaneseq
      %v1382 = vshrl.u32 %v1381, 7
      %v1383 = vsub.s32 0, %v1382
      %v1384 = vrot.slane %v1379, %v1383
      %v1385 = vlaneseq
      %v1386 = vshrl.u32 %v1385, 7
      %v1387 = vsub.s32 1, %v1386
      %v1388 = vrot.slane %v1379, %v1387
      %v1391 = vadd.f32 %v1377, %v1384
      %v1392 = vadd.f32 %v1378, %v1388
      %v1393 = vmax.f32 %v1391, 0.0
      %v1394 = vmax.f32 %v1392, 0.0
      %v1395 = vmin.f32 %v1393, 6.0
      %v1396 = vmin.f32 %v1394, 6.0
      %v1397 = vld [vmem:[%s13] sm:$0x3]
      %v1399 = vlaneseq
      %v1400 = vshrl.u32 %v1399, 7
      %v1401 = vsub.s32 0, %v1400
      %v1402 = vrot.slane %v1397, %v1401
      %v1403 = vlaneseq
      %v1404 = vshrl.u32 %v1403, 7
      %v1405 = vsub.s32 1, %v1404
      %v1406 = vrot.slane %v1397, %v1405
      %v1409 = vmul.f32 %v1395, %v1402
      %v1410 = vmul.f32 %v1396, %v1406
      %vm1411 = vcmask 1043456
      %v1412 = vsel %vm1411, %v1409, 0.0
      %v1413 = vsel %vm1411, %v1410, 0.0
      %v1414 = vadd.f32 %v1412, %v1413
      %1415 = vadd.xlane.f32.xlu0 %v1414
      %v1416 = vpop.xlane.xlu0 %1415
      %v1417 = vld [vmem:[#allocation3] sm:$0x1]
      %v1419 = vlaneseq
      %v1420 = vshrl.u32 %v1419, 7
      %v1421 = vsub.s32 0, %v1420
      %v1422 = vrot.slane %v1417, %v1421
      %v1424 = vadd.f32 %v1416, %v1422
      %v1425 = vxor.u32 %v1424, 2147483648
      %v1426 = vmul.f32 %v1425, 1.442695
      %v1427 = vpow.pop %v1426
      %v1428 = vadd.f32 %v1427, 1.0
      %v1429 = vrcp.pop %v1428
      %v1430 = vmul.f32 1.0, %v1429
      %1432 = vset.pattern.permute.xlu0 0
      %1433 = vperm.xlu0 %1432, %v1430
      %v1434 = vpop.permute.xlu0 %1433
      %v1436 = vmul.f32 %v1395, %v1434
      %v1437 = vmul.f32 %v1396, %v1434
      %v1438 = vsel %vm1411, %v1436, 0.0
      %v1439 = vrot.slane %v1438, 4
      %v1440 = vadd.f32 %v1438, %v1439
      %v1441 = vrot.slane %v1440, 2
      %v1442 = vadd.f32 %v1440, %v1441
      %v1443 = vrot.slane %v1442, 1
      %v1444 = vadd.f32 %v1442, %v1443
      %v1445 = vsel %vm1411, %v1437, 0.0
      %v1446 = vrot.slane %v1445, 4
      %v1447 = vadd.f32 %v1445, %v1446
      %v1448 = vrot.slane %v1447, 2
      %v1449 = vadd.f32 %v1447, %v1448
      %v1450 = vrot.slane %v1449, 1
      %v1451 = vadd.f32 %v1449, %v1450
      %v1452 = vrcp.pop 4.0
      %v1453 = vmul.f32 %v1444, %v1452
      %v1454 = vmul.f32 %v1451, %v1452
      %v1455 = vsel %vm1411, %v1436, -inf
      %v1456 = vrot.slane %v1455, 4
      %v1457 = vmax.f32 %v1455, %v1456
      %v1458 = vrot.slane %v1457, 2
      %v1459 = vmax.f32 %v1457, %v1458
      %v1460 = vrot.slane %v1459, 1
      %v1461 = vmax.f32 %v1459, %v1460
      %v1462 = vsel %vm1411, %v1437, -inf
      %v1463 = vrot.slane %v1462, 4
      %v1464 = vmax.f32 %v1462, %v1463
      %v1465 = vrot.slane %v1464, 2
      %v1466 = vmax.f32 %v1464, %v1465
      %v1467 = vrot.slane %v1466, 1
      %v1468 = vmax.f32 %v1466, %v1467
      %vm1469 = vcmask 1040384
      %v1470 = vsel %vm1469, %v1453, %v1461
      %v1471 = vsel %vm1469, %v1454, %v1468
      %v1472 = vld [vmem:[%s15] sm:$0xff]
      %v1473 = vld [vmem:[%s15 + $0x8] sm:$0xff]
      %v1474 = vld [vmem:[%s15 + $0x10] sm:$0xff]
      %v1475 = vld [vmem:[%s15 + $0x18] sm:$0xff]
      %v1476 = vld [vmem:[%s15 + $0x20] sm:$0xff]
      %v1477 = vld [vmem:[%s15 + $0x28] sm:$0xff]
      %v1478 = vld [vmem:[%s15 + $0x30] sm:$0xff]
      %v1479 = vld [vmem:[%s15 + $0x38] sm:$0xff]
      %v1480 = vld [vmem:[%s15 + $0x40] sm:$0xff]
      %v1481 = vld [vmem:[%s15 + $0x48] sm:$0xff]
      %v1482 = vld [vmem:[%s15 + $0x50] sm:$0xff]
      %v1483 = vld [vmem:[%s15 + $0x58] sm:$0xff]
      %v1484 = vld [vmem:[%s15 + $0x60] sm:$0xff]
      %v1485 = vld [vmem:[%s15 + $0x68] sm:$0xff]
      %v1486 = vld [vmem:[%s15 + $0x70] sm:$0xff]
      %v1487 = vld [vmem:[%s15 + $0x78] sm:$0xff]
      %v1488 = vld [vmem:[%s15 + $0x80] sm:$0xff]
      %v1489 = vld [vmem:[%s15 + $0x88] sm:$0xff]
      %v1490 = vld [vmem:[%s15 + $0x90] sm:$0xff]
      %v1491 = vld [vmem:[%s15 + $0x98] sm:$0xff]
      %v1492 = vld [vmem:[%s15 + $0xa0] sm:$0xff]
      %v1493 = vld [vmem:[%s15 + $0xa8] sm:$0xff]
      %v1494 = vld [vmem:[%s15 + $0xb0] sm:$0xff]
      %v1495 = vld [vmem:[%s15 + $0xb8] sm:$0xff]
      %v1496 = vld [vmem:[%s15 + $0xc0] sm:$0xff]
      %v1497 = vld [vmem:[%s15 + $0xc8] sm:$0xff]
      %v1498 = vld [vmem:[%s15 + $0xd0] sm:$0xff]
      %v1499 = vld [vmem:[%s15 + $0xd8] sm:$0xff]
      %v1500 = vld [vmem:[%s15 + $0xe0] sm:$0xff]
      %v1501 = vld [vmem:[%s15 + $0xe8] sm:$0xff]
      %v1502 = vld [vmem:[%s15 + $0xf0] sm:$0xff]
      %v1503 = vld [vmem:[%s15 + $0xf8] sm:$0xff]
      %1504 = vmatprep.subr.mxu0 0.0
      %1505 = vmatpush1.msra.mxu0 %v1472
      %1506 = vmatprep.subr.mxu0 0.0
      %1507 = vmatpush1.msra.mxu0 %v1473
      %1508 = vmatprep.subr.mxu0 0.0
      %1509 = vmatpush1.msra.mxu0 %v1474
      %1510 = vmatprep.subr.mxu0 0.0
      %1511 = vmatpush1.msra.mxu0 %v1475
      %1512 = vmatprep.subr.mxu0 0.0
      %1513 = vmatpush1.msra.mxu0 %v1476
      %1514 = vmatprep.subr.mxu0 0.0
      %1515 = vmatpush1.msra.mxu0 %v1477
      %1516 = vmatprep.subr.mxu0 0.0
      %1517 = vmatpush1.msra.mxu0 %v1478
      %1518 = vmatprep.subr.mxu0 0.0
      %1519 = vmatpush1.msra.mxu0 %v1479
      %1520 = vmatprep.subr.mxu0 0.0
      %1521 = vmatpush1.msra.mxu0 %v1480
      %1522 = vmatprep.subr.mxu0 0.0
      %1523 = vmatpush1.msra.mxu0 %v1481
      %1524 = vmatprep.subr.mxu0 0.0
      %1525 = vmatpush1.msra.mxu0 %v1482
      %1526 = vmatprep.subr.mxu0 0.0
      %1527 = vmatpush1.msra.mxu0 %v1483
      %1528 = vmatprep.subr.mxu0 0.0
      %1529 = vmatpush1.msra.mxu0 %v1484
      %1530 = vmatprep.subr.mxu0 0.0
      %1531 = vmatpush1.msra.mxu0 %v1485
      %1532 = vmatprep.subr.mxu0 0.0
      %1533 = vmatpush1.msra.mxu0 %v1486
      %1534 = vmatprep.subr.mxu0 0.0
      %1535 = vmatpush1.msra.mxu0 %v1487
      %1536 = vmatprep.subr.mxu0 0.0
      %1537 = vmatpush1.msra.mxu0 %v1488
      %1538 = vmatprep.subr.mxu0 0.0
      %1539 = vmatpush1.msra.mxu0 %v1489
      %1540 = vmatprep.subr.mxu0 0.0
      %1541 = vmatpush1.msra.mxu0 %v1490
      %1542 = vmatprep.subr.mxu0 0.0
      %1543 = vmatpush1.msra.mxu0 %v1491
      %1544 = vmatprep.subr.mxu0 0.0
      %1545 = vmatpush1.msra.mxu0 %v1492
      %1546 = vmatprep.subr.mxu0 0.0
      %1547 = vmatpush1.msra.mxu0 %v1493
      %1548 = vmatprep.subr.mxu0 0.0
      %1549 = vmatpush1.msra.mxu0 %v1494
      %1550 = vmatprep.subr.mxu0 0.0
      %1551 = vmatpush1.msra.mxu0 %v1495
      %1552 = vmatprep.subr.mxu0 0.0
      %1553 = vmatpush1.msra.mxu0 %v1496
      %1554 = vmatprep.subr.mxu0 0.0
      %1555 = vmatpush1.msra.mxu0 %v1497
      %1556 = vmatprep.subr.mxu0 0.0
      %1557 = vmatpush1.msra.mxu0 %v1498
      %1558 = vmatprep.subr.mxu0 0.0
      %1559 = vmatpush1.msra.mxu0 %v1499
      %1560 = vmatprep.subr.mxu0 0.0
      %1561 = vmatpush1.msra.mxu0 %v1500
      %1562 = vmatprep.subr.mxu0 0.0
      %1563 = vmatpush1.msra.mxu0 %v1501
      %1564 = vmatprep.subr.mxu0 0.0
      %1565 = vmatpush1.msra.mxu0 %v1502
      %1566 = vmatprep.subr.mxu0 0.0
      %1567 = vmatpush1.msra.mxu0 %v1503
      %1568 = vmatprep.mubr.f32.mxu0 %v1471
      %1569 = vmatmul.mubr.f32.gmra.mrb[0].mxu0 %v1470
      %v1570 = vpop.f32.mrb[0].mxu0
      %v1571 = vadd.f32 0.0, %v1570
      %v1572 = vpop.f32.mrb[0].mxu0
      %1573 = vdwg.mxu0
      %v1574 = vmax.f32 %v1571, 0.0
      %v1575 = vld [vmem:[%s16] sm:$0xff]
      %v1576 = vld [vmem:[%s16 + $0x8] sm:$0xff]
      %v1577 = vld [vmem:[%s16 + $0x10] sm:$0xff]
      %v1578 = vld [vmem:[%s16 + $0x18] sm:$0xff]
      %v1579 = vld [vmem:[%s16 + $0x20] sm:$0xff]
      %v1580 = vld [vmem:[%s16 + $0x28] sm:$0xff]
      %v1581 = vld [vmem:[%s16 + $0x30] sm:$0xff]
      %v1582 = vld [vmem:[%s16 + $0x38] sm:$0xff]
      %vm1583 = vcmask 261120
      %v1585 = vsel %vm1583, %v1574, 0
      %1587 = vmatprep.subr.mxu0 %v1576
      %1588 = vmatpush1.msra.mxu0 %v1575
      %1589 = vmatprep.subr.mxu0 %v1578
      %1590 = vmatpush1.msra.mxu0 %v1577
      %1591 = vmatprep.subr.mxu0 %v1580
      %1592 = vmatpush1.msra.mxu0 %v1579
      %1593 = vmatprep.subr.mxu0 %v1582
      %1594 = vmatpush1.msra.mxu0 %v1581
      %1595 = vmatprep.subr.mxu0 0.0
      %1596 = vmatpush1.msra.mxu0 0.0
      %1597 = vmatprep.subr.mxu0 0.0
      %1598 = vmatpush1.msra.mxu0 0.0
      %1599 = vmatprep.subr.mxu0 0.0
      %1600 = vmatpush1.msra.mxu0 0.0
      %1601 = vmatprep.subr.mxu0 0.0
      %1602 = vmatpush1.msra.mxu0 0.0
      %1603 = vmatprep.subr.mxu0 0.0
      %1604 = vmatpush1.msra.mxu0 0.0
      %1605 = vmatprep.subr.mxu0 0.0
      %1606 = vmatpush1.msra.mxu0 0.0
      %1607 = vmatprep.subr.mxu0 0.0
      %1608 = vmatpush1.msra.mxu0 0.0
      %1609 = vmatprep.subr.mxu0 0.0
      %1610 = vmatpush1.msra.mxu0 0.0
      %1611 = vmatprep.subr.mxu0 0.0
      %1612 = vmatpush1.msra.mxu0 0.0
      %1613 = vmatprep.subr.mxu0 0.0
      %1614 = vmatpush1.msra.mxu0 0.0
      %1615 = vmatprep.subr.mxu0 0.0
      %1616 = vmatpush1.msra.mxu0 0.0
      %1617 = vmatprep.subr.mxu0 0.0
      %1618 = vmatpush1.msra.mxu0 0.0
      %1619 = vmatprep.subr.mxu0 0.0
      %1620 = vmatpush1.msra.mxu0 0.0
      %1621 = vmatprep.subr.mxu0 0.0
      %1622 = vmatpush1.msra.mxu0 0.0
      %1623 = vmatprep.subr.mxu0 0.0
      %1624 = vmatpush1.msra.mxu0 0.0
      %1625 = vmatprep.subr.mxu0 0.0
      %1626 = vmatpush1.msra.mxu0 0.0
      %1627 = vmatprep.subr.mxu0 0.0
      %1628 = vmatpush1.msra.mxu0 0.0
      %1629 = vmatprep.subr.mxu0 0.0
      %1630 = vmatpush1.msra.mxu0 0.0
      %1631 = vmatprep.subr.mxu0 0.0
      %1632 = vmatpush1.msra.mxu0 0.0
      %1633 = vmatprep.subr.mxu0 0.0
      %1634 = vmatpush1.msra.mxu0 0.0
      %1635 = vmatprep.subr.mxu0 0.0
      %1636 = vmatpush1.msra.mxu0 0.0
      %1637 = vmatprep.subr.mxu0 0.0
      %1638 = vmatpush1.msra.mxu0 0.0
      %1639 = vmatprep.subr.mxu0 0.0
      %1640 = vmatpush1.msra.mxu0 0.0
      %1641 = vmatprep.subr.mxu0 0.0
      %1642 = vmatpush1.msra.mxu0 0.0
      %1643 = vmatprep.subr.mxu0 0.0
      %1644 = vmatpush1.msra.mxu0 0.0
      %1645 = vmatprep.subr.mxu0 0.0
      %1646 = vmatpush1.msra.mxu0 0.0
      %1647 = vmatprep.subr.mxu0 0.0
      %1648 = vmatpush1.msra.mxu0 0.0
      %1649 = vmatprep.subr.mxu0 0.0
      %1650 = vmatpush1.msra.mxu0 0.0
      %1651 = vmatprep.mubr.f32.mxu0 0.0
      %1652 = vmatmul.mubr.f32.gmra.mrb[0].mxu0 %v1585
      %v1653 = vpop.f32.mrb[0].mxu0
      %v1654 = vadd.f32 0.0, %v1653
      %v1655 = vpop.f32.mrb[0].mxu0
      %v1656 = vadd.f32 0.0, %v1655
      %1657 = vdwg.mxu0
      %v1660 = vrot.slane %v1654, 1
      %v1661 = vrot.slane %v1656, 1
      %v1664 = vadd.f32 %v1654, %v1660
      %v1665 = vadd.f32 %v1656, %v1661
      %v1666 = vxor.u32 %v1664, 2147483648
      %v1667 = vxor.u32 %v1665, 2147483648
      %v1668 = vmul.f32 %v1666, 1.442695
      %v1669 = vpow.pop %v1668
      %v1670 = vmul.f32 %v1667, 1.442695
      %v1671 = vpow.pop %v1670
      %v1672 = vadd.f32 %v1669, 1.0
      %v1673 = vadd.f32 %v1671, 1.0
      %v1674 = vrcp.pop %v1672
      %v1675 = vmul.f32 1.0, %v1674
      %v1676 = vrcp.pop %v1673
      %v1677 = vmul.f32 1.0, %v1676
      %v1678 = vlaneseq
      %v1679 = vshrl.u32 %v1678, 7
      %v1680 = vsub.s32 0, %v1679
      %v1681 = vrot.slane %v1675, %v1680
      %v1682 = vlaneseq
      %v1683 = vshrl.u32 %v1682, 7
      %v1684 = vsub.s32 0, %v1683
      %v1685 = vrot.slane %v1677, %v1684
      %v1686 = vmul.f32 %v1436, %v1681
      %v1687 = vmul.f32 %v1437, %v1685
      %v1690 = vcombine.low %v1686, %v1687
      %1692 = vst [vmem:[%s550] sm:$0xff] %v1690
      %p1693 = scmp.lt.s32.totalorder %s30, 1
      %s1694 = scalar_select %p1693, %s30, 1
      %s1695 = smul.addr %s1694, 2
      %s1696 = smul.addr %s1695, 4
      %s1697 = scalar_lea.vmem %s17, %s1696
      // Predicated region
      $region89: #{lightweight_cnn_forward.7} parent=87 // pred_check
        %p1698 = pneg %p410
      $region90: #{lightweight_cnn_forward.7} parent=87 // pred_check_branch
        %1700 = sbr.rel (%p1698) target = $region92
      $region91: #{lightweight_cnn_forward.7} parent=87 // pred_region
        _
      $region92: #{lightweight_cnn_forward.7} parent=87 // pred_fallthru
        _
    $region88: #{lightweight_cnn_forward.7} parent=5 // pred_fallthru
      _
    %p1701 = scmp.le.s32.totalorder 2, %s25
    // Predicated region
    $region93: #{lightweight_cnn_forward.7} parent=5 // pred_check
      %p1702 = pneg %p1701
    $region94: #{lightweight_cnn_forward.7} parent=5 // pred_check_branch
      %1704 = sbr.rel (%p1702) target = $region96
    $region95: #{lightweight_cnn_forward.7} parent=5 // pred_region
      %s1705 = ssub.s32 %s25, 2
      // Predicated region
      $region97: #{lightweight_cnn_forward.7} parent=95 // pred_check
        %p1706 = pneg %p416
      $region98: #{lightweight_cnn_forward.7} parent=95 // pred_check_branch
        %1708 = sbr.rel (%p1706) target = $region100
      $region99: #{lightweight_cnn_forward.7} parent=95 // pred_region
        %p1709 = scmp.lt.s32.totalorder %s31, 1
        %s1710 = scalar_select %p1709, %s31, 1
        %s1711 = smul.addr %s1710, 2
        %s1712 = smul.addr %s1711, 4
        %s1713 = scalar_lea.vmem %s17, %s1712
      $region100: #{lightweight_cnn_forward.7} parent=95 // pred_fallthru
        _
    $region96: #{lightweight_cnn_forward.7} parent=5 // pred_fallthru
      _
  $region6: #{lightweight_cnn_forward.7} parent=0 // loop_footer
    %s29 = sadd.s32 1, %s25
  $region7: #{lightweight_cnn_forward.7} parent=0 // loop_footer_branch
    %24 = sbr.rel target = $region3
  $region8: #{lightweight_cnn_forward.7} parent=0 // loop_exit
    _

</llo_original>
